<compile_context>
chip_gen: v6e
topology: v6e:2x2x1
jax: 0.10.0
libtpu: 0.0.40
codegen_flags: <defaults>
</compile_context>

<pallas_src>
import functools

import numpy as np
import jax
import jax.numpy as jnp
from jax.experimental import pallas as pl
from jax.experimental.pallas import tpu as pltpu

EPS = 1e-5  # PyTorch GroupNorm default eps


# ----------------------------- math helpers (usable inside kernels) ---------
def _gelu(x):
    # tanh-approx GELU: the transcendental goes to the EUP slot (separate
    # bundle slot from the VALU).  |err| vs torch's exact erf GELU <~ 1e-3.
    c = 0.7978845608028654  # sqrt(2/pi)
    return 0.5 * x * (1.0 + jnp.tanh(c * (x + 0.044715 * x * x * x)))


# ----------------------------- fused kernel ----------------------------------
def _down_kernel(x_ref, w1_ref, g1_ref, b1_ref, w2_ref, g2_ref, b2_ref,
                 w3_ref, g3_ref, b3_ref, w4_ref, g4_ref, b4_ref, emb_ref,
                 o_ref, pad_a, pad_b, *, bt, Hp, Wp, Cin, Cout):
    """Whole Down block (post max-pool) for a block of `bt` batch samples."""
    f32 = jnp.float32
    HW = Hp * Wp
    M = bt * HW

    def zero_halo(pad):
        # Interiors are fully rewritten before each conv; only the 1-pixel
        # halo (Conv2d padding=1 zeros) needs zeroing.  Done every grid step
        # (NOT gated on program_id==0) so it is correct under megacore
        # "parallel" where each core has its own scratch.
        c = pad.shape[-1]
        zr = jnp.zeros((bt, 1, Wp + 2, c), pad.dtype)
        zc = jnp.zeros((bt, Hp + 2, 1, c), pad.dtype)
        pad[:, 0:1, :, :] = zr
        pad[:, Hp + 1:Hp + 2, :, :] = zr
        pad[:, :, 0:1, :] = zc
        pad[:, :, Wp + 1:Wp + 2, :] = zc

    def conv3x3_gn(pad_ref, w_ref, g_ref, b_ref, cout):
        cin = pad_ref.shape[-1]
        # 9 accumulating per-tap matmuls (no (M, 9*cin) im2col copy).  Only
        # the matmul operands are bf16; accumulation and everything after is f32.
        acc = jnp.zeros((M, cout), f32)
        for dh in range(3):
            for dw in range(3):
                tap = pad_ref[:, dh:dh + Hp, dw:dw + Wp, :]     # (bt,Hp,Wp,cin) f32
                tap = tap.reshape(M, cin).astype(jnp.bfloat16)  # operand-only cast
                acc = acc + jnp.dot(tap, w_ref[dh * 3 + dw],
                                    preferred_element_type=f32)
        # GroupNorm(1, C): per-sample stats over (spatial, channel), centered
        # two-pass form (avoids E[x^2]-mean^2 cancellation), all f32.
        y = acc.reshape(bt, HW, cout)
        inv_n = 1.0 / float(HW * cout)
        s = jnp.sum(jnp.sum(y, axis=2, keepdims=True), axis=1, keepdims=True)
        mean = s * inv_n                                        # (bt,1,1)
        d = y - mean
        ss = jnp.sum(jnp.sum(d * d, axis=2, keepdims=True), axis=1, keepdims=True)
        var = ss * inv_n
        return d * jax.lax.rsqrt(var + EPS) * g_ref[...][None] + b_ref[...][None]

    zero_halo(pad_a)
    zero_halo(pad_b)

    x = x_ref[...]                                              # (bt,Hp,Wp,Cin) f32
    x_flat = x.reshape(bt, HW, Cin)

    # DoubleConv(in, in, residual=True): gelu(x + GN2(conv2(gelu(GN1(conv1 x)))))
    pad_a[:, 1:Hp + 1, 1:Wp + 1, :] = x
    h1 = _gelu(conv3x3_gn(pad_a, w1_ref, g1_ref, b1_ref, Cin))  # (bt,HW,Cin)

    pad_a[:, 1:Hp + 1, 1:Wp + 1, :] = h1.reshape(bt, Hp, Wp, Cin)
    h2 = _gelu(x_flat + conv3x3_gn(pad_a, w2_ref, g2_ref, b2_ref, Cin))

    # DoubleConv(in, out) (mid = out): gelu(GN3(conv3 .)) then GN4(conv4 .)
    pad_a[:, 1:Hp + 1, 1:Wp + 1, :] = h2.reshape(bt, Hp, Wp, Cin)
    h3 = _gelu(conv3x3_gn(pad_a, w3_ref, g3_ref, b3_ref, Cout)) # (bt,HW,Cout)

    pad_b[:, 1:Hp + 1, 1:Wp + 1, :] = h3.reshape(bt, Hp, Wp, Cout)
    y4 = conv3x3_gn(pad_b, w4_ref, g4_ref, b4_ref, Cout)

    # + time embedding (projection precomputed outside; broadcast over HW)
    b = pl.program_id(0)
    emb_rows = emb_ref[pl.ds(b * bt, bt), :]                    # (bt, Cout) f32
    o_ref[...] = (y4 + emb_rows[:, None, :]).astype(o_ref.dtype)


# ----------------------------- batch-tile policy ------------------------------
def _pick_batch_tile(B, HW, m_target=256):
    # Fold enough samples into each grid step to give the MXU a tall M
    # (>= m_target rows when the batch allows).  When one sample already
    # fills M, keep >= 2 grid steps so v7x's second TensorCore gets work.
    bt = max(1, min(B, -(-m_target // HW)))
    if B >= 2 * bt:
        pass                     # both goals met: tall M and >= 2 grid steps
    elif B >= 2 and HW >= m_target:
        bt = 1                   # per-sample M already tall -> split for 2 cores
    while bt > 1 and B % bt:
        bt -= 1
    return bt


# ----------------------------- pallas_call wrapper ---------------------------
def _fused_down_call(pooled, emb, P, bt=None):
    B, Hp, Wp, Cin = pooled.shape
    Cout = P["w3"].shape[-1]
    HW = Hp * Wp
    if bt is None:
        bt = _pick_batch_tile(B, HW)
    assert B % bt == 0, (B, bt)

    # Weights in per-tap layout (9, Cin, Cout), bf16 (matmul-operand dtype);
    # tap index dh*3 + dw matches the in-kernel loop order.
    w1 = P["w1"].reshape(9, Cin, Cin).astype(jnp.bfloat16)
    w2 = P["w2"].reshape(9, Cin, Cin).astype(jnp.bfloat16)
    w3 = P["w3"].reshape(9, Cin, Cout).astype(jnp.bfloat16)
    w4 = P["w4"].reshape(9, Cout, Cout).astype(jnp.bfloat16)

    def row(p, c):
        return p.reshape(1, c).astype(jnp.float32)

    g1, b1 = row(P["g1"], Cin), row(P["b1"], Cin)
    g2, b2 = row(P["g2"], Cin), row(P["b2"], Cin)
    g3, b3 = row(P["g3"], Cout), row(P["b3"], Cout)
    g4, b4 = row(P["g4"], Cout), row(P["b4"], Cout)
    emb = emb.astype(jnp.float32)

    # Grid-invariant operands: whole-array VMEM residents (single-buffered,
    # no per-step DMA / double-buffering of weights).
    def vmem_full():
        return pl.BlockSpec(memory_space=pltpu.MemorySpace.VMEM)

    in_specs = [pl.BlockSpec((bt, Hp, Wp, Cin), lambda b: (b, 0, 0, 0))]  # pooled x
    in_specs += [vmem_full() for _ in range(13)]   # w1..b4 (12) + emb rows (1)

    kernel = functools.partial(_down_kernel, bt=bt, Hp=Hp, Wp=Wp,
                               Cin=Cin, Cout=Cout)

    # VMEM budget: ~75% of physical per-core VMEM, capped at 100 MiB
    # (v7x: 64 MiB -> 48 MiB; v5e/v6e: 128 MiB -> 96 MiB).
    try:
        phys_vmem = getattr(pltpu.get_tpu_info(), "vmem_capacity_bytes",
                            128 * 1024 * 1024)
    except Exception:
        phys_vmem = 128 * 1024 * 1024
    vmem_limit = int(min(100 * 1024 * 1024, (phys_vmem * 3) // 4))

    return pl.pallas_call(
        kernel,
        # NHWC-flat output: lane-dense whenever Cout is a multiple of 128
        # (all real UNet configs); masked stores only at the toy Cout=8 size.
        out_shape=jax.ShapeDtypeStruct((B, HW, Cout), jnp.float32),
        grid=(B // bt,),
        in_specs=in_specs,
        out_specs=pl.BlockSpec((bt, HW, Cout), lambda b: (b, 0, 0)),
        scratch_shapes=[
            pltpu.VMEM((bt, Hp + 2, Wp + 2, Cin), jnp.float32),   # padded act (Cin stages)
            pltpu.VMEM((bt, Hp + 2, Wp + 2, Cout), jnp.float32),  # padded act (Cout stage)
        ],
        compiler_params=pltpu.CompilerParams(
            dimension_semantics=("parallel",),   # batch tiles are independent
            vmem_limit_bytes=vmem_limit),
    )(pooled, w1, g1, b1, w2, g2, b2, w3, g3, b3, w4, g4, b4, emb)


# ----------------------------- Down.forward ----------------------------------
def down_forward(x_nchw, t, P, bt=None):
    x = jnp.transpose(x_nchw, (0, 2, 3, 1)).astype(jnp.float32)    # NCHW -> NHWC
    B, H, W, Cin = x.shape
    Hp, Wp = H // 2, W // 2
    # TODO(synk): MaxPool2d(2) stays one fused XLA reshape+max; fusing it
    # in-kernel needs stride-2 sublane loads / tiled-dim reshapes that are
    # avoidable lowering risk for a cheap elementwise pass.
    pooled = x.reshape(B, Hp, 2, Wp, 2, Cin).max(axis=(2, 4))
    Cout = P["w3"].shape[-1]
    # emb_layer (SiLU -> Linear) hoisted to one batched XLA matmul.
    emb = (jax.nn.silu(t.astype(jnp.float32)) @ P["wemb"] + P["bemb"]).reshape(B, Cout)
    out = _fused_down_call(pooled, emb, P, bt=bt)                  # (B, Hp*Wp, Cout)
    out = out.reshape(B, Hp, Wp, Cout)
    return jnp.transpose(out, (0, 3, 1, 2))                        # NHWC -> NCHW


# ----------------------------- pure-JAX reference -----------------------------
def ref_forward(x_nchw, t, P):
    x = jnp.transpose(x_nchw, (0, 2, 3, 1)).astype(jnp.float32)
    B, H, W, C = x.shape
    pooled = x.reshape(B, H // 2, 2, W // 2, 2, C).max(axis=(2, 4))

    def conv(h, w):
        return jax.lax.conv_general_dilated(
            h, w, (1, 1), "SAME",
            dimension_numbers=("NHWC", "HWIO", "NHWC"))

    def gn(h, g, b):
        m = h.mean(axis=(1, 2, 3), keepdims=True)
        v = ((h - m) ** 2).mean(axis=(1, 2, 3), keepdims=True)
        return (h - m) * jax.lax.rsqrt(v + EPS) * g + b

    gelu = lambda z: jax.nn.gelu(z, approximate=False)   # exact erf = torch nn.GELU()
    h1 = gelu(gn(conv(pooled, P["w1"]), P["g1"], P["b1"]))
    h2 = gelu(pooled + gn(conv(h1, P["w2"]), P["g2"], P["b2"]))
    h3 = gelu(gn(conv(h2, P["w3"]), P["g3"], P["b3"]))
    h4 = gn(conv(h3, P["w4"]), P["g4"], P["b4"])
    emb = jax.nn.silu(t) @ P["wemb"] + P["bemb"]
    out = h4 + emb[:, None, None, :]
    return jnp.transpose(out, (0, 3, 1, 2))


# ----------------------------- params -----------------------------------------
def init_params(key, in_ch, out_ch, emb_dim):
    ks = jax.random.split(key, 16)

    def conv_w(k, cin, cout):
        return jax.random.normal(k, (3, 3, cin, cout), jnp.float32) / np.sqrt(9 * cin)

    def gn_gb(k1, k2, c):
        return (1.0 + 0.1 * jax.random.normal(k1, (c,), jnp.float32),
                0.1 * jax.random.normal(k2, (c,), jnp.float32))

    P = {}
    P["w1"] = conv_w(ks[0], in_ch, in_ch)
    P["g1"], P["b1"] = gn_gb(ks[1], ks[2], in_ch)
    P["w2"] = conv_w(ks[3], in_ch, in_ch)
    P["g2"], P["b2"] = gn_gb(ks[4], ks[5], in_ch)
    P["w3"] = conv_w(ks[6], in_ch, out_ch)
    P["g3"], P["b3"] = gn_gb(ks[7], ks[8], out_ch)
    P["w4"] = conv_w(ks[9], out_ch, out_ch)
    P["g4"], P["b4"] = gn_gb(ks[10], ks[11], out_ch)
    P["wemb"] = jax.random.normal(ks[12], (emb_dim, out_ch), jnp.float32) / np.sqrt(emb_dim)
    P["bemb"] = 0.1 * jax.random.normal(ks[13], (out_ch,), jnp.float32)
    return P


if __name__ == "__main__":
    key = jax.random.PRNGKey(0)
    kx, kt, kp = jax.random.split(key, 3)

    B, Cin, H, W = 2, 4, 16, 16
    Cout, emb_dim = 8, 256

    x = jax.random.normal(kx, (B, Cin, H, W), jnp.float32)
    t = jax.random.normal(kt, (B, emb_dim), jnp.float32)
    P = init_params(kp, Cin, Cout, emb_dim)

    out = jax.block_until_ready(down_forward(x, t, P))
    assert out.shape == (B, Cout, H // 2, W // 2), out.shape
    assert np.isfinite(np.asarray(out)).all()

    ref = jax.block_until_ready(ref_forward(x, t, P))
    max_err = float(jnp.max(jnp.abs(out - ref)))
    assert max_err < 5e-2, f"max abs err vs reference: {max_err}"

    print("KERNEL_OK")
</pallas_src>

<mosaic_0001>
module attributes {stable_mosaic.version = 11 : i64} {
  func.func @_down_kernel(%arg0: i32, %arg1: memref<2x8x8x4xf32, #tpu.memory_space<vmem>>, %arg2: memref<9x4x4xbf16, #tpu.memory_space<vmem>>, %arg3: memref<1x4xf32, #tpu.memory_space<vmem>>, %arg4: memref<1x4xf32, #tpu.memory_space<vmem>>, %arg5: memref<9x4x4xbf16, #tpu.memory_space<vmem>>, %arg6: memref<1x4xf32, #tpu.memory_space<vmem>>, %arg7: memref<1x4xf32, #tpu.memory_space<vmem>>, %arg8: memref<9x4x8xbf16, #tpu.memory_space<vmem>>, %arg9: memref<1x8xf32, #tpu.memory_space<vmem>>, %arg10: memref<1x8xf32, #tpu.memory_space<vmem>>, %arg11: memref<9x8x8xbf16, #tpu.memory_space<vmem>>, %arg12: memref<1x8xf32, #tpu.memory_space<vmem>>, %arg13: memref<1x8xf32, #tpu.memory_space<vmem>>, %arg14: memref<2x8xf32, #tpu.memory_space<vmem>>, %arg15: memref<2x64x8xf32, #tpu.memory_space<vmem>>, %arg16: memref<2x10x10x4xf32, #tpu.memory_space<vmem>>, %arg17: memref<2x10x10x8xf32, #tpu.memory_space<vmem>>) attributes {dimension_semantics = [#tpu.dimension_semantics<parallel>], iteration_bounds = array<i64: 1>, scalar_prefetch = 0 : i64, scratch_operands = 2 : i64, tpu.core_type = #tpu.core_type<tc>, window_params = [{transform_indices = @transform_0, window_bounds = array<i64: 2, 8, 8, 4>}, {pipeline_mode = #tpu.pipeline_mode<synchronous>, transform_indices = @transform_1, window_bounds = array<i64: 9, 4, 4>}, {pipeline_mode = #tpu.pipeline_mode<synchronous>, transform_indices = @transform_2, window_bounds = array<i64: 1, 4>}, {pipeline_mode = #tpu.pipeline_mode<synchronous>, transform_indices = @transform_3, window_bounds = array<i64: 1, 4>}, {pipeline_mode = #tpu.pipeline_mode<synchronous>, transform_indices = @transform_4, window_bounds = array<i64: 9, 4, 4>}, {pipeline_mode = #tpu.pipeline_mode<synchronous>, transform_indices = @transform_5, window_bounds = array<i64: 1, 4>}, {pipeline_mode = #tpu.pipeline_mode<synchronous>, transform_indices = @transform_6, window_bounds = array<i64: 1, 4>}, {pipeline_mode = #tpu.pipeline_mode<synchronous>, transform_indices = @transform_7, window_bounds = array<i64: 9, 4, 8>}, {pipeline_mode = #tpu.pipeline_mode<synchronous>, transform_indices = @transform_8, window_bounds = array<i64: 1, 8>}, {pipeline_mode = #tpu.pipeline_mode<synchronous>, transform_indices = @transform_9, window_bounds = array<i64: 1, 8>}, {pipeline_mode = #tpu.pipeline_mode<synchronous>, transform_indices = @transform_10, window_bounds = array<i64: 9, 8, 8>}, {pipeline_mode = #tpu.pipeline_mode<synchronous>, transform_indices = @transform_11, window_bounds = array<i64: 1, 8>}, {pipeline_mode = #tpu.pipeline_mode<synchronous>, transform_indices = @transform_12, window_bounds = array<i64: 1, 8>}, {pipeline_mode = #tpu.pipeline_mode<synchronous>, transform_indices = @transform_13, window_bounds = array<i64: 2, 8>}, {transform_indices = @transform_14, window_bounds = array<i64: 2, 64, 8>}]} {
    %cst = arith.constant 0.000000e+00 : f32
    %0 = vector.broadcast %cst : f32 to vector<2x1x10x4xf32>
    %cst_0 = arith.constant 0.000000e+00 : f32
    %1 = vector.broadcast %cst_0 : f32 to vector<2x10x1x4xf32>
    %c0 = arith.constant 0 : index
    %c0_1 = arith.constant 0 : index
    %c0_2 = arith.constant 0 : index
    %c0_3 = arith.constant 0 : index
    %2 = vector.load %arg16[%c0, %c0_1, %c0_2, %c0_3] : memref<2x10x10x4xf32, #tpu.memory_space<vmem>>, vector<2x1x10x4xf32>
    tpu.vector_store %arg16[%c0, %c0_1, %c0_2, %c0_3], %0 {strides = array<i32>} : memref<2x10x10x4xf32, #tpu.memory_space<vmem>>, vector<2x1x10x4xf32>,
    %c0_4 = arith.constant 0 : index
    %c9 = arith.constant 9 : index
    %c0_5 = arith.constant 0 : index
    %c0_6 = arith.constant 0 : index
    %3 = vector.load %arg16[%c0_4, %c9, %c0_5, %c0_6] : memref<2x10x10x4xf32, #tpu.memory_space<vmem>>, vector<2x1x10x4xf32>
    tpu.vector_store %arg16[%c0_4, %c9, %c0_5, %c0_6], %0 {strides = array<i32>} : memref<2x10x10x4xf32, #tpu.memory_space<vmem>>, vector<2x1x10x4xf32>,
    %c0_7 = arith.constant 0 : index
    %c0_8 = arith.constant 0 : index
    %c0_9 = arith.constant 0 : index
    %c0_10 = arith.constant 0 : index
    %4 = vector.load %arg16[%c0_7, %c0_8, %c0_9, %c0_10] : memref<2x10x10x4xf32, #tpu.memory_space<vmem>>, vector<2x10x1x4xf32>
    tpu.vector_store %arg16[%c0_7, %c0_8, %c0_9, %c0_10], %1 {strides = array<i32>} : memref<2x10x10x4xf32, #tpu.memory_space<vmem>>, vector<2x10x1x4xf32>,
    %c0_11 = arith.constant 0 : index
    %c0_12 = arith.constant 0 : index
    %c9_13 = arith.constant 9 : index
    %c0_14 = arith.constant 0 : index
    %5 = vector.load %arg16[%c0_11, %c0_12, %c9_13, %c0_14] : memref<2x10x10x4xf32, #tpu.memory_space<vmem>>, vector<2x10x1x4xf32>
    tpu.vector_store %arg16[%c0_11, %c0_12, %c9_13, %c0_14], %1 {strides = array<i32>} : memref<2x10x10x4xf32, #tpu.memory_space<vmem>>, vector<2x10x1x4xf32>,
    %cst_15 = arith.constant 0.000000e+00 : f32
    %6 = vector.broadcast %cst_15 : f32 to vector<2x1x10x8xf32>
    %cst_16 = arith.constant 0.000000e+00 : f32
    %7 = vector.broadcast %cst_16 : f32 to vector<2x10x1x8xf32>
    %c0_17 = arith.constant 0 : index
    %c0_18 = arith.constant 0 : index
    %c0_19 = arith.constant 0 : index
    %c0_20 = arith.constant 0 : index
    %8 = vector.load %arg17[%c0_17, %c0_18, %c0_19, %c0_20] : memref<2x10x10x8xf32, #tpu.memory_space<vmem>>, vector<2x1x10x8xf32>
    tpu.vector_store %arg17[%c0_17, %c0_18, %c0_19, %c0_20], %6 {strides = array<i32>} : memref<2x10x10x8xf32, #tpu.memory_space<vmem>>, vector<2x1x10x8xf32>,
    %c0_21 = arith.constant 0 : index
    %c9_22 = arith.constant 9 : index
    %c0_23 = arith.constant 0 : index
    %c0_24 = arith.constant 0 : index
    %9 = vector.load %arg17[%c0_21, %c9_22, %c0_23, %c0_24] : memref<2x10x10x8xf32, #tpu.memory_space<vmem>>, vector<2x1x10x8xf32>
    tpu.vector_store %arg17[%c0_21, %c9_22, %c0_23, %c0_24], %6 {strides = array<i32>} : memref<2x10x10x8xf32, #tpu.memory_space<vmem>>, vector<2x1x10x8xf32>,
    %c0_25 = arith.constant 0 : index
    %c0_26 = arith.constant 0 : index
    %c0_27 = arith.constant 0 : index
    %c0_28 = arith.constant 0 : index
    %10 = vector.load %arg17[%c0_25, %c0_26, %c0_27, %c0_28] : memref<2x10x10x8xf32, #tpu.memory_space<vmem>>, vector<2x10x1x8xf32>
    tpu.vector_store %arg17[%c0_25, %c0_26, %c0_27, %c0_28], %7 {strides = array<i32>} : memref<2x10x10x8xf32, #tpu.memory_space<vmem>>, vector<2x10x1x8xf32>,
    %c0_29 = arith.constant 0 : index
    %c0_30 = arith.constant 0 : index
    %c9_31 = arith.constant 9 : index
    %c0_32 = arith.constant 0 : index
    %11 = vector.load %arg17[%c0_29, %c0_30, %c9_31, %c0_32] : memref<2x10x10x8xf32, #tpu.memory_space<vmem>>, vector<2x10x1x8xf32>
    tpu.vector_store %arg17[%c0_29, %c0_30, %c9_31, %c0_32], %7 {strides = array<i32>} : memref<2x10x10x8xf32, #tpu.memory_space<vmem>>, vector<2x10x1x8xf32>,
    %c0_33 = arith.constant 0 : index
    %c0_34 = arith.constant 0 : index
    %c0_35 = arith.constant 0 : index
    %c0_36 = arith.constant 0 : index
    %12 = vector.load %arg1[%c0_33, %c0_34, %c0_35, %c0_36] : memref<2x8x8x4xf32, #tpu.memory_space<vmem>>, vector<2x8x8x4xf32>
    %13 = vector.shape_cast %12 : vector<2x8x8x4xf32> to vector<2x64x4xf32>
    %c0_37 = arith.constant 0 : index
    %c1 = arith.constant 1 : index
    %c1_38 = arith.constant 1 : index
    %c0_39 = arith.constant 0 : index
    %14 = vector.load %arg16[%c0_37, %c1, %c1_38, %c0_39] : memref<2x10x10x4xf32, #tpu.memory_space<vmem>>, vector<2x8x8x4xf32>
    tpu.vector_store %arg16[%c0_37, %c1, %c1_38, %c0_39], %12 {strides = array<i32>} : memref<2x10x10x4xf32, #tpu.memory_space<vmem>>, vector<2x8x8x4xf32>,
    %cst_40 = arith.constant 0.000000e+00 : f32
    %15 = vector.broadcast %cst_40 : f32 to vector<128x4xf32>
    %c0_41 = arith.constant 0 : index
    %c0_42 = arith.constant 0 : index
    %c0_43 = arith.constant 0 : index
    %c0_44 = arith.constant 0 : index
    %16 = vector.load %arg16[%c0_41, %c0_42, %c0_43, %c0_44] : memref<2x10x10x4xf32, #tpu.memory_space<vmem>>, vector<2x8x8x4xf32>
    %17 = vector.shape_cast %16 : vector<2x8x8x4xf32> to vector<128x4xf32>
    %18 = arith.truncf %17 : vector<128x4xf32> to vector<128x4xbf16>
    %c0_45 = arith.constant 0 : index
    %c0_46 = arith.constant 0 : index
    %c0_47 = arith.constant 0 : index
    %19 = vector.load %arg2[%c0_45, %c0_46, %c0_47] : memref<9x4x4xbf16, #tpu.memory_space<vmem>>, vector<1x4x4xbf16>
    %20 = vector.shape_cast %19 : vector<1x4x4xbf16> to vector<4x4xbf16>
    %cst_48 = arith.constant dense<0.000000e+00> : vector<128x4xf32>
    %21 = tpu.matmul %18, %20, %cst_48 {dimension_numbers = #tpu.dot_dimension_numbers<[1], [0], [0], [1], [0, 0, 1, 1], [], []>} : vector<128x4xbf16>, vector<4x4xbf16>, vector<128x4xf32> -> vector<128x4xf32>
    %22 = arith.addf %15, %21 : vector<128x4xf32>
    %c0_49 = arith.constant 0 : index
    %c0_50 = arith.constant 0 : index
    %c1_51 = arith.constant 1 : index
    %c0_52 = arith.constant 0 : index
    %23 = vector.load %arg16[%c0_49, %c0_50, %c1_51, %c0_52] : memref<2x10x10x4xf32, #tpu.memory_space<vmem>>, vector<2x8x8x4xf32>
    %24 = vector.shape_cast %23 : vector<2x8x8x4xf32> to vector<128x4xf32>
    %25 = arith.truncf %24 : vector<128x4xf32> to vector<128x4xbf16>
    %c1_53 = arith.constant 1 : index
    %c0_54 = arith.constant 0 : index
    %c0_55 = arith.constant 0 : index
    %26 = vector.load %arg2[%c1_53, %c0_54, %c0_55] : memref<9x4x4xbf16, #tpu.memory_space<vmem>>, vector<1x4x4xbf16>
    %27 = vector.shape_cast %26 : vector<1x4x4xbf16> to vector<4x4xbf16>
    %cst_56 = arith.constant dense<0.000000e+00> : vector<128x4xf32>
    %28 = tpu.matmul %25, %27, %cst_56 {dimension_numbers = #tpu.dot_dimension_numbers<[1], [0], [0], [1], [0, 0, 1, 1], [], []>} : vector<128x4xbf16>, vector<4x4xbf16>, vector<128x4xf32> -> vector<128x4xf32>
    %29 = arith.addf %22, %28 : vector<128x4xf32>
    %c0_57 = arith.constant 0 : index
    %c0_58 = arith.constant 0 : index
    %c2 = arith.constant 2 : index
    %c0_59 = arith.constant 0 : index
    %30 = vector.load %arg16[%c0_57, %c0_58, %c2, %c0_59] : memref<2x10x10x4xf32, #tpu.memory_space<vmem>>, vector<2x8x8x4xf32>
    %31 = vector.shape_cast %30 : vector<2x8x8x4xf32> to vector<128x4xf32>
    %32 = arith.truncf %31 : vector<128x4xf32> to vector<128x4xbf16>
    %c2_60 = arith.constant 2 : index
    %c0_61 = arith.constant 0 : index
    %c0_62 = arith.constant 0 : index
    %33 = vector.load %arg2[%c2_60, %c0_61, %c0_62] : memref<9x4x4xbf16, #tpu.memory_space<vmem>>, vector<1x4x4xbf16>
    %34 = vector.shape_cast %33 : vector<1x4x4xbf16> to vector<4x4xbf16>
    %cst_63 = arith.constant dense<0.000000e+00> : vector<128x4xf32>
    %35 = tpu.matmul %32, %34, %cst_63 {dimension_numbers = #tpu.dot_dimension_numbers<[1], [0], [0], [1], [0, 0, 1, 1], [], []>} : vector<128x4xbf16>, vector<4x4xbf16>, vector<128x4xf32> -> vector<128x4xf32>
    %36 = arith.addf %29, %35 : vector<128x4xf32>
    %c0_64 = arith.constant 0 : index
    %c1_65 = arith.constant 1 : index
    %c0_66 = arith.constant 0 : index
    %c0_67 = arith.constant 0 : index
    %37 = vector.load %arg16[%c0_64, %c1_65, %c0_66, %c0_67] : memref<2x10x10x4xf32, #tpu.memory_space<vmem>>, vector<2x8x8x4xf32>
    %38 = vector.shape_cast %37 : vector<2x8x8x4xf32> to vector<128x4xf32>
    %39 = arith.truncf %38 : vector<128x4xf32> to vector<128x4xbf16>
    %c3 = arith.constant 3 : index
    %c0_68 = arith.constant 0 : index
    %c0_69 = arith.constant 0 : index
    %40 = vector.load %arg2[%c3, %c0_68, %c0_69] : memref<9x4x4xbf16, #tpu.memory_space<vmem>>, vector<1x4x4xbf16>
    %41 = vector.shape_cast %40 : vector<1x4x4xbf16> to vector<4x4xbf16>
    %cst_70 = arith.constant dense<0.000000e+00> : vector<128x4xf32>
    %42 = tpu.matmul %39, %41, %cst_70 {dimension_numbers = #tpu.dot_dimension_numbers<[1], [0], [0], [1], [0, 0, 1, 1], [], []>} : vector<128x4xbf16>, vector<4x4xbf16>, vector<128x4xf32> -> vector<128x4xf32>
    %43 = arith.addf %36, %42 : vector<128x4xf32>
    %c0_71 = arith.constant 0 : index
    %c1_72 = arith.constant 1 : index
    %c1_73 = arith.constant 1 : index
    %c0_74 = arith.constant 0 : index
    %44 = vector.load %arg16[%c0_71, %c1_72, %c1_73, %c0_74] : memref<2x10x10x4xf32, #tpu.memory_space<vmem>>, vector<2x8x8x4xf32>
    %45 = vector.shape_cast %44 : vector<2x8x8x4xf32> to vector<128x4xf32>
    %46 = arith.truncf %45 : vector<128x4xf32> to vector<128x4xbf16>
    %c4 = arith.constant 4 : index
    %c0_75 = arith.constant 0 : index
    %c0_76 = arith.constant 0 : index
    %47 = vector.load %arg2[%c4, %c0_75, %c0_76] : memref<9x4x4xbf16, #tpu.memory_space<vmem>>, vector<1x4x4xbf16>
    %48 = vector.shape_cast %47 : vector<1x4x4xbf16> to vector<4x4xbf16>
    %cst_77 = arith.constant dense<0.000000e+00> : vector<128x4xf32>
    %49 = tpu.matmul %46, %48, %cst_77 {dimension_numbers = #tpu.dot_dimension_numbers<[1], [0], [0], [1], [0, 0, 1, 1], [], []>} : vector<128x4xbf16>, vector<4x4xbf16>, vector<128x4xf32> -> vector<128x4xf32>
    %50 = arith.addf %43, %49 : vector<128x4xf32>
    %c0_78 = arith.constant 0 : index
    %c1_79 = arith.constant 1 : index
    %c2_80 = arith.constant 2 : index
    %c0_81 = arith.constant 0 : index
    %51 = vector.load %arg16[%c0_78, %c1_79, %c2_80, %c0_81] : memref<2x10x10x4xf32, #tpu.memory_space<vmem>>, vector<2x8x8x4xf32>
    %52 = vector.shape_cast %51 : vector<2x8x8x4xf32> to vector<128x4xf32>
    %53 = arith.truncf %52 : vector<128x4xf32> to vector<128x4xbf16>
    %c5 = arith.constant 5 : index
    %c0_82 = arith.constant 0 : index
    %c0_83 = arith.constant 0 : index
    %54 = vector.load %arg2[%c5, %c0_82, %c0_83] : memref<9x4x4xbf16, #tpu.memory_space<vmem>>, vector<1x4x4xbf16>
    %55 = vector.shape_cast %54 : vector<1x4x4xbf16> to vector<4x4xbf16>
    %cst_84 = arith.constant dense<0.000000e+00> : vector<128x4xf32>
    %56 = tpu.matmul %53, %55, %cst_84 {dimension_numbers = #tpu.dot_dimension_numbers<[1], [0], [0], [1], [0, 0, 1, 1], [], []>} : vector<128x4xbf16>, vector<4x4xbf16>, vector<128x4xf32> -> vector<128x4xf32>
    %57 = arith.addf %50, %56 : vector<128x4xf32>
    %c0_85 = arith.constant 0 : index
    %c2_86 = arith.constant 2 : index
    %c0_87 = arith.constant 0 : index
    %c0_88 = arith.constant 0 : index
    %58 = vector.load %arg16[%c0_85, %c2_86, %c0_87, %c0_88] : memref<2x10x10x4xf32, #tpu.memory_space<vmem>>, vector<2x8x8x4xf32>
    %59 = vector.shape_cast %58 : vector<2x8x8x4xf32> to vector<128x4xf32>
    %60 = arith.truncf %59 : vector<128x4xf32> to vector<128x4xbf16>
    %c6 = arith.constant 6 : index
    %c0_89 = arith.constant 0 : index
    %c0_90 = arith.constant 0 : index
    %61 = vector.load %arg2[%c6, %c0_89, %c0_90] : memref<9x4x4xbf16, #tpu.memory_space<vmem>>, vector<1x4x4xbf16>
    %62 = vector.shape_cast %61 : vector<1x4x4xbf16> to vector<4x4xbf16>
    %cst_91 = arith.constant dense<0.000000e+00> : vector<128x4xf32>
    %63 = tpu.matmul %60, %62, %cst_91 {dimension_numbers = #tpu.dot_dimension_numbers<[1], [0], [0], [1], [0, 0, 1, 1], [], []>} : vector<128x4xbf16>, vector<4x4xbf16>, vector<128x4xf32> -> vector<128x4xf32>
    %64 = arith.addf %57, %63 : vector<128x4xf32>
    %c0_92 = arith.constant 0 : index
    %c2_93 = arith.constant 2 : index
    %c1_94 = arith.constant 1 : index
    %c0_95 = arith.constant 0 : index
    %65 = vector.load %arg16[%c0_92, %c2_93, %c1_94, %c0_95] : memref<2x10x10x4xf32, #tpu.memory_space<vmem>>, vector<2x8x8x4xf32>
    %66 = vector.shape_cast %65 : vector<2x8x8x4xf32> to vector<128x4xf32>
    %67 = arith.truncf %66 : vector<128x4xf32> to vector<128x4xbf16>
    %c7 = arith.constant 7 : index
    %c0_96 = arith.constant 0 : index
    %c0_97 = arith.constant 0 : index
    %68 = vector.load %arg2[%c7, %c0_96, %c0_97] : memref<9x4x4xbf16, #tpu.memory_space<vmem>>, vector<1x4x4xbf16>
    %69 = vector.shape_cast %68 : vector<1x4x4xbf16> to vector<4x4xbf16>
    %cst_98 = arith.constant dense<0.000000e+00> : vector<128x4xf32>
    %70 = tpu.matmul %67, %69, %cst_98 {dimension_numbers = #tpu.dot_dimension_numbers<[1], [0], [0], [1], [0, 0, 1, 1], [], []>} : vector<128x4xbf16>, vector<4x4xbf16>, vector<128x4xf32> -> vector<128x4xf32>
    %71 = arith.addf %64, %70 : vector<128x4xf32>
    %c0_99 = arith.constant 0 : index
    %c2_100 = arith.constant 2 : index
    %c2_101 = arith.constant 2 : index
    %c0_102 = arith.constant 0 : index
    %72 = vector.load %arg16[%c0_99, %c2_100, %c2_101, %c0_102] : memref<2x10x10x4xf32, #tpu.memory_space<vmem>>, vector<2x8x8x4xf32>
    %73 = vector.shape_cast %72 : vector<2x8x8x4xf32> to vector<128x4xf32>
    %74 = arith.truncf %73 : vector<128x4xf32> to vector<128x4xbf16>
    %c8 = arith.constant 8 : index
    %c0_103 = arith.constant 0 : index
    %c0_104 = arith.constant 0 : index
    %75 = vector.load %arg2[%c8, %c0_103, %c0_104] : memref<9x4x4xbf16, #tpu.memory_space<vmem>>, vector<1x4x4xbf16>
    %76 = vector.shape_cast %75 : vector<1x4x4xbf16> to vector<4x4xbf16>
    %cst_105 = arith.constant dense<0.000000e+00> : vector<128x4xf32>
    %77 = tpu.matmul %74, %76, %cst_105 {dimension_numbers = #tpu.dot_dimension_numbers<[1], [0], [0], [1], [0, 0, 1, 1], [], []>} : vector<128x4xbf16>, vector<4x4xbf16>, vector<128x4xf32> -> vector<128x4xf32>
    %78 = arith.addf %71, %77 : vector<128x4xf32>
    %79 = vector.shape_cast %78 : vector<128x4xf32> to vector<2x64x4xf32>
    %cst_106 = arith.constant dense<0.000000e+00> : vector<2x64xf32>
    %80 = vector.multi_reduction <add>, %79, %cst_106 [2] : vector<2x64x4xf32> to vector<2x64xf32>
    %81 = vector.shape_cast %80 : vector<2x64xf32> to vector<2x64x1xf32>
    %cst_107 = arith.constant dense<0.000000e+00> : vector<2x1xf32>
    %82 = vector.multi_reduction <add>, %81, %cst_107 [1] : vector<2x64x1xf32> to vector<2x1xf32>
    %83 = vector.shape_cast %82 : vector<2x1xf32> to vector<2x1x1xf32>
    %cst_108 = arith.constant 3.906250e-03 : f32
    %84 = vector.broadcast %cst_108 : f32 to vector<2x1x1xf32>
    %85 = arith.mulf %83, %84 : vector<2x1x1xf32>
    %86 = vector.broadcast %85 : vector<2x1x1xf32> to vector<2x64x4xf32>
    %87 = arith.subf %79, %86 : vector<2x64x4xf32>
    %88 = arith.mulf %87, %87 : vector<2x64x4xf32>
    %cst_109 = arith.constant dense<0.000000e+00> : vector<2x64xf32>
    %89 = vector.multi_reduction <add>, %88, %cst_109 [2] : vector<2x64x4xf32> to vector<2x64xf32>
    %90 = vector.shape_cast %89 : vector<2x64xf32> to vector<2x64x1xf32>
    %cst_110 = arith.constant dense<0.000000e+00> : vector<2x1xf32>
    %91 = vector.multi_reduction <add>, %90, %cst_110 [1] : vector<2x64x1xf32> to vector<2x1xf32>
    %92 = vector.shape_cast %91 : vector<2x1xf32> to vector<2x1x1xf32>
    %cst_111 = arith.constant 3.906250e-03 : f32
    %93 = vector.broadcast %cst_111 : f32 to vector<2x1x1xf32>
    %94 = arith.mulf %92, %93 : vector<2x1x1xf32>
    %cst_112 = arith.constant 9.99999974E-6 : f32
    %95 = vector.broadcast %cst_112 : f32 to vector<2x1x1xf32>
    %96 = arith.addf %94, %95 : vector<2x1x1xf32>
    %97 = math.rsqrt %96 : vector<2x1x1xf32>
    %98 = vector.broadcast %97 : vector<2x1x1xf32> to vector<2x64x4xf32>
    %99 = arith.mulf %87, %98 : vector<2x64x4xf32>
    %c0_113 = arith.constant 0 : index
    %c0_114 = arith.constant 0 : index
    %100 = vector.load %arg3[%c0_113, %c0_114] : memref<1x4xf32, #tpu.memory_space<vmem>>, vector<1x4xf32>
    %101 = vector.shape_cast %100 : vector<1x4xf32> to vector<1x1x4xf32>
    %102 = vector.broadcast %101 : vector<1x1x4xf32> to vector<2x64x4xf32>
    %103 = arith.mulf %99, %102 : vector<2x64x4xf32>
    %c0_115 = arith.constant 0 : index
    %c0_116 = arith.constant 0 : index
    %104 = vector.load %arg4[%c0_115, %c0_116] : memref<1x4xf32, #tpu.memory_space<vmem>>, vector<1x4xf32>
    %105 = vector.shape_cast %104 : vector<1x4xf32> to vector<1x1x4xf32>
    %106 = vector.broadcast %105 : vector<1x1x4xf32> to vector<2x64x4xf32>
    %107 = arith.addf %103, %106 : vector<2x64x4xf32>
    %cst_117 = arith.constant 5.000000e-01 : f32
    %108 = vector.broadcast %cst_117 : f32 to vector<2x64x4xf32>
    %109 = arith.mulf %108, %107 : vector<2x64x4xf32>
    %cst_118 = arith.constant 4.471500e-02 : f32
    %110 = vector.broadcast %cst_118 : f32 to vector<2x64x4xf32>
    %111 = arith.mulf %110, %107 : vector<2x64x4xf32>
    %112 = arith.mulf %111, %107 : vector<2x64x4xf32>
    %113 = arith.mulf %112, %107 : vector<2x64x4xf32>
    %114 = arith.addf %107, %113 : vector<2x64x4xf32>
    %cst_119 = arith.constant 0.797884583 : f32
    %115 = vector.broadcast %cst_119 : f32 to vector<2x64x4xf32>
    %116 = arith.mulf %115, %114 : vector<2x64x4xf32>
    %117 = math.tanh %116 : vector<2x64x4xf32>
    %cst_120 = arith.constant 1.000000e+00 : f32
    %118 = vector.broadcast %cst_120 : f32 to vector<2x64x4xf32>
    %119 = arith.addf %118, %117 : vector<2x64x4xf32>
    %120 = arith.mulf %109, %119 : vector<2x64x4xf32>
    %121 = vector.shape_cast %120 : vector<2x64x4xf32> to vector<2x8x8x4xf32>
    %c0_121 = arith.constant 0 : index
    %c1_122 = arith.constant 1 : index
    %c1_123 = arith.constant 1 : index
    %c0_124 = arith.constant 0 : index
    %122 = vector.load %arg16[%c0_121, %c1_122, %c1_123, %c0_124] : memref<2x10x10x4xf32, #tpu.memory_space<vmem>>, vector<2x8x8x4xf32>
    tpu.vector_store %arg16[%c0_121, %c1_122, %c1_123, %c0_124], %121 {strides = array<i32>} : memref<2x10x10x4xf32, #tpu.memory_space<vmem>>, vector<2x8x8x4xf32>,
    %cst_125 = arith.constant 0.000000e+00 : f32
    %123 = vector.broadcast %cst_125 : f32 to vector<128x4xf32>
    %c0_126 = arith.constant 0 : index
    %c0_127 = arith.constant 0 : index
    %c0_128 = arith.constant 0 : index
    %c0_129 = arith.constant 0 : index
    %124 = vector.load %arg16[%c0_126, %c0_127, %c0_128, %c0_129] : memref<2x10x10x4xf32, #tpu.memory_space<vmem>>, vector<2x8x8x4xf32>
    %125 = vector.shape_cast %124 : vector<2x8x8x4xf32> to vector<128x4xf32>
    %126 = arith.truncf %125 : vector<128x4xf32> to vector<128x4xbf16>
    %c0_130 = arith.constant 0 : index
    %c0_131 = arith.constant 0 : index
    %c0_132 = arith.constant 0 : index
    %127 = vector.load %arg5[%c0_130, %c0_131, %c0_132] : memref<9x4x4xbf16, #tpu.memory_space<vmem>>, vector<1x4x4xbf16>
    %128 = vector.shape_cast %127 : vector<1x4x4xbf16> to vector<4x4xbf16>
    %cst_133 = arith.constant dense<0.000000e+00> : vector<128x4xf32>
    %129 = tpu.matmul %126, %128, %cst_133 {dimension_numbers = #tpu.dot_dimension_numbers<[1], [0], [0], [1], [0, 0, 1, 1], [], []>} : vector<128x4xbf16>, vector<4x4xbf16>, vector<128x4xf32> -> vector<128x4xf32>
    %130 = arith.addf %123, %129 : vector<128x4xf32>
    %c0_134 = arith.constant 0 : index
    %c0_135 = arith.constant 0 : index
    %c1_136 = arith.constant 1 : index
    %c0_137 = arith.constant 0 : index
    %131 = vector.load %arg16[%c0_134, %c0_135, %c1_136, %c0_137] : memref<2x10x10x4xf32, #tpu.memory_space<vmem>>, vector<2x8x8x4xf32>
    %132 = vector.shape_cast %131 : vector<2x8x8x4xf32> to vector<128x4xf32>
    %133 = arith.truncf %132 : vector<128x4xf32> to vector<128x4xbf16>
    %c1_138 = arith.constant 1 : index
    %c0_139 = arith.constant 0 : index
    %c0_140 = arith.constant 0 : index
    %134 = vector.load %arg5[%c1_138, %c0_139, %c0_140] : memref<9x4x4xbf16, #tpu.memory_space<vmem>>, vector<1x4x4xbf16>
    %135 = vector.shape_cast %134 : vector<1x4x4xbf16> to vector<4x4xbf16>
    %cst_141 = arith.constant dense<0.000000e+00> : vector<128x4xf32>
    %136 = tpu.matmul %133, %135, %cst_141 {dimension_numbers = #tpu.dot_dimension_numbers<[1], [0], [0], [1], [0, 0, 1, 1], [], []>} : vector<128x4xbf16>, vector<4x4xbf16>, vector<128x4xf32> -> vector<128x4xf32>
    %137 = arith.addf %130, %136 : vector<128x4xf32>
    %c0_142 = arith.constant 0 : index
    %c0_143 = arith.constant 0 : index
    %c2_144 = arith.constant 2 : index
    %c0_145 = arith.constant 0 : index
    %138 = vector.load %arg16[%c0_142, %c0_143, %c2_144, %c0_145] : memref<2x10x10x4xf32, #tpu.memory_space<vmem>>, vector<2x8x8x4xf32>
    %139 = vector.shape_cast %138 : vector<2x8x8x4xf32> to vector<128x4xf32>
    %140 = arith.truncf %139 : vector<128x4xf32> to vector<128x4xbf16>
    %c2_146 = arith.constant 2 : index
    %c0_147 = arith.constant 0 : index
    %c0_148 = arith.constant 0 : index
    %141 = vector.load %arg5[%c2_146, %c0_147, %c0_148] : memref<9x4x4xbf16, #tpu.memory_space<vmem>>, vector<1x4x4xbf16>
    %142 = vector.shape_cast %141 : vector<1x4x4xbf16> to vector<4x4xbf16>
    %cst_149 = arith.constant dense<0.000000e+00> : vector<128x4xf32>
    %143 = tpu.matmul %140, %142, %cst_149 {dimension_numbers = #tpu.dot_dimension_numbers<[1], [0], [0], [1], [0, 0, 1, 1], [], []>} : vector<128x4xbf16>, vector<4x4xbf16>, vector<128x4xf32> -> vector<128x4xf32>
    %144 = arith.addf %137, %143 : vector<128x4xf32>
    %c0_150 = arith.constant 0 : index
    %c1_151 = arith.constant 1 : index
    %c0_152 = arith.constant 0 : index
    %c0_153 = arith.constant 0 : index
    %145 = vector.load %arg16[%c0_150, %c1_151, %c0_152, %c0_153] : memref<2x10x10x4xf32, #tpu.memory_space<vmem>>, vector<2x8x8x4xf32>
    %146 = vector.shape_cast %145 : vector<2x8x8x4xf32> to vector<128x4xf32>
    %147 = arith.truncf %146 : vector<128x4xf32> to vector<128x4xbf16>
    %c3_154 = arith.constant 3 : index
    %c0_155 = arith.constant 0 : index
    %c0_156 = arith.constant 0 : index
    %148 = vector.load %arg5[%c3_154, %c0_155, %c0_156] : memref<9x4x4xbf16, #tpu.memory_space<vmem>>, vector<1x4x4xbf16>
    %149 = vector.shape_cast %148 : vector<1x4x4xbf16> to vector<4x4xbf16>
    %cst_157 = arith.constant dense<0.000000e+00> : vector<128x4xf32>
    %150 = tpu.matmul %147, %149, %cst_157 {dimension_numbers = #tpu.dot_dimension_numbers<[1], [0], [0], [1], [0, 0, 1, 1], [], []>} : vector<128x4xbf16>, vector<4x4xbf16>, vector<128x4xf32> -> vector<128x4xf32>
    %151 = arith.addf %144, %150 : vector<128x4xf32>
    %c0_158 = arith.constant 0 : index
    %c1_159 = arith.constant 1 : index
    %c1_160 = arith.constant 1 : index
    %c0_161 = arith.constant 0 : index
    %152 = vector.load %arg16[%c0_158, %c1_159, %c1_160, %c0_161] : memref<2x10x10x4xf32, #tpu.memory_space<vmem>>, vector<2x8x8x4xf32>
    %153 = vector.shape_cast %152 : vector<2x8x8x4xf32> to vector<128x4xf32>
    %154 = arith.truncf %153 : vector<128x4xf32> to vector<128x4xbf16>
    %c4_162 = arith.constant 4 : index
    %c0_163 = arith.constant 0 : index
    %c0_164 = arith.constant 0 : index
    %155 = vector.load %arg5[%c4_162, %c0_163, %c0_164] : memref<9x4x4xbf16, #tpu.memory_space<vmem>>, vector<1x4x4xbf16>
    %156 = vector.shape_cast %155 : vector<1x4x4xbf16> to vector<4x4xbf16>
    %cst_165 = arith.constant dense<0.000000e+00> : vector<128x4xf32>
    %157 = tpu.matmul %154, %156, %cst_165 {dimension_numbers = #tpu.dot_dimension_numbers<[1], [0], [0], [1], [0, 0, 1, 1], [], []>} : vector<128x4xbf16>, vector<4x4xbf16>, vector<128x4xf32> -> vector<128x4xf32>
    %158 = arith.addf %151, %157 : vector<128x4xf32>
    %c0_166 = arith.constant 0 : index
    %c1_167 = arith.constant 1 : index
    %c2_168 = arith.constant 2 : index
    %c0_169 = arith.constant 0 : index
    %159 = vector.load %arg16[%c0_166, %c1_167, %c2_168, %c0_169] : memref<2x10x10x4xf32, #tpu.memory_space<vmem>>, vector<2x8x8x4xf32>
    %160 = vector.shape_cast %159 : vector<2x8x8x4xf32> to vector<128x4xf32>
    %161 = arith.truncf %160 : vector<128x4xf32> to vector<128x4xbf16>
    %c5_170 = arith.constant 5 : index
    %c0_171 = arith.constant 0 : index
    %c0_172 = arith.constant 0 : index
    %162 = vector.load %arg5[%c5_170, %c0_171, %c0_172] : memref<9x4x4xbf16, #tpu.memory_space<vmem>>, vector<1x4x4xbf16>
    %163 = vector.shape_cast %162 : vector<1x4x4xbf16> to vector<4x4xbf16>
    %cst_173 = arith.constant dense<0.000000e+00> : vector<128x4xf32>
    %164 = tpu.matmul %161, %163, %cst_173 {dimension_numbers = #tpu.dot_dimension_numbers<[1], [0], [0], [1], [0, 0, 1, 1], [], []>} : vector<128x4xbf16>, vector<4x4xbf16>, vector<128x4xf32> -> vector<128x4xf32>
    %165 = arith.addf %158, %164 : vector<128x4xf32>
    %c0_174 = arith.constant 0 : index
    %c2_175 = arith.constant 2 : index
    %c0_176 = arith.constant 0 : index
    %c0_177 = arith.constant 0 : index
    %166 = vector.load %arg16[%c0_174, %c2_175, %c0_176, %c0_177] : memref<2x10x10x4xf32, #tpu.memory_space<vmem>>, vector<2x8x8x4xf32>
    %167 = vector.shape_cast %166 : vector<2x8x8x4xf32> to vector<128x4xf32>
    %168 = arith.truncf %167 : vector<128x4xf32> to vector<128x4xbf16>
    %c6_178 = arith.constant 6 : index
    %c0_179 = arith.constant 0 : index
    %c0_180 = arith.constant 0 : index
    %169 = vector.load %arg5[%c6_178, %c0_179, %c0_180] : memref<9x4x4xbf16, #tpu.memory_space<vmem>>, vector<1x4x4xbf16>
    %170 = vector.shape_cast %169 : vector<1x4x4xbf16> to vector<4x4xbf16>
    %cst_181 = arith.constant dense<0.000000e+00> : vector<128x4xf32>
    %171 = tpu.matmul %168, %170, %cst_181 {dimension_numbers = #tpu.dot_dimension_numbers<[1], [0], [0], [1], [0, 0, 1, 1], [], []>} : vector<128x4xbf16>, vector<4x4xbf16>, vector<128x4xf32> -> vector<128x4xf32>
    %172 = arith.addf %165, %171 : vector<128x4xf32>
    %c0_182 = arith.constant 0 : index
    %c2_183 = arith.constant 2 : index
    %c1_184 = arith.constant 1 : index
    %c0_185 = arith.constant 0 : index
    %173 = vector.load %arg16[%c0_182, %c2_183, %c1_184, %c0_185] : memref<2x10x10x4xf32, #tpu.memory_space<vmem>>, vector<2x8x8x4xf32>
    %174 = vector.shape_cast %173 : vector<2x8x8x4xf32> to vector<128x4xf32>
    %175 = arith.truncf %174 : vector<128x4xf32> to vector<128x4xbf16>
    %c7_186 = arith.constant 7 : index
    %c0_187 = arith.constant 0 : index
    %c0_188 = arith.constant 0 : index
    %176 = vector.load %arg5[%c7_186, %c0_187, %c0_188] : memref<9x4x4xbf16, #tpu.memory_space<vmem>>, vector<1x4x4xbf16>
    %177 = vector.shape_cast %176 : vector<1x4x4xbf16> to vector<4x4xbf16>
    %cst_189 = arith.constant dense<0.000000e+00> : vector<128x4xf32>
    %178 = tpu.matmul %175, %177, %cst_189 {dimension_numbers = #tpu.dot_dimension_numbers<[1], [0], [0], [1], [0, 0, 1, 1], [], []>} : vector<128x4xbf16>, vector<4x4xbf16>, vector<128x4xf32> -> vector<128x4xf32>
    %179 = arith.addf %172, %178 : vector<128x4xf32>
    %c0_190 = arith.constant 0 : index
    %c2_191 = arith.constant 2 : index
    %c2_192 = arith.constant 2 : index
    %c0_193 = arith.constant 0 : index
    %180 = vector.load %arg16[%c0_190, %c2_191, %c2_192, %c0_193] : memref<2x10x10x4xf32, #tpu.memory_space<vmem>>, vector<2x8x8x4xf32>
    %181 = vector.shape_cast %180 : vector<2x8x8x4xf32> to vector<128x4xf32>
    %182 = arith.truncf %181 : vector<128x4xf32> to vector<128x4xbf16>
    %c8_194 = arith.constant 8 : index
    %c0_195 = arith.constant 0 : index
    %c0_196 = arith.constant 0 : index
    %183 = vector.load %arg5[%c8_194, %c0_195, %c0_196] : memref<9x4x4xbf16, #tpu.memory_space<vmem>>, vector<1x4x4xbf16>
    %184 = vector.shape_cast %183 : vector<1x4x4xbf16> to vector<4x4xbf16>
    %cst_197 = arith.constant dense<0.000000e+00> : vector<128x4xf32>
    %185 = tpu.matmul %182, %184, %cst_197 {dimension_numbers = #tpu.dot_dimension_numbers<[1], [0], [0], [1], [0, 0, 1, 1], [], []>} : vector<128x4xbf16>, vector<4x4xbf16>, vector<128x4xf32> -> vector<128x4xf32>
    %186 = arith.addf %179, %185 : vector<128x4xf32>
    %187 = vector.shape_cast %186 : vector<128x4xf32> to vector<2x64x4xf32>
    %cst_198 = arith.constant dense<0.000000e+00> : vector<2x64xf32>
    %188 = vector.multi_reduction <add>, %187, %cst_198 [2] : vector<2x64x4xf32> to vector<2x64xf32>
    %189 = vector.shape_cast %188 : vector<2x64xf32> to vector<2x64x1xf32>
    %cst_199 = arith.constant dense<0.000000e+00> : vector<2x1xf32>
    %190 = vector.multi_reduction <add>, %189, %cst_199 [1] : vector<2x64x1xf32> to vector<2x1xf32>
    %191 = vector.shape_cast %190 : vector<2x1xf32> to vector<2x1x1xf32>
    %cst_200 = arith.constant 3.906250e-03 : f32
    %192 = vector.broadcast %cst_200 : f32 to vector<2x1x1xf32>
    %193 = arith.mulf %191, %192 : vector<2x1x1xf32>
    %194 = vector.broadcast %193 : vector<2x1x1xf32> to vector<2x64x4xf32>
    %195 = arith.subf %187, %194 : vector<2x64x4xf32>
    %196 = arith.mulf %195, %195 : vector<2x64x4xf32>
    %cst_201 = arith.constant dense<0.000000e+00> : vector<2x64xf32>
    %197 = vector.multi_reduction <add>, %196, %cst_201 [2] : vector<2x64x4xf32> to vector<2x64xf32>
    %198 = vector.shape_cast %197 : vector<2x64xf32> to vector<2x64x1xf32>
    %cst_202 = arith.constant dense<0.000000e+00> : vector<2x1xf32>
    %199 = vector.multi_reduction <add>, %198, %cst_202 [1] : vector<2x64x1xf32> to vector<2x1xf32>
    %200 = vector.shape_cast %199 : vector<2x1xf32> to vector<2x1x1xf32>
    %cst_203 = arith.constant 3.906250e-03 : f32
    %201 = vector.broadcast %cst_203 : f32 to vector<2x1x1xf32>
    %202 = arith.mulf %200, %201 : vector<2x1x1xf32>
    %cst_204 = arith.constant 9.99999974E-6 : f32
    %203 = vector.broadcast %cst_204 : f32 to vector<2x1x1xf32>
    %204 = arith.addf %202, %203 : vector<2x1x1xf32>
    %205 = math.rsqrt %204 : vector<2x1x1xf32>
    %206 = vector.broadcast %205 : vector<2x1x1xf32> to vector<2x64x4xf32>
    %207 = arith.mulf %195, %206 : vector<2x64x4xf32>
    %c0_205 = arith.constant 0 : index
    %c0_206 = arith.constant 0 : index
    %208 = vector.load %arg6[%c0_205, %c0_206] : memref<1x4xf32, #tpu.memory_space<vmem>>, vector<1x4xf32>
    %209 = vector.shape_cast %208 : vector<1x4xf32> to vector<1x1x4xf32>
    %210 = vector.broadcast %209 : vector<1x1x4xf32> to vector<2x64x4xf32>
    %211 = arith.mulf %207, %210 : vector<2x64x4xf32>
    %c0_207 = arith.constant 0 : index
    %c0_208 = arith.constant 0 : index
    %212 = vector.load %arg7[%c0_207, %c0_208] : memref<1x4xf32, #tpu.memory_space<vmem>>, vector<1x4xf32>
    %213 = vector.shape_cast %212 : vector<1x4xf32> to vector<1x1x4xf32>
    %214 = vector.broadcast %213 : vector<1x1x4xf32> to vector<2x64x4xf32>
    %215 = arith.addf %211, %214 : vector<2x64x4xf32>
    %216 = arith.addf %13, %215 : vector<2x64x4xf32>
    %cst_209 = arith.constant 5.000000e-01 : f32
    %217 = vector.broadcast %cst_209 : f32 to vector<2x64x4xf32>
    %218 = arith.mulf %217, %216 : vector<2x64x4xf32>
    %cst_210 = arith.constant 4.471500e-02 : f32
    %219 = vector.broadcast %cst_210 : f32 to vector<2x64x4xf32>
    %220 = arith.mulf %219, %216 : vector<2x64x4xf32>
    %221 = arith.mulf %220, %216 : vector<2x64x4xf32>
    %222 = arith.mulf %221, %216 : vector<2x64x4xf32>
    %223 = arith.addf %216, %222 : vector<2x64x4xf32>
    %cst_211 = arith.constant 0.797884583 : f32
    %224 = vector.broadcast %cst_211 : f32 to vector<2x64x4xf32>
    %225 = arith.mulf %224, %223 : vector<2x64x4xf32>
    %226 = math.tanh %225 : vector<2x64x4xf32>
    %cst_212 = arith.constant 1.000000e+00 : f32
    %227 = vector.broadcast %cst_212 : f32 to vector<2x64x4xf32>
    %228 = arith.addf %227, %226 : vector<2x64x4xf32>
    %229 = arith.mulf %218, %228 : vector<2x64x4xf32>
    %230 = vector.shape_cast %229 : vector<2x64x4xf32> to vector<2x8x8x4xf32>
    %c0_213 = arith.constant 0 : index
    %c1_214 = arith.constant 1 : index
    %c1_215 = arith.constant 1 : index
    %c0_216 = arith.constant 0 : index
    %231 = vector.load %arg16[%c0_213, %c1_214, %c1_215, %c0_216] : memref<2x10x10x4xf32, #tpu.memory_space<vmem>>, vector<2x8x8x4xf32>
    tpu.vector_store %arg16[%c0_213, %c1_214, %c1_215, %c0_216], %230 {strides = array<i32>} : memref<2x10x10x4xf32, #tpu.memory_space<vmem>>, vector<2x8x8x4xf32>,
    %cst_217 = arith.constant 0.000000e+00 : f32
    %232 = vector.broadcast %cst_217 : f32 to vector<128x8xf32>
    %c0_218 = arith.constant 0 : index
    %c0_219 = arith.constant 0 : index
    %c0_220 = arith.constant 0 : index
    %c0_221 = arith.constant 0 : index
    %233 = vector.load %arg16[%c0_218, %c0_219, %c0_220, %c0_221] : memref<2x10x10x4xf32, #tpu.memory_space<vmem>>, vector<2x8x8x4xf32>
    %234 = vector.shape_cast %233 : vector<2x8x8x4xf32> to vector<128x4xf32>
    %235 = arith.truncf %234 : vector<128x4xf32> to vector<128x4xbf16>
    %c0_222 = arith.constant 0 : index
    %c0_223 = arith.constant 0 : index
    %c0_224 = arith.constant 0 : index
    %236 = vector.load %arg8[%c0_222, %c0_223, %c0_224] : memref<9x4x8xbf16, #tpu.memory_space<vmem>>, vector<1x4x8xbf16>
    %237 = vector.shape_cast %236 : vector<1x4x8xbf16> to vector<4x8xbf16>
    %cst_225 = arith.constant dense<0.000000e+00> : vector<128x8xf32>
    %238 = tpu.matmul %235, %237, %cst_225 {dimension_numbers = #tpu.dot_dimension_numbers<[1], [0], [0], [1], [0, 0, 1, 1], [], []>} : vector<128x4xbf16>, vector<4x8xbf16>, vector<128x8xf32> -> vector<128x8xf32>
    %239 = arith.addf %232, %238 : vector<128x8xf32>
    %c0_226 = arith.constant 0 : index
    %c0_227 = arith.constant 0 : index
    %c1_228 = arith.constant 1 : index
    %c0_229 = arith.constant 0 : index
    %240 = vector.load %arg16[%c0_226, %c0_227, %c1_228, %c0_229] : memref<2x10x10x4xf32, #tpu.memory_space<vmem>>, vector<2x8x8x4xf32>
    %241 = vector.shape_cast %240 : vector<2x8x8x4xf32> to vector<128x4xf32>
    %242 = arith.truncf %241 : vector<128x4xf32> to vector<128x4xbf16>
    %c1_230 = arith.constant 1 : index
    %c0_231 = arith.constant 0 : index
    %c0_232 = arith.constant 0 : index
    %243 = vector.load %arg8[%c1_230, %c0_231, %c0_232] : memref<9x4x8xbf16, #tpu.memory_space<vmem>>, vector<1x4x8xbf16>
    %244 = vector.shape_cast %243 : vector<1x4x8xbf16> to vector<4x8xbf16>
    %cst_233 = arith.constant dense<0.000000e+00> : vector<128x8xf32>
    %245 = tpu.matmul %242, %244, %cst_233 {dimension_numbers = #tpu.dot_dimension_numbers<[1], [0], [0], [1], [0, 0, 1, 1], [], []>} : vector<128x4xbf16>, vector<4x8xbf16>, vector<128x8xf32> -> vector<128x8xf32>
    %246 = arith.addf %239, %245 : vector<128x8xf32>
    %c0_234 = arith.constant 0 : index
    %c0_235 = arith.constant 0 : index
    %c2_236 = arith.constant 2 : index
    %c0_237 = arith.constant 0 : index
    %247 = vector.load %arg16[%c0_234, %c0_235, %c2_236, %c0_237] : memref<2x10x10x4xf32, #tpu.memory_space<vmem>>, vector<2x8x8x4xf32>
    %248 = vector.shape_cast %247 : vector<2x8x8x4xf32> to vector<128x4xf32>
    %249 = arith.truncf %248 : vector<128x4xf32> to vector<128x4xbf16>
    %c2_238 = arith.constant 2 : index
    %c0_239 = arith.constant 0 : index
    %c0_240 = arith.constant 0 : index
    %250 = vector.load %arg8[%c2_238, %c0_239, %c0_240] : memref<9x4x8xbf16, #tpu.memory_space<vmem>>, vector<1x4x8xbf16>
    %251 = vector.shape_cast %250 : vector<1x4x8xbf16> to vector<4x8xbf16>
    %cst_241 = arith.constant dense<0.000000e+00> : vector<128x8xf32>
    %252 = tpu.matmul %249, %251, %cst_241 {dimension_numbers = #tpu.dot_dimension_numbers<[1], [0], [0], [1], [0, 0, 1, 1], [], []>} : vector<128x4xbf16>, vector<4x8xbf16>, vector<128x8xf32> -> vector<128x8xf32>
    %253 = arith.addf %246, %252 : vector<128x8xf32>
    %c0_242 = arith.constant 0 : index
    %c1_243 = arith.constant 1 : index
    %c0_244 = arith.constant 0 : index
    %c0_245 = arith.constant 0 : index
    %254 = vector.load %arg16[%c0_242, %c1_243, %c0_244, %c0_245] : memref<2x10x10x4xf32, #tpu.memory_space<vmem>>, vector<2x8x8x4xf32>
    %255 = vector.shape_cast %254 : vector<2x8x8x4xf32> to vector<128x4xf32>
    %256 = arith.truncf %255 : vector<128x4xf32> to vector<128x4xbf16>
    %c3_246 = arith.constant 3 : index
    %c0_247 = arith.constant 0 : index
    %c0_248 = arith.constant 0 : index
    %257 = vector.load %arg8[%c3_246, %c0_247, %c0_248] : memref<9x4x8xbf16, #tpu.memory_space<vmem>>, vector<1x4x8xbf16>
    %258 = vector.shape_cast %257 : vector<1x4x8xbf16> to vector<4x8xbf16>
    %cst_249 = arith.constant dense<0.000000e+00> : vector<128x8xf32>
    %259 = tpu.matmul %256, %258, %cst_249 {dimension_numbers = #tpu.dot_dimension_numbers<[1], [0], [0], [1], [0, 0, 1, 1], [], []>} : vector<128x4xbf16>, vector<4x8xbf16>, vector<128x8xf32> -> vector<128x8xf32>
    %260 = arith.addf %253, %259 : vector<128x8xf32>
    %c0_250 = arith.constant 0 : index
    %c1_251 = arith.constant 1 : index
    %c1_252 = arith.constant 1 : index
    %c0_253 = arith.constant 0 : index
    %261 = vector.load %arg16[%c0_250, %c1_251, %c1_252, %c0_253] : memref<2x10x10x4xf32, #tpu.memory_space<vmem>>, vector<2x8x8x4xf32>
    %262 = vector.shape_cast %261 : vector<2x8x8x4xf32> to vector<128x4xf32>
    %263 = arith.truncf %262 : vector<128x4xf32> to vector<128x4xbf16>
    %c4_254 = arith.constant 4 : index
    %c0_255 = arith.constant 0 : index
    %c0_256 = arith.constant 0 : index
    %264 = vector.load %arg8[%c4_254, %c0_255, %c0_256] : memref<9x4x8xbf16, #tpu.memory_space<vmem>>, vector<1x4x8xbf16>
    %265 = vector.shape_cast %264 : vector<1x4x8xbf16> to vector<4x8xbf16>
    %cst_257 = arith.constant dense<0.000000e+00> : vector<128x8xf32>
    %266 = tpu.matmul %263, %265, %cst_257 {dimension_numbers = #tpu.dot_dimension_numbers<[1], [0], [0], [1], [0, 0, 1, 1], [], []>} : vector<128x4xbf16>, vector<4x8xbf16>, vector<128x8xf32> -> vector<128x8xf32>
    %267 = arith.addf %260, %266 : vector<128x8xf32>
    %c0_258 = arith.constant 0 : index
    %c1_259 = arith.constant 1 : index
    %c2_260 = arith.constant 2 : index
    %c0_261 = arith.constant 0 : index
    %268 = vector.load %arg16[%c0_258, %c1_259, %c2_260, %c0_261] : memref<2x10x10x4xf32, #tpu.memory_space<vmem>>, vector<2x8x8x4xf32>
    %269 = vector.shape_cast %268 : vector<2x8x8x4xf32> to vector<128x4xf32>
    %270 = arith.truncf %269 : vector<128x4xf32> to vector<128x4xbf16>
    %c5_262 = arith.constant 5 : index
    %c0_263 = arith.constant 0 : index
    %c0_264 = arith.constant 0 : index
    %271 = vector.load %arg8[%c5_262, %c0_263, %c0_264] : memref<9x4x8xbf16, #tpu.memory_space<vmem>>, vector<1x4x8xbf16>
    %272 = vector.shape_cast %271 : vector<1x4x8xbf16> to vector<4x8xbf16>
    %cst_265 = arith.constant dense<0.000000e+00> : vector<128x8xf32>
    %273 = tpu.matmul %270, %272, %cst_265 {dimension_numbers = #tpu.dot_dimension_numbers<[1], [0], [0], [1], [0, 0, 1, 1], [], []>} : vector<128x4xbf16>, vector<4x8xbf16>, vector<128x8xf32> -> vector<128x8xf32>
    %274 = arith.addf %267, %273 : vector<128x8xf32>
    %c0_266 = arith.constant 0 : index
    %c2_267 = arith.constant 2 : index
    %c0_268 = arith.constant 0 : index
    %c0_269 = arith.constant 0 : index
    %275 = vector.load %arg16[%c0_266, %c2_267, %c0_268, %c0_269] : memref<2x10x10x4xf32, #tpu.memory_space<vmem>>, vector<2x8x8x4xf32>
    %276 = vector.shape_cast %275 : vector<2x8x8x4xf32> to vector<128x4xf32>
    %277 = arith.truncf %276 : vector<128x4xf32> to vector<128x4xbf16>
    %c6_270 = arith.constant 6 : index
    %c0_271 = arith.constant 0 : index
    %c0_272 = arith.constant 0 : index
    %278 = vector.load %arg8[%c6_270, %c0_271, %c0_272] : memref<9x4x8xbf16, #tpu.memory_space<vmem>>, vector<1x4x8xbf16>
    %279 = vector.shape_cast %278 : vector<1x4x8xbf16> to vector<4x8xbf16>
    %cst_273 = arith.constant dense<0.000000e+00> : vector<128x8xf32>
    %280 = tpu.matmul %277, %279, %cst_273 {dimension_numbers = #tpu.dot_dimension_numbers<[1], [0], [0], [1], [0, 0, 1, 1], [], []>} : vector<128x4xbf16>, vector<4x8xbf16>, vector<128x8xf32> -> vector<128x8xf32>
    %281 = arith.addf %274, %280 : vector<128x8xf32>
    %c0_274 = arith.constant 0 : index
    %c2_275 = arith.constant 2 : index
    %c1_276 = arith.constant 1 : index
    %c0_277 = arith.constant 0 : index
    %282 = vector.load %arg16[%c0_274, %c2_275, %c1_276, %c0_277] : memref<2x10x10x4xf32, #tpu.memory_space<vmem>>, vector<2x8x8x4xf32>
    %283 = vector.shape_cast %282 : vector<2x8x8x4xf32> to vector<128x4xf32>
    %284 = arith.truncf %283 : vector<128x4xf32> to vector<128x4xbf16>
    %c7_278 = arith.constant 7 : index
    %c0_279 = arith.constant 0 : index
    %c0_280 = arith.constant 0 : index
    %285 = vector.load %arg8[%c7_278, %c0_279, %c0_280] : memref<9x4x8xbf16, #tpu.memory_space<vmem>>, vector<1x4x8xbf16>
    %286 = vector.shape_cast %285 : vector<1x4x8xbf16> to vector<4x8xbf16>
    %cst_281 = arith.constant dense<0.000000e+00> : vector<128x8xf32>
    %287 = tpu.matmul %284, %286, %cst_281 {dimension_numbers = #tpu.dot_dimension_numbers<[1], [0], [0], [1], [0, 0, 1, 1], [], []>} : vector<128x4xbf16>, vector<4x8xbf16>, vector<128x8xf32> -> vector<128x8xf32>
    %288 = arith.addf %281, %287 : vector<128x8xf32>
    %c0_282 = arith.constant 0 : index
    %c2_283 = arith.constant 2 : index
    %c2_284 = arith.constant 2 : index
    %c0_285 = arith.constant 0 : index
    %289 = vector.load %arg16[%c0_282, %c2_283, %c2_284, %c0_285] : memref<2x10x10x4xf32, #tpu.memory_space<vmem>>, vector<2x8x8x4xf32>
    %290 = vector.shape_cast %289 : vector<2x8x8x4xf32> to vector<128x4xf32>
    %291 = arith.truncf %290 : vector<128x4xf32> to vector<128x4xbf16>
    %c8_286 = arith.constant 8 : index
    %c0_287 = arith.constant 0 : index
    %c0_288 = arith.constant 0 : index
    %292 = vector.load %arg8[%c8_286, %c0_287, %c0_288] : memref<9x4x8xbf16, #tpu.memory_space<vmem>>, vector<1x4x8xbf16>
    %293 = vector.shape_cast %292 : vector<1x4x8xbf16> to vector<4x8xbf16>
    %cst_289 = arith.constant dense<0.000000e+00> : vector<128x8xf32>
    %294 = tpu.matmul %291, %293, %cst_289 {dimension_numbers = #tpu.dot_dimension_numbers<[1], [0], [0], [1], [0, 0, 1, 1], [], []>} : vector<128x4xbf16>, vector<4x8xbf16>, vector<128x8xf32> -> vector<128x8xf32>
    %295 = arith.addf %288, %294 : vector<128x8xf32>
    %296 = vector.shape_cast %295 : vector<128x8xf32> to vector<2x64x8xf32>
    %cst_290 = arith.constant dense<0.000000e+00> : vector<2x64xf32>
    %297 = vector.multi_reduction <add>, %296, %cst_290 [2] : vector<2x64x8xf32> to vector<2x64xf32>
    %298 = vector.shape_cast %297 : vector<2x64xf32> to vector<2x64x1xf32>
    %cst_291 = arith.constant dense<0.000000e+00> : vector<2x1xf32>
    %299 = vector.multi_reduction <add>, %298, %cst_291 [1] : vector<2x64x1xf32> to vector<2x1xf32>
    %300 = vector.shape_cast %299 : vector<2x1xf32> to vector<2x1x1xf32>
    %cst_292 = arith.constant 0.001953125 : f32
    %301 = vector.broadcast %cst_292 : f32 to vector<2x1x1xf32>
    %302 = arith.mulf %300, %301 : vector<2x1x1xf32>
    %303 = vector.broadcast %302 : vector<2x1x1xf32> to vector<2x64x8xf32>
    %304 = arith.subf %296, %303 : vector<2x64x8xf32>
    %305 = arith.mulf %304, %304 : vector<2x64x8xf32>
    %cst_293 = arith.constant dense<0.000000e+00> : vector<2x64xf32>
    %306 = vector.multi_reduction <add>, %305, %cst_293 [2] : vector<2x64x8xf32> to vector<2x64xf32>
    %307 = vector.shape_cast %306 : vector<2x64xf32> to vector<2x64x1xf32>
    %cst_294 = arith.constant dense<0.000000e+00> : vector<2x1xf32>
    %308 = vector.multi_reduction <add>, %307, %cst_294 [1] : vector<2x64x1xf32> to vector<2x1xf32>
    %309 = vector.shape_cast %308 : vector<2x1xf32> to vector<2x1x1xf32>
    %cst_295 = arith.constant 0.001953125 : f32
    %310 = vector.broadcast %cst_295 : f32 to vector<2x1x1xf32>
    %311 = arith.mulf %309, %310 : vector<2x1x1xf32>
    %cst_296 = arith.constant 9.99999974E-6 : f32
    %312 = vector.broadcast %cst_296 : f32 to vector<2x1x1xf32>
    %313 = arith.addf %311, %312 : vector<2x1x1xf32>
    %314 = math.rsqrt %313 : vector<2x1x1xf32>
    %315 = vector.broadcast %314 : vector<2x1x1xf32> to vector<2x64x8xf32>
    %316 = arith.mulf %304, %315 : vector<2x64x8xf32>
    %c0_297 = arith.constant 0 : index
    %c0_298 = arith.constant 0 : index
    %317 = vector.load %arg9[%c0_297, %c0_298] : memref<1x8xf32, #tpu.memory_space<vmem>>, vector<1x8xf32>
    %318 = vector.shape_cast %317 : vector<1x8xf32> to vector<1x1x8xf32>
    %319 = vector.broadcast %318 : vector<1x1x8xf32> to vector<2x64x8xf32>
    %320 = arith.mulf %316, %319 : vector<2x64x8xf32>
    %c0_299 = arith.constant 0 : index
    %c0_300 = arith.constant 0 : index
    %321 = vector.load %arg10[%c0_299, %c0_300] : memref<1x8xf32, #tpu.memory_space<vmem>>, vector<1x8xf32>
    %322 = vector.shape_cast %321 : vector<1x8xf32> to vector<1x1x8xf32>
    %323 = vector.broadcast %322 : vector<1x1x8xf32> to vector<2x64x8xf32>
    %324 = arith.addf %320, %323 : vector<2x64x8xf32>
    %cst_301 = arith.constant 5.000000e-01 : f32
    %325 = vector.broadcast %cst_301 : f32 to vector<2x64x8xf32>
    %326 = arith.mulf %325, %324 : vector<2x64x8xf32>
    %cst_302 = arith.constant 4.471500e-02 : f32
    %327 = vector.broadcast %cst_302 : f32 to vector<2x64x8xf32>
    %328 = arith.mulf %327, %324 : vector<2x64x8xf32>
    %329 = arith.mulf %328, %324 : vector<2x64x8xf32>
    %330 = arith.mulf %329, %324 : vector<2x64x8xf32>
    %331 = arith.addf %324, %330 : vector<2x64x8xf32>
    %cst_303 = arith.constant 0.797884583 : f32
    %332 = vector.broadcast %cst_303 : f32 to vector<2x64x8xf32>
    %333 = arith.mulf %332, %331 : vector<2x64x8xf32>
    %334 = math.tanh %333 : vector<2x64x8xf32>
    %cst_304 = arith.constant 1.000000e+00 : f32
    %335 = vector.broadcast %cst_304 : f32 to vector<2x64x8xf32>
    %336 = arith.addf %335, %334 : vector<2x64x8xf32>
    %337 = arith.mulf %326, %336 : vector<2x64x8xf32>
    %338 = vector.shape_cast %337 : vector<2x64x8xf32> to vector<2x8x8x8xf32>
    %c0_305 = arith.constant 0 : index
    %c1_306 = arith.constant 1 : index
    %c1_307 = arith.constant 1 : index
    %c0_308 = arith.constant 0 : index
    %339 = vector.load %arg17[%c0_305, %c1_306, %c1_307, %c0_308] : memref<2x10x10x8xf32, #tpu.memory_space<vmem>>, vector<2x8x8x8xf32>
    tpu.vector_store %arg17[%c0_305, %c1_306, %c1_307, %c0_308], %338 {strides = array<i32>} : memref<2x10x10x8xf32, #tpu.memory_space<vmem>>, vector<2x8x8x8xf32>,
    %cst_309 = arith.constant 0.000000e+00 : f32
    %340 = vector.broadcast %cst_309 : f32 to vector<128x8xf32>
    %c0_310 = arith.constant 0 : index
    %c0_311 = arith.constant 0 : index
    %c0_312 = arith.constant 0 : index
    %c0_313 = arith.constant 0 : index
    %341 = vector.load %arg17[%c0_310, %c0_311, %c0_312, %c0_313] : memref<2x10x10x8xf32, #tpu.memory_space<vmem>>, vector<2x8x8x8xf32>
    %342 = vector.shape_cast %341 : vector<2x8x8x8xf32> to vector<128x8xf32>
    %343 = arith.truncf %342 : vector<128x8xf32> to vector<128x8xbf16>
    %c0_314 = arith.constant 0 : index
    %c0_315 = arith.constant 0 : index
    %c0_316 = arith.constant 0 : index
    %344 = vector.load %arg11[%c0_314, %c0_315, %c0_316] : memref<9x8x8xbf16, #tpu.memory_space<vmem>>, vector<1x8x8xbf16>
    %345 = vector.shape_cast %344 : vector<1x8x8xbf16> to vector<8x8xbf16>
    %cst_317 = arith.constant dense<0.000000e+00> : vector<128x8xf32>
    %346 = tpu.matmul %343, %345, %cst_317 {dimension_numbers = #tpu.dot_dimension_numbers<[1], [0], [0], [1], [0, 0, 1, 1], [], []>} : vector<128x8xbf16>, vector<8x8xbf16>, vector<128x8xf32> -> vector<128x8xf32>
    %347 = arith.addf %340, %346 : vector<128x8xf32>
    %c0_318 = arith.constant 0 : index
    %c0_319 = arith.constant 0 : index
    %c1_320 = arith.constant 1 : index
    %c0_321 = arith.constant 0 : index
    %348 = vector.load %arg17[%c0_318, %c0_319, %c1_320, %c0_321] : memref<2x10x10x8xf32, #tpu.memory_space<vmem>>, vector<2x8x8x8xf32>
    %349 = vector.shape_cast %348 : vector<2x8x8x8xf32> to vector<128x8xf32>
    %350 = arith.truncf %349 : vector<128x8xf32> to vector<128x8xbf16>
    %c1_322 = arith.constant 1 : index
    %c0_323 = arith.constant 0 : index
    %c0_324 = arith.constant 0 : index
    %351 = vector.load %arg11[%c1_322, %c0_323, %c0_324] : memref<9x8x8xbf16, #tpu.memory_space<vmem>>, vector<1x8x8xbf16>
    %352 = vector.shape_cast %351 : vector<1x8x8xbf16> to vector<8x8xbf16>
    %cst_325 = arith.constant dense<0.000000e+00> : vector<128x8xf32>
    %353 = tpu.matmul %350, %352, %cst_325 {dimension_numbers = #tpu.dot_dimension_numbers<[1], [0], [0], [1], [0, 0, 1, 1], [], []>} : vector<128x8xbf16>, vector<8x8xbf16>, vector<128x8xf32> -> vector<128x8xf32>
    %354 = arith.addf %347, %353 : vector<128x8xf32>
    %c0_326 = arith.constant 0 : index
    %c0_327 = arith.constant 0 : index
    %c2_328 = arith.constant 2 : index
    %c0_329 = arith.constant 0 : index
    %355 = vector.load %arg17[%c0_326, %c0_327, %c2_328, %c0_329] : memref<2x10x10x8xf32, #tpu.memory_space<vmem>>, vector<2x8x8x8xf32>
    %356 = vector.shape_cast %355 : vector<2x8x8x8xf32> to vector<128x8xf32>
    %357 = arith.truncf %356 : vector<128x8xf32> to vector<128x8xbf16>
    %c2_330 = arith.constant 2 : index
    %c0_331 = arith.constant 0 : index
    %c0_332 = arith.constant 0 : index
    %358 = vector.load %arg11[%c2_330, %c0_331, %c0_332] : memref<9x8x8xbf16, #tpu.memory_space<vmem>>, vector<1x8x8xbf16>
    %359 = vector.shape_cast %358 : vector<1x8x8xbf16> to vector<8x8xbf16>
    %cst_333 = arith.constant dense<0.000000e+00> : vector<128x8xf32>
    %360 = tpu.matmul %357, %359, %cst_333 {dimension_numbers = #tpu.dot_dimension_numbers<[1], [0], [0], [1], [0, 0, 1, 1], [], []>} : vector<128x8xbf16>, vector<8x8xbf16>, vector<128x8xf32> -> vector<128x8xf32>
    %361 = arith.addf %354, %360 : vector<128x8xf32>
    %c0_334 = arith.constant 0 : index
    %c1_335 = arith.constant 1 : index
    %c0_336 = arith.constant 0 : index
    %c0_337 = arith.constant 0 : index
    %362 = vector.load %arg17[%c0_334, %c1_335, %c0_336, %c0_337] : memref<2x10x10x8xf32, #tpu.memory_space<vmem>>, vector<2x8x8x8xf32>
    %363 = vector.shape_cast %362 : vector<2x8x8x8xf32> to vector<128x8xf32>
    %364 = arith.truncf %363 : vector<128x8xf32> to vector<128x8xbf16>
    %c3_338 = arith.constant 3 : index
    %c0_339 = arith.constant 0 : index
    %c0_340 = arith.constant 0 : index
    %365 = vector.load %arg11[%c3_338, %c0_339, %c0_340] : memref<9x8x8xbf16, #tpu.memory_space<vmem>>, vector<1x8x8xbf16>
    %366 = vector.shape_cast %365 : vector<1x8x8xbf16> to vector<8x8xbf16>
    %cst_341 = arith.constant dense<0.000000e+00> : vector<128x8xf32>
    %367 = tpu.matmul %364, %366, %cst_341 {dimension_numbers = #tpu.dot_dimension_numbers<[1], [0], [0], [1], [0, 0, 1, 1], [], []>} : vector<128x8xbf16>, vector<8x8xbf16>, vector<128x8xf32> -> vector<128x8xf32>
    %368 = arith.addf %361, %367 : vector<128x8xf32>
    %c0_342 = arith.constant 0 : index
    %c1_343 = arith.constant 1 : index
    %c1_344 = arith.constant 1 : index
    %c0_345 = arith.constant 0 : index
    %369 = vector.load %arg17[%c0_342, %c1_343, %c1_344, %c0_345] : memref<2x10x10x8xf32, #tpu.memory_space<vmem>>, vector<2x8x8x8xf32>
    %370 = vector.shape_cast %369 : vector<2x8x8x8xf32> to vector<128x8xf32>
    %371 = arith.truncf %370 : vector<128x8xf32> to vector<128x8xbf16>
    %c4_346 = arith.constant 4 : index
    %c0_347 = arith.constant 0 : index
    %c0_348 = arith.constant 0 : index
    %372 = vector.load %arg11[%c4_346, %c0_347, %c0_348] : memref<9x8x8xbf16, #tpu.memory_space<vmem>>, vector<1x8x8xbf16>
    %373 = vector.shape_cast %372 : vector<1x8x8xbf16> to vector<8x8xbf16>
    %cst_349 = arith.constant dense<0.000000e+00> : vector<128x8xf32>
    %374 = tpu.matmul %371, %373, %cst_349 {dimension_numbers = #tpu.dot_dimension_numbers<[1], [0], [0], [1], [0, 0, 1, 1], [], []>} : vector<128x8xbf16>, vector<8x8xbf16>, vector<128x8xf32> -> vector<128x8xf32>
    %375 = arith.addf %368, %374 : vector<128x8xf32>
    %c0_350 = arith.constant 0 : index
    %c1_351 = arith.constant 1 : index
    %c2_352 = arith.constant 2 : index
    %c0_353 = arith.constant 0 : index
    %376 = vector.load %arg17[%c0_350, %c1_351, %c2_352, %c0_353] : memref<2x10x10x8xf32, #tpu.memory_space<vmem>>, vector<2x8x8x8xf32>
    %377 = vector.shape_cast %376 : vector<2x8x8x8xf32> to vector<128x8xf32>
    %378 = arith.truncf %377 : vector<128x8xf32> to vector<128x8xbf16>
    %c5_354 = arith.constant 5 : index
    %c0_355 = arith.constant 0 : index
    %c0_356 = arith.constant 0 : index
    %379 = vector.load %arg11[%c5_354, %c0_355, %c0_356] : memref<9x8x8xbf16, #tpu.memory_space<vmem>>, vector<1x8x8xbf16>
    %380 = vector.shape_cast %379 : vector<1x8x8xbf16> to vector<8x8xbf16>
    %cst_357 = arith.constant dense<0.000000e+00> : vector<128x8xf32>
    %381 = tpu.matmul %378, %380, %cst_357 {dimension_numbers = #tpu.dot_dimension_numbers<[1], [0], [0], [1], [0, 0, 1, 1], [], []>} : vector<128x8xbf16>, vector<8x8xbf16>, vector<128x8xf32> -> vector<128x8xf32>
    %382 = arith.addf %375, %381 : vector<128x8xf32>
    %c0_358 = arith.constant 0 : index
    %c2_359 = arith.constant 2 : index
    %c0_360 = arith.constant 0 : index
    %c0_361 = arith.constant 0 : index
    %383 = vector.load %arg17[%c0_358, %c2_359, %c0_360, %c0_361] : memref<2x10x10x8xf32, #tpu.memory_space<vmem>>, vector<2x8x8x8xf32>
    %384 = vector.shape_cast %383 : vector<2x8x8x8xf32> to vector<128x8xf32>
    %385 = arith.truncf %384 : vector<128x8xf32> to vector<128x8xbf16>
    %c6_362 = arith.constant 6 : index
    %c0_363 = arith.constant 0 : index
    %c0_364 = arith.constant 0 : index
    %386 = vector.load %arg11[%c6_362, %c0_363, %c0_364] : memref<9x8x8xbf16, #tpu.memory_space<vmem>>, vector<1x8x8xbf16>
    %387 = vector.shape_cast %386 : vector<1x8x8xbf16> to vector<8x8xbf16>
    %cst_365 = arith.constant dense<0.000000e+00> : vector<128x8xf32>
    %388 = tpu.matmul %385, %387, %cst_365 {dimension_numbers = #tpu.dot_dimension_numbers<[1], [0], [0], [1], [0, 0, 1, 1], [], []>} : vector<128x8xbf16>, vector<8x8xbf16>, vector<128x8xf32> -> vector<128x8xf32>
    %389 = arith.addf %382, %388 : vector<128x8xf32>
    %c0_366 = arith.constant 0 : index
    %c2_367 = arith.constant 2 : index
    %c1_368 = arith.constant 1 : index
    %c0_369 = arith.constant 0 : index
    %390 = vector.load %arg17[%c0_366, %c2_367, %c1_368, %c0_369] : memref<2x10x10x8xf32, #tpu.memory_space<vmem>>, vector<2x8x8x8xf32>
    %391 = vector.shape_cast %390 : vector<2x8x8x8xf32> to vector<128x8xf32>
    %392 = arith.truncf %391 : vector<128x8xf32> to vector<128x8xbf16>
    %c7_370 = arith.constant 7 : index
    %c0_371 = arith.constant 0 : index
    %c0_372 = arith.constant 0 : index
    %393 = vector.load %arg11[%c7_370, %c0_371, %c0_372] : memref<9x8x8xbf16, #tpu.memory_space<vmem>>, vector<1x8x8xbf16>
    %394 = vector.shape_cast %393 : vector<1x8x8xbf16> to vector<8x8xbf16>
    %cst_373 = arith.constant dense<0.000000e+00> : vector<128x8xf32>
    %395 = tpu.matmul %392, %394, %cst_373 {dimension_numbers = #tpu.dot_dimension_numbers<[1], [0], [0], [1], [0, 0, 1, 1], [], []>} : vector<128x8xbf16>, vector<8x8xbf16>, vector<128x8xf32> -> vector<128x8xf32>
    %396 = arith.addf %389, %395 : vector<128x8xf32>
    %c0_374 = arith.constant 0 : index
    %c2_375 = arith.constant 2 : index
    %c2_376 = arith.constant 2 : index
    %c0_377 = arith.constant 0 : index
    %397 = vector.load %arg17[%c0_374, %c2_375, %c2_376, %c0_377] : memref<2x10x10x8xf32, #tpu.memory_space<vmem>>, vector<2x8x8x8xf32>
    %398 = vector.shape_cast %397 : vector<2x8x8x8xf32> to vector<128x8xf32>
    %399 = arith.truncf %398 : vector<128x8xf32> to vector<128x8xbf16>
    %c8_378 = arith.constant 8 : index
    %c0_379 = arith.constant 0 : index
    %c0_380 = arith.constant 0 : index
    %400 = vector.load %arg11[%c8_378, %c0_379, %c0_380] : memref<9x8x8xbf16, #tpu.memory_space<vmem>>, vector<1x8x8xbf16>
    %401 = vector.shape_cast %400 : vector<1x8x8xbf16> to vector<8x8xbf16>
    %cst_381 = arith.constant dense<0.000000e+00> : vector<128x8xf32>
    %402 = tpu.matmul %399, %401, %cst_381 {dimension_numbers = #tpu.dot_dimension_numbers<[1], [0], [0], [1], [0, 0, 1, 1], [], []>} : vector<128x8xbf16>, vector<8x8xbf16>, vector<128x8xf32> -> vector<128x8xf32>
    %403 = arith.addf %396, %402 : vector<128x8xf32>
    %404 = vector.shape_cast %403 : vector<128x8xf32> to vector<2x64x8xf32>
    %cst_382 = arith.constant dense<0.000000e+00> : vector<2x64xf32>
    %405 = vector.multi_reduction <add>, %404, %cst_382 [2] : vector<2x64x8xf32> to vector<2x64xf32>
    %406 = vector.shape_cast %405 : vector<2x64xf32> to vector<2x64x1xf32>
    %cst_383 = arith.constant dense<0.000000e+00> : vector<2x1xf32>
    %407 = vector.multi_reduction <add>, %406, %cst_383 [1] : vector<2x64x1xf32> to vector<2x1xf32>
    %408 = vector.shape_cast %407 : vector<2x1xf32> to vector<2x1x1xf32>
    %cst_384 = arith.constant 0.001953125 : f32
    %409 = vector.broadcast %cst_384 : f32 to vector<2x1x1xf32>
    %410 = arith.mulf %408, %409 : vector<2x1x1xf32>
    %411 = vector.broadcast %410 : vector<2x1x1xf32> to vector<2x64x8xf32>
    %412 = arith.subf %404, %411 : vector<2x64x8xf32>
    %413 = arith.mulf %412, %412 : vector<2x64x8xf32>
    %cst_385 = arith.constant dense<0.000000e+00> : vector<2x64xf32>
    %414 = vector.multi_reduction <add>, %413, %cst_385 [2] : vector<2x64x8xf32> to vector<2x64xf32>
    %415 = vector.shape_cast %414 : vector<2x64xf32> to vector<2x64x1xf32>
    %cst_386 = arith.constant dense<0.000000e+00> : vector<2x1xf32>
    %416 = vector.multi_reduction <add>, %415, %cst_386 [1] : vector<2x64x1xf32> to vector<2x1xf32>
    %417 = vector.shape_cast %416 : vector<2x1xf32> to vector<2x1x1xf32>
    %cst_387 = arith.constant 0.001953125 : f32
    %418 = vector.broadcast %cst_387 : f32 to vector<2x1x1xf32>
    %419 = arith.mulf %417, %418 : vector<2x1x1xf32>
    %cst_388 = arith.constant 9.99999974E-6 : f32
    %420 = vector.broadcast %cst_388 : f32 to vector<2x1x1xf32>
    %421 = arith.addf %419, %420 : vector<2x1x1xf32>
    %422 = math.rsqrt %421 : vector<2x1x1xf32>
    %423 = vector.broadcast %422 : vector<2x1x1xf32> to vector<2x64x8xf32>
    %424 = arith.mulf %412, %423 : vector<2x64x8xf32>
    %c0_389 = arith.constant 0 : index
    %c0_390 = arith.constant 0 : index
    %425 = vector.load %arg12[%c0_389, %c0_390] : memref<1x8xf32, #tpu.memory_space<vmem>>, vector<1x8xf32>
    %426 = vector.shape_cast %425 : vector<1x8xf32> to vector<1x1x8xf32>
    %427 = vector.broadcast %426 : vector<1x1x8xf32> to vector<2x64x8xf32>
    %428 = arith.mulf %424, %427 : vector<2x64x8xf32>
    %c0_391 = arith.constant 0 : index
    %c0_392 = arith.constant 0 : index
    %429 = vector.load %arg13[%c0_391, %c0_392] : memref<1x8xf32, #tpu.memory_space<vmem>>, vector<1x8xf32>
    %430 = vector.shape_cast %429 : vector<1x8xf32> to vector<1x1x8xf32>
    %431 = vector.broadcast %430 : vector<1x1x8xf32> to vector<2x64x8xf32>
    %432 = arith.addf %428, %431 : vector<2x64x8xf32>
    %c2_i32 = arith.constant 2 : i32
    %433 = arith.muli %arg0, %c2_i32 : i32
    %434 = arith.index_cast %433 : i32 to index
    %c0_393 = arith.constant 0 : index
    %435 = vector.load %arg14[%434, %c0_393] : memref<2x8xf32, #tpu.memory_space<vmem>>, vector<2x8xf32>
    %436 = vector.shape_cast %435 : vector<2x8xf32> to vector<2x1x8xf32>
    %437 = vector.broadcast %436 : vector<2x1x8xf32> to vector<2x64x8xf32>
    %438 = arith.addf %432, %437 : vector<2x64x8xf32>
    %c0_394 = arith.constant 0 : index
    %c0_395 = arith.constant 0 : index
    %c0_396 = arith.constant 0 : index
    %439 = vector.load %arg15[%c0_394, %c0_395, %c0_396] : memref<2x64x8xf32, #tpu.memory_space<vmem>>, vector<2x64x8xf32>
    tpu.vector_store %arg15[%c0_394, %c0_395, %c0_396], %438 {strides = array<i32>} : memref<2x64x8xf32, #tpu.memory_space<vmem>>, vector<2x64x8xf32>,
    return
  }
  func.func @transform_0(%arg0: i32) -> (i32, i32, i32, i32) {
    %c0_i32 = arith.constant 0 : i32
    %c0_i32_0 = arith.constant 0 : i32
    %c0_i32_1 = arith.constant 0 : i32
    %c0_i32_2 = arith.constant 0 : i32
    return %arg0, %c0_i32, %c0_i32_0, %c0_i32_1 : i32, i32, i32, i32
  }
  func.func @transform_1(%arg0: i32) -> (i32, i32, i32) {
    %c0_i32 = arith.constant 0 : i32
    %c0_i32_0 = arith.constant 0 : i32
    %c0_i32_1 = arith.constant 0 : i32
    %c0_i32_2 = arith.constant 0 : i32
    return %c0_i32, %c0_i32_0, %c0_i32_1 : i32, i32, i32
  }
  func.func @transform_2(%arg0: i32) -> (i32, i32) {
    %c0_i32 = arith.constant 0 : i32
    %c0_i32_0 = arith.constant 0 : i32
    %c0_i32_1 = arith.constant 0 : i32
    return %c0_i32, %c0_i32_0 : i32, i32
  }
  func.func @transform_3(%arg0: i32) -> (i32, i32) {
    %c0_i32 = arith.constant 0 : i32
    %c0_i32_0 = arith.constant 0 : i32
    %c0_i32_1 = arith.constant 0 : i32
    return %c0_i32, %c0_i32_0 : i32, i32
  }
  func.func @transform_4(%arg0: i32) -> (i32, i32, i32) {
    %c0_i32 = arith.constant 0 : i32
    %c0_i32_0 = arith.constant 0 : i32
    %c0_i32_1 = arith.constant 0 : i32
    %c0_i32_2 = arith.constant 0 : i32
    return %c0_i32, %c0_i32_0, %c0_i32_1 : i32, i32, i32
  }
  func.func @transform_5(%arg0: i32) -> (i32, i32) {
    %c0_i32 = arith.constant 0 : i32
    %c0_i32_0 = arith.constant 0 : i32
    %c0_i32_1 = arith.constant 0 : i32
    return %c0_i32, %c0_i32_0 : i32, i32
  }
  func.func @transform_6(%arg0: i32) -> (i32, i32) {
    %c0_i32 = arith.constant 0 : i32
    %c0_i32_0 = arith.constant 0 : i32
    %c0_i32_1 = arith.constant 0 : i32
    return %c0_i32, %c0_i32_0 : i32, i32
  }
  func.func @transform_7(%arg0: i32) -> (i32, i32, i32) {
    %c0_i32 = arith.constant 0 : i32
    %c0_i32_0 = arith.constant 0 : i32
    %c0_i32_1 = arith.constant 0 : i32
    %c0_i32_2 = arith.constant 0 : i32
    return %c0_i32, %c0_i32_0, %c0_i32_1 : i32, i32, i32
  }
  func.func @transform_8(%arg0: i32) -> (i32, i32) {
    %c0_i32 = arith.constant 0 : i32
    %c0_i32_0 = arith.constant 0 : i32
    %c0_i32_1 = arith.constant 0 : i32
    return %c0_i32, %c0_i32_0 : i32, i32
  }
  func.func @transform_9(%arg0: i32) -> (i32, i32) {
    %c0_i32 = arith.constant 0 : i32
    %c0_i32_0 = arith.constant 0 : i32
    %c0_i32_1 = arith.constant 0 : i32
    return %c0_i32, %c0_i32_0 : i32, i32
  }
  func.func @transform_10(%arg0: i32) -> (i32, i32, i32) {
    %c0_i32 = arith.constant 0 : i32
    %c0_i32_0 = arith.constant 0 : i32
    %c0_i32_1 = arith.constant 0 : i32
    %c0_i32_2 = arith.constant 0 : i32
    return %c0_i32, %c0_i32_0, %c0_i32_1 : i32, i32, i32
  }
  func.func @transform_11(%arg0: i32) -> (i32, i32) {
    %c0_i32 = arith.constant 0 : i32
    %c0_i32_0 = arith.constant 0 : i32
    %c0_i32_1 = arith.constant 0 : i32
    return %c0_i32, %c0_i32_0 : i32, i32
  }
  func.func @transform_12(%arg0: i32) -> (i32, i32) {
    %c0_i32 = arith.constant 0 : i32
    %c0_i32_0 = arith.constant 0 : i32
    %c0_i32_1 = arith.constant 0 : i32
    return %c0_i32, %c0_i32_0 : i32, i32
  }
  func.func @transform_13(%arg0: i32) -> (i32, i32) {
    %c0_i32 = arith.constant 0 : i32
    %c0_i32_0 = arith.constant 0 : i32
    %c0_i32_1 = arith.constant 0 : i32
    return %c0_i32, %c0_i32_0 : i32, i32
  }
  func.func @transform_14(%arg0: i32) -> (i32, i32, i32) {
    %c0_i32 = arith.constant 0 : i32
    %c0_i32_0 = arith.constant 0 : i32
    %c0_i32_1 = arith.constant 0 : i32
    return %arg0, %c0_i32, %c0_i32_0 : i32, i32, i32
  }
}

</mosaic_0001>

<llo_original>
// kernel: tpu_custom_call.1
$region0: #{tpu_custom_call.1}
  #allocation0 [shape = 'u32[]', space=smem, size = 0x4, offset = 0x4, fixed_abs, tag = 'smem constant byte address 0x4 - core index']
  #allocation1 [shape = 'u32[144,128]{1,0:T(1,128)}', space=vmem, size = 0x12000, scoped, tag = 'internal scratch']
  #allocation2 [shape = 'f32[2,10,10,4]{3,2,1,0:T(8,128)}', space=vmem, size = 0x28000, scoped, tag = 'scratch operand']
  #allocation3 [shape = 'f32[2,10,10,8]{3,2,1,0:T(8,128)}', space=vmem, size = 0x28000, scoped, tag = 'scratch operand']
  %s0 = inlined_call_operand.vmem [shape: f32[2,8,8,4], index: 0, kind: input, shape index: {}]
  %s1 = inlined_call_operand.vmem [shape: bf16[9,4,4], index: 1, kind: input, shape index: {}]
  %s2 = inlined_call_operand.vmem [shape: f32[1,4], index: 2, kind: input, shape index: {}]
  %s3 = inlined_call_operand.vmem [shape: f32[1,4], index: 3, kind: input, shape index: {}]
  %s4 = inlined_call_operand.vmem [shape: bf16[9,4,4], index: 4, kind: input, shape index: {}]
  %s5 = inlined_call_operand.vmem [shape: f32[1,4], index: 5, kind: input, shape index: {}]
  %s6 = inlined_call_operand.vmem [shape: f32[1,4], index: 6, kind: input, shape index: {}]
  %s7 = inlined_call_operand.vmem [shape: bf16[9,4,8], index: 7, kind: input, shape index: {}]
  %s8 = inlined_call_operand.vmem [shape: f32[1,8], index: 8, kind: input, shape index: {}]
  %s9 = inlined_call_operand.vmem [shape: f32[1,8], index: 9, kind: input, shape index: {}]
  %s10 = inlined_call_operand.vmem [shape: bf16[9,8,8], index: 10, kind: input, shape index: {}]
  %s11 = inlined_call_operand.vmem [shape: f32[1,8], index: 11, kind: input, shape index: {}]
  %s12 = inlined_call_operand.vmem [shape: f32[1,8], index: 12, kind: input, shape index: {}]
  %s13 = inlined_call_operand.vmem [shape: f32[2,8], index: 13, kind: input, shape index: {}]
  %s14 = inlined_call_operand.vmem [shape: f32[2,64,8], index: 14, kind: output, shape index: {}]
  %s15 = sld [smem:[#allocation0]]
  $region66: #{tpu_custom_call.1} parent=0
    _
  %s17 = ssub.s32 1, %s15
  %s18 = scalar_select 0, %s17, %s15
  // Predicated region
  $region2: #{tpu_custom_call.1} parent=0 // pred_check
    _
  $region3: #{tpu_custom_call.1} parent=0 // pred_check_branch
    %20 = sbr.rel (0) target = $region5
  $region4: #{tpu_custom_call.1} parent=0 // pred_region
    _
  $region5: #{tpu_custom_call.1} parent=0 // pred_fallthru
    _
  // Predicated region
  $region6: #{tpu_custom_call.1} parent=0 // pred_check
    _
  $region7: #{tpu_custom_call.1} parent=0 // pred_check_branch
    %22 = sbr.rel (0) target = $region9
  $region8: #{tpu_custom_call.1} parent=0 // pred_region
    _
  $region9: #{tpu_custom_call.1} parent=0 // pred_fallthru
    _
  // Predicated region
  $region10: #{tpu_custom_call.1} parent=0 // pred_check
    _
  $region11: #{tpu_custom_call.1} parent=0 // pred_check_branch
    %24 = sbr.rel (0) target = $region13
  $region12: #{tpu_custom_call.1} parent=0 // pred_region
    _
  $region13: #{tpu_custom_call.1} parent=0 // pred_fallthru
    _
  // Predicated region
  $region14: #{tpu_custom_call.1} parent=0 // pred_check
    _
  $region15: #{tpu_custom_call.1} parent=0 // pred_check_branch
    %26 = sbr.rel (0) target = $region17
  $region16: #{tpu_custom_call.1} parent=0 // pred_region
    _
  $region17: #{tpu_custom_call.1} parent=0 // pred_fallthru
    _
  // Predicated region
  $region18: #{tpu_custom_call.1} parent=0 // pred_check
    _
  $region19: #{tpu_custom_call.1} parent=0 // pred_check_branch
    %28 = sbr.rel (0) target = $region21
  $region20: #{tpu_custom_call.1} parent=0 // pred_region
    _
  $region21: #{tpu_custom_call.1} parent=0 // pred_fallthru
    _
  // Predicated region
  $region22: #{tpu_custom_call.1} parent=0 // pred_check
    _
  $region23: #{tpu_custom_call.1} parent=0 // pred_check_branch
    %30 = sbr.rel (0) target = $region25
  $region24: #{tpu_custom_call.1} parent=0 // pred_region
    _
  $region25: #{tpu_custom_call.1} parent=0 // pred_fallthru
    _
  // Predicated region
  $region26: #{tpu_custom_call.1} parent=0 // pred_check
    _
  $region27: #{tpu_custom_call.1} parent=0 // pred_check_branch
    %32 = sbr.rel (0) target = $region29
  $region28: #{tpu_custom_call.1} parent=0 // pred_region
    _
  $region29: #{tpu_custom_call.1} parent=0 // pred_fallthru
    _
  // Predicated region
  $region30: #{tpu_custom_call.1} parent=0 // pred_check
    _
  $region31: #{tpu_custom_call.1} parent=0 // pred_check_branch
    %34 = sbr.rel (0) target = $region33
  $region32: #{tpu_custom_call.1} parent=0 // pred_region
    _
  $region33: #{tpu_custom_call.1} parent=0 // pred_fallthru
    _
  // Predicated region
  $region34: #{tpu_custom_call.1} parent=0 // pred_check
    _
  $region35: #{tpu_custom_call.1} parent=0 // pred_check_branch
    %36 = sbr.rel (0) target = $region37
  $region36: #{tpu_custom_call.1} parent=0 // pred_region
    _
  $region37: #{tpu_custom_call.1} parent=0 // pred_fallthru
    _
  // Predicated region
  $region38: #{tpu_custom_call.1} parent=0 // pred_check
    _
  $region39: #{tpu_custom_call.1} parent=0 // pred_check_branch
    %38 = sbr.rel (0) target = $region41
  $region40: #{tpu_custom_call.1} parent=0 // pred_region
    _
  $region41: #{tpu_custom_call.1} parent=0 // pred_fallthru
    _
  // Predicated region
  $region42: #{tpu_custom_call.1} parent=0 // pred_check
    _
  $region43: #{tpu_custom_call.1} parent=0 // pred_check_branch
    %40 = sbr.rel (0) target = $region45
  $region44: #{tpu_custom_call.1} parent=0 // pred_region
    _
  $region45: #{tpu_custom_call.1} parent=0 // pred_fallthru
    _
  // Predicated region
  $region46: #{tpu_custom_call.1} parent=0 // pred_check
    _
  $region47: #{tpu_custom_call.1} parent=0 // pred_check_branch
    %42 = sbr.rel (0) target = $region49
  $region48: #{tpu_custom_call.1} parent=0 // pred_region
    _
  $region49: #{tpu_custom_call.1} parent=0 // pred_fallthru
    _
  // Predicated region
  $region50: #{tpu_custom_call.1} parent=0 // pred_check
    _
  $region51: #{tpu_custom_call.1} parent=0 // pred_check_branch
    %44 = sbr.rel (0) target = $region53
  $region52: #{tpu_custom_call.1} parent=0 // pred_region
    _
  $region53: #{tpu_custom_call.1} parent=0 // pred_fallthru
    _
  // Predicated region
  $region54: #{tpu_custom_call.1} parent=0 // pred_check
    _
  $region55: #{tpu_custom_call.1} parent=0 // pred_check_branch
    %46 = sbr.rel (0) target = $region57
  $region56: #{tpu_custom_call.1} parent=0 // pred_region
    _
  $region57: #{tpu_custom_call.1} parent=0 // pred_fallthru
    _
  %vm48 = vcmask 31744
  %49 = vst.msk [vmem:[#allocation2] sm:$0xff] %vm48, 0.0
  %vm50 = vcmask 25600
  %51 = vst.msk [vmem:[#allocation2 + $0x8] sm:$0x3] %vm50, 0.0
  %52 = vst.msk [vmem:[#allocation2 + $0xa0] sm:$0xff] %vm48, 0.0
  %53 = vst.msk [vmem:[#allocation2 + $0xa8] sm:$0x3] %vm50, 0.0
  %s54 = scalar_lea.vmem [#allocation2], 144
  %55 = vst.msk [vmem:[%s54] sm:$0xff] %vm48, 0.0
  %56 = vst.msk [vmem:[%s54 + $0x8] sm:$0x3] %vm50, 0.0
  %57 = vst.msk [vmem:[%s54 + $0xa0] sm:$0xff] %vm48, 0.0
  %58 = vst.msk [vmem:[%s54 + $0xa8] sm:$0x3] %vm50, 0.0
  %vm59 = vcmask 24576
  %60 = vst.msk [vmem:[#allocation2] sm:$0x1] %vm59, 0.0
  %61 = vst.msk [vmem:[#allocation2 + $0x10] sm:$0x1] %vm59, 0.0
  %62 = vst.msk [vmem:[#allocation2 + $0x20] sm:$0x1] %vm59, 0.0
  %63 = vst.msk [vmem:[#allocation2 + $0x30] sm:$0x1] %vm59, 0.0
  %64 = vst.msk [vmem:[#allocation2 + $0x40] sm:$0x1] %vm59, 0.0
  %65 = vst.msk [vmem:[#allocation2 + $0x50] sm:$0x1] %vm59, 0.0
  %66 = vst.msk [vmem:[#allocation2 + $0x60] sm:$0x1] %vm59, 0.0
  %67 = vst.msk [vmem:[#allocation2 + $0x70] sm:$0x1] %vm59, 0.0
  %68 = vst.msk [vmem:[#allocation2 + $0x80] sm:$0x1] %vm59, 0.0
  %69 = vst.msk [vmem:[#allocation2 + $0x90] sm:$0x1] %vm59, 0.0
  %70 = vst.msk [vmem:[#allocation2 + $0xa0] sm:$0x1] %vm59, 0.0
  %71 = vst.msk [vmem:[#allocation2 + $0xb0] sm:$0x1] %vm59, 0.0
  %72 = vst.msk [vmem:[#allocation2 + $0xc0] sm:$0x1] %vm59, 0.0
  %73 = vst.msk [vmem:[#allocation2 + $0xd0] sm:$0x1] %vm59, 0.0
  %74 = vst.msk [vmem:[#allocation2 + $0xe0] sm:$0x1] %vm59, 0.0
  %75 = vst.msk [vmem:[#allocation2 + $0xf0] sm:$0x1] %vm59, 0.0
  %76 = vst.msk [vmem:[#allocation2 + $0x100] sm:$0x1] %vm59, 0.0
  %77 = vst.msk [vmem:[#allocation2 + $0x110] sm:$0x1] %vm59, 0.0
  %78 = vst.msk [vmem:[#allocation2 + $0x120] sm:$0x1] %vm59, 0.0
  %79 = vst.msk [vmem:[#allocation2 + $0x130] sm:$0x1] %vm59, 0.0
  %80 = vst.msk [vmem:[#allocation2 + $0x9] sm:$0x1] %vm59, 0.0
  %81 = vst.msk [vmem:[#allocation2 + $0x19] sm:$0x1] %vm59, 0.0
  %82 = vst.msk [vmem:[#allocation2 + $0x29] sm:$0x1] %vm59, 0.0
  %83 = vst.msk [vmem:[#allocation2 + $0x39] sm:$0x1] %vm59, 0.0
  %84 = vst.msk [vmem:[#allocation2 + $0x49] sm:$0x1] %vm59, 0.0
  %85 = vst.msk [vmem:[#allocation2 + $0x59] sm:$0x1] %vm59, 0.0
  %86 = vst.msk [vmem:[#allocation2 + $0x69] sm:$0x1] %vm59, 0.0
  %87 = vst.msk [vmem:[#allocation2 + $0x79] sm:$0x1] %vm59, 0.0
  %88 = vst.msk [vmem:[#allocation2 + $0x89] sm:$0x1] %vm59, 0.0
  %89 = vst.msk [vmem:[#allocation2 + $0x99] sm:$0x1] %vm59, 0.0
  %90 = vst.msk [vmem:[#allocation2 + $0xa9] sm:$0x1] %vm59, 0.0
  %91 = vst.msk [vmem:[#allocation2 + $0xb9] sm:$0x1] %vm59, 0.0
  %92 = vst.msk [vmem:[#allocation2 + $0xc9] sm:$0x1] %vm59, 0.0
  %93 = vst.msk [vmem:[#allocation2 + $0xd9] sm:$0x1] %vm59, 0.0
  %94 = vst.msk [vmem:[#allocation2 + $0xe9] sm:$0x1] %vm59, 0.0
  %95 = vst.msk [vmem:[#allocation2 + $0xf9] sm:$0x1] %vm59, 0.0
  %96 = vst.msk [vmem:[#allocation2 + $0x109] sm:$0x1] %vm59, 0.0
  %97 = vst.msk [vmem:[#allocation2 + $0x119] sm:$0x1] %vm59, 0.0
  %98 = vst.msk [vmem:[#allocation2 + $0x129] sm:$0x1] %vm59, 0.0
  %99 = vst.msk [vmem:[#allocation2 + $0x139] sm:$0x1] %vm59, 0.0
  %vm100 = vcmask 64512
  %101 = vst.msk [vmem:[#allocation3] sm:$0xff] %vm100, 0.0
  %vm102 = vcmask 58368
  %103 = vst.msk [vmem:[#allocation3 + $0x8] sm:$0x3] %vm102, 0.0
  %104 = vst.msk [vmem:[#allocation3 + $0xa0] sm:$0xff] %vm100, 0.0
  %105 = vst.msk [vmem:[#allocation3 + $0xa8] sm:$0x3] %vm102, 0.0
  %s106 = scalar_lea.vmem [#allocation3], 144
  %107 = vst.msk [vmem:[%s106] sm:$0xff] %vm100, 0.0
  %108 = vst.msk [vmem:[%s106 + $0x8] sm:$0x3] %vm102, 0.0
  %109 = vst.msk [vmem:[%s106 + $0xa0] sm:$0xff] %vm100, 0.0
  %110 = vst.msk [vmem:[%s106 + $0xa8] sm:$0x3] %vm102, 0.0
  %vm111 = vcmask 57344
  %112 = vst.msk [vmem:[#allocation3] sm:$0x1] %vm111, 0.0
  %113 = vst.msk [vmem:[#allocation3 + $0x10] sm:$0x1] %vm111, 0.0
  %114 = vst.msk [vmem:[#allocation3 + $0x20] sm:$0x1] %vm111, 0.0
  %115 = vst.msk [vmem:[#allocation3 + $0x30] sm:$0x1] %vm111, 0.0
  %116 = vst.msk [vmem:[#allocation3 + $0x40] sm:$0x1] %vm111, 0.0
  %117 = vst.msk [vmem:[#allocation3 + $0x50] sm:$0x1] %vm111, 0.0
  %118 = vst.msk [vmem:[#allocation3 + $0x60] sm:$0x1] %vm111, 0.0
  %119 = vst.msk [vmem:[#allocation3 + $0x70] sm:$0x1] %vm111, 0.0
  %120 = vst.msk [vmem:[#allocation3 + $0x80] sm:$0x1] %vm111, 0.0
  %121 = vst.msk [vmem:[#allocation3 + $0x90] sm:$0x1] %vm111, 0.0
  %122 = vst.msk [vmem:[#allocation3 + $0xa0] sm:$0x1] %vm111, 0.0
  %123 = vst.msk [vmem:[#allocation3 + $0xb0] sm:$0x1] %vm111, 0.0
  %124 = vst.msk [vmem:[#allocation3 + $0xc0] sm:$0x1] %vm111, 0.0
  %125 = vst.msk [vmem:[#allocation3 + $0xd0] sm:$0x1] %vm111, 0.0
  %126 = vst.msk [vmem:[#allocation3 + $0xe0] sm:$0x1] %vm111, 0.0
  %127 = vst.msk [vmem:[#allocation3 + $0xf0] sm:$0x1] %vm111, 0.0
  %128 = vst.msk [vmem:[#allocation3 + $0x100] sm:$0x1] %vm111, 0.0
  %129 = vst.msk [vmem:[#allocation3 + $0x110] sm:$0x1] %vm111, 0.0
  %130 = vst.msk [vmem:[#allocation3 + $0x120] sm:$0x1] %vm111, 0.0
  %131 = vst.msk [vmem:[#allocation3 + $0x130] sm:$0x1] %vm111, 0.0
  %132 = vst.msk [vmem:[#allocation3 + $0x9] sm:$0x1] %vm111, 0.0
  %133 = vst.msk [vmem:[#allocation3 + $0x19] sm:$0x1] %vm111, 0.0
  %134 = vst.msk [vmem:[#allocation3 + $0x29] sm:$0x1] %vm111, 0.0
  %135 = vst.msk [vmem:[#allocation3 + $0x39] sm:$0x1] %vm111, 0.0
  %136 = vst.msk [vmem:[#allocation3 + $0x49] sm:$0x1] %vm111, 0.0
  %137 = vst.msk [vmem:[#allocation3 + $0x59] sm:$0x1] %vm111, 0.0
  %138 = vst.msk [vmem:[#allocation3 + $0x69] sm:$0x1] %vm111, 0.0
  %139 = vst.msk [vmem:[#allocation3 + $0x79] sm:$0x1] %vm111, 0.0
  %140 = vst.msk [vmem:[#allocation3 + $0x89] sm:$0x1] %vm111, 0.0
  %141 = vst.msk [vmem:[#allocation3 + $0x99] sm:$0x1] %vm111, 0.0
  %142 = vst.msk [vmem:[#allocation3 + $0xa9] sm:$0x1] %vm111, 0.0
  %143 = vst.msk [vmem:[#allocation3 + $0xb9] sm:$0x1] %vm111, 0.0
  %144 = vst.msk [vmem:[#allocation3 + $0xc9] sm:$0x1] %vm111, 0.0
  %145 = vst.msk [vmem:[#allocation3 + $0xd9] sm:$0x1] %vm111, 0.0
  %146 = vst.msk [vmem:[#allocation3 + $0xe9] sm:$0x1] %vm111, 0.0
  %147 = vst.msk [vmem:[#allocation3 + $0xf9] sm:$0x1] %vm111, 0.0
  %148 = vst.msk [vmem:[#allocation3 + $0x109] sm:$0x1] %vm111, 0.0
  %149 = vst.msk [vmem:[#allocation3 + $0x119] sm:$0x1] %vm111, 0.0
  %150 = vst.msk [vmem:[#allocation3 + $0x129] sm:$0x1] %vm111, 0.0
  %151 = vst.msk [vmem:[#allocation3 + $0x139] sm:$0x1] %vm111, 0.0
  %v152 = vld [vmem:[%s0] sm:$0xff]
  %v153 = vld [vmem:[%s0 + $0x8] sm:$0xff]
  %v154 = vld [vmem:[%s0 + $0x10] sm:$0xff]
  %v155 = vld [vmem:[%s0 + $0x18] sm:$0xff]
  %v156 = vld [vmem:[%s0 + $0x20] sm:$0xff]
  %v157 = vld [vmem:[%s0 + $0x28] sm:$0xff]
  %v158 = vld [vmem:[%s0 + $0x30] sm:$0xff]
  %v159 = vld [vmem:[%s0 + $0x38] sm:$0xff]
  %v160 = vld [vmem:[%s0 + $0x40] sm:$0xff]
  %v161 = vld [vmem:[%s0 + $0x48] sm:$0xff]
  %v162 = vld [vmem:[%s0 + $0x50] sm:$0xff]
  %v163 = vld [vmem:[%s0 + $0x58] sm:$0xff]
  %v164 = vld [vmem:[%s0 + $0x60] sm:$0xff]
  %v165 = vld [vmem:[%s0 + $0x68] sm:$0xff]
  %v166 = vld [vmem:[%s0 + $0x70] sm:$0xff]
  %v167 = vld [vmem:[%s0 + $0x78] sm:$0xff]
  %s168 = scalar_lea.vmem [#allocation2], 16
  %169 = vst.msk [vmem:[%s168 + $0x1] sm:$0xff] %vm48, %v152
  %170 = vst.msk [vmem:[%s168 + $0x11] sm:$0xff] %vm48, %v153
  %171 = vst.msk [vmem:[%s168 + $0x21] sm:$0xff] %vm48, %v154
  %172 = vst.msk [vmem:[%s168 + $0x31] sm:$0xff] %vm48, %v155
  %173 = vst.msk [vmem:[%s168 + $0x41] sm:$0xff] %vm48, %v156
  %174 = vst.msk [vmem:[%s168 + $0x51] sm:$0xff] %vm48, %v157
  %175 = vst.msk [vmem:[%s168 + $0x61] sm:$0xff] %vm48, %v158
  %176 = vst.msk [vmem:[%s168 + $0x71] sm:$0xff] %vm48, %v159
  %177 = vst.msk [vmem:[%s168 + $0xa1] sm:$0xff] %vm48, %v160
  %178 = vst.msk [vmem:[%s168 + $0xb1] sm:$0xff] %vm48, %v161
  %179 = vst.msk [vmem:[%s168 + $0xc1] sm:$0xff] %vm48, %v162
  %180 = vst.msk [vmem:[%s168 + $0xd1] sm:$0xff] %vm48, %v163
  %181 = vst.msk [vmem:[%s168 + $0xe1] sm:$0xff] %vm48, %v164
  %182 = vst.msk [vmem:[%s168 + $0xf1] sm:$0xff] %vm48, %v165
  %183 = vst.msk [vmem:[%s168 + $0x101] sm:$0xff] %vm48, %v166
  %184 = vst.msk [vmem:[%s168 + $0x111] sm:$0xff] %vm48, %v167
  %v185 = vld [vmem:[#allocation2] sm:$0xff]
  %v186 = vld [vmem:[#allocation2 + $0x10] sm:$0xff]
  %v187 = vld [vmem:[#allocation2 + $0x20] sm:$0xff]
  %v188 = vld [vmem:[#allocation2 + $0x30] sm:$0xff]
  %v189 = vld [vmem:[#allocation2 + $0x40] sm:$0xff]
  %v190 = vld [vmem:[#allocation2 + $0x50] sm:$0xff]
  %v191 = vld [vmem:[#allocation2 + $0x60] sm:$0xff]
  %v192 = vld [vmem:[#allocation2 + $0x70] sm:$0xff]
  %v193 = vld [vmem:[#allocation2 + $0xa0] sm:$0xff]
  %v194 = vld [vmem:[#allocation2 + $0xb0] sm:$0xff]
  %v195 = vld [vmem:[#allocation2 + $0xc0] sm:$0xff]
  %v196 = vld [vmem:[#allocation2 + $0xd0] sm:$0xff]
  %v197 = vld [vmem:[#allocation2 + $0xe0] sm:$0xff]
  %v198 = vld [vmem:[#allocation2 + $0xf0] sm:$0xff]
  %v199 = vld [vmem:[#allocation2 + $0x100] sm:$0xff]
  %v200 = vld [vmem:[#allocation2 + $0x110] sm:$0xff]
  %v201 = vpack.c.bf16 %v186, %v185
  %v202 = vpack.c.bf16 %v188, %v187
  %v203 = vpack.c.bf16 %v190, %v189
  %v204 = vpack.c.bf16 %v192, %v191
  %v205 = vpack.c.bf16 %v194, %v193
  %v206 = vpack.c.bf16 %v196, %v195
  %v207 = vpack.c.bf16 %v198, %v197
  %v208 = vpack.c.bf16 %v200, %v199
  %v209 = vld [vmem:[%s1] sm:$0x3]
  %v210 = vld [vmem:[#allocation2 + $0x1] sm:$0xff]
  %v211 = vld [vmem:[#allocation2 + $0x11] sm:$0xff]
  %v212 = vld [vmem:[#allocation2 + $0x21] sm:$0xff]
  %v213 = vld [vmem:[#allocation2 + $0x31] sm:$0xff]
  %v214 = vld [vmem:[#allocation2 + $0x41] sm:$0xff]
  %v215 = vld [vmem:[#allocation2 + $0x51] sm:$0xff]
  %v216 = vld [vmem:[#allocation2 + $0x61] sm:$0xff]
  %v217 = vld [vmem:[#allocation2 + $0x71] sm:$0xff]
  %v218 = vld [vmem:[#allocation2 + $0xa1] sm:$0xff]
  %v219 = vld [vmem:[#allocation2 + $0xb1] sm:$0xff]
  %v220 = vld [vmem:[#allocation2 + $0xc1] sm:$0xff]
  %v221 = vld [vmem:[#allocation2 + $0xd1] sm:$0xff]
  %v222 = vld [vmem:[#allocation2 + $0xe1] sm:$0xff]
  %v223 = vld [vmem:[#allocation2 + $0xf1] sm:$0xff]
  %v224 = vld [vmem:[#allocation2 + $0x101] sm:$0xff]
  %v225 = vld [vmem:[#allocation2 + $0x111] sm:$0xff]
  %v226 = vpack.c.bf16 %v211, %v210
  %v227 = vpack.c.bf16 %v213, %v212
  %v228 = vpack.c.bf16 %v215, %v214
  %v229 = vpack.c.bf16 %v217, %v216
  %v230 = vpack.c.bf16 %v219, %v218
  %v231 = vpack.c.bf16 %v221, %v220
  %v232 = vpack.c.bf16 %v223, %v222
  %v233 = vpack.c.bf16 %v225, %v224
  %s234 = scalar_lea.vmem %s1, 2
  %v235 = vld [vmem:[%s234] sm:$0x3]
  %v237 = vsel %vm48, %v226, 0
  %v240 = vsel %vm48, %v227, 0
  %v243 = vsel %vm48, %v228, 0
  %v246 = vsel %vm48, %v229, 0
  %v249 = vsel %vm48, %v230, 0
  %v252 = vsel %vm48, %v231, 0
  %v255 = vsel %vm48, %v232, 0
  %v258 = vsel %vm48, %v233, 0
  %vm260 = vcmask 1041408
  %v262 = vsel %vm260, %v235, 0
  %264 = vmatprep.subr.bf16.mxu0 0
  %265 = vmatpush1.bf16.msra.mxu0 0
  %266 = vmatprep.subr.bf16.mxu0 0
  %267 = vmatpush1.bf16.msra.mxu0 0
  %268 = vmatprep.subr.bf16.mxu0 0
  %269 = vmatpush1.bf16.msra.mxu0 0
  %270 = vmatprep.subr.bf16.mxu0 0
  %271 = vmatpush1.bf16.msra.mxu0 0
  %272 = vmatprep.subr.bf16.mxu0 0
  %273 = vmatpush1.bf16.msra.mxu0 0
  %274 = vmatprep.subr.bf16.mxu0 0
  %275 = vmatpush1.bf16.msra.mxu0 0
  %276 = vmatprep.subr.bf16.mxu0 0
  %277 = vmatpush1.bf16.msra.mxu0 0
  %278 = vmatprep.subr.bf16.mxu0 0
  %279 = vmatpush1.bf16.msra.mxu0 %v262
  %280 = vmatprep.subr.bf16.mxu0 0
  %281 = vmatpush2.bf16.msra.mxu0 0
  %282 = vmatprep.subr.bf16.mxu0 0
  %283 = vmatpush2.bf16.msra.mxu0 0
  %284 = vmatprep.subr.bf16.mxu0 0
  %285 = vmatpush2.bf16.msra.mxu0 0
  %286 = vmatprep.subr.bf16.mxu0 0
  %287 = vmatpush2.bf16.msra.mxu0 0
  %288 = vmatprep.subr.bf16.mxu0 0
  %289 = vmatpush2.bf16.msra.mxu0 0
  %290 = vmatprep.subr.bf16.mxu0 0
  %291 = vmatpush2.bf16.msra.mxu0 0
  %292 = vmatprep.subr.bf16.mxu0 0
  %293 = vmatpush2.bf16.msra.mxu0 0
  %294 = vmatprep.subr.bf16.mxu0 0
  %295 = vmatpush2.bf16.msra.mxu0 0
  %296 = vmatprep.mubr.bf16.mxu0 0
  %297 = vmatmul.mubr.bf16.gmra.mxu0 %v237
  %v298 = vpop.f32.mrf.mxu0
  %v299 = vadd.f32 0.0, %v298
  %v300 = vpop.f32.mrf.mxu0
  %v301 = vpop.f32.mrf.mxu0
  %v302 = vadd.f32 0.0, %v301
  %v303 = vpop.f32.mrf.mxu0
  %304 = vmatprep.mubr.bf16.mxu0 0
  %305 = vmatmul.mubr.bf16.gmra.mxu0 %v240
  %v306 = vpop.f32.mrf.mxu0
  %v307 = vadd.f32 0.0, %v306
  %v308 = vpop.f32.mrf.mxu0
  %v309 = vpop.f32.mrf.mxu0
  %v310 = vadd.f32 0.0, %v309
  %v311 = vpop.f32.mrf.mxu0
  %312 = vmatprep.mubr.bf16.mxu0 0
  %313 = vmatmul.mubr.bf16.gmra.mxu0 %v243
  %v314 = vpop.f32.mrf.mxu0
  %v315 = vadd.f32 0.0, %v314
  %v316 = vpop.f32.mrf.mxu0
  %v317 = vpop.f32.mrf.mxu0
  %v318 = vadd.f32 0.0, %v317
  %v319 = vpop.f32.mrf.mxu0
  %320 = vmatprep.mubr.bf16.mxu0 0
  %321 = vmatmul.mubr.bf16.gmra.mxu0 %v246
  %v322 = vpop.f32.mrf.mxu0
  %v323 = vadd.f32 0.0, %v322
  %v324 = vpop.f32.mrf.mxu0
  %v325 = vpop.f32.mrf.mxu0
  %v326 = vadd.f32 0.0, %v325
  %v327 = vpop.f32.mrf.mxu0
  %328 = vmatprep.mubr.bf16.mxu0 0
  %329 = vmatmul.mubr.bf16.gmra.mxu0 %v249
  %v330 = vpop.f32.mrf.mxu0
  %v331 = vadd.f32 0.0, %v330
  %v332 = vpop.f32.mrf.mxu0
  %v333 = vpop.f32.mrf.mxu0
  %v334 = vadd.f32 0.0, %v333
  %v335 = vpop.f32.mrf.mxu0
  %336 = vmatprep.mubr.bf16.mxu0 0
  %337 = vmatmul.mubr.bf16.gmra.mxu0 %v252
  %v338 = vpop.f32.mrf.mxu0
  %v339 = vadd.f32 0.0, %v338
  %v340 = vpop.f32.mrf.mxu0
  %v341 = vpop.f32.mrf.mxu0
  %v342 = vadd.f32 0.0, %v341
  %v343 = vpop.f32.mrf.mxu0
  %344 = vmatprep.mubr.bf16.mxu0 0
  %345 = vmatmul.mubr.bf16.gmra.mxu0 %v255
  %v346 = vpop.f32.mrf.mxu0
  %v347 = vadd.f32 0.0, %v346
  %v348 = vpop.f32.mrf.mxu0
  %v349 = vpop.f32.mrf.mxu0
  %v350 = vadd.f32 0.0, %v349
  %v351 = vpop.f32.mrf.mxu0
  %352 = vmatprep.mubr.bf16.mxu0 0
  %353 = vmatmul.mubr.bf16.gmra.mxu0 %v258
  %v354 = vpop.f32.mrf.mxu0
  %v355 = vadd.f32 0.0, %v354
  %v356 = vpop.f32.mrf.mxu0
  %v357 = vpop.f32.mrf.mxu0
  %v358 = vadd.f32 0.0, %v357
  %v359 = vpop.f32.mrf.mxu0
  %360 = vdwg.mxu0
  %v362 = vsel %vm48, %v201, 0
  %v365 = vsel %vm48, %v202, 0
  %v368 = vsel %vm48, %v203, 0
  %v371 = vsel %vm48, %v204, 0
  %v374 = vsel %vm48, %v205, 0
  %v377 = vsel %vm48, %v206, 0
  %v380 = vsel %vm48, %v207, 0
  %v383 = vsel %vm48, %v208, 0
  %v386 = vsel %vm260, %v209, 0
  %388 = vmatprep.subr.bf16.mxu0 0
  %389 = vmatpush1.bf16.msra.mxu0 0
  %390 = vmatprep.subr.bf16.mxu0 0
  %391 = vmatpush1.bf16.msra.mxu0 0
  %392 = vmatprep.subr.bf16.mxu0 0
  %393 = vmatpush1.bf16.msra.mxu0 0
  %394 = vmatprep.subr.bf16.mxu0 0
  %395 = vmatpush1.bf16.msra.mxu0 0
  %396 = vmatprep.subr.bf16.mxu0 0
  %397 = vmatpush1.bf16.msra.mxu0 0
  %398 = vmatprep.subr.bf16.mxu0 0
  %399 = vmatpush1.bf16.msra.mxu0 0
  %400 = vmatprep.subr.bf16.mxu0 0
  %401 = vmatpush1.bf16.msra.mxu0 0
  %402 = vmatprep.subr.bf16.mxu0 0
  %403 = vmatpush1.bf16.msra.mxu0 %v386
  %404 = vmatprep.subr.bf16.mxu0 0
  %405 = vmatpush2.bf16.msra.mxu0 0
  %406 = vmatprep.subr.bf16.mxu0 0
  %407 = vmatpush2.bf16.msra.mxu0 0
  %408 = vmatprep.subr.bf16.mxu0 0
  %409 = vmatpush2.bf16.msra.mxu0 0
  %410 = vmatprep.subr.bf16.mxu0 0
  %411 = vmatpush2.bf16.msra.mxu0 0
  %412 = vmatprep.subr.bf16.mxu0 0
  %413 = vmatpush2.bf16.msra.mxu0 0
  %414 = vmatprep.subr.bf16.mxu0 0
  %415 = vmatpush2.bf16.msra.mxu0 0
  %416 = vmatprep.subr.bf16.mxu0 0
  %417 = vmatpush2.bf16.msra.mxu0 0
  %418 = vmatprep.subr.bf16.mxu0 0
  %419 = vmatpush2.bf16.msra.mxu0 0
  %420 = vmatprep.mubr.bf16.mxu0 0
  %421 = vmatmul.mubr.bf16.gmra.mxu0 %v362
  %v422 = vpop.f32.mrf.mxu0
  %v423 = vadd.f32 %v299, %v422
  %v424 = vpop.f32.mrf.mxu0
  %v425 = vpop.f32.mrf.mxu0
  %v426 = vadd.f32 %v302, %v425
  %v427 = vpop.f32.mrf.mxu0
  %428 = vmatprep.mubr.bf16.mxu0 0
  %429 = vmatmul.mubr.bf16.gmra.mxu0 %v365
  %v430 = vpop.f32.mrf.mxu0
  %v431 = vadd.f32 %v307, %v430
  %v432 = vpop.f32.mrf.mxu0
  %v433 = vpop.f32.mrf.mxu0
  %v434 = vadd.f32 %v310, %v433
  %v435 = vpop.f32.mrf.mxu0
  %436 = vmatprep.mubr.bf16.mxu0 0
  %437 = vmatmul.mubr.bf16.gmra.mxu0 %v368
  %v438 = vpop.f32.mrf.mxu0
  %v439 = vadd.f32 %v315, %v438
  %v440 = vpop.f32.mrf.mxu0
  %v441 = vpop.f32.mrf.mxu0
  %v442 = vadd.f32 %v318, %v441
  %v443 = vpop.f32.mrf.mxu0
  %444 = vmatprep.mubr.bf16.mxu0 0
  %445 = vmatmul.mubr.bf16.gmra.mxu0 %v371
  %v446 = vpop.f32.mrf.mxu0
  %v447 = vadd.f32 %v323, %v446
  %v448 = vpop.f32.mrf.mxu0
  %v449 = vpop.f32.mrf.mxu0
  %v450 = vadd.f32 %v326, %v449
  %v451 = vpop.f32.mrf.mxu0
  %452 = vmatprep.mubr.bf16.mxu0 0
  %453 = vmatmul.mubr.bf16.gmra.mxu0 %v374
  %v454 = vpop.f32.mrf.mxu0
  %v455 = vadd.f32 %v331, %v454
  %v456 = vpop.f32.mrf.mxu0
  %v457 = vpop.f32.mrf.mxu0
  %v458 = vadd.f32 %v334, %v457
  %v459 = vpop.f32.mrf.mxu0
  %460 = vmatprep.mubr.bf16.mxu0 0
  %461 = vmatmul.mubr.bf16.gmra.mxu0 %v377
  %v462 = vpop.f32.mrf.mxu0
  %v463 = vadd.f32 %v339, %v462
  %v464 = vpop.f32.mrf.mxu0
  %v465 = vpop.f32.mrf.mxu0
  %v466 = vadd.f32 %v342, %v465
  %v467 = vpop.f32.mrf.mxu0
  %468 = vmatprep.mubr.bf16.mxu0 0
  %469 = vmatmul.mubr.bf16.gmra.mxu0 %v380
  %v470 = vpop.f32.mrf.mxu0
  %v471 = vadd.f32 %v347, %v470
  %v472 = vpop.f32.mrf.mxu0
  %v473 = vpop.f32.mrf.mxu0
  %v474 = vadd.f32 %v350, %v473
  %v475 = vpop.f32.mrf.mxu0
  %476 = vmatprep.mubr.bf16.mxu0 0
  %477 = vmatmul.mubr.bf16.gmra.mxu0 %v383
  %v478 = vpop.f32.mrf.mxu0
  %v479 = vadd.f32 %v355, %v478
  %v480 = vpop.f32.mrf.mxu0
  %v481 = vpop.f32.mrf.mxu0
  %v482 = vadd.f32 %v358, %v481
  %v483 = vpop.f32.mrf.mxu0
  %484 = vdwg.mxu0
  %v485 = vld [vmem:[#allocation2 + $0x2] sm:$0xff]
  %v486 = vld [vmem:[#allocation2 + $0x12] sm:$0xff]
  %v487 = vld [vmem:[#allocation2 + $0x22] sm:$0xff]
  %v488 = vld [vmem:[#allocation2 + $0x32] sm:$0xff]
  %v489 = vld [vmem:[#allocation2 + $0x42] sm:$0xff]
  %v490 = vld [vmem:[#allocation2 + $0x52] sm:$0xff]
  %v491 = vld [vmem:[#allocation2 + $0x62] sm:$0xff]
  %v492 = vld [vmem:[#allocation2 + $0x72] sm:$0xff]
  %v493 = vld [vmem:[#allocation2 + $0xa2] sm:$0xff]
  %v494 = vld [vmem:[#allocation2 + $0xb2] sm:$0xff]
  %v495 = vld [vmem:[#allocation2 + $0xc2] sm:$0xff]
  %v496 = vld [vmem:[#allocation2 + $0xd2] sm:$0xff]
  %v497 = vld [vmem:[#allocation2 + $0xe2] sm:$0xff]
  %v498 = vld [vmem:[#allocation2 + $0xf2] sm:$0xff]
  %v499 = vld [vmem:[#allocation2 + $0x102] sm:$0xff]
  %v500 = vld [vmem:[#allocation2 + $0x112] sm:$0xff]
  %v501 = vpack.c.bf16 %v486, %v485
  %v502 = vpack.c.bf16 %v488, %v487
  %v503 = vpack.c.bf16 %v490, %v489
  %v504 = vpack.c.bf16 %v492, %v491
  %v505 = vpack.c.bf16 %v494, %v493
  %v506 = vpack.c.bf16 %v496, %v495
  %v507 = vpack.c.bf16 %v498, %v497
  %v508 = vpack.c.bf16 %v500, %v499
  %s509 = scalar_lea.vmem %s1, 4
  %v510 = vld [vmem:[%s509] sm:$0x3]
  %v512 = vsel %vm48, %v501, 0
  %v515 = vsel %vm48, %v502, 0
  %v518 = vsel %vm48, %v503, 0
  %v521 = vsel %vm48, %v504, 0
  %v524 = vsel %vm48, %v505, 0
  %v527 = vsel %vm48, %v506, 0
  %v530 = vsel %vm48, %v507, 0
  %v533 = vsel %vm48, %v508, 0
  %v536 = vsel %vm260, %v510, 0
  %538 = vmatprep.subr.bf16.mxu0 0
  %539 = vmatpush1.bf16.msra.mxu0 0
  %540 = vmatprep.subr.bf16.mxu0 0
  %541 = vmatpush1.bf16.msra.mxu0 0
  %542 = vmatprep.subr.bf16.mxu0 0
  %543 = vmatpush1.bf16.msra.mxu0 0
  %544 = vmatprep.subr.bf16.mxu0 0
  %545 = vmatpush1.bf16.msra.mxu0 0
  %546 = vmatprep.subr.bf16.mxu0 0
  %547 = vmatpush1.bf16.msra.mxu0 0
  %548 = vmatprep.subr.bf16.mxu0 0
  %549 = vmatpush1.bf16.msra.mxu0 0
  %550 = vmatprep.subr.bf16.mxu0 0
  %551 = vmatpush1.bf16.msra.mxu0 0
  %552 = vmatprep.subr.bf16.mxu0 0
  %553 = vmatpush1.bf16.msra.mxu0 %v536
  %554 = vmatprep.subr.bf16.mxu0 0
  %555 = vmatpush2.bf16.msra.mxu0 0
  %556 = vmatprep.subr.bf16.mxu0 0
  %557 = vmatpush2.bf16.msra.mxu0 0
  %558 = vmatprep.subr.bf16.mxu0 0
  %559 = vmatpush2.bf16.msra.mxu0 0
  %560 = vmatprep.subr.bf16.mxu0 0
  %561 = vmatpush2.bf16.msra.mxu0 0
  %562 = vmatprep.subr.bf16.mxu0 0
  %563 = vmatpush2.bf16.msra.mxu0 0
  %564 = vmatprep.subr.bf16.mxu0 0
  %565 = vmatpush2.bf16.msra.mxu0 0
  %566 = vmatprep.subr.bf16.mxu0 0
  %567 = vmatpush2.bf16.msra.mxu0 0
  %568 = vmatprep.subr.bf16.mxu0 0
  %569 = vmatpush2.bf16.msra.mxu0 0
  %570 = vmatprep.mubr.bf16.mxu0 0
  %571 = vmatmul.mubr.bf16.gmra.mxu0 %v512
  %v572 = vpop.f32.mrf.mxu0
  %v573 = vadd.f32 0.0, %v572
  %v574 = vpop.f32.mrf.mxu0
  %v575 = vpop.f32.mrf.mxu0
  %v576 = vadd.f32 0.0, %v575
  %v577 = vpop.f32.mrf.mxu0
  %578 = vmatprep.mubr.bf16.mxu0 0
  %579 = vmatmul.mubr.bf16.gmra.mxu0 %v515
  %v580 = vpop.f32.mrf.mxu0
  %v581 = vadd.f32 0.0, %v580
  %v582 = vpop.f32.mrf.mxu0
  %v583 = vpop.f32.mrf.mxu0
  %v584 = vadd.f32 0.0, %v583
  %v585 = vpop.f32.mrf.mxu0
  %586 = vmatprep.mubr.bf16.mxu0 0
  %587 = vmatmul.mubr.bf16.gmra.mxu0 %v518
  %v588 = vpop.f32.mrf.mxu0
  %v589 = vadd.f32 0.0, %v588
  %v590 = vpop.f32.mrf.mxu0
  %v591 = vpop.f32.mrf.mxu0
  %v592 = vadd.f32 0.0, %v591
  %v593 = vpop.f32.mrf.mxu0
  %594 = vmatprep.mubr.bf16.mxu0 0
  %595 = vmatmul.mubr.bf16.gmra.mxu0 %v521
  %v596 = vpop.f32.mrf.mxu0
  %v597 = vadd.f32 0.0, %v596
  %v598 = vpop.f32.mrf.mxu0
  %v599 = vpop.f32.mrf.mxu0
  %v600 = vadd.f32 0.0, %v599
  %v601 = vpop.f32.mrf.mxu0
  %602 = vmatprep.mubr.bf16.mxu0 0
  %603 = vmatmul.mubr.bf16.gmra.mxu0 %v524
  %v604 = vpop.f32.mrf.mxu0
  %v605 = vadd.f32 0.0, %v604
  %v606 = vpop.f32.mrf.mxu0
  %v607 = vpop.f32.mrf.mxu0
  %v608 = vadd.f32 0.0, %v607
  %v609 = vpop.f32.mrf.mxu0
  %610 = vmatprep.mubr.bf16.mxu0 0
  %611 = vmatmul.mubr.bf16.gmra.mxu0 %v527
  %v612 = vpop.f32.mrf.mxu0
  %v613 = vadd.f32 0.0, %v612
  %v614 = vpop.f32.mrf.mxu0
  %v615 = vpop.f32.mrf.mxu0
  %v616 = vadd.f32 0.0, %v615
  %v617 = vpop.f32.mrf.mxu0
  %618 = vmatprep.mubr.bf16.mxu0 0
  %619 = vmatmul.mubr.bf16.gmra.mxu0 %v530
  %v620 = vpop.f32.mrf.mxu0
  %v621 = vadd.f32 0.0, %v620
  %v622 = vpop.f32.mrf.mxu0
  %v623 = vpop.f32.mrf.mxu0
  %v624 = vadd.f32 0.0, %v623
  %v625 = vpop.f32.mrf.mxu0
  %626 = vmatprep.mubr.bf16.mxu0 0
  %627 = vmatmul.mubr.bf16.gmra.mxu0 %v533
  %v628 = vpop.f32.mrf.mxu0
  %v629 = vadd.f32 0.0, %v628
  %v630 = vpop.f32.mrf.mxu0
  %v631 = vpop.f32.mrf.mxu0
  %v632 = vadd.f32 0.0, %v631
  %v633 = vpop.f32.mrf.mxu0
  %634 = vdwg.mxu0
  %v635 = vadd.f32 %v423, %v573
  %v636 = vadd.f32 %v426, %v576
  %v637 = vadd.f32 %v431, %v581
  %v638 = vadd.f32 %v434, %v584
  %v639 = vadd.f32 %v439, %v589
  %v640 = vadd.f32 %v442, %v592
  %v641 = vadd.f32 %v447, %v597
  %v642 = vadd.f32 %v450, %v600
  %v643 = vadd.f32 %v455, %v605
  %v644 = vadd.f32 %v458, %v608
  %v645 = vadd.f32 %v463, %v613
  %v646 = vadd.f32 %v466, %v616
  %v647 = vadd.f32 %v471, %v621
  %v648 = vadd.f32 %v474, %v624
  %v649 = vadd.f32 %v479, %v629
  %v650 = vadd.f32 %v482, %v632
  %v651 = vld [vmem:[%s168] sm:$0xff]
  %v652 = vld [vmem:[%s168 + $0x10] sm:$0xff]
  %v653 = vld [vmem:[%s168 + $0x20] sm:$0xff]
  %v654 = vld [vmem:[%s168 + $0x30] sm:$0xff]
  %v655 = vld [vmem:[%s168 + $0x40] sm:$0xff]
  %v656 = vld [vmem:[%s168 + $0x50] sm:$0xff]
  %v657 = vld [vmem:[%s168 + $0x60] sm:$0xff]
  %v658 = vld [vmem:[%s168 + $0x70] sm:$0xff]
  %v659 = vld [vmem:[%s168 + $0xa0] sm:$0xff]
  %v660 = vld [vmem:[%s168 + $0xb0] sm:$0xff]
  %v661 = vld [vmem:[%s168 + $0xc0] sm:$0xff]
  %v662 = vld [vmem:[%s168 + $0xd0] sm:$0xff]
  %v663 = vld [vmem:[%s168 + $0xe0] sm:$0xff]
  %v664 = vld [vmem:[%s168 + $0xf0] sm:$0xff]
  %v665 = vld [vmem:[%s168 + $0x100] sm:$0xff]
  %v666 = vld [vmem:[%s168 + $0x110] sm:$0xff]
  %v667 = vpack.c.bf16 %v652, %v651
  %v668 = vpack.c.bf16 %v654, %v653
  %v669 = vpack.c.bf16 %v656, %v655
  %v670 = vpack.c.bf16 %v658, %v657
  %v671 = vpack.c.bf16 %v660, %v659
  %v672 = vpack.c.bf16 %v662, %v661
  %v673 = vpack.c.bf16 %v664, %v663
  %v674 = vpack.c.bf16 %v666, %v665
  %s675 = scalar_lea.vmem %s1, 6
  %v676 = vld [vmem:[%s675] sm:$0x3]
  %v678 = vsel %vm48, %v667, 0
  %v681 = vsel %vm48, %v668, 0
  %v684 = vsel %vm48, %v669, 0
  %v687 = vsel %vm48, %v670, 0
  %v690 = vsel %vm48, %v671, 0
  %v693 = vsel %vm48, %v672, 0
  %v696 = vsel %vm48, %v673, 0
  %v699 = vsel %vm48, %v674, 0
  %v702 = vsel %vm260, %v676, 0
  %704 = vmatprep.subr.bf16.mxu0 0
  %705 = vmatpush1.bf16.msra.mxu0 0
  %706 = vmatprep.subr.bf16.mxu0 0
  %707 = vmatpush1.bf16.msra.mxu0 0
  %708 = vmatprep.subr.bf16.mxu0 0
  %709 = vmatpush1.bf16.msra.mxu0 0
  %710 = vmatprep.subr.bf16.mxu0 0
  %711 = vmatpush1.bf16.msra.mxu0 0
  %712 = vmatprep.subr.bf16.mxu0 0
  %713 = vmatpush1.bf16.msra.mxu0 0
  %714 = vmatprep.subr.bf16.mxu0 0
  %715 = vmatpush1.bf16.msra.mxu0 0
  %716 = vmatprep.subr.bf16.mxu0 0
  %717 = vmatpush1.bf16.msra.mxu0 0
  %718 = vmatprep.subr.bf16.mxu0 0
  %719 = vmatpush1.bf16.msra.mxu0 %v702
  %720 = vmatprep.subr.bf16.mxu0 0
  %721 = vmatpush2.bf16.msra.mxu0 0
  %722 = vmatprep.subr.bf16.mxu0 0
  %723 = vmatpush2.bf16.msra.mxu0 0
  %724 = vmatprep.subr.bf16.mxu0 0
  %725 = vmatpush2.bf16.msra.mxu0 0
  %726 = vmatprep.subr.bf16.mxu0 0
  %727 = vmatpush2.bf16.msra.mxu0 0
  %728 = vmatprep.subr.bf16.mxu0 0
  %729 = vmatpush2.bf16.msra.mxu0 0
  %730 = vmatprep.subr.bf16.mxu0 0
  %731 = vmatpush2.bf16.msra.mxu0 0
  %732 = vmatprep.subr.bf16.mxu0 0
  %733 = vmatpush2.bf16.msra.mxu0 0
  %734 = vmatprep.subr.bf16.mxu0 0
  %735 = vmatpush2.bf16.msra.mxu0 0
  %736 = vmatprep.mubr.bf16.mxu0 0
  %737 = vmatmul.mubr.bf16.gmra.mxu0 %v678
  %v738 = vpop.f32.mrf.mxu0
  %v739 = vadd.f32 0.0, %v738
  %v740 = vpop.f32.mrf.mxu0
  %v741 = vpop.f32.mrf.mxu0
  %v742 = vadd.f32 0.0, %v741
  %v743 = vpop.f32.mrf.mxu0
  %744 = vmatprep.mubr.bf16.mxu0 0
  %745 = vmatmul.mubr.bf16.gmra.mxu0 %v681
  %v746 = vpop.f32.mrf.mxu0
  %v747 = vadd.f32 0.0, %v746
  %v748 = vpop.f32.mrf.mxu0
  %v749 = vpop.f32.mrf.mxu0
  %v750 = vadd.f32 0.0, %v749
  %v751 = vpop.f32.mrf.mxu0
  %752 = vmatprep.mubr.bf16.mxu0 0
  %753 = vmatmul.mubr.bf16.gmra.mxu0 %v684
  %v754 = vpop.f32.mrf.mxu0
  %v755 = vadd.f32 0.0, %v754
  %v756 = vpop.f32.mrf.mxu0
  %v757 = vpop.f32.mrf.mxu0
  %v758 = vadd.f32 0.0, %v757
  %v759 = vpop.f32.mrf.mxu0
  %760 = vmatprep.mubr.bf16.mxu0 0
  %761 = vmatmul.mubr.bf16.gmra.mxu0 %v687
  %v762 = vpop.f32.mrf.mxu0
  %v763 = vadd.f32 0.0, %v762
  %v764 = vpop.f32.mrf.mxu0
  %v765 = vpop.f32.mrf.mxu0
  %v766 = vadd.f32 0.0, %v765
  %v767 = vpop.f32.mrf.mxu0
  %768 = vmatprep.mubr.bf16.mxu0 0
  %769 = vmatmul.mubr.bf16.gmra.mxu0 %v690
  %v770 = vpop.f32.mrf.mxu0
  %v771 = vadd.f32 0.0, %v770
  %v772 = vpop.f32.mrf.mxu0
  %v773 = vpop.f32.mrf.mxu0
  %v774 = vadd.f32 0.0, %v773
  %v775 = vpop.f32.mrf.mxu0
  %776 = vmatprep.mubr.bf16.mxu0 0
  %777 = vmatmul.mubr.bf16.gmra.mxu0 %v693
  %v778 = vpop.f32.mrf.mxu0
  %v779 = vadd.f32 0.0, %v778
  %v780 = vpop.f32.mrf.mxu0
  %v781 = vpop.f32.mrf.mxu0
  %v782 = vadd.f32 0.0, %v781
  %v783 = vpop.f32.mrf.mxu0
  %784 = vmatprep.mubr.bf16.mxu0 0
  %785 = vmatmul.mubr.bf16.gmra.mxu0 %v696
  %v786 = vpop.f32.mrf.mxu0
  %v787 = vadd.f32 0.0, %v786
  %v788 = vpop.f32.mrf.mxu0
  %v789 = vpop.f32.mrf.mxu0
  %v790 = vadd.f32 0.0, %v789
  %v791 = vpop.f32.mrf.mxu0
  %792 = vmatprep.mubr.bf16.mxu0 0
  %793 = vmatmul.mubr.bf16.gmra.mxu0 %v699
  %v794 = vpop.f32.mrf.mxu0
  %v795 = vadd.f32 0.0, %v794
  %v796 = vpop.f32.mrf.mxu0
  %v797 = vpop.f32.mrf.mxu0
  %v798 = vadd.f32 0.0, %v797
  %v799 = vpop.f32.mrf.mxu0
  %800 = vdwg.mxu0
  %v801 = vadd.f32 %v635, %v739
  %v802 = vadd.f32 %v636, %v742
  %v803 = vadd.f32 %v637, %v747
  %v804 = vadd.f32 %v638, %v750
  %v805 = vadd.f32 %v639, %v755
  %v806 = vadd.f32 %v640, %v758
  %v807 = vadd.f32 %v641, %v763
  %v808 = vadd.f32 %v642, %v766
  %v809 = vadd.f32 %v643, %v771
  %v810 = vadd.f32 %v644, %v774
  %v811 = vadd.f32 %v645, %v779
  %v812 = vadd.f32 %v646, %v782
  %v813 = vadd.f32 %v647, %v787
  %v814 = vadd.f32 %v648, %v790
  %v815 = vadd.f32 %v649, %v795
  %v816 = vadd.f32 %v650, %v798
  %v817 = vld [vmem:[%s168 + $0x1] sm:$0xff]
  %v818 = vld [vmem:[%s168 + $0x11] sm:$0xff]
  %v819 = vld [vmem:[%s168 + $0x21] sm:$0xff]
  %v820 = vld [vmem:[%s168 + $0x31] sm:$0xff]
  %v821 = vld [vmem:[%s168 + $0x41] sm:$0xff]
  %v822 = vld [vmem:[%s168 + $0x51] sm:$0xff]
  %v823 = vld [vmem:[%s168 + $0x61] sm:$0xff]
  %v824 = vld [vmem:[%s168 + $0x71] sm:$0xff]
  %v825 = vld [vmem:[%s168 + $0xa1] sm:$0xff]
  %v826 = vld [vmem:[%s168 + $0xb1] sm:$0xff]
  %v827 = vld [vmem:[%s168 + $0xc1] sm:$0xff]
  %v828 = vld [vmem:[%s168 + $0xd1] sm:$0xff]
  %v829 = vld [vmem:[%s168 + $0xe1] sm:$0xff]
  %v830 = vld [vmem:[%s168 + $0xf1] sm:$0xff]
  %v831 = vld [vmem:[%s168 + $0x101] sm:$0xff]
  %v832 = vld [vmem:[%s168 + $0x111] sm:$0xff]
  %v833 = vpack.c.bf16 %v818, %v817
  %v834 = vpack.c.bf16 %v820, %v819
  %v835 = vpack.c.bf16 %v822, %v821
  %v836 = vpack.c.bf16 %v824, %v823
  %v837 = vpack.c.bf16 %v826, %v825
  %v838 = vpack.c.bf16 %v828, %v827
  %v839 = vpack.c.bf16 %v830, %v829
  %v840 = vpack.c.bf16 %v832, %v831
  %s841 = scalar_lea.vmem %s1, 8
  %v842 = vld [vmem:[%s841] sm:$0x3]
  %v844 = vsel %vm48, %v833, 0
  %v847 = vsel %vm48, %v834, 0
  %v850 = vsel %vm48, %v835, 0
  %v853 = vsel %vm48, %v836, 0
  %v856 = vsel %vm48, %v837, 0
  %v859 = vsel %vm48, %v838, 0
  %v862 = vsel %vm48, %v839, 0
  %v865 = vsel %vm48, %v840, 0
  %v868 = vsel %vm260, %v842, 0
  %870 = vmatprep.subr.bf16.mxu0 0
  %871 = vmatpush1.bf16.msra.mxu0 0
  %872 = vmatprep.subr.bf16.mxu0 0
  %873 = vmatpush1.bf16.msra.mxu0 0
  %874 = vmatprep.subr.bf16.mxu0 0
  %875 = vmatpush1.bf16.msra.mxu0 0
  %876 = vmatprep.subr.bf16.mxu0 0
  %877 = vmatpush1.bf16.msra.mxu0 0
  %878 = vmatprep.subr.bf16.mxu0 0
  %879 = vmatpush1.bf16.msra.mxu0 0
  %880 = vmatprep.subr.bf16.mxu0 0
  %881 = vmatpush1.bf16.msra.mxu0 0
  %882 = vmatprep.subr.bf16.mxu0 0
  %883 = vmatpush1.bf16.msra.mxu0 0
  %884 = vmatprep.subr.bf16.mxu0 0
  %885 = vmatpush1.bf16.msra.mxu0 %v868
  %886 = vmatprep.subr.bf16.mxu0 0
  %887 = vmatpush2.bf16.msra.mxu0 0
  %888 = vmatprep.subr.bf16.mxu0 0
  %889 = vmatpush2.bf16.msra.mxu0 0
  %890 = vmatprep.subr.bf16.mxu0 0
  %891 = vmatpush2.bf16.msra.mxu0 0
  %892 = vmatprep.subr.bf16.mxu0 0
  %893 = vmatpush2.bf16.msra.mxu0 0
  %894 = vmatprep.subr.bf16.mxu0 0
  %895 = vmatpush2.bf16.msra.mxu0 0
  %896 = vmatprep.subr.bf16.mxu0 0
  %897 = vmatpush2.bf16.msra.mxu0 0
  %898 = vmatprep.subr.bf16.mxu0 0
  %899 = vmatpush2.bf16.msra.mxu0 0
  %900 = vmatprep.subr.bf16.mxu0 0
  %901 = vmatpush2.bf16.msra.mxu0 0
  %902 = vmatprep.mubr.bf16.mxu0 0
  %903 = vmatmul.mubr.bf16.gmra.mxu0 %v844
  %v904 = vpop.f32.mrf.mxu0
  %v905 = vadd.f32 0.0, %v904
  %v906 = vpop.f32.mrf.mxu0
  %v907 = vpop.f32.mrf.mxu0
  %v908 = vadd.f32 0.0, %v907
  %v909 = vpop.f32.mrf.mxu0
  %910 = vmatprep.mubr.bf16.mxu0 0
  %911 = vmatmul.mubr.bf16.gmra.mxu0 %v847
  %v912 = vpop.f32.mrf.mxu0
  %v913 = vadd.f32 0.0, %v912
  %v914 = vpop.f32.mrf.mxu0
  %v915 = vpop.f32.mrf.mxu0
  %v916 = vadd.f32 0.0, %v915
  %v917 = vpop.f32.mrf.mxu0
  %918 = vmatprep.mubr.bf16.mxu0 0
  %919 = vmatmul.mubr.bf16.gmra.mxu0 %v850
  %v920 = vpop.f32.mrf.mxu0
  %v921 = vadd.f32 0.0, %v920
  %v922 = vpop.f32.mrf.mxu0
  %v923 = vpop.f32.mrf.mxu0
  %v924 = vadd.f32 0.0, %v923
  %v925 = vpop.f32.mrf.mxu0
  %926 = vmatprep.mubr.bf16.mxu0 0
  %927 = vmatmul.mubr.bf16.gmra.mxu0 %v853
  %v928 = vpop.f32.mrf.mxu0
  %v929 = vadd.f32 0.0, %v928
  %v930 = vpop.f32.mrf.mxu0
  %v931 = vpop.f32.mrf.mxu0
  %v932 = vadd.f32 0.0, %v931
  %v933 = vpop.f32.mrf.mxu0
  %934 = vmatprep.mubr.bf16.mxu0 0
  %935 = vmatmul.mubr.bf16.gmra.mxu0 %v856
  %v936 = vpop.f32.mrf.mxu0
  %v937 = vadd.f32 0.0, %v936
  %v938 = vpop.f32.mrf.mxu0
  %v939 = vpop.f32.mrf.mxu0
  %v940 = vadd.f32 0.0, %v939
  %v941 = vpop.f32.mrf.mxu0
  %942 = vmatprep.mubr.bf16.mxu0 0
  %943 = vmatmul.mubr.bf16.gmra.mxu0 %v859
  %v944 = vpop.f32.mrf.mxu0
  %v945 = vadd.f32 0.0, %v944
  %v946 = vpop.f32.mrf.mxu0
  %v947 = vpop.f32.mrf.mxu0
  %v948 = vadd.f32 0.0, %v947
  %v949 = vpop.f32.mrf.mxu0
  %950 = vmatprep.mubr.bf16.mxu0 0
  %951 = vmatmul.mubr.bf16.gmra.mxu0 %v862
  %v952 = vpop.f32.mrf.mxu0
  %v953 = vadd.f32 0.0, %v952
  %v954 = vpop.f32.mrf.mxu0
  %v955 = vpop.f32.mrf.mxu0
  %v956 = vadd.f32 0.0, %v955
  %v957 = vpop.f32.mrf.mxu0
  %958 = vmatprep.mubr.bf16.mxu0 0
  %959 = vmatmul.mubr.bf16.gmra.mxu0 %v865
  %v960 = vpop.f32.mrf.mxu0
  %v961 = vadd.f32 0.0, %v960
  %v962 = vpop.f32.mrf.mxu0
  %v963 = vpop.f32.mrf.mxu0
  %v964 = vadd.f32 0.0, %v963
  %v965 = vpop.f32.mrf.mxu0
  %966 = vdwg.mxu0
  %v967 = vadd.f32 %v801, %v905
  %v968 = vadd.f32 %v802, %v908
  %v969 = vadd.f32 %v803, %v913
  %v970 = vadd.f32 %v804, %v916
  %v971 = vadd.f32 %v805, %v921
  %v972 = vadd.f32 %v806, %v924
  %v973 = vadd.f32 %v807, %v929
  %v974 = vadd.f32 %v808, %v932
  %v975 = vadd.f32 %v809, %v937
  %v976 = vadd.f32 %v810, %v940
  %v977 = vadd.f32 %v811, %v945
  %v978 = vadd.f32 %v812, %v948
  %v979 = vadd.f32 %v813, %v953
  %v980 = vadd.f32 %v814, %v956
  %v981 = vadd.f32 %v815, %v961
  %v982 = vadd.f32 %v816, %v964
  %v983 = vld [vmem:[%s168 + $0x2] sm:$0xff]
  %v984 = vld [vmem:[%s168 + $0x12] sm:$0xff]
  %v985 = vld [vmem:[%s168 + $0x22] sm:$0xff]
  %v986 = vld [vmem:[%s168 + $0x32] sm:$0xff]
  %v987 = vld [vmem:[%s168 + $0x42] sm:$0xff]
  %v988 = vld [vmem:[%s168 + $0x52] sm:$0xff]
  %v989 = vld [vmem:[%s168 + $0x62] sm:$0xff]
  %v990 = vld [vmem:[%s168 + $0x72] sm:$0xff]
  %v991 = vld [vmem:[%s168 + $0xa2] sm:$0xff]
  %v992 = vld [vmem:[%s168 + $0xb2] sm:$0xff]
  %v993 = vld [vmem:[%s168 + $0xc2] sm:$0xff]
  %v994 = vld [vmem:[%s168 + $0xd2] sm:$0xff]
  %v995 = vld [vmem:[%s168 + $0xe2] sm:$0xff]
  %v996 = vld [vmem:[%s168 + $0xf2] sm:$0xff]
  %v997 = vld [vmem:[%s168 + $0x102] sm:$0xff]
  %v998 = vld [vmem:[%s168 + $0x112] sm:$0xff]
  %v999 = vpack.c.bf16 %v984, %v983
  %v1000 = vpack.c.bf16 %v986, %v985
  %v1001 = vpack.c.bf16 %v988, %v987
  %v1002 = vpack.c.bf16 %v990, %v989
  %v1003 = vpack.c.bf16 %v992, %v991
  %v1004 = vpack.c.bf16 %v994, %v993
  %v1005 = vpack.c.bf16 %v996, %v995
  %v1006 = vpack.c.bf16 %v998, %v997
  %s1007 = scalar_lea.vmem %s1, 10
  %v1008 = vld [vmem:[%s1007] sm:$0x3]
  %v1010 = vsel %vm48, %v999, 0
  %v1013 = vsel %vm48, %v1000, 0
  %v1016 = vsel %vm48, %v1001, 0
  %v1019 = vsel %vm48, %v1002, 0
  %v1022 = vsel %vm48, %v1003, 0
  %v1025 = vsel %vm48, %v1004, 0
  %v1028 = vsel %vm48, %v1005, 0
  %v1031 = vsel %vm48, %v1006, 0
  %v1034 = vsel %vm260, %v1008, 0
  %1036 = vmatprep.subr.bf16.mxu0 0
  %1037 = vmatpush1.bf16.msra.mxu0 0
  %1038 = vmatprep.subr.bf16.mxu0 0
  %1039 = vmatpush1.bf16.msra.mxu0 0
  %1040 = vmatprep.subr.bf16.mxu0 0
  %1041 = vmatpush1.bf16.msra.mxu0 0
  %1042 = vmatprep.subr.bf16.mxu0 0
  %1043 = vmatpush1.bf16.msra.mxu0 0
  %1044 = vmatprep.subr.bf16.mxu0 0
  %1045 = vmatpush1.bf16.msra.mxu0 0
  %1046 = vmatprep.subr.bf16.mxu0 0
  %1047 = vmatpush1.bf16.msra.mxu0 0
  %1048 = vmatprep.subr.bf16.mxu0 0
  %1049 = vmatpush1.bf16.msra.mxu0 0
  %1050 = vmatprep.subr.bf16.mxu0 0
  %1051 = vmatpush1.bf16.msra.mxu0 %v1034
  %1052 = vmatprep.subr.bf16.mxu0 0
  %1053 = vmatpush2.bf16.msra.mxu0 0
  %1054 = vmatprep.subr.bf16.mxu0 0
  %1055 = vmatpush2.bf16.msra.mxu0 0
  %1056 = vmatprep.subr.bf16.mxu0 0
  %1057 = vmatpush2.bf16.msra.mxu0 0
  %1058 = vmatprep.subr.bf16.mxu0 0
  %1059 = vmatpush2.bf16.msra.mxu0 0
  %1060 = vmatprep.subr.bf16.mxu0 0
  %1061 = vmatpush2.bf16.msra.mxu0 0
  %1062 = vmatprep.subr.bf16.mxu0 0
  %1063 = vmatpush2.bf16.msra.mxu0 0
  %1064 = vmatprep.subr.bf16.mxu0 0
  %1065 = vmatpush2.bf16.msra.mxu0 0
  %1066 = vmatprep.subr.bf16.mxu0 0
  %1067 = vmatpush2.bf16.msra.mxu0 0
  %1068 = vmatprep.mubr.bf16.mxu0 0
  %1069 = vmatmul.mubr.bf16.gmra.mxu0 %v1010
  %v1070 = vpop.f32.mrf.mxu0
  %v1071 = vadd.f32 0.0, %v1070
  %v1072 = vpop.f32.mrf.mxu0
  %v1073 = vpop.f32.mrf.mxu0
  %v1074 = vadd.f32 0.0, %v1073
  %v1075 = vpop.f32.mrf.mxu0
  %1076 = vmatprep.mubr.bf16.mxu0 0
  %1077 = vmatmul.mubr.bf16.gmra.mxu0 %v1013
  %v1078 = vpop.f32.mrf.mxu0
  %v1079 = vadd.f32 0.0, %v1078
  %v1080 = vpop.f32.mrf.mxu0
  %v1081 = vpop.f32.mrf.mxu0
  %v1082 = vadd.f32 0.0, %v1081
  %v1083 = vpop.f32.mrf.mxu0
  %1084 = vmatprep.mubr.bf16.mxu0 0
  %1085 = vmatmul.mubr.bf16.gmra.mxu0 %v1016
  %v1086 = vpop.f32.mrf.mxu0
  %v1087 = vadd.f32 0.0, %v1086
  %v1088 = vpop.f32.mrf.mxu0
  %v1089 = vpop.f32.mrf.mxu0
  %v1090 = vadd.f32 0.0, %v1089
  %v1091 = vpop.f32.mrf.mxu0
  %1092 = vmatprep.mubr.bf16.mxu0 0
  %1093 = vmatmul.mubr.bf16.gmra.mxu0 %v1019
  %v1094 = vpop.f32.mrf.mxu0
  %v1095 = vadd.f32 0.0, %v1094
  %v1096 = vpop.f32.mrf.mxu0
  %v1097 = vpop.f32.mrf.mxu0
  %v1098 = vadd.f32 0.0, %v1097
  %v1099 = vpop.f32.mrf.mxu0
  %1100 = vmatprep.mubr.bf16.mxu0 0
  %1101 = vmatmul.mubr.bf16.gmra.mxu0 %v1022
  %v1102 = vpop.f32.mrf.mxu0
  %v1103 = vadd.f32 0.0, %v1102
  %v1104 = vpop.f32.mrf.mxu0
  %v1105 = vpop.f32.mrf.mxu0
  %v1106 = vadd.f32 0.0, %v1105
  %v1107 = vpop.f32.mrf.mxu0
  %1108 = vmatprep.mubr.bf16.mxu0 0
  %1109 = vmatmul.mubr.bf16.gmra.mxu0 %v1025
  %v1110 = vpop.f32.mrf.mxu0
  %v1111 = vadd.f32 0.0, %v1110
  %v1112 = vpop.f32.mrf.mxu0
  %v1113 = vpop.f32.mrf.mxu0
  %v1114 = vadd.f32 0.0, %v1113
  %v1115 = vpop.f32.mrf.mxu0
  %1116 = vmatprep.mubr.bf16.mxu0 0
  %1117 = vmatmul.mubr.bf16.gmra.mxu0 %v1028
  %v1118 = vpop.f32.mrf.mxu0
  %v1119 = vadd.f32 0.0, %v1118
  %v1120 = vpop.f32.mrf.mxu0
  %v1121 = vpop.f32.mrf.mxu0
  %v1122 = vadd.f32 0.0, %v1121
  %v1123 = vpop.f32.mrf.mxu0
  %1124 = vmatprep.mubr.bf16.mxu0 0
  %1125 = vmatmul.mubr.bf16.gmra.mxu0 %v1031
  %v1126 = vpop.f32.mrf.mxu0
  %v1127 = vadd.f32 0.0, %v1126
  %v1128 = vpop.f32.mrf.mxu0
  %v1129 = vpop.f32.mrf.mxu0
  %v1130 = vadd.f32 0.0, %v1129
  %v1131 = vpop.f32.mrf.mxu0
  %1132 = vdwg.mxu0
  %v1133 = vadd.f32 %v967, %v1071
  %v1134 = vadd.f32 %v968, %v1074
  %v1135 = vadd.f32 %v969, %v1079
  %v1136 = vadd.f32 %v970, %v1082
  %v1137 = vadd.f32 %v971, %v1087
  %v1138 = vadd.f32 %v972, %v1090
  %v1139 = vadd.f32 %v973, %v1095
  %v1140 = vadd.f32 %v974, %v1098
  %v1141 = vadd.f32 %v975, %v1103
  %v1142 = vadd.f32 %v976, %v1106
  %v1143 = vadd.f32 %v977, %v1111
  %v1144 = vadd.f32 %v978, %v1114
  %v1145 = vadd.f32 %v979, %v1119
  %v1146 = vadd.f32 %v980, %v1122
  %v1147 = vadd.f32 %v981, %v1127
  %v1148 = vadd.f32 %v982, %v1130
  %s1149 = scalar_lea.vmem [#allocation2], 32
  %v1150 = vld [vmem:[%s1149] sm:$0xff]
  %v1151 = vld [vmem:[%s1149 + $0x10] sm:$0xff]
  %v1152 = vld [vmem:[%s1149 + $0x20] sm:$0xff]
  %v1153 = vld [vmem:[%s1149 + $0x30] sm:$0xff]
  %v1154 = vld [vmem:[%s1149 + $0x40] sm:$0xff]
  %v1155 = vld [vmem:[%s1149 + $0x50] sm:$0xff]
  %v1156 = vld [vmem:[%s1149 + $0x60] sm:$0xff]
  %v1157 = vld [vmem:[%s1149 + $0x70] sm:$0xff]
  %v1158 = vld [vmem:[%s1149 + $0xa0] sm:$0xff]
  %v1159 = vld [vmem:[%s1149 + $0xb0] sm:$0xff]
  %v1160 = vld [vmem:[%s1149 + $0xc0] sm:$0xff]
  %v1161 = vld [vmem:[%s1149 + $0xd0] sm:$0xff]
  %v1162 = vld [vmem:[%s1149 + $0xe0] sm:$0xff]
  %v1163 = vld [vmem:[%s1149 + $0xf0] sm:$0xff]
  %v1164 = vld [vmem:[%s1149 + $0x100] sm:$0xff]
  %v1165 = vld [vmem:[%s1149 + $0x110] sm:$0xff]
  %v1166 = vpack.c.bf16 %v1151, %v1150
  %v1167 = vpack.c.bf16 %v1153, %v1152
  %v1168 = vpack.c.bf16 %v1155, %v1154
  %v1169 = vpack.c.bf16 %v1157, %v1156
  %v1170 = vpack.c.bf16 %v1159, %v1158
  %v1171 = vpack.c.bf16 %v1161, %v1160
  %v1172 = vpack.c.bf16 %v1163, %v1162
  %v1173 = vpack.c.bf16 %v1165, %v1164
  %s1174 = scalar_lea.vmem %s1, 12
  %v1175 = vld [vmem:[%s1174] sm:$0x3]
  %v1177 = vsel %vm48, %v1166, 0
  %v1180 = vsel %vm48, %v1167, 0
  %v1183 = vsel %vm48, %v1168, 0
  %v1186 = vsel %vm48, %v1169, 0
  %v1189 = vsel %vm48, %v1170, 0
  %v1192 = vsel %vm48, %v1171, 0
  %v1195 = vsel %vm48, %v1172, 0
  %v1198 = vsel %vm48, %v1173, 0
  %v1201 = vsel %vm260, %v1175, 0
  %1203 = vmatprep.subr.bf16.mxu0 0
  %1204 = vmatpush1.bf16.msra.mxu0 0
  %1205 = vmatprep.subr.bf16.mxu0 0
  %1206 = vmatpush1.bf16.msra.mxu0 0
  %1207 = vmatprep.subr.bf16.mxu0 0
  %1208 = vmatpush1.bf16.msra.mxu0 0
  %1209 = vmatprep.subr.bf16.mxu0 0
  %1210 = vmatpush1.bf16.msra.mxu0 0
  %1211 = vmatprep.subr.bf16.mxu0 0
  %1212 = vmatpush1.bf16.msra.mxu0 0
  %1213 = vmatprep.subr.bf16.mxu0 0
  %1214 = vmatpush1.bf16.msra.mxu0 0
  %1215 = vmatprep.subr.bf16.mxu0 0
  %1216 = vmatpush1.bf16.msra.mxu0 0
  %1217 = vmatprep.subr.bf16.mxu0 0
  %1218 = vmatpush1.bf16.msra.mxu0 %v1201
  %1219 = vmatprep.subr.bf16.mxu0 0
  %1220 = vmatpush2.bf16.msra.mxu0 0
  %1221 = vmatprep.subr.bf16.mxu0 0
  %1222 = vmatpush2.bf16.msra.mxu0 0
  %1223 = vmatprep.subr.bf16.mxu0 0
  %1224 = vmatpush2.bf16.msra.mxu0 0
  %1225 = vmatprep.subr.bf16.mxu0 0
  %1226 = vmatpush2.bf16.msra.mxu0 0
  %1227 = vmatprep.subr.bf16.mxu0 0
  %1228 = vmatpush2.bf16.msra.mxu0 0
  %1229 = vmatprep.subr.bf16.mxu0 0
  %1230 = vmatpush2.bf16.msra.mxu0 0
  %1231 = vmatprep.subr.bf16.mxu0 0
  %1232 = vmatpush2.bf16.msra.mxu0 0
  %1233 = vmatprep.subr.bf16.mxu0 0
  %1234 = vmatpush2.bf16.msra.mxu0 0
  %1235 = vmatprep.mubr.bf16.mxu0 0
  %1236 = vmatmul.mubr.bf16.gmra.mxu0 %v1177
  %v1237 = vpop.f32.mrf.mxu0
  %v1238 = vadd.f32 0.0, %v1237
  %v1239 = vpop.f32.mrf.mxu0
  %v1240 = vpop.f32.mrf.mxu0
  %v1241 = vadd.f32 0.0, %v1240
  %v1242 = vpop.f32.mrf.mxu0
  %1243 = vmatprep.mubr.bf16.mxu0 0
  %1244 = vmatmul.mubr.bf16.gmra.mxu0 %v1180
  %v1245 = vpop.f32.mrf.mxu0
  %v1246 = vadd.f32 0.0, %v1245
  %v1247 = vpop.f32.mrf.mxu0
  %v1248 = vpop.f32.mrf.mxu0
  %v1249 = vadd.f32 0.0, %v1248
  %v1250 = vpop.f32.mrf.mxu0
  %1251 = vmatprep.mubr.bf16.mxu0 0
  %1252 = vmatmul.mubr.bf16.gmra.mxu0 %v1183
  %v1253 = vpop.f32.mrf.mxu0
  %v1254 = vadd.f32 0.0, %v1253
  %v1255 = vpop.f32.mrf.mxu0
  %v1256 = vpop.f32.mrf.mxu0
  %v1257 = vadd.f32 0.0, %v1256
  %v1258 = vpop.f32.mrf.mxu0
  %1259 = vmatprep.mubr.bf16.mxu0 0
  %1260 = vmatmul.mubr.bf16.gmra.mxu0 %v1186
  %v1261 = vpop.f32.mrf.mxu0
  %v1262 = vadd.f32 0.0, %v1261
  %v1263 = vpop.f32.mrf.mxu0
  %v1264 = vpop.f32.mrf.mxu0
  %v1265 = vadd.f32 0.0, %v1264
  %v1266 = vpop.f32.mrf.mxu0
  %1267 = vmatprep.mubr.bf16.mxu0 0
  %1268 = vmatmul.mubr.bf16.gmra.mxu0 %v1189
  %v1269 = vpop.f32.mrf.mxu0
  %v1270 = vadd.f32 0.0, %v1269
  %v1271 = vpop.f32.mrf.mxu0
  %v1272 = vpop.f32.mrf.mxu0
  %v1273 = vadd.f32 0.0, %v1272
  %v1274 = vpop.f32.mrf.mxu0
  %1275 = vmatprep.mubr.bf16.mxu0 0
  %1276 = vmatmul.mubr.bf16.gmra.mxu0 %v1192
  %v1277 = vpop.f32.mrf.mxu0
  %v1278 = vadd.f32 0.0, %v1277
  %v1279 = vpop.f32.mrf.mxu0
  %v1280 = vpop.f32.mrf.mxu0
  %v1281 = vadd.f32 0.0, %v1280
  %v1282 = vpop.f32.mrf.mxu0
  %1283 = vmatprep.mubr.bf16.mxu0 0
  %1284 = vmatmul.mubr.bf16.gmra.mxu0 %v1195
  %v1285 = vpop.f32.mrf.mxu0
  %v1286 = vadd.f32 0.0, %v1285
  %v1287 = vpop.f32.mrf.mxu0
  %v1288 = vpop.f32.mrf.mxu0
  %v1289 = vadd.f32 0.0, %v1288
  %v1290 = vpop.f32.mrf.mxu0
  %1291 = vmatprep.mubr.bf16.mxu0 0
  %1292 = vmatmul.mubr.bf16.gmra.mxu0 %v1198
  %v1293 = vpop.f32.mrf.mxu0
  %v1294 = vadd.f32 0.0, %v1293
  %v1295 = vpop.f32.mrf.mxu0
  %v1296 = vpop.f32.mrf.mxu0
  %v1297 = vadd.f32 0.0, %v1296
  %v1298 = vpop.f32.mrf.mxu0
  %1299 = vdwg.mxu0
  %v1300 = vadd.f32 %v1133, %v1238
  %v1301 = vadd.f32 %v1134, %v1241
  %v1302 = vadd.f32 %v1135, %v1246
  %v1303 = vadd.f32 %v1136, %v1249
  %v1304 = vadd.f32 %v1137, %v1254
  %v1305 = vadd.f32 %v1138, %v1257
  %v1306 = vadd.f32 %v1139, %v1262
  %v1307 = vadd.f32 %v1140, %v1265
  %v1308 = vadd.f32 %v1141, %v1270
  %v1309 = vadd.f32 %v1142, %v1273
  %v1310 = vadd.f32 %v1143, %v1278
  %v1311 = vadd.f32 %v1144, %v1281
  %v1312 = vadd.f32 %v1145, %v1286
  %v1313 = vadd.f32 %v1146, %v1289
  %v1314 = vadd.f32 %v1147, %v1294
  %v1315 = vadd.f32 %v1148, %v1297
  %v1316 = vld [vmem:[%s1149 + $0x1] sm:$0xff]
  %v1317 = vld [vmem:[%s1149 + $0x11] sm:$0xff]
  %v1318 = vld [vmem:[%s1149 + $0x21] sm:$0xff]
  %v1319 = vld [vmem:[%s1149 + $0x31] sm:$0xff]
  %v1320 = vld [vmem:[%s1149 + $0x41] sm:$0xff]
  %v1321 = vld [vmem:[%s1149 + $0x51] sm:$0xff]
  %v1322 = vld [vmem:[%s1149 + $0x61] sm:$0xff]
  %v1323 = vld [vmem:[%s1149 + $0x71] sm:$0xff]
  %v1324 = vld [vmem:[%s1149 + $0xa1] sm:$0xff]
  %v1325 = vld [vmem:[%s1149 + $0xb1] sm:$0xff]
  %v1326 = vld [vmem:[%s1149 + $0xc1] sm:$0xff]
  %v1327 = vld [vmem:[%s1149 + $0xd1] sm:$0xff]
  %v1328 = vld [vmem:[%s1149 + $0xe1] sm:$0xff]
  %v1329 = vld [vmem:[%s1149 + $0xf1] sm:$0xff]
  %v1330 = vld [vmem:[%s1149 + $0x101] sm:$0xff]
  %v1331 = vld [vmem:[%s1149 + $0x111] sm:$0xff]
  %v1332 = vpack.c.bf16 %v1317, %v1316
  %v1333 = vpack.c.bf16 %v1319, %v1318
  %v1334 = vpack.c.bf16 %v1321, %v1320
  %v1335 = vpack.c.bf16 %v1323, %v1322
  %v1336 = vpack.c.bf16 %v1325, %v1324
  %v1337 = vpack.c.bf16 %v1327, %v1326
  %v1338 = vpack.c.bf16 %v1329, %v1328
  %v1339 = vpack.c.bf16 %v1331, %v1330
  %s1340 = scalar_lea.vmem %s1, 14
  %v1341 = vld [vmem:[%s1340] sm:$0x3]
  %v1343 = vsel %vm48, %v1332, 0
  %v1346 = vsel %vm48, %v1333, 0
  %v1349 = vsel %vm48, %v1334, 0
  %v1352 = vsel %vm48, %v1335, 0
  %v1355 = vsel %vm48, %v1336, 0
  %v1358 = vsel %vm48, %v1337, 0
  %v1361 = vsel %vm48, %v1338, 0
  %v1364 = vsel %vm48, %v1339, 0
  %v1367 = vsel %vm260, %v1341, 0
  %1369 = vmatprep.subr.bf16.mxu0 0
  %1370 = vmatpush1.bf16.msra.mxu0 0
  %1371 = vmatprep.subr.bf16.mxu0 0
  %1372 = vmatpush1.bf16.msra.mxu0 0
  %1373 = vmatprep.subr.bf16.mxu0 0
  %1374 = vmatpush1.bf16.msra.mxu0 0
  %1375 = vmatprep.subr.bf16.mxu0 0
  %1376 = vmatpush1.bf16.msra.mxu0 0
  %1377 = vmatprep.subr.bf16.mxu0 0
  %1378 = vmatpush1.bf16.msra.mxu0 0
  %1379 = vmatprep.subr.bf16.mxu0 0
  %1380 = vmatpush1.bf16.msra.mxu0 0
  %1381 = vmatprep.subr.bf16.mxu0 0
  %1382 = vmatpush1.bf16.msra.mxu0 0
  %1383 = vmatprep.subr.bf16.mxu0 0
  %1384 = vmatpush1.bf16.msra.mxu0 %v1367
  %1385 = vmatprep.subr.bf16.mxu0 0
  %1386 = vmatpush2.bf16.msra.mxu0 0
  %1387 = vmatprep.subr.bf16.mxu0 0
  %1388 = vmatpush2.bf16.msra.mxu0 0
  %1389 = vmatprep.subr.bf16.mxu0 0
  %1390 = vmatpush2.bf16.msra.mxu0 0
  %1391 = vmatprep.subr.bf16.mxu0 0
  %1392 = vmatpush2.bf16.msra.mxu0 0
  %1393 = vmatprep.subr.bf16.mxu0 0
  %1394 = vmatpush2.bf16.msra.mxu0 0
  %1395 = vmatprep.subr.bf16.mxu0 0
  %1396 = vmatpush2.bf16.msra.mxu0 0
  %1397 = vmatprep.subr.bf16.mxu0 0
  %1398 = vmatpush2.bf16.msra.mxu0 0
  %1399 = vmatprep.subr.bf16.mxu0 0
  %1400 = vmatpush2.bf16.msra.mxu0 0
  %1401 = vmatprep.mubr.bf16.mxu0 0
  %1402 = vmatmul.mubr.bf16.gmra.mxu0 %v1343
  %v1403 = vpop.f32.mrf.mxu0
  %v1404 = vadd.f32 0.0, %v1403
  %v1405 = vpop.f32.mrf.mxu0
  %v1406 = vpop.f32.mrf.mxu0
  %v1407 = vadd.f32 0.0, %v1406
  %v1408 = vpop.f32.mrf.mxu0
  %1409 = vmatprep.mubr.bf16.mxu0 0
  %1410 = vmatmul.mubr.bf16.gmra.mxu0 %v1346
  %v1411 = vpop.f32.mrf.mxu0
  %v1412 = vadd.f32 0.0, %v1411
  %v1413 = vpop.f32.mrf.mxu0
  %v1414 = vpop.f32.mrf.mxu0
  %v1415 = vadd.f32 0.0, %v1414
  %v1416 = vpop.f32.mrf.mxu0
  %1417 = vmatprep.mubr.bf16.mxu0 0
  %1418 = vmatmul.mubr.bf16.gmra.mxu0 %v1349
  %v1419 = vpop.f32.mrf.mxu0
  %v1420 = vadd.f32 0.0, %v1419
  %v1421 = vpop.f32.mrf.mxu0
  %v1422 = vpop.f32.mrf.mxu0
  %v1423 = vadd.f32 0.0, %v1422
  %v1424 = vpop.f32.mrf.mxu0
  %1425 = vmatprep.mubr.bf16.mxu0 0
  %1426 = vmatmul.mubr.bf16.gmra.mxu0 %v1352
  %v1427 = vpop.f32.mrf.mxu0
  %v1428 = vadd.f32 0.0, %v1427
  %v1429 = vpop.f32.mrf.mxu0
  %v1430 = vpop.f32.mrf.mxu0
  %v1431 = vadd.f32 0.0, %v1430
  %v1432 = vpop.f32.mrf.mxu0
  %1433 = vmatprep.mubr.bf16.mxu0 0
  %1434 = vmatmul.mubr.bf16.gmra.mxu0 %v1355
  %v1435 = vpop.f32.mrf.mxu0
  %v1436 = vadd.f32 0.0, %v1435
  %v1437 = vpop.f32.mrf.mxu0
  %v1438 = vpop.f32.mrf.mxu0
  %v1439 = vadd.f32 0.0, %v1438
  %v1440 = vpop.f32.mrf.mxu0
  %1441 = vmatprep.mubr.bf16.mxu0 0
  %1442 = vmatmul.mubr.bf16.gmra.mxu0 %v1358
  %v1443 = vpop.f32.mrf.mxu0
  %v1444 = vadd.f32 0.0, %v1443
  %v1445 = vpop.f32.mrf.mxu0
  %v1446 = vpop.f32.mrf.mxu0
  %v1447 = vadd.f32 0.0, %v1446
  %v1448 = vpop.f32.mrf.mxu0
  %1449 = vmatprep.mubr.bf16.mxu0 0
  %1450 = vmatmul.mubr.bf16.gmra.mxu0 %v1361
  %v1451 = vpop.f32.mrf.mxu0
  %v1452 = vadd.f32 0.0, %v1451
  %v1453 = vpop.f32.mrf.mxu0
  %v1454 = vpop.f32.mrf.mxu0
  %v1455 = vadd.f32 0.0, %v1454
  %v1456 = vpop.f32.mrf.mxu0
  %1457 = vmatprep.mubr.bf16.mxu0 0
  %1458 = vmatmul.mubr.bf16.gmra.mxu0 %v1364
  %v1459 = vpop.f32.mrf.mxu0
  %v1460 = vadd.f32 0.0, %v1459
  %v1461 = vpop.f32.mrf.mxu0
  %v1462 = vpop.f32.mrf.mxu0
  %v1463 = vadd.f32 0.0, %v1462
  %v1464 = vpop.f32.mrf.mxu0
  %1465 = vdwg.mxu0
  %v1466 = vadd.f32 %v1300, %v1404
  %v1467 = vadd.f32 %v1301, %v1407
  %v1468 = vadd.f32 %v1302, %v1412
  %v1469 = vadd.f32 %v1303, %v1415
  %v1470 = vadd.f32 %v1304, %v1420
  %v1471 = vadd.f32 %v1305, %v1423
  %v1472 = vadd.f32 %v1306, %v1428
  %v1473 = vadd.f32 %v1307, %v1431
  %v1474 = vadd.f32 %v1308, %v1436
  %v1475 = vadd.f32 %v1309, %v1439
  %v1476 = vadd.f32 %v1310, %v1444
  %v1477 = vadd.f32 %v1311, %v1447
  %v1478 = vadd.f32 %v1312, %v1452
  %v1479 = vadd.f32 %v1313, %v1455
  %v1480 = vadd.f32 %v1314, %v1460
  %v1481 = vadd.f32 %v1315, %v1463
  %v1482 = vld [vmem:[%s1149 + $0x2] sm:$0xff]
  %v1483 = vld [vmem:[%s1149 + $0x12] sm:$0xff]
  %v1484 = vld [vmem:[%s1149 + $0x22] sm:$0xff]
  %v1485 = vld [vmem:[%s1149 + $0x32] sm:$0xff]
  %v1486 = vld [vmem:[%s1149 + $0x42] sm:$0xff]
  %v1487 = vld [vmem:[%s1149 + $0x52] sm:$0xff]
  %v1488 = vld [vmem:[%s1149 + $0x62] sm:$0xff]
  %v1489 = vld [vmem:[%s1149 + $0x72] sm:$0xff]
  %v1490 = vld [vmem:[%s1149 + $0xa2] sm:$0xff]
  %v1491 = vld [vmem:[%s1149 + $0xb2] sm:$0xff]
  %v1492 = vld [vmem:[%s1149 + $0xc2] sm:$0xff]
  %v1493 = vld [vmem:[%s1149 + $0xd2] sm:$0xff]
  %v1494 = vld [vmem:[%s1149 + $0xe2] sm:$0xff]
  %v1495 = vld [vmem:[%s1149 + $0xf2] sm:$0xff]
  %v1496 = vld [vmem:[%s1149 + $0x102] sm:$0xff]
  %v1497 = vld [vmem:[%s1149 + $0x112] sm:$0xff]
  %v1498 = vpack.c.bf16 %v1483, %v1482
  %v1499 = vpack.c.bf16 %v1485, %v1484
  %v1500 = vpack.c.bf16 %v1487, %v1486
  %v1501 = vpack.c.bf16 %v1489, %v1488
  %v1502 = vpack.c.bf16 %v1491, %v1490
  %v1503 = vpack.c.bf16 %v1493, %v1492
  %v1504 = vpack.c.bf16 %v1495, %v1494
  %v1505 = vpack.c.bf16 %v1497, %v1496
  %s1506 = scalar_lea.vmem %s1, 16
  %v1507 = vld [vmem:[%s1506] sm:$0x3]
  %v1509 = vsel %vm48, %v1498, 0
  %v1512 = vsel %vm48, %v1499, 0
  %v1515 = vsel %vm48, %v1500, 0
  %v1518 = vsel %vm48, %v1501, 0
  %v1521 = vsel %vm48, %v1502, 0
  %v1524 = vsel %vm48, %v1503, 0
  %v1527 = vsel %vm48, %v1504, 0
  %v1530 = vsel %vm48, %v1505, 0
  %v1533 = vsel %vm260, %v1507, 0
  %1535 = vmatprep.subr.bf16.mxu0 0
  %1536 = vmatpush1.bf16.msra.mxu0 0
  %1537 = vmatprep.subr.bf16.mxu0 0
  %1538 = vmatpush1.bf16.msra.mxu0 0
  %1539 = vmatprep.subr.bf16.mxu0 0
  %1540 = vmatpush1.bf16.msra.mxu0 0
  %1541 = vmatprep.subr.bf16.mxu0 0
  %1542 = vmatpush1.bf16.msra.mxu0 0
  %1543 = vmatprep.subr.bf16.mxu0 0
  %1544 = vmatpush1.bf16.msra.mxu0 0
  %1545 = vmatprep.subr.bf16.mxu0 0
  %1546 = vmatpush1.bf16.msra.mxu0 0
  %1547 = vmatprep.subr.bf16.mxu0 0
  %1548 = vmatpush1.bf16.msra.mxu0 0
  %1549 = vmatprep.subr.bf16.mxu0 0
  %1550 = vmatpush1.bf16.msra.mxu0 %v1533
  %1551 = vmatprep.subr.bf16.mxu0 0
  %1552 = vmatpush2.bf16.msra.mxu0 0
  %1553 = vmatprep.subr.bf16.mxu0 0
  %1554 = vmatpush2.bf16.msra.mxu0 0
  %1555 = vmatprep.subr.bf16.mxu0 0
  %1556 = vmatpush2.bf16.msra.mxu0 0
  %1557 = vmatprep.subr.bf16.mxu0 0
  %1558 = vmatpush2.bf16.msra.mxu0 0
  %1559 = vmatprep.subr.bf16.mxu0 0
  %1560 = vmatpush2.bf16.msra.mxu0 0
  %1561 = vmatprep.subr.bf16.mxu0 0
  %1562 = vmatpush2.bf16.msra.mxu0 0
  %1563 = vmatprep.subr.bf16.mxu0 0
  %1564 = vmatpush2.bf16.msra.mxu0 0
  %1565 = vmatprep.subr.bf16.mxu0 0
  %1566 = vmatpush2.bf16.msra.mxu0 0
  %1567 = vmatprep.mubr.bf16.mxu0 0
  %1568 = vmatmul.mubr.bf16.gmra.mxu0 %v1509
  %v1569 = vpop.f32.mrf.mxu0
  %v1570 = vadd.f32 0.0, %v1569
  %v1571 = vpop.f32.mrf.mxu0
  %v1572 = vpop.f32.mrf.mxu0
  %v1573 = vadd.f32 0.0, %v1572
  %v1574 = vpop.f32.mrf.mxu0
  %1575 = vmatprep.mubr.bf16.mxu0 0
  %1576 = vmatmul.mubr.bf16.gmra.mxu0 %v1512
  %v1577 = vpop.f32.mrf.mxu0
  %v1578 = vadd.f32 0.0, %v1577
  %v1579 = vpop.f32.mrf.mxu0
  %v1580 = vpop.f32.mrf.mxu0
  %v1581 = vadd.f32 0.0, %v1580
  %v1582 = vpop.f32.mrf.mxu0
  %1583 = vmatprep.mubr.bf16.mxu0 0
  %1584 = vmatmul.mubr.bf16.gmra.mxu0 %v1515
  %v1585 = vpop.f32.mrf.mxu0
  %v1586 = vadd.f32 0.0, %v1585
  %v1587 = vpop.f32.mrf.mxu0
  %v1588 = vpop.f32.mrf.mxu0
  %v1589 = vadd.f32 0.0, %v1588
  %v1590 = vpop.f32.mrf.mxu0
  %1591 = vmatprep.mubr.bf16.mxu0 0
  %1592 = vmatmul.mubr.bf16.gmra.mxu0 %v1518
  %v1593 = vpop.f32.mrf.mxu0
  %v1594 = vadd.f32 0.0, %v1593
  %v1595 = vpop.f32.mrf.mxu0
  %v1596 = vpop.f32.mrf.mxu0
  %v1597 = vadd.f32 0.0, %v1596
  %v1598 = vpop.f32.mrf.mxu0
  %1599 = vmatprep.mubr.bf16.mxu0 0
  %1600 = vmatmul.mubr.bf16.gmra.mxu0 %v1521
  %v1601 = vpop.f32.mrf.mxu0
  %v1602 = vadd.f32 0.0, %v1601
  %v1603 = vpop.f32.mrf.mxu0
  %v1604 = vpop.f32.mrf.mxu0
  %v1605 = vadd.f32 0.0, %v1604
  %v1606 = vpop.f32.mrf.mxu0
  %1607 = vmatprep.mubr.bf16.mxu0 0
  %1608 = vmatmul.mubr.bf16.gmra.mxu0 %v1524
  %v1609 = vpop.f32.mrf.mxu0
  %v1610 = vadd.f32 0.0, %v1609
  %v1611 = vpop.f32.mrf.mxu0
  %v1612 = vpop.f32.mrf.mxu0
  %v1613 = vadd.f32 0.0, %v1612
  %v1614 = vpop.f32.mrf.mxu0
  %1615 = vmatprep.mubr.bf16.mxu0 0
  %1616 = vmatmul.mubr.bf16.gmra.mxu0 %v1527
  %v1617 = vpop.f32.mrf.mxu0
  %v1618 = vadd.f32 0.0, %v1617
  %v1619 = vpop.f32.mrf.mxu0
  %v1620 = vpop.f32.mrf.mxu0
  %v1621 = vadd.f32 0.0, %v1620
  %v1622 = vpop.f32.mrf.mxu0
  %1623 = vmatprep.mubr.bf16.mxu0 0
  %1624 = vmatmul.mubr.bf16.gmra.mxu0 %v1530
  %v1625 = vpop.f32.mrf.mxu0
  %v1626 = vadd.f32 0.0, %v1625
  %v1627 = vpop.f32.mrf.mxu0
  %v1628 = vpop.f32.mrf.mxu0
  %v1629 = vadd.f32 0.0, %v1628
  %v1630 = vpop.f32.mrf.mxu0
  %1631 = vdwg.mxu0
  %v1632 = vadd.f32 %v1466, %v1570
  %v1633 = vadd.f32 %v1467, %v1573
  %v1634 = vadd.f32 %v1468, %v1578
  %v1635 = vadd.f32 %v1469, %v1581
  %v1636 = vadd.f32 %v1470, %v1586
  %v1637 = vadd.f32 %v1471, %v1589
  %v1638 = vadd.f32 %v1472, %v1594
  %v1639 = vadd.f32 %v1473, %v1597
  %v1640 = vadd.f32 %v1474, %v1602
  %v1641 = vadd.f32 %v1475, %v1605
  %v1642 = vadd.f32 %v1476, %v1610
  %v1643 = vadd.f32 %v1477, %v1613
  %v1644 = vadd.f32 %v1478, %v1618
  %v1645 = vadd.f32 %v1479, %v1621
  %v1646 = vadd.f32 %v1480, %v1626
  %v1647 = vadd.f32 %v1481, %v1629
  %v1648 = vsel %vm48, %v1632, 0.0
  %1649 = vadd.xlane.f32.xlu0 %v1648
  %v1650 = vpop.xlane.xlu0 %1649
  %v1651 = vsel %vm48, %v1633, 0.0
  %1652 = vadd.xlane.f32.xlu0 %v1651
  %v1653 = vpop.xlane.xlu0 %1652
  %v1654 = vsel %vm48, %v1634, 0.0
  %1655 = vadd.xlane.f32.xlu0 %v1654
  %v1656 = vpop.xlane.xlu0 %1655
  %v1657 = vsel %vm48, %v1635, 0.0
  %1658 = vadd.xlane.f32.xlu0 %v1657
  %v1659 = vpop.xlane.xlu0 %1658
  %v1660 = vsel %vm48, %v1636, 0.0
  %1661 = vadd.xlane.f32.xlu0 %v1660
  %v1662 = vpop.xlane.xlu0 %1661
  %v1663 = vsel %vm48, %v1637, 0.0
  %1664 = vadd.xlane.f32.xlu0 %v1663
  %v1665 = vpop.xlane.xlu0 %1664
  %v1666 = vsel %vm48, %v1638, 0.0
  %1667 = vadd.xlane.f32.xlu0 %v1666
  %v1668 = vpop.xlane.xlu0 %1667
  %v1669 = vsel %vm48, %v1639, 0.0
  %1670 = vadd.xlane.f32.xlu0 %v1669
  %v1671 = vpop.xlane.xlu0 %1670
  %v1672 = vsel %vm48, %v1640, 0.0
  %1673 = vadd.xlane.f32.xlu0 %v1672
  %v1674 = vpop.xlane.xlu0 %1673
  %v1675 = vsel %vm48, %v1641, 0.0
  %1676 = vadd.xlane.f32.xlu0 %v1675
  %v1677 = vpop.xlane.xlu0 %1676
  %v1678 = vsel %vm48, %v1642, 0.0
  %1679 = vadd.xlane.f32.xlu0 %v1678
  %v1680 = vpop.xlane.xlu0 %1679
  %v1681 = vsel %vm48, %v1643, 0.0
  %1682 = vadd.xlane.f32.xlu0 %v1681
  %v1683 = vpop.xlane.xlu0 %1682
  %v1684 = vsel %vm48, %v1644, 0.0
  %1685 = vadd.xlane.f32.xlu0 %v1684
  %v1686 = vpop.xlane.xlu0 %1685
  %v1687 = vsel %vm48, %v1645, 0.0
  %1688 = vadd.xlane.f32.xlu0 %v1687
  %v1689 = vpop.xlane.xlu0 %1688
  %v1690 = vsel %vm48, %v1646, 0.0
  %1691 = vadd.xlane.f32.xlu0 %v1690
  %v1692 = vpop.xlane.xlu0 %1691
  %v1693 = vsel %vm48, %v1647, 0.0
  %1694 = vadd.xlane.f32.xlu0 %v1693
  %v1695 = vpop.xlane.xlu0 %1694
  %v1696 = vadd.f32 %v1650, %v1653
  %v1697 = vadd.f32 %v1696, %v1656
  %v1698 = vadd.f32 %v1697, %v1659
  %v1699 = vadd.f32 %v1698, %v1662
  %v1700 = vadd.f32 %v1699, %v1665
  %v1701 = vadd.f32 %v1700, %v1668
  %v1702 = vadd.f32 %v1701, %v1671
  %v1703 = vrot.slane %v1702, 4
  %v1704 = vadd.f32 %v1702, %v1703
  %v1705 = vrot.slane %v1704, 2
  %v1706 = vadd.f32 %v1704, %v1705
  %v1707 = vrot.slane %v1706, 1
  %v1708 = vadd.f32 %v1706, %v1707
  %v1709 = vadd.f32 %v1674, %v1677
  %v1710 = vadd.f32 %v1709, %v1680
  %v1711 = vadd.f32 %v1710, %v1683
  %v1712 = vadd.f32 %v1711, %v1686
  %v1713 = vadd.f32 %v1712, %v1689
  %v1714 = vadd.f32 %v1713, %v1692
  %v1715 = vadd.f32 %v1714, %v1695
  %v1716 = vrot.slane %v1715, 4
  %v1717 = vadd.f32 %v1715, %v1716
  %v1718 = vrot.slane %v1717, 2
  %v1719 = vadd.f32 %v1717, %v1718
  %v1720 = vrot.slane %v1719, 1
  %v1721 = vadd.f32 %v1719, %v1720
  %v1722 = vmul.f32 %v1708, 0.00390625
  %v1723 = vmul.f32 %v1721, 0.00390625
  %v1724 = vsub.f32 %v1632, %v1722
  %v1725 = vsub.f32 %v1633, %v1722
  %v1726 = vsub.f32 %v1634, %v1722
  %v1727 = vsub.f32 %v1635, %v1722
  %v1728 = vsub.f32 %v1636, %v1722
  %v1729 = vsub.f32 %v1637, %v1722
  %v1730 = vsub.f32 %v1638, %v1722
  %v1731 = vsub.f32 %v1639, %v1722
  %v1732 = vsub.f32 %v1640, %v1723
  %v1733 = vsub.f32 %v1641, %v1723
  %v1734 = vsub.f32 %v1642, %v1723
  %v1735 = vsub.f32 %v1643, %v1723
  %v1736 = vsub.f32 %v1644, %v1723
  %v1737 = vsub.f32 %v1645, %v1723
  %v1738 = vsub.f32 %v1646, %v1723
  %v1739 = vsub.f32 %v1647, %v1723
  %v1740 = vmul.f32 %v1724, %v1724
  %v1741 = vmul.f32 %v1725, %v1725
  %v1742 = vmul.f32 %v1726, %v1726
  %v1743 = vmul.f32 %v1727, %v1727
  %v1744 = vmul.f32 %v1728, %v1728
  %v1745 = vmul.f32 %v1729, %v1729
  %v1746 = vmul.f32 %v1730, %v1730
  %v1747 = vmul.f32 %v1731, %v1731
  %v1748 = vmul.f32 %v1732, %v1732
  %v1749 = vmul.f32 %v1733, %v1733
  %v1750 = vmul.f32 %v1734, %v1734
  %v1751 = vmul.f32 %v1735, %v1735
  %v1752 = vmul.f32 %v1736, %v1736
  %v1753 = vmul.f32 %v1737, %v1737
  %v1754 = vmul.f32 %v1738, %v1738
  %v1755 = vmul.f32 %v1739, %v1739
  %v1756 = vsel %vm48, %v1740, 0.0
  %1757 = vadd.xlane.f32.xlu0 %v1756
  %v1758 = vpop.xlane.xlu0 %1757
  %v1759 = vsel %vm48, %v1741, 0.0
  %1760 = vadd.xlane.f32.xlu0 %v1759
  %v1761 = vpop.xlane.xlu0 %1760
  %v1762 = vsel %vm48, %v1742, 0.0
  %1763 = vadd.xlane.f32.xlu0 %v1762
  %v1764 = vpop.xlane.xlu0 %1763
  %v1765 = vsel %vm48, %v1743, 0.0
  %1766 = vadd.xlane.f32.xlu0 %v1765
  %v1767 = vpop.xlane.xlu0 %1766
  %v1768 = vsel %vm48, %v1744, 0.0
  %1769 = vadd.xlane.f32.xlu0 %v1768
  %v1770 = vpop.xlane.xlu0 %1769
  %v1771 = vsel %vm48, %v1745, 0.0
  %1772 = vadd.xlane.f32.xlu0 %v1771
  %v1773 = vpop.xlane.xlu0 %1772
  %v1774 = vsel %vm48, %v1746, 0.0
  %1775 = vadd.xlane.f32.xlu0 %v1774
  %v1776 = vpop.xlane.xlu0 %1775
  %v1777 = vsel %vm48, %v1747, 0.0
  %1778 = vadd.xlane.f32.xlu0 %v1777
  %v1779 = vpop.xlane.xlu0 %1778
  %v1780 = vsel %vm48, %v1748, 0.0
  %1781 = vadd.xlane.f32.xlu0 %v1780
  %v1782 = vpop.xlane.xlu0 %1781
  %v1783 = vsel %vm48, %v1749, 0.0
  %1784 = vadd.xlane.f32.xlu0 %v1783
  %v1785 = vpop.xlane.xlu0 %1784
  %v1786 = vsel %vm48, %v1750, 0.0
  %1787 = vadd.xlane.f32.xlu0 %v1786
  %v1788 = vpop.xlane.xlu0 %1787
  %v1789 = vsel %vm48, %v1751, 0.0
  %1790 = vadd.xlane.f32.xlu0 %v1789
  %v1791 = vpop.xlane.xlu0 %1790
  %v1792 = vsel %vm48, %v1752, 0.0
  %1793 = vadd.xlane.f32.xlu0 %v1792
  %v1794 = vpop.xlane.xlu0 %1793
  %v1795 = vsel %vm48, %v1753, 0.0
  %1796 = vadd.xlane.f32.xlu0 %v1795
  %v1797 = vpop.xlane.xlu0 %1796
  %v1798 = vsel %vm48, %v1754, 0.0
  %1799 = vadd.xlane.f32.xlu0 %v1798
  %v1800 = vpop.xlane.xlu0 %1799
  %v1801 = vsel %vm48, %v1755, 0.0
  %1802 = vadd.xlane.f32.xlu0 %v1801
  %v1803 = vpop.xlane.xlu0 %1802
  %v1804 = vadd.f32 %v1758, %v1761
  %v1805 = vadd.f32 %v1804, %v1764
  %v1806 = vadd.f32 %v1805, %v1767
  %v1807 = vadd.f32 %v1806, %v1770
  %v1808 = vadd.f32 %v1807, %v1773
  %v1809 = vadd.f32 %v1808, %v1776
  %v1810 = vadd.f32 %v1809, %v1779
  %v1811 = vrot.slane %v1810, 4
  %v1812 = vadd.f32 %v1810, %v1811
  %v1813 = vrot.slane %v1812, 2
  %v1814 = vadd.f32 %v1812, %v1813
  %v1815 = vrot.slane %v1814, 1
  %v1816 = vadd.f32 %v1814, %v1815
  %v1817 = vadd.f32 %v1782, %v1785
  %v1818 = vadd.f32 %v1817, %v1788
  %v1819 = vadd.f32 %v1818, %v1791
  %v1820 = vadd.f32 %v1819, %v1794
  %v1821 = vadd.f32 %v1820, %v1797
  %v1822 = vadd.f32 %v1821, %v1800
  %v1823 = vadd.f32 %v1822, %v1803
  %v1824 = vrot.slane %v1823, 4
  %v1825 = vadd.f32 %v1823, %v1824
  %v1826 = vrot.slane %v1825, 2
  %v1827 = vadd.f32 %v1825, %v1826
  %v1828 = vrot.slane %v1827, 1
  %v1829 = vadd.f32 %v1827, %v1828
  %v1830 = vmul.f32 %v1816, 0.00390625
  %v1831 = vmul.f32 %v1829, 0.00390625
  %v1832 = vadd.f32 %v1830, 1e-05
  %v1833 = vadd.f32 %v1831, 1e-05
  %v1834 = vrsqrt.pop %v1832
  %v1835 = vrsqrt.pop %v1833
  %v1836 = vmul.f32 %v1724, %v1834
  %v1837 = vmul.f32 %v1725, %v1834
  %v1838 = vmul.f32 %v1726, %v1834
  %v1839 = vmul.f32 %v1727, %v1834
  %v1840 = vmul.f32 %v1728, %v1834
  %v1841 = vmul.f32 %v1729, %v1834
  %v1842 = vmul.f32 %v1730, %v1834
  %v1843 = vmul.f32 %v1731, %v1834
  %v1844 = vmul.f32 %v1732, %v1835
  %v1845 = vmul.f32 %v1733, %v1835
  %v1846 = vmul.f32 %v1734, %v1835
  %v1847 = vmul.f32 %v1735, %v1835
  %v1848 = vmul.f32 %v1736, %v1835
  %v1849 = vmul.f32 %v1737, %v1835
  %v1850 = vmul.f32 %v1738, %v1835
  %v1851 = vmul.f32 %v1739, %v1835
  %v1852 = vld [vmem:[%s2] sm:$0x1]
  %v1854 = vlaneseq
  %v1855 = vshrl.u32 %v1854, 7
  %v1856 = vsub.s32 0, %v1855
  %v1857 = vrot.slane %v1852, %v1856
  %v1859 = vmul.f32 %v1836, %v1857
  %v1860 = vmul.f32 %v1837, %v1857
  %v1861 = vmul.f32 %v1838, %v1857
  %v1862 = vmul.f32 %v1839, %v1857
  %v1863 = vmul.f32 %v1840, %v1857
  %v1864 = vmul.f32 %v1841, %v1857
  %v1865 = vmul.f32 %v1842, %v1857
  %v1866 = vmul.f32 %v1843, %v1857
  %v1867 = vmul.f32 %v1844, %v1857
  %v1868 = vmul.f32 %v1845, %v1857
  %v1869 = vmul.f32 %v1846, %v1857
  %v1870 = vmul.f32 %v1847, %v1857
  %v1871 = vmul.f32 %v1848, %v1857
  %v1872 = vmul.f32 %v1849, %v1857
  %v1873 = vmul.f32 %v1850, %v1857
  %v1874 = vmul.f32 %v1851, %v1857
  %v1875 = vld [vmem:[%s3] sm:$0x1]
  %v1877 = vlaneseq
  %v1878 = vshrl.u32 %v1877, 7
  %v1879 = vsub.s32 0, %v1878
  %v1880 = vrot.slane %v1875, %v1879
  %v1882 = vadd.f32 %v1859, %v1880
  %v1883 = vadd.f32 %v1860, %v1880
  %v1884 = vadd.f32 %v1861, %v1880
  %v1885 = vadd.f32 %v1862, %v1880
  %v1886 = vadd.f32 %v1863, %v1880
  %v1887 = vadd.f32 %v1864, %v1880
  %v1888 = vadd.f32 %v1865, %v1880
  %v1889 = vadd.f32 %v1866, %v1880
  %v1890 = vadd.f32 %v1867, %v1880
  %v1891 = vadd.f32 %v1868, %v1880
  %v1892 = vadd.f32 %v1869, %v1880
  %v1893 = vadd.f32 %v1870, %v1880
  %v1894 = vadd.f32 %v1871, %v1880
  %v1895 = vadd.f32 %v1872, %v1880
  %v1896 = vadd.f32 %v1873, %v1880
  %v1897 = vadd.f32 %v1874, %v1880
  %v1898 = vmul.f32 %v1882, 0.5
  %v1899 = vmul.f32 %v1883, 0.5
  %v1900 = vmul.f32 %v1884, 0.5
  %v1901 = vmul.f32 %v1885, 0.5
  %v1902 = vmul.f32 %v1886, 0.5
  %v1903 = vmul.f32 %v1887, 0.5
  %v1904 = vmul.f32 %v1888, 0.5
  %v1905 = vmul.f32 %v1889, 0.5
  %v1906 = vmul.f32 %v1890, 0.5
  %v1907 = vmul.f32 %v1891, 0.5
  %v1908 = vmul.f32 %v1892, 0.5
  %v1909 = vmul.f32 %v1893, 0.5
  %v1910 = vmul.f32 %v1894, 0.5
  %v1911 = vmul.f32 %v1895, 0.5
  %v1912 = vmul.f32 %v1896, 0.5
  %v1913 = vmul.f32 %v1897, 0.5
  %v1914 = vmul.f32 %v1882, 0.044715
  %v1915 = vmul.f32 %v1883, 0.044715
  %v1916 = vmul.f32 %v1884, 0.044715
  %v1917 = vmul.f32 %v1885, 0.044715
  %v1918 = vmul.f32 %v1886, 0.044715
  %v1919 = vmul.f32 %v1887, 0.044715
  %v1920 = vmul.f32 %v1888, 0.044715
  %v1921 = vmul.f32 %v1889, 0.044715
  %v1922 = vmul.f32 %v1890, 0.044715
  %v1923 = vmul.f32 %v1891, 0.044715
  %v1924 = vmul.f32 %v1892, 0.044715
  %v1925 = vmul.f32 %v1893, 0.044715
  %v1926 = vmul.f32 %v1894, 0.044715
  %v1927 = vmul.f32 %v1895, 0.044715
  %v1928 = vmul.f32 %v1896, 0.044715
  %v1929 = vmul.f32 %v1897, 0.044715
  %v1930 = vmul.f32 %v1914, %v1882
  %v1931 = vmul.f32 %v1915, %v1883
  %v1932 = vmul.f32 %v1916, %v1884
  %v1933 = vmul.f32 %v1917, %v1885
  %v1934 = vmul.f32 %v1918, %v1886
  %v1935 = vmul.f32 %v1919, %v1887
  %v1936 = vmul.f32 %v1920, %v1888
  %v1937 = vmul.f32 %v1921, %v1889
  %v1938 = vmul.f32 %v1922, %v1890
  %v1939 = vmul.f32 %v1923, %v1891
  %v1940 = vmul.f32 %v1924, %v1892
  %v1941 = vmul.f32 %v1925, %v1893
  %v1942 = vmul.f32 %v1926, %v1894
  %v1943 = vmul.f32 %v1927, %v1895
  %v1944 = vmul.f32 %v1928, %v1896
  %v1945 = vmul.f32 %v1929, %v1897
  %v1946 = vmul.f32 %v1930, %v1882
  %v1947 = vmul.f32 %v1931, %v1883
  %v1948 = vmul.f32 %v1932, %v1884
  %v1949 = vmul.f32 %v1933, %v1885
  %v1950 = vmul.f32 %v1934, %v1886
  %v1951 = vmul.f32 %v1935, %v1887
  %v1952 = vmul.f32 %v1936, %v1888
  %v1953 = vmul.f32 %v1937, %v1889
  %v1954 = vmul.f32 %v1938, %v1890
  %v1955 = vmul.f32 %v1939, %v1891
  %v1956 = vmul.f32 %v1940, %v1892
  %v1957 = vmul.f32 %v1941, %v1893
  %v1958 = vmul.f32 %v1942, %v1894
  %v1959 = vmul.f32 %v1943, %v1895
  %v1960 = vmul.f32 %v1944, %v1896
  %v1961 = vmul.f32 %v1945, %v1897
  %v1962 = vadd.f32 %v1882, %v1946
  %v1963 = vadd.f32 %v1883, %v1947
  %v1964 = vadd.f32 %v1884, %v1948
  %v1965 = vadd.f32 %v1885, %v1949
  %v1966 = vadd.f32 %v1886, %v1950
  %v1967 = vadd.f32 %v1887, %v1951
  %v1968 = vadd.f32 %v1888, %v1952
  %v1969 = vadd.f32 %v1889, %v1953
  %v1970 = vadd.f32 %v1890, %v1954
  %v1971 = vadd.f32 %v1891, %v1955
  %v1972 = vadd.f32 %v1892, %v1956
  %v1973 = vadd.f32 %v1893, %v1957
  %v1974 = vadd.f32 %v1894, %v1958
  %v1975 = vadd.f32 %v1895, %v1959
  %v1976 = vadd.f32 %v1896, %v1960
  %v1977 = vadd.f32 %v1897, %v1961
  %v1978 = vmul.f32 %v1962, 0.7978846
  %v1979 = vmul.f32 %v1963, 0.7978846
  %v1980 = vmul.f32 %v1964, 0.7978846
  %v1981 = vmul.f32 %v1965, 0.7978846
  %v1982 = vmul.f32 %v1966, 0.7978846
  %v1983 = vmul.f32 %v1967, 0.7978846
  %v1984 = vmul.f32 %v1968, 0.7978846
  %v1985 = vmul.f32 %v1969, 0.7978846
  %v1986 = vmul.f32 %v1970, 0.7978846
  %v1987 = vmul.f32 %v1971, 0.7978846
  %v1988 = vmul.f32 %v1972, 0.7978846
  %v1989 = vmul.f32 %v1973, 0.7978846
  %v1990 = vmul.f32 %v1974, 0.7978846
  %v1991 = vmul.f32 %v1975, 0.7978846
  %v1992 = vmul.f32 %v1976, 0.7978846
  %v1993 = vmul.f32 %v1977, 0.7978846
  %v1994 = vtanh.pop %v1978
  %v1995 = vtanh.pop %v1979
  %v1996 = vtanh.pop %v1980
  %v1997 = vtanh.pop %v1981
  %v1998 = vtanh.pop %v1982
  %v1999 = vtanh.pop %v1983
  %v2000 = vtanh.pop %v1984
  %v2001 = vtanh.pop %v1985
  %v2002 = vtanh.pop %v1986
  %v2003 = vtanh.pop %v1987
  %v2004 = vtanh.pop %v1988
  %v2005 = vtanh.pop %v1989
  %v2006 = vtanh.pop %v1990
  %v2007 = vtanh.pop %v1991
  %v2008 = vtanh.pop %v1992
  %v2009 = vtanh.pop %v1993
  %v2010 = vadd.f32 %v1994, 1.0
  %v2011 = vadd.f32 %v1995, 1.0
  %v2012 = vadd.f32 %v1996, 1.0
  %v2013 = vadd.f32 %v1997, 1.0
  %v2014 = vadd.f32 %v1998, 1.0
  %v2015 = vadd.f32 %v1999, 1.0
  %v2016 = vadd.f32 %v2000, 1.0
  %v2017 = vadd.f32 %v2001, 1.0
  %v2018 = vadd.f32 %v2002, 1.0
  %v2019 = vadd.f32 %v2003, 1.0
  %v2020 = vadd.f32 %v2004, 1.0
  %v2021 = vadd.f32 %v2005, 1.0
  %v2022 = vadd.f32 %v2006, 1.0
  %v2023 = vadd.f32 %v2007, 1.0
  %v2024 = vadd.f32 %v2008, 1.0
  %v2025 = vadd.f32 %v2009, 1.0
  %v2026 = vmul.f32 %v1898, %v2010
  %v2027 = vmul.f32 %v1899, %v2011
  %v2028 = vmul.f32 %v1900, %v2012
  %v2029 = vmul.f32 %v1901, %v2013
  %v2030 = vmul.f32 %v1902, %v2014
  %v2031 = vmul.f32 %v1903, %v2015
  %v2032 = vmul.f32 %v1904, %v2016
  %v2033 = vmul.f32 %v1905, %v2017
  %v2034 = vmul.f32 %v1906, %v2018
  %v2035 = vmul.f32 %v1907, %v2019
  %v2036 = vmul.f32 %v1908, %v2020
  %v2037 = vmul.f32 %v1909, %v2021
  %v2038 = vmul.f32 %v1910, %v2022
  %v2039 = vmul.f32 %v1911, %v2023
  %v2040 = vmul.f32 %v1912, %v2024
  %v2041 = vmul.f32 %v1913, %v2025
  %2042 = vst.msk [vmem:[%s168 + $0x1] sm:$0xff] %vm48, %v2026
  %2043 = vst.msk [vmem:[%s168 + $0x11] sm:$0xff] %vm48, %v2027
  %2044 = vst.msk [vmem:[%s168 + $0x21] sm:$0xff] %vm48, %v2028
  %2045 = vst.msk [vmem:[%s168 + $0x31] sm:$0xff] %vm48, %v2029
  %2046 = vst.msk [vmem:[%s168 + $0x41] sm:$0xff] %vm48, %v2030
  %2047 = vst.msk [vmem:[%s168 + $0x51] sm:$0xff] %vm48, %v2031
  %2048 = vst.msk [vmem:[%s168 + $0x61] sm:$0xff] %vm48, %v2032
  %2049 = vst.msk [vmem:[%s168 + $0x71] sm:$0xff] %vm48, %v2033
  %2050 = vst.msk [vmem:[%s168 + $0xa1] sm:$0xff] %vm48, %v2034
  %2051 = vst.msk [vmem:[%s168 + $0xb1] sm:$0xff] %vm48, %v2035
  %2052 = vst.msk [vmem:[%s168 + $0xc1] sm:$0xff] %vm48, %v2036
  %2053 = vst.msk [vmem:[%s168 + $0xd1] sm:$0xff] %vm48, %v2037
  %2054 = vst.msk [vmem:[%s168 + $0xe1] sm:$0xff] %vm48, %v2038
  %2055 = vst.msk [vmem:[%s168 + $0xf1] sm:$0xff] %vm48, %v2039
  %2056 = vst.msk [vmem:[%s168 + $0x101] sm:$0xff] %vm48, %v2040
  %2057 = vst.msk [vmem:[%s168 + $0x111] sm:$0xff] %vm48, %v2041
  %v2058 = vld [vmem:[#allocation2] sm:$0xff]
  %v2059 = vld [vmem:[#allocation2 + $0x10] sm:$0xff]
  %v2060 = vld [vmem:[#allocation2 + $0x20] sm:$0xff]
  %v2061 = vld [vmem:[#allocation2 + $0x30] sm:$0xff]
  %v2062 = vld [vmem:[#allocation2 + $0x40] sm:$0xff]
  %v2063 = vld [vmem:[#allocation2 + $0x50] sm:$0xff]
  %v2064 = vld [vmem:[#allocation2 + $0x60] sm:$0xff]
  %v2065 = vld [vmem:[#allocation2 + $0x70] sm:$0xff]
  %v2066 = vld [vmem:[#allocation2 + $0xa0] sm:$0xff]
  %v2067 = vld [vmem:[#allocation2 + $0xb0] sm:$0xff]
  %v2068 = vld [vmem:[#allocation2 + $0xc0] sm:$0xff]
  %v2069 = vld [vmem:[#allocation2 + $0xd0] sm:$0xff]
  %v2070 = vld [vmem:[#allocation2 + $0xe0] sm:$0xff]
  %v2071 = vld [vmem:[#allocation2 + $0xf0] sm:$0xff]
  %v2072 = vld [vmem:[#allocation2 + $0x100] sm:$0xff]
  %v2073 = vld [vmem:[#allocation2 + $0x110] sm:$0xff]
  %v2074 = vpack.c.bf16 %v2059, %v2058
  %v2075 = vpack.c.bf16 %v2061, %v2060
  %v2076 = vpack.c.bf16 %v2063, %v2062
  %v2077 = vpack.c.bf16 %v2065, %v2064
  %v2078 = vpack.c.bf16 %v2067, %v2066
  %v2079 = vpack.c.bf16 %v2069, %v2068
  %v2080 = vpack.c.bf16 %v2071, %v2070
  %v2081 = vpack.c.bf16 %v2073, %v2072
  %v2082 = vld [vmem:[%s4] sm:$0x3]
  %v2083 = vld [vmem:[#allocation2 + $0x1] sm:$0xff]
  %v2084 = vld [vmem:[#allocation2 + $0x11] sm:$0xff]
  %v2085 = vld [vmem:[#allocation2 + $0x21] sm:$0xff]
  %v2086 = vld [vmem:[#allocation2 + $0x31] sm:$0xff]
  %v2087 = vld [vmem:[#allocation2 + $0x41] sm:$0xff]
  %v2088 = vld [vmem:[#allocation2 + $0x51] sm:$0xff]
  %v2089 = vld [vmem:[#allocation2 + $0x61] sm:$0xff]
  %v2090 = vld [vmem:[#allocation2 + $0x71] sm:$0xff]
  %v2091 = vld [vmem:[#allocation2 + $0xa1] sm:$0xff]
  %v2092 = vld [vmem:[#allocation2 + $0xb1] sm:$0xff]
  %v2093 = vld [vmem:[#allocation2 + $0xc1] sm:$0xff]
  %v2094 = vld [vmem:[#allocation2 + $0xd1] sm:$0xff]
  %v2095 = vld [vmem:[#allocation2 + $0xe1] sm:$0xff]
  %v2096 = vld [vmem:[#allocation2 + $0xf1] sm:$0xff]
  %v2097 = vld [vmem:[#allocation2 + $0x101] sm:$0xff]
  %v2098 = vld [vmem:[#allocation2 + $0x111] sm:$0xff]
  %v2099 = vpack.c.bf16 %v2084, %v2083
  %v2100 = vpack.c.bf16 %v2086, %v2085
  %v2101 = vpack.c.bf16 %v2088, %v2087
  %v2102 = vpack.c.bf16 %v2090, %v2089
  %v2103 = vpack.c.bf16 %v2092, %v2091
  %v2104 = vpack.c.bf16 %v2094, %v2093
  %v2105 = vpack.c.bf16 %v2096, %v2095
  %v2106 = vpack.c.bf16 %v2098, %v2097
  %s2107 = scalar_lea.vmem %s4, 2
  %v2108 = vld [vmem:[%s2107] sm:$0x3]
  %v2110 = vsel %vm48, %v2099, 0
  %v2113 = vsel %vm48, %v2100, 0
  %v2116 = vsel %vm48, %v2101, 0
  %v2119 = vsel %vm48, %v2102, 0
  %v2122 = vsel %vm48, %v2103, 0
  %v2125 = vsel %vm48, %v2104, 0
  %v2128 = vsel %vm48, %v2105, 0
  %v2131 = vsel %vm48, %v2106, 0
  %v2134 = vsel %vm260, %v2108, 0
  %2136 = vmatprep.subr.bf16.mxu0 0
  %2137 = vmatpush1.bf16.msra.mxu0 0
  %2138 = vmatprep.subr.bf16.mxu0 0
  %2139 = vmatpush1.bf16.msra.mxu0 0
  %2140 = vmatprep.subr.bf16.mxu0 0
  %2141 = vmatpush1.bf16.msra.mxu0 0
  %2142 = vmatprep.subr.bf16.mxu0 0
  %2143 = vmatpush1.bf16.msra.mxu0 0
  %2144 = vmatprep.subr.bf16.mxu0 0
  %2145 = vmatpush1.bf16.msra.mxu0 0
  %2146 = vmatprep.subr.bf16.mxu0 0
  %2147 = vmatpush1.bf16.msra.mxu0 0
  %2148 = vmatprep.subr.bf16.mxu0 0
  %2149 = vmatpush1.bf16.msra.mxu0 0
  %2150 = vmatprep.subr.bf16.mxu0 0
  %2151 = vmatpush1.bf16.msra.mxu0 %v2134
  %2152 = vmatprep.subr.bf16.mxu0 0
  %2153 = vmatpush2.bf16.msra.mxu0 0
  %2154 = vmatprep.subr.bf16.mxu0 0
  %2155 = vmatpush2.bf16.msra.mxu0 0
  %2156 = vmatprep.subr.bf16.mxu0 0
  %2157 = vmatpush2.bf16.msra.mxu0 0
  %2158 = vmatprep.subr.bf16.mxu0 0
  %2159 = vmatpush2.bf16.msra.mxu0 0
  %2160 = vmatprep.subr.bf16.mxu0 0
  %2161 = vmatpush2.bf16.msra.mxu0 0
  %2162 = vmatprep.subr.bf16.mxu0 0
  %2163 = vmatpush2.bf16.msra.mxu0 0
  %2164 = vmatprep.subr.bf16.mxu0 0
  %2165 = vmatpush2.bf16.msra.mxu0 0
  %2166 = vmatprep.subr.bf16.mxu0 0
  %2167 = vmatpush2.bf16.msra.mxu0 0
  %2168 = vmatprep.mubr.bf16.mxu0 0
  %2169 = vmatmul.mubr.bf16.gmra.mxu0 %v2110
  %v2170 = vpop.f32.mrf.mxu0
  %v2171 = vadd.f32 0.0, %v2170
  %v2172 = vpop.f32.mrf.mxu0
  %v2173 = vpop.f32.mrf.mxu0
  %v2174 = vadd.f32 0.0, %v2173
  %v2175 = vpop.f32.mrf.mxu0
  %2176 = vmatprep.mubr.bf16.mxu0 0
  %2177 = vmatmul.mubr.bf16.gmra.mxu0 %v2113
  %v2178 = vpop.f32.mrf.mxu0
  %v2179 = vadd.f32 0.0, %v2178
  %v2180 = vpop.f32.mrf.mxu0
  %v2181 = vpop.f32.mrf.mxu0
  %v2182 = vadd.f32 0.0, %v2181
  %v2183 = vpop.f32.mrf.mxu0
  %2184 = vmatprep.mubr.bf16.mxu0 0
  %2185 = vmatmul.mubr.bf16.gmra.mxu0 %v2116
  %v2186 = vpop.f32.mrf.mxu0
  %v2187 = vadd.f32 0.0, %v2186
  %v2188 = vpop.f32.mrf.mxu0
  %v2189 = vpop.f32.mrf.mxu0
  %v2190 = vadd.f32 0.0, %v2189
  %v2191 = vpop.f32.mrf.mxu0
  %2192 = vmatprep.mubr.bf16.mxu0 0
  %2193 = vmatmul.mubr.bf16.gmra.mxu0 %v2119
  %v2194 = vpop.f32.mrf.mxu0
  %v2195 = vadd.f32 0.0, %v2194
  %v2196 = vpop.f32.mrf.mxu0
  %v2197 = vpop.f32.mrf.mxu0
  %v2198 = vadd.f32 0.0, %v2197
  %v2199 = vpop.f32.mrf.mxu0
  %2200 = vmatprep.mubr.bf16.mxu0 0
  %2201 = vmatmul.mubr.bf16.gmra.mxu0 %v2122
  %v2202 = vpop.f32.mrf.mxu0
  %v2203 = vadd.f32 0.0, %v2202
  %v2204 = vpop.f32.mrf.mxu0
  %v2205 = vpop.f32.mrf.mxu0
  %v2206 = vadd.f32 0.0, %v2205
  %v2207 = vpop.f32.mrf.mxu0
  %2208 = vmatprep.mubr.bf16.mxu0 0
  %2209 = vmatmul.mubr.bf16.gmra.mxu0 %v2125
  %v2210 = vpop.f32.mrf.mxu0
  %v2211 = vadd.f32 0.0, %v2210
  %v2212 = vpop.f32.mrf.mxu0
  %v2213 = vpop.f32.mrf.mxu0
  %v2214 = vadd.f32 0.0, %v2213
  %v2215 = vpop.f32.mrf.mxu0
  %2216 = vmatprep.mubr.bf16.mxu0 0
  %2217 = vmatmul.mubr.bf16.gmra.mxu0 %v2128
  %v2218 = vpop.f32.mrf.mxu0
  %v2219 = vadd.f32 0.0, %v2218
  %v2220 = vpop.f32.mrf.mxu0
  %v2221 = vpop.f32.mrf.mxu0
  %v2222 = vadd.f32 0.0, %v2221
  %v2223 = vpop.f32.mrf.mxu0
  %2224 = vmatprep.mubr.bf16.mxu0 0
  %2225 = vmatmul.mubr.bf16.gmra.mxu0 %v2131
  %v2226 = vpop.f32.mrf.mxu0
  %v2227 = vadd.f32 0.0, %v2226
  %v2228 = vpop.f32.mrf.mxu0
  %v2229 = vpop.f32.mrf.mxu0
  %v2230 = vadd.f32 0.0, %v2229
  %v2231 = vpop.f32.mrf.mxu0
  %2232 = vdwg.mxu0
  %v2234 = vsel %vm48, %v2074, 0
  %v2237 = vsel %vm48, %v2075, 0
  %v2240 = vsel %vm48, %v2076, 0
  %v2243 = vsel %vm48, %v2077, 0
  %v2246 = vsel %vm48, %v2078, 0
  %v2249 = vsel %vm48, %v2079, 0
  %v2252 = vsel %vm48, %v2080, 0
  %v2255 = vsel %vm48, %v2081, 0
  %v2258 = vsel %vm260, %v2082, 0
  %2260 = vmatprep.subr.bf16.mxu0 0
  %2261 = vmatpush1.bf16.msra.mxu0 0
  %2262 = vmatprep.subr.bf16.mxu0 0
  %2263 = vmatpush1.bf16.msra.mxu0 0
  %2264 = vmatprep.subr.bf16.mxu0 0
  %2265 = vmatpush1.bf16.msra.mxu0 0
  %2266 = vmatprep.subr.bf16.mxu0 0
  %2267 = vmatpush1.bf16.msra.mxu0 0
  %2268 = vmatprep.subr.bf16.mxu0 0
  %2269 = vmatpush1.bf16.msra.mxu0 0
  %2270 = vmatprep.subr.bf16.mxu0 0
  %2271 = vmatpush1.bf16.msra.mxu0 0
  %2272 = vmatprep.subr.bf16.mxu0 0
  %2273 = vmatpush1.bf16.msra.mxu0 0
  %2274 = vmatprep.subr.bf16.mxu0 0
  %2275 = vmatpush1.bf16.msra.mxu0 %v2258
  %2276 = vmatprep.subr.bf16.mxu0 0
  %2277 = vmatpush2.bf16.msra.mxu0 0
  %2278 = vmatprep.subr.bf16.mxu0 0
  %2279 = vmatpush2.bf16.msra.mxu0 0
  %2280 = vmatprep.subr.bf16.mxu0 0
  %2281 = vmatpush2.bf16.msra.mxu0 0
  %2282 = vmatprep.subr.bf16.mxu0 0
  %2283 = vmatpush2.bf16.msra.mxu0 0
  %2284 = vmatprep.subr.bf16.mxu0 0
  %2285 = vmatpush2.bf16.msra.mxu0 0
  %2286 = vmatprep.subr.bf16.mxu0 0
  %2287 = vmatpush2.bf16.msra.mxu0 0
  %2288 = vmatprep.subr.bf16.mxu0 0
  %2289 = vmatpush2.bf16.msra.mxu0 0
  %2290 = vmatprep.subr.bf16.mxu0 0
  %2291 = vmatpush2.bf16.msra.mxu0 0
  %2292 = vmatprep.mubr.bf16.mxu0 0
  %2293 = vmatmul.mubr.bf16.gmra.mxu0 %v2234
  %v2294 = vpop.f32.mrf.mxu0
  %v2295 = vadd.f32 %v2171, %v2294
  %v2296 = vpop.f32.mrf.mxu0
  %v2297 = vpop.f32.mrf.mxu0
  %v2298 = vadd.f32 %v2174, %v2297
  %v2299 = vpop.f32.mrf.mxu0
  %2300 = vmatprep.mubr.bf16.mxu0 0
  %2301 = vmatmul.mubr.bf16.gmra.mxu0 %v2237
  %v2302 = vpop.f32.mrf.mxu0
  %v2303 = vadd.f32 %v2179, %v2302
  %v2304 = vpop.f32.mrf.mxu0
  %v2305 = vpop.f32.mrf.mxu0
  %v2306 = vadd.f32 %v2182, %v2305
  %v2307 = vpop.f32.mrf.mxu0
  %2308 = vmatprep.mubr.bf16.mxu0 0
  %2309 = vmatmul.mubr.bf16.gmra.mxu0 %v2240
  %v2310 = vpop.f32.mrf.mxu0
  %v2311 = vadd.f32 %v2187, %v2310
  %v2312 = vpop.f32.mrf.mxu0
  %v2313 = vpop.f32.mrf.mxu0
  %v2314 = vadd.f32 %v2190, %v2313
  %v2315 = vpop.f32.mrf.mxu0
  %2316 = vmatprep.mubr.bf16.mxu0 0
  %2317 = vmatmul.mubr.bf16.gmra.mxu0 %v2243
  %v2318 = vpop.f32.mrf.mxu0
  %v2319 = vadd.f32 %v2195, %v2318
  %v2320 = vpop.f32.mrf.mxu0
  %v2321 = vpop.f32.mrf.mxu0
  %v2322 = vadd.f32 %v2198, %v2321
  %v2323 = vpop.f32.mrf.mxu0
  %2324 = vmatprep.mubr.bf16.mxu0 0
  %2325 = vmatmul.mubr.bf16.gmra.mxu0 %v2246
  %v2326 = vpop.f32.mrf.mxu0
  %v2327 = vadd.f32 %v2203, %v2326
  %v2328 = vpop.f32.mrf.mxu0
  %v2329 = vpop.f32.mrf.mxu0
  %v2330 = vadd.f32 %v2206, %v2329
  %v2331 = vpop.f32.mrf.mxu0
  %2332 = vmatprep.mubr.bf16.mxu0 0
  %2333 = vmatmul.mubr.bf16.gmra.mxu0 %v2249
  %v2334 = vpop.f32.mrf.mxu0
  %v2335 = vadd.f32 %v2211, %v2334
  %v2336 = vpop.f32.mrf.mxu0
  %v2337 = vpop.f32.mrf.mxu0
  %v2338 = vadd.f32 %v2214, %v2337
  %v2339 = vpop.f32.mrf.mxu0
  %2340 = vmatprep.mubr.bf16.mxu0 0
  %2341 = vmatmul.mubr.bf16.gmra.mxu0 %v2252
  %v2342 = vpop.f32.mrf.mxu0
  %v2343 = vadd.f32 %v2219, %v2342
  %v2344 = vpop.f32.mrf.mxu0
  %v2345 = vpop.f32.mrf.mxu0
  %v2346 = vadd.f32 %v2222, %v2345
  %v2347 = vpop.f32.mrf.mxu0
  %2348 = vmatprep.mubr.bf16.mxu0 0
  %2349 = vmatmul.mubr.bf16.gmra.mxu0 %v2255
  %v2350 = vpop.f32.mrf.mxu0
  %v2351 = vadd.f32 %v2227, %v2350
  %v2352 = vpop.f32.mrf.mxu0
  %v2353 = vpop.f32.mrf.mxu0
  %v2354 = vadd.f32 %v2230, %v2353
  %v2355 = vpop.f32.mrf.mxu0
  %2356 = vdwg.mxu0
  %v2357 = vld [vmem:[#allocation2 + $0x2] sm:$0xff]
  %v2358 = vld [vmem:[#allocation2 + $0x12] sm:$0xff]
  %v2359 = vld [vmem:[#allocation2 + $0x22] sm:$0xff]
  %v2360 = vld [vmem:[#allocation2 + $0x32] sm:$0xff]
  %v2361 = vld [vmem:[#allocation2 + $0x42] sm:$0xff]
  %v2362 = vld [vmem:[#allocation2 + $0x52] sm:$0xff]
  %v2363 = vld [vmem:[#allocation2 + $0x62] sm:$0xff]
  %v2364 = vld [vmem:[#allocation2 + $0x72] sm:$0xff]
  %v2365 = vld [vmem:[#allocation2 + $0xa2] sm:$0xff]
  %v2366 = vld [vmem:[#allocation2 + $0xb2] sm:$0xff]
  %v2367 = vld [vmem:[#allocation2 + $0xc2] sm:$0xff]
  %v2368 = vld [vmem:[#allocation2 + $0xd2] sm:$0xff]
  %v2369 = vld [vmem:[#allocation2 + $0xe2] sm:$0xff]
  %v2370 = vld [vmem:[#allocation2 + $0xf2] sm:$0xff]
  %v2371 = vld [vmem:[#allocation2 + $0x102] sm:$0xff]
  %v2372 = vld [vmem:[#allocation2 + $0x112] sm:$0xff]
  %v2373 = vpack.c.bf16 %v2358, %v2357
  %v2374 = vpack.c.bf16 %v2360, %v2359
  %v2375 = vpack.c.bf16 %v2362, %v2361
  %v2376 = vpack.c.bf16 %v2364, %v2363
  %v2377 = vpack.c.bf16 %v2366, %v2365
  %v2378 = vpack.c.bf16 %v2368, %v2367
  %v2379 = vpack.c.bf16 %v2370, %v2369
  %v2380 = vpack.c.bf16 %v2372, %v2371
  %s2381 = scalar_lea.vmem %s4, 4
  %v2382 = vld [vmem:[%s2381] sm:$0x3]
  %v2384 = vsel %vm48, %v2373, 0
  %v2387 = vsel %vm48, %v2374, 0
  %v2390 = vsel %vm48, %v2375, 0
  %v2393 = vsel %vm48, %v2376, 0
  %v2396 = vsel %vm48, %v2377, 0
  %v2399 = vsel %vm48, %v2378, 0
  %v2402 = vsel %vm48, %v2379, 0
  %v2405 = vsel %vm48, %v2380, 0
  %v2408 = vsel %vm260, %v2382, 0
  %2410 = vmatprep.subr.bf16.mxu0 0
  %2411 = vmatpush1.bf16.msra.mxu0 0
  %2412 = vmatprep.subr.bf16.mxu0 0
  %2413 = vmatpush1.bf16.msra.mxu0 0
  %2414 = vmatprep.subr.bf16.mxu0 0
  %2415 = vmatpush1.bf16.msra.mxu0 0
  %2416 = vmatprep.subr.bf16.mxu0 0
  %2417 = vmatpush1.bf16.msra.mxu0 0
  %2418 = vmatprep.subr.bf16.mxu0 0
  %2419 = vmatpush1.bf16.msra.mxu0 0
  %2420 = vmatprep.subr.bf16.mxu0 0
  %2421 = vmatpush1.bf16.msra.mxu0 0
  %2422 = vmatprep.subr.bf16.mxu0 0
  %2423 = vmatpush1.bf16.msra.mxu0 0
  %2424 = vmatprep.subr.bf16.mxu0 0
  %2425 = vmatpush1.bf16.msra.mxu0 %v2408
  %2426 = vmatprep.subr.bf16.mxu0 0
  %2427 = vmatpush2.bf16.msra.mxu0 0
  %2428 = vmatprep.subr.bf16.mxu0 0
  %2429 = vmatpush2.bf16.msra.mxu0 0
  %2430 = vmatprep.subr.bf16.mxu0 0
  %2431 = vmatpush2.bf16.msra.mxu0 0
  %2432 = vmatprep.subr.bf16.mxu0 0
  %2433 = vmatpush2.bf16.msra.mxu0 0
  %2434 = vmatprep.subr.bf16.mxu0 0
  %2435 = vmatpush2.bf16.msra.mxu0 0
  %2436 = vmatprep.subr.bf16.mxu0 0
  %2437 = vmatpush2.bf16.msra.mxu0 0
  %2438 = vmatprep.subr.bf16.mxu0 0
  %2439 = vmatpush2.bf16.msra.mxu0 0
  %2440 = vmatprep.subr.bf16.mxu0 0
  %2441 = vmatpush2.bf16.msra.mxu0 0
  %2442 = vmatprep.mubr.bf16.mxu0 0
  %2443 = vmatmul.mubr.bf16.gmra.mxu0 %v2384
  %v2444 = vpop.f32.mrf.mxu0
  %v2445 = vadd.f32 0.0, %v2444
  %v2446 = vpop.f32.mrf.mxu0
  %v2447 = vpop.f32.mrf.mxu0
  %v2448 = vadd.f32 0.0, %v2447
  %v2449 = vpop.f32.mrf.mxu0
  %2450 = vmatprep.mubr.bf16.mxu0 0
  %2451 = vmatmul.mubr.bf16.gmra.mxu0 %v2387
  %v2452 = vpop.f32.mrf.mxu0
  %v2453 = vadd.f32 0.0, %v2452
  %v2454 = vpop.f32.mrf.mxu0
  %v2455 = vpop.f32.mrf.mxu0
  %v2456 = vadd.f32 0.0, %v2455
  %v2457 = vpop.f32.mrf.mxu0
  %2458 = vmatprep.mubr.bf16.mxu0 0
  %2459 = vmatmul.mubr.bf16.gmra.mxu0 %v2390
  %v2460 = vpop.f32.mrf.mxu0
  %v2461 = vadd.f32 0.0, %v2460
  %v2462 = vpop.f32.mrf.mxu0
  %v2463 = vpop.f32.mrf.mxu0
  %v2464 = vadd.f32 0.0, %v2463
  %v2465 = vpop.f32.mrf.mxu0
  %2466 = vmatprep.mubr.bf16.mxu0 0
  %2467 = vmatmul.mubr.bf16.gmra.mxu0 %v2393
  %v2468 = vpop.f32.mrf.mxu0
  %v2469 = vadd.f32 0.0, %v2468
  %v2470 = vpop.f32.mrf.mxu0
  %v2471 = vpop.f32.mrf.mxu0
  %v2472 = vadd.f32 0.0, %v2471
  %v2473 = vpop.f32.mrf.mxu0
  %2474 = vmatprep.mubr.bf16.mxu0 0
  %2475 = vmatmul.mubr.bf16.gmra.mxu0 %v2396
  %v2476 = vpop.f32.mrf.mxu0
  %v2477 = vadd.f32 0.0, %v2476
  %v2478 = vpop.f32.mrf.mxu0
  %v2479 = vpop.f32.mrf.mxu0
  %v2480 = vadd.f32 0.0, %v2479
  %v2481 = vpop.f32.mrf.mxu0
  %2482 = vmatprep.mubr.bf16.mxu0 0
  %2483 = vmatmul.mubr.bf16.gmra.mxu0 %v2399
  %v2484 = vpop.f32.mrf.mxu0
  %v2485 = vadd.f32 0.0, %v2484
  %v2486 = vpop.f32.mrf.mxu0
  %v2487 = vpop.f32.mrf.mxu0
  %v2488 = vadd.f32 0.0, %v2487
  %v2489 = vpop.f32.mrf.mxu0
  %2490 = vmatprep.mubr.bf16.mxu0 0
  %2491 = vmatmul.mubr.bf16.gmra.mxu0 %v2402
  %v2492 = vpop.f32.mrf.mxu0
  %v2493 = vadd.f32 0.0, %v2492
  %v2494 = vpop.f32.mrf.mxu0
  %v2495 = vpop.f32.mrf.mxu0
  %v2496 = vadd.f32 0.0, %v2495
  %v2497 = vpop.f32.mrf.mxu0
  %2498 = vmatprep.mubr.bf16.mxu0 0
  %2499 = vmatmul.mubr.bf16.gmra.mxu0 %v2405
  %v2500 = vpop.f32.mrf.mxu0
  %v2501 = vadd.f32 0.0, %v2500
  %v2502 = vpop.f32.mrf.mxu0
  %v2503 = vpop.f32.mrf.mxu0
  %v2504 = vadd.f32 0.0, %v2503
  %v2505 = vpop.f32.mrf.mxu0
  %2506 = vdwg.mxu0
  %v2507 = vadd.f32 %v2295, %v2445
  %v2508 = vadd.f32 %v2298, %v2448
  %v2509 = vadd.f32 %v2303, %v2453
  %v2510 = vadd.f32 %v2306, %v2456
  %v2511 = vadd.f32 %v2311, %v2461
  %v2512 = vadd.f32 %v2314, %v2464
  %v2513 = vadd.f32 %v2319, %v2469
  %v2514 = vadd.f32 %v2322, %v2472
  %v2515 = vadd.f32 %v2327, %v2477
  %v2516 = vadd.f32 %v2330, %v2480
  %v2517 = vadd.f32 %v2335, %v2485
  %v2518 = vadd.f32 %v2338, %v2488
  %v2519 = vadd.f32 %v2343, %v2493
  %v2520 = vadd.f32 %v2346, %v2496
  %v2521 = vadd.f32 %v2351, %v2501
  %v2522 = vadd.f32 %v2354, %v2504
  %v2523 = vld [vmem:[%s168] sm:$0xff]
  %v2524 = vld [vmem:[%s168 + $0x10] sm:$0xff]
  %v2525 = vld [vmem:[%s168 + $0x20] sm:$0xff]
  %v2526 = vld [vmem:[%s168 + $0x30] sm:$0xff]
  %v2527 = vld [vmem:[%s168 + $0x40] sm:$0xff]
  %v2528 = vld [vmem:[%s168 + $0x50] sm:$0xff]
  %v2529 = vld [vmem:[%s168 + $0x60] sm:$0xff]
  %v2530 = vld [vmem:[%s168 + $0x70] sm:$0xff]
  %v2531 = vld [vmem:[%s168 + $0xa0] sm:$0xff]
  %v2532 = vld [vmem:[%s168 + $0xb0] sm:$0xff]
  %v2533 = vld [vmem:[%s168 + $0xc0] sm:$0xff]
  %v2534 = vld [vmem:[%s168 + $0xd0] sm:$0xff]
  %v2535 = vld [vmem:[%s168 + $0xe0] sm:$0xff]
  %v2536 = vld [vmem:[%s168 + $0xf0] sm:$0xff]
  %v2537 = vld [vmem:[%s168 + $0x100] sm:$0xff]
  %v2538 = vld [vmem:[%s168 + $0x110] sm:$0xff]
  %v2539 = vpack.c.bf16 %v2524, %v2523
  %v2540 = vpack.c.bf16 %v2526, %v2525
  %v2541 = vpack.c.bf16 %v2528, %v2527
  %v2542 = vpack.c.bf16 %v2530, %v2529
  %v2543 = vpack.c.bf16 %v2532, %v2531
  %v2544 = vpack.c.bf16 %v2534, %v2533
  %v2545 = vpack.c.bf16 %v2536, %v2535
  %v2546 = vpack.c.bf16 %v2538, %v2537
  %s2547 = scalar_lea.vmem %s4, 6
  %v2548 = vld [vmem:[%s2547] sm:$0x3]
  %v2550 = vsel %vm48, %v2539, 0
  %v2553 = vsel %vm48, %v2540, 0
  %v2556 = vsel %vm48, %v2541, 0
  %v2559 = vsel %vm48, %v2542, 0
  %v2562 = vsel %vm48, %v2543, 0
  %v2565 = vsel %vm48, %v2544, 0
  %v2568 = vsel %vm48, %v2545, 0
  %v2571 = vsel %vm48, %v2546, 0
  %v2574 = vsel %vm260, %v2548, 0
  %2576 = vmatprep.subr.bf16.mxu0 0
  %2577 = vmatpush1.bf16.msra.mxu0 0
  %2578 = vmatprep.subr.bf16.mxu0 0
  %2579 = vmatpush1.bf16.msra.mxu0 0
  %2580 = vmatprep.subr.bf16.mxu0 0
  %2581 = vmatpush1.bf16.msra.mxu0 0
  %2582 = vmatprep.subr.bf16.mxu0 0
  %2583 = vmatpush1.bf16.msra.mxu0 0
  %2584 = vmatprep.subr.bf16.mxu0 0
  %2585 = vmatpush1.bf16.msra.mxu0 0
  %2586 = vmatprep.subr.bf16.mxu0 0
  %2587 = vmatpush1.bf16.msra.mxu0 0
  %2588 = vmatprep.subr.bf16.mxu0 0
  %2589 = vmatpush1.bf16.msra.mxu0 0
  %2590 = vmatprep.subr.bf16.mxu0 0
  %2591 = vmatpush1.bf16.msra.mxu0 %v2574
  %2592 = vmatprep.subr.bf16.mxu0 0
  %2593 = vmatpush2.bf16.msra.mxu0 0
  %2594 = vmatprep.subr.bf16.mxu0 0
  %2595 = vmatpush2.bf16.msra.mxu0 0
  %2596 = vmatprep.subr.bf16.mxu0 0
  %2597 = vmatpush2.bf16.msra.mxu0 0
  %2598 = vmatprep.subr.bf16.mxu0 0
  %2599 = vmatpush2.bf16.msra.mxu0 0
  %2600 = vmatprep.subr.bf16.mxu0 0
  %2601 = vmatpush2.bf16.msra.mxu0 0
  %2602 = vmatprep.subr.bf16.mxu0 0
  %2603 = vmatpush2.bf16.msra.mxu0 0
  %2604 = vmatprep.subr.bf16.mxu0 0
  %2605 = vmatpush2.bf16.msra.mxu0 0
  %2606 = vmatprep.subr.bf16.mxu0 0
  %2607 = vmatpush2.bf16.msra.mxu0 0
  %2608 = vmatprep.mubr.bf16.mxu0 0
  %2609 = vmatmul.mubr.bf16.gmra.mxu0 %v2550
  %v2610 = vpop.f32.mrf.mxu0
  %v2611 = vadd.f32 0.0, %v2610
  %v2612 = vpop.f32.mrf.mxu0
  %v2613 = vpop.f32.mrf.mxu0
  %v2614 = vadd.f32 0.0, %v2613
  %v2615 = vpop.f32.mrf.mxu0
  %2616 = vmatprep.mubr.bf16.mxu0 0
  %2617 = vmatmul.mubr.bf16.gmra.mxu0 %v2553
  %v2618 = vpop.f32.mrf.mxu0
  %v2619 = vadd.f32 0.0, %v2618
  %v2620 = vpop.f32.mrf.mxu0
  %v2621 = vpop.f32.mrf.mxu0
  %v2622 = vadd.f32 0.0, %v2621
  %v2623 = vpop.f32.mrf.mxu0
  %2624 = vmatprep.mubr.bf16.mxu0 0
  %2625 = vmatmul.mubr.bf16.gmra.mxu0 %v2556
  %v2626 = vpop.f32.mrf.mxu0
  %v2627 = vadd.f32 0.0, %v2626
  %v2628 = vpop.f32.mrf.mxu0
  %v2629 = vpop.f32.mrf.mxu0
  %v2630 = vadd.f32 0.0, %v2629
  %v2631 = vpop.f32.mrf.mxu0
  %2632 = vmatprep.mubr.bf16.mxu0 0
  %2633 = vmatmul.mubr.bf16.gmra.mxu0 %v2559
  %v2634 = vpop.f32.mrf.mxu0
  %v2635 = vadd.f32 0.0, %v2634
  %v2636 = vpop.f32.mrf.mxu0
  %v2637 = vpop.f32.mrf.mxu0
  %v2638 = vadd.f32 0.0, %v2637
  %v2639 = vpop.f32.mrf.mxu0
  %2640 = vmatprep.mubr.bf16.mxu0 0
  %2641 = vmatmul.mubr.bf16.gmra.mxu0 %v2562
  %v2642 = vpop.f32.mrf.mxu0
  %v2643 = vadd.f32 0.0, %v2642
  %v2644 = vpop.f32.mrf.mxu0
  %v2645 = vpop.f32.mrf.mxu0
  %v2646 = vadd.f32 0.0, %v2645
  %v2647 = vpop.f32.mrf.mxu0
  %2648 = vmatprep.mubr.bf16.mxu0 0
  %2649 = vmatmul.mubr.bf16.gmra.mxu0 %v2565
  %v2650 = vpop.f32.mrf.mxu0
  %v2651 = vadd.f32 0.0, %v2650
  %v2652 = vpop.f32.mrf.mxu0
  %v2653 = vpop.f32.mrf.mxu0
  %v2654 = vadd.f32 0.0, %v2653
  %v2655 = vpop.f32.mrf.mxu0
  %2656 = vmatprep.mubr.bf16.mxu0 0
  %2657 = vmatmul.mubr.bf16.gmra.mxu0 %v2568
  %v2658 = vpop.f32.mrf.mxu0
  %v2659 = vadd.f32 0.0, %v2658
  %v2660 = vpop.f32.mrf.mxu0
  %v2661 = vpop.f32.mrf.mxu0
  %v2662 = vadd.f32 0.0, %v2661
  %v2663 = vpop.f32.mrf.mxu0
  %2664 = vmatprep.mubr.bf16.mxu0 0
  %2665 = vmatmul.mubr.bf16.gmra.mxu0 %v2571
  %v2666 = vpop.f32.mrf.mxu0
  %v2667 = vadd.f32 0.0, %v2666
  %v2668 = vpop.f32.mrf.mxu0
  %v2669 = vpop.f32.mrf.mxu0
  %v2670 = vadd.f32 0.0, %v2669
  %v2671 = vpop.f32.mrf.mxu0
  %2672 = vdwg.mxu0
  %v2673 = vadd.f32 %v2507, %v2611
  %v2674 = vadd.f32 %v2508, %v2614
  %v2675 = vadd.f32 %v2509, %v2619
  %v2676 = vadd.f32 %v2510, %v2622
  %v2677 = vadd.f32 %v2511, %v2627
  %v2678 = vadd.f32 %v2512, %v2630
  %v2679 = vadd.f32 %v2513, %v2635
  %v2680 = vadd.f32 %v2514, %v2638
  %v2681 = vadd.f32 %v2515, %v2643
  %v2682 = vadd.f32 %v2516, %v2646
  %v2683 = vadd.f32 %v2517, %v2651
  %v2684 = vadd.f32 %v2518, %v2654
  %v2685 = vadd.f32 %v2519, %v2659
  %v2686 = vadd.f32 %v2520, %v2662
  %v2687 = vadd.f32 %v2521, %v2667
  %v2688 = vadd.f32 %v2522, %v2670
  %v2689 = vld [vmem:[%s168 + $0x1] sm:$0xff]
  %v2690 = vld [vmem:[%s168 + $0x11] sm:$0xff]
  %v2691 = vld [vmem:[%s168 + $0x21] sm:$0xff]
  %v2692 = vld [vmem:[%s168 + $0x31] sm:$0xff]
  %v2693 = vld [vmem:[%s168 + $0x41] sm:$0xff]
  %v2694 = vld [vmem:[%s168 + $0x51] sm:$0xff]
  %v2695 = vld [vmem:[%s168 + $0x61] sm:$0xff]
  %v2696 = vld [vmem:[%s168 + $0x71] sm:$0xff]
  %v2697 = vld [vmem:[%s168 + $0xa1] sm:$0xff]
  %v2698 = vld [vmem:[%s168 + $0xb1] sm:$0xff]
  %v2699 = vld [vmem:[%s168 + $0xc1] sm:$0xff]
  %v2700 = vld [vmem:[%s168 + $0xd1] sm:$0xff]
  %v2701 = vld [vmem:[%s168 + $0xe1] sm:$0xff]
  %v2702 = vld [vmem:[%s168 + $0xf1] sm:$0xff]
  %v2703 = vld [vmem:[%s168 + $0x101] sm:$0xff]
  %v2704 = vld [vmem:[%s168 + $0x111] sm:$0xff]
  %v2705 = vpack.c.bf16 %v2690, %v2689
  %v2706 = vpack.c.bf16 %v2692, %v2691
  %v2707 = vpack.c.bf16 %v2694, %v2693
  %v2708 = vpack.c.bf16 %v2696, %v2695
  %v2709 = vpack.c.bf16 %v2698, %v2697
  %v2710 = vpack.c.bf16 %v2700, %v2699
  %v2711 = vpack.c.bf16 %v2702, %v2701
  %v2712 = vpack.c.bf16 %v2704, %v2703
  %s2713 = scalar_lea.vmem %s4, 8
  %v2714 = vld [vmem:[%s2713] sm:$0x3]
  %v2716 = vsel %vm48, %v2705, 0
  %v2719 = vsel %vm48, %v2706, 0
  %v2722 = vsel %vm48, %v2707, 0
  %v2725 = vsel %vm48, %v2708, 0
  %v2728 = vsel %vm48, %v2709, 0
  %v2731 = vsel %vm48, %v2710, 0
  %v2734 = vsel %vm48, %v2711, 0
  %v2737 = vsel %vm48, %v2712, 0
  %v2740 = vsel %vm260, %v2714, 0
  %2742 = vmatprep.subr.bf16.mxu0 0
  %2743 = vmatpush1.bf16.msra.mxu0 0
  %2744 = vmatprep.subr.bf16.mxu0 0
  %2745 = vmatpush1.bf16.msra.mxu0 0
  %2746 = vmatprep.subr.bf16.mxu0 0
  %2747 = vmatpush1.bf16.msra.mxu0 0
  %2748 = vmatprep.subr.bf16.mxu0 0
  %2749 = vmatpush1.bf16.msra.mxu0 0
  %2750 = vmatprep.subr.bf16.mxu0 0
  %2751 = vmatpush1.bf16.msra.mxu0 0
  %2752 = vmatprep.subr.bf16.mxu0 0
  %2753 = vmatpush1.bf16.msra.mxu0 0
  %2754 = vmatprep.subr.bf16.mxu0 0
  %2755 = vmatpush1.bf16.msra.mxu0 0
  %2756 = vmatprep.subr.bf16.mxu0 0
  %2757 = vmatpush1.bf16.msra.mxu0 %v2740
  %2758 = vmatprep.subr.bf16.mxu0 0
  %2759 = vmatpush2.bf16.msra.mxu0 0
  %2760 = vmatprep.subr.bf16.mxu0 0
  %2761 = vmatpush2.bf16.msra.mxu0 0
  %2762 = vmatprep.subr.bf16.mxu0 0
  %2763 = vmatpush2.bf16.msra.mxu0 0
  %2764 = vmatprep.subr.bf16.mxu0 0
  %2765 = vmatpush2.bf16.msra.mxu0 0
  %2766 = vmatprep.subr.bf16.mxu0 0
  %2767 = vmatpush2.bf16.msra.mxu0 0
  %2768 = vmatprep.subr.bf16.mxu0 0
  %2769 = vmatpush2.bf16.msra.mxu0 0
  %2770 = vmatprep.subr.bf16.mxu0 0
  %2771 = vmatpush2.bf16.msra.mxu0 0
  %2772 = vmatprep.subr.bf16.mxu0 0
  %2773 = vmatpush2.bf16.msra.mxu0 0
  %2774 = vmatprep.mubr.bf16.mxu0 0
  %2775 = vmatmul.mubr.bf16.gmra.mxu0 %v2716
  %v2776 = vpop.f32.mrf.mxu0
  %v2777 = vadd.f32 0.0, %v2776
  %v2778 = vpop.f32.mrf.mxu0
  %v2779 = vpop.f32.mrf.mxu0
  %v2780 = vadd.f32 0.0, %v2779
  %v2781 = vpop.f32.mrf.mxu0
  %2782 = vmatprep.mubr.bf16.mxu0 0
  %2783 = vmatmul.mubr.bf16.gmra.mxu0 %v2719
  %v2784 = vpop.f32.mrf.mxu0
  %v2785 = vadd.f32 0.0, %v2784
  %v2786 = vpop.f32.mrf.mxu0
  %v2787 = vpop.f32.mrf.mxu0
  %v2788 = vadd.f32 0.0, %v2787
  %v2789 = vpop.f32.mrf.mxu0
  %2790 = vmatprep.mubr.bf16.mxu0 0
  %2791 = vmatmul.mubr.bf16.gmra.mxu0 %v2722
  %v2792 = vpop.f32.mrf.mxu0
  %v2793 = vadd.f32 0.0, %v2792
  %v2794 = vpop.f32.mrf.mxu0
  %v2795 = vpop.f32.mrf.mxu0
  %v2796 = vadd.f32 0.0, %v2795
  %v2797 = vpop.f32.mrf.mxu0
  %2798 = vmatprep.mubr.bf16.mxu0 0
  %2799 = vmatmul.mubr.bf16.gmra.mxu0 %v2725
  %v2800 = vpop.f32.mrf.mxu0
  %v2801 = vadd.f32 0.0, %v2800
  %v2802 = vpop.f32.mrf.mxu0
  %v2803 = vpop.f32.mrf.mxu0
  %v2804 = vadd.f32 0.0, %v2803
  %v2805 = vpop.f32.mrf.mxu0
  %2806 = vmatprep.mubr.bf16.mxu0 0
  %2807 = vmatmul.mubr.bf16.gmra.mxu0 %v2728
  %v2808 = vpop.f32.mrf.mxu0
  %v2809 = vadd.f32 0.0, %v2808
  %v2810 = vpop.f32.mrf.mxu0
  %v2811 = vpop.f32.mrf.mxu0
  %v2812 = vadd.f32 0.0, %v2811
  %v2813 = vpop.f32.mrf.mxu0
  %2814 = vmatprep.mubr.bf16.mxu0 0
  %2815 = vmatmul.mubr.bf16.gmra.mxu0 %v2731
  %v2816 = vpop.f32.mrf.mxu0
  %v2817 = vadd.f32 0.0, %v2816
  %v2818 = vpop.f32.mrf.mxu0
  %v2819 = vpop.f32.mrf.mxu0
  %v2820 = vadd.f32 0.0, %v2819
  %v2821 = vpop.f32.mrf.mxu0
  %2822 = vmatprep.mubr.bf16.mxu0 0
  %2823 = vmatmul.mubr.bf16.gmra.mxu0 %v2734
  %v2824 = vpop.f32.mrf.mxu0
  %v2825 = vadd.f32 0.0, %v2824
  %v2826 = vpop.f32.mrf.mxu0
  %v2827 = vpop.f32.mrf.mxu0
  %v2828 = vadd.f32 0.0, %v2827
  %v2829 = vpop.f32.mrf.mxu0
  %2830 = vmatprep.mubr.bf16.mxu0 0
  %2831 = vmatmul.mubr.bf16.gmra.mxu0 %v2737
  %v2832 = vpop.f32.mrf.mxu0
  %v2833 = vadd.f32 0.0, %v2832
  %v2834 = vpop.f32.mrf.mxu0
  %v2835 = vpop.f32.mrf.mxu0
  %v2836 = vadd.f32 0.0, %v2835
  %v2837 = vpop.f32.mrf.mxu0
  %2838 = vdwg.mxu0
  %v2839 = vadd.f32 %v2673, %v2777
  %v2840 = vadd.f32 %v2674, %v2780
  %v2841 = vadd.f32 %v2675, %v2785
  %v2842 = vadd.f32 %v2676, %v2788
  %v2843 = vadd.f32 %v2677, %v2793
  %v2844 = vadd.f32 %v2678, %v2796
  %v2845 = vadd.f32 %v2679, %v2801
  %v2846 = vadd.f32 %v2680, %v2804
  %v2847 = vadd.f32 %v2681, %v2809
  %v2848 = vadd.f32 %v2682, %v2812
  %v2849 = vadd.f32 %v2683, %v2817
  %v2850 = vadd.f32 %v2684, %v2820
  %v2851 = vadd.f32 %v2685, %v2825
  %v2852 = vadd.f32 %v2686, %v2828
  %v2853 = vadd.f32 %v2687, %v2833
  %v2854 = vadd.f32 %v2688, %v2836
  %v2855 = vld [vmem:[%s168 + $0x2] sm:$0xff]
  %v2856 = vld [vmem:[%s168 + $0x12] sm:$0xff]
  %v2857 = vld [vmem:[%s168 + $0x22] sm:$0xff]
  %v2858 = vld [vmem:[%s168 + $0x32] sm:$0xff]
  %v2859 = vld [vmem:[%s168 + $0x42] sm:$0xff]
  %v2860 = vld [vmem:[%s168 + $0x52] sm:$0xff]
  %v2861 = vld [vmem:[%s168 + $0x62] sm:$0xff]
  %v2862 = vld [vmem:[%s168 + $0x72] sm:$0xff]
  %v2863 = vld [vmem:[%s168 + $0xa2] sm:$0xff]
  %v2864 = vld [vmem:[%s168 + $0xb2] sm:$0xff]
  %v2865 = vld [vmem:[%s168 + $0xc2] sm:$0xff]
  %v2866 = vld [vmem:[%s168 + $0xd2] sm:$0xff]
  %v2867 = vld [vmem:[%s168 + $0xe2] sm:$0xff]
  %v2868 = vld [vmem:[%s168 + $0xf2] sm:$0xff]
  %v2869 = vld [vmem:[%s168 + $0x102] sm:$0xff]
  %v2870 = vld [vmem:[%s168 + $0x112] sm:$0xff]
  %v2871 = vpack.c.bf16 %v2856, %v2855
  %v2872 = vpack.c.bf16 %v2858, %v2857
  %v2873 = vpack.c.bf16 %v2860, %v2859
  %v2874 = vpack.c.bf16 %v2862, %v2861
  %v2875 = vpack.c.bf16 %v2864, %v2863
  %v2876 = vpack.c.bf16 %v2866, %v2865
  %v2877 = vpack.c.bf16 %v2868, %v2867
  %v2878 = vpack.c.bf16 %v2870, %v2869
  %s2879 = scalar_lea.vmem %s4, 10
  %v2880 = vld [vmem:[%s2879] sm:$0x3]
  %v2882 = vsel %vm48, %v2871, 0
  %v2885 = vsel %vm48, %v2872, 0
  %v2888 = vsel %vm48, %v2873, 0
  %v2891 = vsel %vm48, %v2874, 0
  %v2894 = vsel %vm48, %v2875, 0
  %v2897 = vsel %vm48, %v2876, 0
  %v2900 = vsel %vm48, %v2877, 0
  %v2903 = vsel %vm48, %v2878, 0
  %v2906 = vsel %vm260, %v2880, 0
  %2908 = vmatprep.subr.bf16.mxu0 0
  %2909 = vmatpush1.bf16.msra.mxu0 0
  %2910 = vmatprep.subr.bf16.mxu0 0
  %2911 = vmatpush1.bf16.msra.mxu0 0
  %2912 = vmatprep.subr.bf16.mxu0 0
  %2913 = vmatpush1.bf16.msra.mxu0 0
  %2914 = vmatprep.subr.bf16.mxu0 0
  %2915 = vmatpush1.bf16.msra.mxu0 0
  %2916 = vmatprep.subr.bf16.mxu0 0
  %2917 = vmatpush1.bf16.msra.mxu0 0
  %2918 = vmatprep.subr.bf16.mxu0 0
  %2919 = vmatpush1.bf16.msra.mxu0 0
  %2920 = vmatprep.subr.bf16.mxu0 0
  %2921 = vmatpush1.bf16.msra.mxu0 0
  %2922 = vmatprep.subr.bf16.mxu0 0
  %2923 = vmatpush1.bf16.msra.mxu0 %v2906
  %2924 = vmatprep.subr.bf16.mxu0 0
  %2925 = vmatpush2.bf16.msra.mxu0 0
  %2926 = vmatprep.subr.bf16.mxu0 0
  %2927 = vmatpush2.bf16.msra.mxu0 0
  %2928 = vmatprep.subr.bf16.mxu0 0
  %2929 = vmatpush2.bf16.msra.mxu0 0
  %2930 = vmatprep.subr.bf16.mxu0 0
  %2931 = vmatpush2.bf16.msra.mxu0 0
  %2932 = vmatprep.subr.bf16.mxu0 0
  %2933 = vmatpush2.bf16.msra.mxu0 0
  %2934 = vmatprep.subr.bf16.mxu0 0
  %2935 = vmatpush2.bf16.msra.mxu0 0
  %2936 = vmatprep.subr.bf16.mxu0 0
  %2937 = vmatpush2.bf16.msra.mxu0 0
  %2938 = vmatprep.subr.bf16.mxu0 0
  %2939 = vmatpush2.bf16.msra.mxu0 0
  %2940 = vmatprep.mubr.bf16.mxu0 0
  %2941 = vmatmul.mubr.bf16.gmra.mxu0 %v2882
  %v2942 = vpop.f32.mrf.mxu0
  %v2943 = vadd.f32 0.0, %v2942
  %v2944 = vpop.f32.mrf.mxu0
  %v2945 = vpop.f32.mrf.mxu0
  %v2946 = vadd.f32 0.0, %v2945
  %v2947 = vpop.f32.mrf.mxu0
  %2948 = vmatprep.mubr.bf16.mxu0 0
  %2949 = vmatmul.mubr.bf16.gmra.mxu0 %v2885
  %v2950 = vpop.f32.mrf.mxu0
  %v2951 = vadd.f32 0.0, %v2950
  %v2952 = vpop.f32.mrf.mxu0
  %v2953 = vpop.f32.mrf.mxu0
  %v2954 = vadd.f32 0.0, %v2953
  %v2955 = vpop.f32.mrf.mxu0
  %2956 = vmatprep.mubr.bf16.mxu0 0
  %2957 = vmatmul.mubr.bf16.gmra.mxu0 %v2888
  %v2958 = vpop.f32.mrf.mxu0
  %v2959 = vadd.f32 0.0, %v2958
  %v2960 = vpop.f32.mrf.mxu0
  %v2961 = vpop.f32.mrf.mxu0
  %v2962 = vadd.f32 0.0, %v2961
  %v2963 = vpop.f32.mrf.mxu0
  %2964 = vmatprep.mubr.bf16.mxu0 0
  %2965 = vmatmul.mubr.bf16.gmra.mxu0 %v2891
  %v2966 = vpop.f32.mrf.mxu0
  %v2967 = vadd.f32 0.0, %v2966
  %v2968 = vpop.f32.mrf.mxu0
  %v2969 = vpop.f32.mrf.mxu0
  %v2970 = vadd.f32 0.0, %v2969
  %v2971 = vpop.f32.mrf.mxu0
  %2972 = vmatprep.mubr.bf16.mxu0 0
  %2973 = vmatmul.mubr.bf16.gmra.mxu0 %v2894
  %v2974 = vpop.f32.mrf.mxu0
  %v2975 = vadd.f32 0.0, %v2974
  %v2976 = vpop.f32.mrf.mxu0
  %v2977 = vpop.f32.mrf.mxu0
  %v2978 = vadd.f32 0.0, %v2977
  %v2979 = vpop.f32.mrf.mxu0
  %2980 = vmatprep.mubr.bf16.mxu0 0
  %2981 = vmatmul.mubr.bf16.gmra.mxu0 %v2897
  %v2982 = vpop.f32.mrf.mxu0
  %v2983 = vadd.f32 0.0, %v2982
  %v2984 = vpop.f32.mrf.mxu0
  %v2985 = vpop.f32.mrf.mxu0
  %v2986 = vadd.f32 0.0, %v2985
  %v2987 = vpop.f32.mrf.mxu0
  %2988 = vmatprep.mubr.bf16.mxu0 0
  %2989 = vmatmul.mubr.bf16.gmra.mxu0 %v2900
  %v2990 = vpop.f32.mrf.mxu0
  %v2991 = vadd.f32 0.0, %v2990
  %v2992 = vpop.f32.mrf.mxu0
  %v2993 = vpop.f32.mrf.mxu0
  %v2994 = vadd.f32 0.0, %v2993
  %v2995 = vpop.f32.mrf.mxu0
  %2996 = vmatprep.mubr.bf16.mxu0 0
  %2997 = vmatmul.mubr.bf16.gmra.mxu0 %v2903
  %v2998 = vpop.f32.mrf.mxu0
  %v2999 = vadd.f32 0.0, %v2998
  %v3000 = vpop.f32.mrf.mxu0
  %v3001 = vpop.f32.mrf.mxu0
  %v3002 = vadd.f32 0.0, %v3001
  %v3003 = vpop.f32.mrf.mxu0
  %3004 = vdwg.mxu0
  %v3005 = vadd.f32 %v2839, %v2943
  %v3006 = vadd.f32 %v2840, %v2946
  %v3007 = vadd.f32 %v2841, %v2951
  %v3008 = vadd.f32 %v2842, %v2954
  %v3009 = vadd.f32 %v2843, %v2959
  %v3010 = vadd.f32 %v2844, %v2962
  %v3011 = vadd.f32 %v2845, %v2967
  %v3012 = vadd.f32 %v2846, %v2970
  %v3013 = vadd.f32 %v2847, %v2975
  %v3014 = vadd.f32 %v2848, %v2978
  %v3015 = vadd.f32 %v2849, %v2983
  %v3016 = vadd.f32 %v2850, %v2986
  %v3017 = vadd.f32 %v2851, %v2991
  %v3018 = vadd.f32 %v2852, %v2994
  %v3019 = vadd.f32 %v2853, %v2999
  %v3020 = vadd.f32 %v2854, %v3002
  %v3021 = vld [vmem:[%s1149] sm:$0xff]
  %v3022 = vld [vmem:[%s1149 + $0x10] sm:$0xff]
  %v3023 = vld [vmem:[%s1149 + $0x20] sm:$0xff]
  %v3024 = vld [vmem:[%s1149 + $0x30] sm:$0xff]
  %v3025 = vld [vmem:[%s1149 + $0x40] sm:$0xff]
  %v3026 = vld [vmem:[%s1149 + $0x50] sm:$0xff]
  %v3027 = vld [vmem:[%s1149 + $0x60] sm:$0xff]
  %v3028 = vld [vmem:[%s1149 + $0x70] sm:$0xff]
  %v3029 = vld [vmem:[%s1149 + $0xa0] sm:$0xff]
  %v3030 = vld [vmem:[%s1149 + $0xb0] sm:$0xff]
  %v3031 = vld [vmem:[%s1149 + $0xc0] sm:$0xff]
  %v3032 = vld [vmem:[%s1149 + $0xd0] sm:$0xff]
  %v3033 = vld [vmem:[%s1149 + $0xe0] sm:$0xff]
  %v3034 = vld [vmem:[%s1149 + $0xf0] sm:$0xff]
  %v3035 = vld [vmem:[%s1149 + $0x100] sm:$0xff]
  %v3036 = vld [vmem:[%s1149 + $0x110] sm:$0xff]
  %v3037 = vpack.c.bf16 %v3022, %v3021
  %v3038 = vpack.c.bf16 %v3024, %v3023
  %v3039 = vpack.c.bf16 %v3026, %v3025
  %v3040 = vpack.c.bf16 %v3028, %v3027
  %v3041 = vpack.c.bf16 %v3030, %v3029
  %v3042 = vpack.c.bf16 %v3032, %v3031
  %v3043 = vpack.c.bf16 %v3034, %v3033
  %v3044 = vpack.c.bf16 %v3036, %v3035
  %s3045 = scalar_lea.vmem %s4, 12
  %v3046 = vld [vmem:[%s3045] sm:$0x3]
  %v3048 = vsel %vm48, %v3037, 0
  %v3051 = vsel %vm48, %v3038, 0
  %v3054 = vsel %vm48, %v3039, 0
  %v3057 = vsel %vm48, %v3040, 0
  %v3060 = vsel %vm48, %v3041, 0
  %v3063 = vsel %vm48, %v3042, 0
  %v3066 = vsel %vm48, %v3043, 0
  %v3069 = vsel %vm48, %v3044, 0
  %v3072 = vsel %vm260, %v3046, 0
  %3074 = vmatprep.subr.bf16.mxu0 0
  %3075 = vmatpush1.bf16.msra.mxu0 0
  %3076 = vmatprep.subr.bf16.mxu0 0
  %3077 = vmatpush1.bf16.msra.mxu0 0
  %3078 = vmatprep.subr.bf16.mxu0 0
  %3079 = vmatpush1.bf16.msra.mxu0 0
  %3080 = vmatprep.subr.bf16.mxu0 0
  %3081 = vmatpush1.bf16.msra.mxu0 0
  %3082 = vmatprep.subr.bf16.mxu0 0
  %3083 = vmatpush1.bf16.msra.mxu0 0
  %3084 = vmatprep.subr.bf16.mxu0 0
  %3085 = vmatpush1.bf16.msra.mxu0 0
  %3086 = vmatprep.subr.bf16.mxu0 0
  %3087 = vmatpush1.bf16.msra.mxu0 0
  %3088 = vmatprep.subr.bf16.mxu0 0
  %3089 = vmatpush1.bf16.msra.mxu0 %v3072
  %3090 = vmatprep.subr.bf16.mxu0 0
  %3091 = vmatpush2.bf16.msra.mxu0 0
  %3092 = vmatprep.subr.bf16.mxu0 0
  %3093 = vmatpush2.bf16.msra.mxu0 0
  %3094 = vmatprep.subr.bf16.mxu0 0
  %3095 = vmatpush2.bf16.msra.mxu0 0
  %3096 = vmatprep.subr.bf16.mxu0 0
  %3097 = vmatpush2.bf16.msra.mxu0 0
  %3098 = vmatprep.subr.bf16.mxu0 0
  %3099 = vmatpush2.bf16.msra.mxu0 0
  %3100 = vmatprep.subr.bf16.mxu0 0
  %3101 = vmatpush2.bf16.msra.mxu0 0
  %3102 = vmatprep.subr.bf16.mxu0 0
  %3103 = vmatpush2.bf16.msra.mxu0 0
  %3104 = vmatprep.subr.bf16.mxu0 0
  %3105 = vmatpush2.bf16.msra.mxu0 0
  %3106 = vmatprep.mubr.bf16.mxu0 0
  %3107 = vmatmul.mubr.bf16.gmra.mxu0 %v3048
  %v3108 = vpop.f32.mrf.mxu0
  %v3109 = vadd.f32 0.0, %v3108
  %v3110 = vpop.f32.mrf.mxu0
  %v3111 = vpop.f32.mrf.mxu0
  %v3112 = vadd.f32 0.0, %v3111
  %v3113 = vpop.f32.mrf.mxu0
  %3114 = vmatprep.mubr.bf16.mxu0 0
  %3115 = vmatmul.mubr.bf16.gmra.mxu0 %v3051
  %v3116 = vpop.f32.mrf.mxu0
  %v3117 = vadd.f32 0.0, %v3116
  %v3118 = vpop.f32.mrf.mxu0
  %v3119 = vpop.f32.mrf.mxu0
  %v3120 = vadd.f32 0.0, %v3119
  %v3121 = vpop.f32.mrf.mxu0
  %3122 = vmatprep.mubr.bf16.mxu0 0
  %3123 = vmatmul.mubr.bf16.gmra.mxu0 %v3054
  %v3124 = vpop.f32.mrf.mxu0
  %v3125 = vadd.f32 0.0, %v3124
  %v3126 = vpop.f32.mrf.mxu0
  %v3127 = vpop.f32.mrf.mxu0
  %v3128 = vadd.f32 0.0, %v3127
  %v3129 = vpop.f32.mrf.mxu0
  %3130 = vmatprep.mubr.bf16.mxu0 0
  %3131 = vmatmul.mubr.bf16.gmra.mxu0 %v3057
  %v3132 = vpop.f32.mrf.mxu0
  %v3133 = vadd.f32 0.0, %v3132
  %v3134 = vpop.f32.mrf.mxu0
  %v3135 = vpop.f32.mrf.mxu0
  %v3136 = vadd.f32 0.0, %v3135
  %v3137 = vpop.f32.mrf.mxu0
  %3138 = vmatprep.mubr.bf16.mxu0 0
  %3139 = vmatmul.mubr.bf16.gmra.mxu0 %v3060
  %v3140 = vpop.f32.mrf.mxu0
  %v3141 = vadd.f32 0.0, %v3140
  %v3142 = vpop.f32.mrf.mxu0
  %v3143 = vpop.f32.mrf.mxu0
  %v3144 = vadd.f32 0.0, %v3143
  %v3145 = vpop.f32.mrf.mxu0
  %3146 = vmatprep.mubr.bf16.mxu0 0
  %3147 = vmatmul.mubr.bf16.gmra.mxu0 %v3063
  %v3148 = vpop.f32.mrf.mxu0
  %v3149 = vadd.f32 0.0, %v3148
  %v3150 = vpop.f32.mrf.mxu0
  %v3151 = vpop.f32.mrf.mxu0
  %v3152 = vadd.f32 0.0, %v3151
  %v3153 = vpop.f32.mrf.mxu0
  %3154 = vmatprep.mubr.bf16.mxu0 0
  %3155 = vmatmul.mubr.bf16.gmra.mxu0 %v3066
  %v3156 = vpop.f32.mrf.mxu0
  %v3157 = vadd.f32 0.0, %v3156
  %v3158 = vpop.f32.mrf.mxu0
  %v3159 = vpop.f32.mrf.mxu0
  %v3160 = vadd.f32 0.0, %v3159
  %v3161 = vpop.f32.mrf.mxu0
  %3162 = vmatprep.mubr.bf16.mxu0 0
  %3163 = vmatmul.mubr.bf16.gmra.mxu0 %v3069
  %v3164 = vpop.f32.mrf.mxu0
  %v3165 = vadd.f32 0.0, %v3164
  %v3166 = vpop.f32.mrf.mxu0
  %v3167 = vpop.f32.mrf.mxu0
  %v3168 = vadd.f32 0.0, %v3167
  %v3169 = vpop.f32.mrf.mxu0
  %3170 = vdwg.mxu0
  %v3171 = vadd.f32 %v3005, %v3109
  %v3172 = vadd.f32 %v3006, %v3112
  %v3173 = vadd.f32 %v3007, %v3117
  %v3174 = vadd.f32 %v3008, %v3120
  %v3175 = vadd.f32 %v3009, %v3125
  %v3176 = vadd.f32 %v3010, %v3128
  %v3177 = vadd.f32 %v3011, %v3133
  %v3178 = vadd.f32 %v3012, %v3136
  %v3179 = vadd.f32 %v3013, %v3141
  %v3180 = vadd.f32 %v3014, %v3144
  %v3181 = vadd.f32 %v3015, %v3149
  %v3182 = vadd.f32 %v3016, %v3152
  %v3183 = vadd.f32 %v3017, %v3157
  %v3184 = vadd.f32 %v3018, %v3160
  %v3185 = vadd.f32 %v3019, %v3165
  %v3186 = vadd.f32 %v3020, %v3168
  %v3187 = vld [vmem:[%s1149 + $0x1] sm:$0xff]
  %v3188 = vld [vmem:[%s1149 + $0x11] sm:$0xff]
  %v3189 = vld [vmem:[%s1149 + $0x21] sm:$0xff]
  %v3190 = vld [vmem:[%s1149 + $0x31] sm:$0xff]
  %v3191 = vld [vmem:[%s1149 + $0x41] sm:$0xff]
  %v3192 = vld [vmem:[%s1149 + $0x51] sm:$0xff]
  %v3193 = vld [vmem:[%s1149 + $0x61] sm:$0xff]
  %v3194 = vld [vmem:[%s1149 + $0x71] sm:$0xff]
  %v3195 = vld [vmem:[%s1149 + $0xa1] sm:$0xff]
  %v3196 = vld [vmem:[%s1149 + $0xb1] sm:$0xff]
  %v3197 = vld [vmem:[%s1149 + $0xc1] sm:$0xff]
  %v3198 = vld [vmem:[%s1149 + $0xd1] sm:$0xff]
  %v3199 = vld [vmem:[%s1149 + $0xe1] sm:$0xff]
  %v3200 = vld [vmem:[%s1149 + $0xf1] sm:$0xff]
  %v3201 = vld [vmem:[%s1149 + $0x101] sm:$0xff]
  %v3202 = vld [vmem:[%s1149 + $0x111] sm:$0xff]
  %v3203 = vpack.c.bf16 %v3188, %v3187
  %v3204 = vpack.c.bf16 %v3190, %v3189
  %v3205 = vpack.c.bf16 %v3192, %v3191
  %v3206 = vpack.c.bf16 %v3194, %v3193
  %v3207 = vpack.c.bf16 %v3196, %v3195
  %v3208 = vpack.c.bf16 %v3198, %v3197
  %v3209 = vpack.c.bf16 %v3200, %v3199
  %v3210 = vpack.c.bf16 %v3202, %v3201
  %s3211 = scalar_lea.vmem %s4, 14
  %v3212 = vld [vmem:[%s3211] sm:$0x3]
  %v3214 = vsel %vm48, %v3203, 0
  %v3217 = vsel %vm48, %v3204, 0
  %v3220 = vsel %vm48, %v3205, 0
  %v3223 = vsel %vm48, %v3206, 0
  %v3226 = vsel %vm48, %v3207, 0
  %v3229 = vsel %vm48, %v3208, 0
  %v3232 = vsel %vm48, %v3209, 0
  %v3235 = vsel %vm48, %v3210, 0
  %v3238 = vsel %vm260, %v3212, 0
  %3240 = vmatprep.subr.bf16.mxu0 0
  %3241 = vmatpush1.bf16.msra.mxu0 0
  %3242 = vmatprep.subr.bf16.mxu0 0
  %3243 = vmatpush1.bf16.msra.mxu0 0
  %3244 = vmatprep.subr.bf16.mxu0 0
  %3245 = vmatpush1.bf16.msra.mxu0 0
  %3246 = vmatprep.subr.bf16.mxu0 0
  %3247 = vmatpush1.bf16.msra.mxu0 0
  %3248 = vmatprep.subr.bf16.mxu0 0
  %3249 = vmatpush1.bf16.msra.mxu0 0
  %3250 = vmatprep.subr.bf16.mxu0 0
  %3251 = vmatpush1.bf16.msra.mxu0 0
  %3252 = vmatprep.subr.bf16.mxu0 0
  %3253 = vmatpush1.bf16.msra.mxu0 0
  %3254 = vmatprep.subr.bf16.mxu0 0
  %3255 = vmatpush1.bf16.msra.mxu0 %v3238
  %3256 = vmatprep.subr.bf16.mxu0 0
  %3257 = vmatpush2.bf16.msra.mxu0 0
  %3258 = vmatprep.subr.bf16.mxu0 0
  %3259 = vmatpush2.bf16.msra.mxu0 0
  %3260 = vmatprep.subr.bf16.mxu0 0
  %3261 = vmatpush2.bf16.msra.mxu0 0
  %3262 = vmatprep.subr.bf16.mxu0 0
  %3263 = vmatpush2.bf16.msra.mxu0 0
  %3264 = vmatprep.subr.bf16.mxu0 0
  %3265 = vmatpush2.bf16.msra.mxu0 0
  %3266 = vmatprep.subr.bf16.mxu0 0
  %3267 = vmatpush2.bf16.msra.mxu0 0
  %3268 = vmatprep.subr.bf16.mxu0 0
  %3269 = vmatpush2.bf16.msra.mxu0 0
  %3270 = vmatprep.subr.bf16.mxu0 0
  %3271 = vmatpush2.bf16.msra.mxu0 0
  %3272 = vmatprep.mubr.bf16.mxu0 0
  %3273 = vmatmul.mubr.bf16.gmra.mxu0 %v3214
  %v3274 = vpop.f32.mrf.mxu0
  %v3275 = vadd.f32 0.0, %v3274
  %v3276 = vpop.f32.mrf.mxu0
  %v3277 = vpop.f32.mrf.mxu0
  %v3278 = vadd.f32 0.0, %v3277
  %v3279 = vpop.f32.mrf.mxu0
  %3280 = vmatprep.mubr.bf16.mxu0 0
  %3281 = vmatmul.mubr.bf16.gmra.mxu0 %v3217
  %v3282 = vpop.f32.mrf.mxu0
  %v3283 = vadd.f32 0.0, %v3282
  %v3284 = vpop.f32.mrf.mxu0
  %v3285 = vpop.f32.mrf.mxu0
  %v3286 = vadd.f32 0.0, %v3285
  %v3287 = vpop.f32.mrf.mxu0
  %3288 = vmatprep.mubr.bf16.mxu0 0
  %3289 = vmatmul.mubr.bf16.gmra.mxu0 %v3220
  %v3290 = vpop.f32.mrf.mxu0
  %v3291 = vadd.f32 0.0, %v3290
  %v3292 = vpop.f32.mrf.mxu0
  %v3293 = vpop.f32.mrf.mxu0
  %v3294 = vadd.f32 0.0, %v3293
  %v3295 = vpop.f32.mrf.mxu0
  %3296 = vmatprep.mubr.bf16.mxu0 0
  %3297 = vmatmul.mubr.bf16.gmra.mxu0 %v3223
  %v3298 = vpop.f32.mrf.mxu0
  %v3299 = vadd.f32 0.0, %v3298
  %v3300 = vpop.f32.mrf.mxu0
  %v3301 = vpop.f32.mrf.mxu0
  %v3302 = vadd.f32 0.0, %v3301
  %v3303 = vpop.f32.mrf.mxu0
  %3304 = vmatprep.mubr.bf16.mxu0 0
  %3305 = vmatmul.mubr.bf16.gmra.mxu0 %v3226
  %v3306 = vpop.f32.mrf.mxu0
  %v3307 = vadd.f32 0.0, %v3306
  %v3308 = vpop.f32.mrf.mxu0
  %v3309 = vpop.f32.mrf.mxu0
  %v3310 = vadd.f32 0.0, %v3309
  %v3311 = vpop.f32.mrf.mxu0
  %3312 = vmatprep.mubr.bf16.mxu0 0
  %3313 = vmatmul.mubr.bf16.gmra.mxu0 %v3229
  %v3314 = vpop.f32.mrf.mxu0
  %v3315 = vadd.f32 0.0, %v3314
  %v3316 = vpop.f32.mrf.mxu0
  %v3317 = vpop.f32.mrf.mxu0
  %v3318 = vadd.f32 0.0, %v3317
  %v3319 = vpop.f32.mrf.mxu0
  %3320 = vmatprep.mubr.bf16.mxu0 0
  %3321 = vmatmul.mubr.bf16.gmra.mxu0 %v3232
  %v3322 = vpop.f32.mrf.mxu0
  %v3323 = vadd.f32 0.0, %v3322
  %v3324 = vpop.f32.mrf.mxu0
  %v3325 = vpop.f32.mrf.mxu0
  %v3326 = vadd.f32 0.0, %v3325
  %v3327 = vpop.f32.mrf.mxu0
  %3328 = vmatprep.mubr.bf16.mxu0 0
  %3329 = vmatmul.mubr.bf16.gmra.mxu0 %v3235
  %v3330 = vpop.f32.mrf.mxu0
  %v3331 = vadd.f32 0.0, %v3330
  %v3332 = vpop.f32.mrf.mxu0
  %v3333 = vpop.f32.mrf.mxu0
  %v3334 = vadd.f32 0.0, %v3333
  %v3335 = vpop.f32.mrf.mxu0
  %3336 = vdwg.mxu0
  %v3337 = vadd.f32 %v3171, %v3275
  %v3338 = vadd.f32 %v3172, %v3278
  %v3339 = vadd.f32 %v3173, %v3283
  %v3340 = vadd.f32 %v3174, %v3286
  %v3341 = vadd.f32 %v3175, %v3291
  %v3342 = vadd.f32 %v3176, %v3294
  %v3343 = vadd.f32 %v3177, %v3299
  %v3344 = vadd.f32 %v3178, %v3302
  %v3345 = vadd.f32 %v3179, %v3307
  %v3346 = vadd.f32 %v3180, %v3310
  %v3347 = vadd.f32 %v3181, %v3315
  %v3348 = vadd.f32 %v3182, %v3318
  %v3349 = vadd.f32 %v3183, %v3323
  %v3350 = vadd.f32 %v3184, %v3326
  %v3351 = vadd.f32 %v3185, %v3331
  %v3352 = vadd.f32 %v3186, %v3334
  %v3353 = vld [vmem:[%s1149 + $0x2] sm:$0xff]
  %v3354 = vld [vmem:[%s1149 + $0x12] sm:$0xff]
  %v3355 = vld [vmem:[%s1149 + $0x22] sm:$0xff]
  %v3356 = vld [vmem:[%s1149 + $0x32] sm:$0xff]
  %v3357 = vld [vmem:[%s1149 + $0x42] sm:$0xff]
  %v3358 = vld [vmem:[%s1149 + $0x52] sm:$0xff]
  %v3359 = vld [vmem:[%s1149 + $0x62] sm:$0xff]
  %v3360 = vld [vmem:[%s1149 + $0x72] sm:$0xff]
  %v3361 = vld [vmem:[%s1149 + $0xa2] sm:$0xff]
  %v3362 = vld [vmem:[%s1149 + $0xb2] sm:$0xff]
  %v3363 = vld [vmem:[%s1149 + $0xc2] sm:$0xff]
  %v3364 = vld [vmem:[%s1149 + $0xd2] sm:$0xff]
  %v3365 = vld [vmem:[%s1149 + $0xe2] sm:$0xff]
  %v3366 = vld [vmem:[%s1149 + $0xf2] sm:$0xff]
  %v3367 = vld [vmem:[%s1149 + $0x102] sm:$0xff]
  %v3368 = vld [vmem:[%s1149 + $0x112] sm:$0xff]
  %v3369 = vpack.c.bf16 %v3354, %v3353
  %v3370 = vpack.c.bf16 %v3356, %v3355
  %v3371 = vpack.c.bf16 %v3358, %v3357
  %v3372 = vpack.c.bf16 %v3360, %v3359
  %v3373 = vpack.c.bf16 %v3362, %v3361
  %v3374 = vpack.c.bf16 %v3364, %v3363
  %v3375 = vpack.c.bf16 %v3366, %v3365
  %v3376 = vpack.c.bf16 %v3368, %v3367
  %s3377 = scalar_lea.vmem %s4, 16
  %v3378 = vld [vmem:[%s3377] sm:$0x3]
  %v3380 = vsel %vm48, %v3369, 0
  %v3383 = vsel %vm48, %v3370, 0
  %v3386 = vsel %vm48, %v3371, 0
  %v3389 = vsel %vm48, %v3372, 0
  %v3392 = vsel %vm48, %v3373, 0
  %v3395 = vsel %vm48, %v3374, 0
  %v3398 = vsel %vm48, %v3375, 0
  %v3401 = vsel %vm48, %v3376, 0
  %v3404 = vsel %vm260, %v3378, 0
  %3406 = vmatprep.subr.bf16.mxu0 0
  %3407 = vmatpush1.bf16.msra.mxu0 0
  %3408 = vmatprep.subr.bf16.mxu0 0
  %3409 = vmatpush1.bf16.msra.mxu0 0
  %3410 = vmatprep.subr.bf16.mxu0 0
  %3411 = vmatpush1.bf16.msra.mxu0 0
  %3412 = vmatprep.subr.bf16.mxu0 0
  %3413 = vmatpush1.bf16.msra.mxu0 0
  %3414 = vmatprep.subr.bf16.mxu0 0
  %3415 = vmatpush1.bf16.msra.mxu0 0
  %3416 = vmatprep.subr.bf16.mxu0 0
  %3417 = vmatpush1.bf16.msra.mxu0 0
  %3418 = vmatprep.subr.bf16.mxu0 0
  %3419 = vmatpush1.bf16.msra.mxu0 0
  %3420 = vmatprep.subr.bf16.mxu0 0
  %3421 = vmatpush1.bf16.msra.mxu0 %v3404
  %3422 = vmatprep.subr.bf16.mxu0 0
  %3423 = vmatpush2.bf16.msra.mxu0 0
  %3424 = vmatprep.subr.bf16.mxu0 0
  %3425 = vmatpush2.bf16.msra.mxu0 0
  %3426 = vmatprep.subr.bf16.mxu0 0
  %3427 = vmatpush2.bf16.msra.mxu0 0
  %3428 = vmatprep.subr.bf16.mxu0 0
  %3429 = vmatpush2.bf16.msra.mxu0 0
  %3430 = vmatprep.subr.bf16.mxu0 0
  %3431 = vmatpush2.bf16.msra.mxu0 0
  %3432 = vmatprep.subr.bf16.mxu0 0
  %3433 = vmatpush2.bf16.msra.mxu0 0
  %3434 = vmatprep.subr.bf16.mxu0 0
  %3435 = vmatpush2.bf16.msra.mxu0 0
  %3436 = vmatprep.subr.bf16.mxu0 0
  %3437 = vmatpush2.bf16.msra.mxu0 0
  %3438 = vmatprep.mubr.bf16.mxu0 0
  %3439 = vmatmul.mubr.bf16.gmra.mxu0 %v3380
  %v3440 = vpop.f32.mrf.mxu0
  %v3441 = vadd.f32 0.0, %v3440
  %v3442 = vpop.f32.mrf.mxu0
  %v3443 = vpop.f32.mrf.mxu0
  %v3444 = vadd.f32 0.0, %v3443
  %v3445 = vpop.f32.mrf.mxu0
  %3446 = vmatprep.mubr.bf16.mxu0 0
  %3447 = vmatmul.mubr.bf16.gmra.mxu0 %v3383
  %v3448 = vpop.f32.mrf.mxu0
  %v3449 = vadd.f32 0.0, %v3448
  %v3450 = vpop.f32.mrf.mxu0
  %v3451 = vpop.f32.mrf.mxu0
  %v3452 = vadd.f32 0.0, %v3451
  %v3453 = vpop.f32.mrf.mxu0
  %3454 = vmatprep.mubr.bf16.mxu0 0
  %3455 = vmatmul.mubr.bf16.gmra.mxu0 %v3386
  %v3456 = vpop.f32.mrf.mxu0
  %v3457 = vadd.f32 0.0, %v3456
  %v3458 = vpop.f32.mrf.mxu0
  %v3459 = vpop.f32.mrf.mxu0
  %v3460 = vadd.f32 0.0, %v3459
  %v3461 = vpop.f32.mrf.mxu0
  %3462 = vmatprep.mubr.bf16.mxu0 0
  %3463 = vmatmul.mubr.bf16.gmra.mxu0 %v3389
  %v3464 = vpop.f32.mrf.mxu0
  %v3465 = vadd.f32 0.0, %v3464
  %v3466 = vpop.f32.mrf.mxu0
  %v3467 = vpop.f32.mrf.mxu0
  %v3468 = vadd.f32 0.0, %v3467
  %v3469 = vpop.f32.mrf.mxu0
  %3470 = vmatprep.mubr.bf16.mxu0 0
  %3471 = vmatmul.mubr.bf16.gmra.mxu0 %v3392
  %v3472 = vpop.f32.mrf.mxu0
  %v3473 = vadd.f32 0.0, %v3472
  %v3474 = vpop.f32.mrf.mxu0
  %v3475 = vpop.f32.mrf.mxu0
  %v3476 = vadd.f32 0.0, %v3475
  %v3477 = vpop.f32.mrf.mxu0
  %3478 = vmatprep.mubr.bf16.mxu0 0
  %3479 = vmatmul.mubr.bf16.gmra.mxu0 %v3395
  %v3480 = vpop.f32.mrf.mxu0
  %v3481 = vadd.f32 0.0, %v3480
  %v3482 = vpop.f32.mrf.mxu0
  %v3483 = vpop.f32.mrf.mxu0
  %v3484 = vadd.f32 0.0, %v3483
  %v3485 = vpop.f32.mrf.mxu0
  %3486 = vmatprep.mubr.bf16.mxu0 0
  %3487 = vmatmul.mubr.bf16.gmra.mxu0 %v3398
  %v3488 = vpop.f32.mrf.mxu0
  %v3489 = vadd.f32 0.0, %v3488
  %v3490 = vpop.f32.mrf.mxu0
  %v3491 = vpop.f32.mrf.mxu0
  %v3492 = vadd.f32 0.0, %v3491
  %v3493 = vpop.f32.mrf.mxu0
  %3494 = vmatprep.mubr.bf16.mxu0 0
  %3495 = vmatmul.mubr.bf16.gmra.mxu0 %v3401
  %v3496 = vpop.f32.mrf.mxu0
  %v3497 = vadd.f32 0.0, %v3496
  %v3498 = vpop.f32.mrf.mxu0
  %v3499 = vpop.f32.mrf.mxu0
  %v3500 = vadd.f32 0.0, %v3499
  %v3501 = vpop.f32.mrf.mxu0
  %3502 = vdwg.mxu0
  %v3503 = vadd.f32 %v3337, %v3441
  %v3504 = vadd.f32 %v3338, %v3444
  %v3505 = vadd.f32 %v3339, %v3449
  %v3506 = vadd.f32 %v3340, %v3452
  %v3507 = vadd.f32 %v3341, %v3457
  %v3508 = vadd.f32 %v3342, %v3460
  %v3509 = vadd.f32 %v3343, %v3465
  %v3510 = vadd.f32 %v3344, %v3468
  %v3511 = vadd.f32 %v3345, %v3473
  %v3512 = vadd.f32 %v3346, %v3476
  %v3513 = vadd.f32 %v3347, %v3481
  %v3514 = vadd.f32 %v3348, %v3484
  %v3515 = vadd.f32 %v3349, %v3489
  %v3516 = vadd.f32 %v3350, %v3492
  %v3517 = vadd.f32 %v3351, %v3497
  %v3518 = vadd.f32 %v3352, %v3500
  %v3519 = vsel %vm48, %v3503, 0.0
  %3520 = vadd.xlane.f32.xlu0 %v3519
  %v3521 = vpop.xlane.xlu0 %3520
  %v3522 = vsel %vm48, %v3504, 0.0
  %3523 = vadd.xlane.f32.xlu0 %v3522
  %v3524 = vpop.xlane.xlu0 %3523
  %v3525 = vsel %vm48, %v3505, 0.0
  %3526 = vadd.xlane.f32.xlu0 %v3525
  %v3527 = vpop.xlane.xlu0 %3526
  %v3528 = vsel %vm48, %v3506, 0.0
  %3529 = vadd.xlane.f32.xlu0 %v3528
  %v3530 = vpop.xlane.xlu0 %3529
  %v3531 = vsel %vm48, %v3507, 0.0
  %3532 = vadd.xlane.f32.xlu0 %v3531
  %v3533 = vpop.xlane.xlu0 %3532
  %v3534 = vsel %vm48, %v3508, 0.0
  %3535 = vadd.xlane.f32.xlu0 %v3534
  %v3536 = vpop.xlane.xlu0 %3535
  %v3537 = vsel %vm48, %v3509, 0.0
  %3538 = vadd.xlane.f32.xlu0 %v3537
  %v3539 = vpop.xlane.xlu0 %3538
  %v3540 = vsel %vm48, %v3510, 0.0
  %3541 = vadd.xlane.f32.xlu0 %v3540
  %v3542 = vpop.xlane.xlu0 %3541
  %v3543 = vsel %vm48, %v3511, 0.0
  %3544 = vadd.xlane.f32.xlu0 %v3543
  %v3545 = vpop.xlane.xlu0 %3544
  %v3546 = vsel %vm48, %v3512, 0.0
  %3547 = vadd.xlane.f32.xlu0 %v3546
  %v3548 = vpop.xlane.xlu0 %3547
  %v3549 = vsel %vm48, %v3513, 0.0
  %3550 = vadd.xlane.f32.xlu0 %v3549
  %v3551 = vpop.xlane.xlu0 %3550
  %v3552 = vsel %vm48, %v3514, 0.0
  %3553 = vadd.xlane.f32.xlu0 %v3552
  %v3554 = vpop.xlane.xlu0 %3553
  %v3555 = vsel %vm48, %v3515, 0.0
  %3556 = vadd.xlane.f32.xlu0 %v3555
  %v3557 = vpop.xlane.xlu0 %3556
  %v3558 = vsel %vm48, %v3516, 0.0
  %3559 = vadd.xlane.f32.xlu0 %v3558
  %v3560 = vpop.xlane.xlu0 %3559
  %v3561 = vsel %vm48, %v3517, 0.0
  %3562 = vadd.xlane.f32.xlu0 %v3561
  %v3563 = vpop.xlane.xlu0 %3562
  %v3564 = vsel %vm48, %v3518, 0.0
  %3565 = vadd.xlane.f32.xlu0 %v3564
  %v3566 = vpop.xlane.xlu0 %3565
  %v3567 = vadd.f32 %v3521, %v3524
  %v3568 = vadd.f32 %v3567, %v3527
  %v3569 = vadd.f32 %v3568, %v3530
  %v3570 = vadd.f32 %v3569, %v3533
  %v3571 = vadd.f32 %v3570, %v3536
  %v3572 = vadd.f32 %v3571, %v3539
  %v3573 = vadd.f32 %v3572, %v3542
  %v3574 = vrot.slane %v3573, 4
  %v3575 = vadd.f32 %v3573, %v3574
  %v3576 = vrot.slane %v3575, 2
  %v3577 = vadd.f32 %v3575, %v3576
  %v3578 = vrot.slane %v3577, 1
  %v3579 = vadd.f32 %v3577, %v3578
  %v3580 = vadd.f32 %v3545, %v3548
  %v3581 = vadd.f32 %v3580, %v3551
  %v3582 = vadd.f32 %v3581, %v3554
  %v3583 = vadd.f32 %v3582, %v3557
  %v3584 = vadd.f32 %v3583, %v3560
  %v3585 = vadd.f32 %v3584, %v3563
  %v3586 = vadd.f32 %v3585, %v3566
  %v3587 = vrot.slane %v3586, 4
  %v3588 = vadd.f32 %v3586, %v3587
  %v3589 = vrot.slane %v3588, 2
  %v3590 = vadd.f32 %v3588, %v3589
  %v3591 = vrot.slane %v3590, 1
  %v3592 = vadd.f32 %v3590, %v3591
  %v3593 = vmul.f32 %v3579, 0.00390625
  %v3594 = vmul.f32 %v3592, 0.00390625
  %v3595 = vsub.f32 %v3503, %v3593
  %v3596 = vsub.f32 %v3504, %v3593
  %v3597 = vsub.f32 %v3505, %v3593
  %v3598 = vsub.f32 %v3506, %v3593
  %v3599 = vsub.f32 %v3507, %v3593
  %v3600 = vsub.f32 %v3508, %v3593
  %v3601 = vsub.f32 %v3509, %v3593
  %v3602 = vsub.f32 %v3510, %v3593
  %v3603 = vsub.f32 %v3511, %v3594
  %v3604 = vsub.f32 %v3512, %v3594
  %v3605 = vsub.f32 %v3513, %v3594
  %v3606 = vsub.f32 %v3514, %v3594
  %v3607 = vsub.f32 %v3515, %v3594
  %v3608 = vsub.f32 %v3516, %v3594
  %v3609 = vsub.f32 %v3517, %v3594
  %v3610 = vsub.f32 %v3518, %v3594
  %v3611 = vmul.f32 %v3595, %v3595
  %v3612 = vmul.f32 %v3596, %v3596
  %v3613 = vmul.f32 %v3597, %v3597
  %v3614 = vmul.f32 %v3598, %v3598
  %v3615 = vmul.f32 %v3599, %v3599
  %v3616 = vmul.f32 %v3600, %v3600
  %v3617 = vmul.f32 %v3601, %v3601
  %v3618 = vmul.f32 %v3602, %v3602
  %v3619 = vmul.f32 %v3603, %v3603
  %v3620 = vmul.f32 %v3604, %v3604
  %v3621 = vmul.f32 %v3605, %v3605
  %v3622 = vmul.f32 %v3606, %v3606
  %v3623 = vmul.f32 %v3607, %v3607
  %v3624 = vmul.f32 %v3608, %v3608
  %v3625 = vmul.f32 %v3609, %v3609
  %v3626 = vmul.f32 %v3610, %v3610
  %v3627 = vsel %vm48, %v3611, 0.0
  %3628 = vadd.xlane.f32.xlu0 %v3627
  %v3629 = vpop.xlane.xlu0 %3628
  %v3630 = vsel %vm48, %v3612, 0.0
  %3631 = vadd.xlane.f32.xlu0 %v3630
  %v3632 = vpop.xlane.xlu0 %3631
  %v3633 = vsel %vm48, %v3613, 0.0
  %3634 = vadd.xlane.f32.xlu0 %v3633
  %v3635 = vpop.xlane.xlu0 %3634
  %v3636 = vsel %vm48, %v3614, 0.0
  %3637 = vadd.xlane.f32.xlu0 %v3636
  %v3638 = vpop.xlane.xlu0 %3637
  %v3639 = vsel %vm48, %v3615, 0.0
  %3640 = vadd.xlane.f32.xlu0 %v3639
  %v3641 = vpop.xlane.xlu0 %3640
  %v3642 = vsel %vm48, %v3616, 0.0
  %3643 = vadd.xlane.f32.xlu0 %v3642
  %v3644 = vpop.xlane.xlu0 %3643
  %v3645 = vsel %vm48, %v3617, 0.0
  %3646 = vadd.xlane.f32.xlu0 %v3645
  %v3647 = vpop.xlane.xlu0 %3646
  %v3648 = vsel %vm48, %v3618, 0.0
  %3649 = vadd.xlane.f32.xlu0 %v3648
  %v3650 = vpop.xlane.xlu0 %3649
  %v3651 = vsel %vm48, %v3619, 0.0
  %3652 = vadd.xlane.f32.xlu0 %v3651
  %v3653 = vpop.xlane.xlu0 %3652
  %v3654 = vsel %vm48, %v3620, 0.0
  %3655 = vadd.xlane.f32.xlu0 %v3654
  %v3656 = vpop.xlane.xlu0 %3655
  %v3657 = vsel %vm48, %v3621, 0.0
  %3658 = vadd.xlane.f32.xlu0 %v3657
  %v3659 = vpop.xlane.xlu0 %3658
  %v3660 = vsel %vm48, %v3622, 0.0
  %3661 = vadd.xlane.f32.xlu0 %v3660
  %v3662 = vpop.xlane.xlu0 %3661
  %v3663 = vsel %vm48, %v3623, 0.0
  %3664 = vadd.xlane.f32.xlu0 %v3663
  %v3665 = vpop.xlane.xlu0 %3664
  %v3666 = vsel %vm48, %v3624, 0.0
  %3667 = vadd.xlane.f32.xlu0 %v3666
  %v3668 = vpop.xlane.xlu0 %3667
  %v3669 = vsel %vm48, %v3625, 0.0
  %3670 = vadd.xlane.f32.xlu0 %v3669
  %v3671 = vpop.xlane.xlu0 %3670
  %v3672 = vsel %vm48, %v3626, 0.0
  %3673 = vadd.xlane.f32.xlu0 %v3672
  %v3674 = vpop.xlane.xlu0 %3673
  %v3675 = vadd.f32 %v3629, %v3632
  %v3676 = vadd.f32 %v3675, %v3635
  %v3677 = vadd.f32 %v3676, %v3638
  %v3678 = vadd.f32 %v3677, %v3641
  %v3679 = vadd.f32 %v3678, %v3644
  %v3680 = vadd.f32 %v3679, %v3647
  %v3681 = vadd.f32 %v3680, %v3650
  %v3682 = vrot.slane %v3681, 4
  %v3683 = vadd.f32 %v3681, %v3682
  %v3684 = vrot.slane %v3683, 2
  %v3685 = vadd.f32 %v3683, %v3684
  %v3686 = vrot.slane %v3685, 1
  %v3687 = vadd.f32 %v3685, %v3686
  %v3688 = vadd.f32 %v3653, %v3656
  %v3689 = vadd.f32 %v3688, %v3659
  %v3690 = vadd.f32 %v3689, %v3662
  %v3691 = vadd.f32 %v3690, %v3665
  %v3692 = vadd.f32 %v3691, %v3668
  %v3693 = vadd.f32 %v3692, %v3671
  %v3694 = vadd.f32 %v3693, %v3674
  %v3695 = vrot.slane %v3694, 4
  %v3696 = vadd.f32 %v3694, %v3695
  %v3697 = vrot.slane %v3696, 2
  %v3698 = vadd.f32 %v3696, %v3697
  %v3699 = vrot.slane %v3698, 1
  %v3700 = vadd.f32 %v3698, %v3699
  %v3701 = vmul.f32 %v3687, 0.00390625
  %v3702 = vmul.f32 %v3700, 0.00390625
  %v3703 = vadd.f32 %v3701, 1e-05
  %v3704 = vadd.f32 %v3702, 1e-05
  %v3705 = vrsqrt.pop %v3703
  %v3706 = vrsqrt.pop %v3704
  %v3707 = vmul.f32 %v3595, %v3705
  %v3708 = vmul.f32 %v3596, %v3705
  %v3709 = vmul.f32 %v3597, %v3705
  %v3710 = vmul.f32 %v3598, %v3705
  %v3711 = vmul.f32 %v3599, %v3705
  %v3712 = vmul.f32 %v3600, %v3705
  %v3713 = vmul.f32 %v3601, %v3705
  %v3714 = vmul.f32 %v3602, %v3705
  %v3715 = vmul.f32 %v3603, %v3706
  %v3716 = vmul.f32 %v3604, %v3706
  %v3717 = vmul.f32 %v3605, %v3706
  %v3718 = vmul.f32 %v3606, %v3706
  %v3719 = vmul.f32 %v3607, %v3706
  %v3720 = vmul.f32 %v3608, %v3706
  %v3721 = vmul.f32 %v3609, %v3706
  %v3722 = vmul.f32 %v3610, %v3706
  %v3723 = vld [vmem:[%s5] sm:$0x1]
  %v3725 = vlaneseq
  %v3726 = vshrl.u32 %v3725, 7
  %v3727 = vsub.s32 0, %v3726
  %v3728 = vrot.slane %v3723, %v3727
  %v3730 = vmul.f32 %v3707, %v3728
  %v3731 = vmul.f32 %v3708, %v3728
  %v3732 = vmul.f32 %v3709, %v3728
  %v3733 = vmul.f32 %v3710, %v3728
  %v3734 = vmul.f32 %v3711, %v3728
  %v3735 = vmul.f32 %v3712, %v3728
  %v3736 = vmul.f32 %v3713, %v3728
  %v3737 = vmul.f32 %v3714, %v3728
  %v3738 = vmul.f32 %v3715, %v3728
  %v3739 = vmul.f32 %v3716, %v3728
  %v3740 = vmul.f32 %v3717, %v3728
  %v3741 = vmul.f32 %v3718, %v3728
  %v3742 = vmul.f32 %v3719, %v3728
  %v3743 = vmul.f32 %v3720, %v3728
  %v3744 = vmul.f32 %v3721, %v3728
  %v3745 = vmul.f32 %v3722, %v3728
  %v3746 = vld [vmem:[%s6] sm:$0x1]
  %v3748 = vlaneseq
  %v3749 = vshrl.u32 %v3748, 7
  %v3750 = vsub.s32 0, %v3749
  %v3751 = vrot.slane %v3746, %v3750
  %v3753 = vadd.f32 %v3730, %v3751
  %v3754 = vadd.f32 %v3731, %v3751
  %v3755 = vadd.f32 %v3732, %v3751
  %v3756 = vadd.f32 %v3733, %v3751
  %v3757 = vadd.f32 %v3734, %v3751
  %v3758 = vadd.f32 %v3735, %v3751
  %v3759 = vadd.f32 %v3736, %v3751
  %v3760 = vadd.f32 %v3737, %v3751
  %v3761 = vadd.f32 %v3738, %v3751
  %v3762 = vadd.f32 %v3739, %v3751
  %v3763 = vadd.f32 %v3740, %v3751
  %v3764 = vadd.f32 %v3741, %v3751
  %v3765 = vadd.f32 %v3742, %v3751
  %v3766 = vadd.f32 %v3743, %v3751
  %v3767 = vadd.f32 %v3744, %v3751
  %v3768 = vadd.f32 %v3745, %v3751
  %v3769 = vadd.f32 %v152, %v3753
  %v3770 = vadd.f32 %v153, %v3754
  %v3771 = vadd.f32 %v154, %v3755
  %v3772 = vadd.f32 %v155, %v3756
  %v3773 = vadd.f32 %v156, %v3757
  %v3774 = vadd.f32 %v157, %v3758
  %v3775 = vadd.f32 %v158, %v3759
  %v3776 = vadd.f32 %v159, %v3760
  %v3777 = vadd.f32 %v160, %v3761
  %v3778 = vadd.f32 %v161, %v3762
  %v3779 = vadd.f32 %v162, %v3763
  %v3780 = vadd.f32 %v163, %v3764
  %v3781 = vadd.f32 %v164, %v3765
  %v3782 = vadd.f32 %v165, %v3766
  %v3783 = vadd.f32 %v166, %v3767
  %v3784 = vadd.f32 %v167, %v3768
  %v3785 = vmul.f32 %v3769, 0.5
  %v3786 = vmul.f32 %v3770, 0.5
  %v3787 = vmul.f32 %v3771, 0.5
  %v3788 = vmul.f32 %v3772, 0.5
  %v3789 = vmul.f32 %v3773, 0.5
  %v3790 = vmul.f32 %v3774, 0.5
  %v3791 = vmul.f32 %v3775, 0.5
  %v3792 = vmul.f32 %v3776, 0.5
  %v3793 = vmul.f32 %v3777, 0.5
  %v3794 = vmul.f32 %v3778, 0.5
  %v3795 = vmul.f32 %v3779, 0.5
  %v3796 = vmul.f32 %v3780, 0.5
  %v3797 = vmul.f32 %v3781, 0.5
  %v3798 = vmul.f32 %v3782, 0.5
  %v3799 = vmul.f32 %v3783, 0.5
  %v3800 = vmul.f32 %v3784, 0.5
  %v3801 = vmul.f32 %v3769, 0.044715
  %v3802 = vmul.f32 %v3770, 0.044715
  %v3803 = vmul.f32 %v3771, 0.044715
  %v3804 = vmul.f32 %v3772, 0.044715
  %v3805 = vmul.f32 %v3773, 0.044715
  %v3806 = vmul.f32 %v3774, 0.044715
  %v3807 = vmul.f32 %v3775, 0.044715
  %v3808 = vmul.f32 %v3776, 0.044715
  %v3809 = vmul.f32 %v3777, 0.044715
  %v3810 = vmul.f32 %v3778, 0.044715
  %v3811 = vmul.f32 %v3779, 0.044715
  %v3812 = vmul.f32 %v3780, 0.044715
  %v3813 = vmul.f32 %v3781, 0.044715
  %v3814 = vmul.f32 %v3782, 0.044715
  %v3815 = vmul.f32 %v3783, 0.044715
  %v3816 = vmul.f32 %v3784, 0.044715
  %v3817 = vmul.f32 %v3801, %v3769
  %v3818 = vmul.f32 %v3802, %v3770
  %v3819 = vmul.f32 %v3803, %v3771
  %v3820 = vmul.f32 %v3804, %v3772
  %v3821 = vmul.f32 %v3805, %v3773
  %v3822 = vmul.f32 %v3806, %v3774
  %v3823 = vmul.f32 %v3807, %v3775
  %v3824 = vmul.f32 %v3808, %v3776
  %v3825 = vmul.f32 %v3809, %v3777
  %v3826 = vmul.f32 %v3810, %v3778
  %v3827 = vmul.f32 %v3811, %v3779
  %v3828 = vmul.f32 %v3812, %v3780
  %v3829 = vmul.f32 %v3813, %v3781
  %v3830 = vmul.f32 %v3814, %v3782
  %v3831 = vmul.f32 %v3815, %v3783
  %v3832 = vmul.f32 %v3816, %v3784
  %v3833 = vmul.f32 %v3817, %v3769
  %v3834 = vmul.f32 %v3818, %v3770
  %v3835 = vmul.f32 %v3819, %v3771
  %v3836 = vmul.f32 %v3820, %v3772
  %v3837 = vmul.f32 %v3821, %v3773
  %v3838 = vmul.f32 %v3822, %v3774
  %v3839 = vmul.f32 %v3823, %v3775
  %v3840 = vmul.f32 %v3824, %v3776
  %v3841 = vmul.f32 %v3825, %v3777
  %v3842 = vmul.f32 %v3826, %v3778
  %v3843 = vmul.f32 %v3827, %v3779
  %v3844 = vmul.f32 %v3828, %v3780
  %v3845 = vmul.f32 %v3829, %v3781
  %v3846 = vmul.f32 %v3830, %v3782
  %v3847 = vmul.f32 %v3831, %v3783
  %v3848 = vmul.f32 %v3832, %v3784
  %v3849 = vadd.f32 %v3769, %v3833
  %v3850 = vadd.f32 %v3770, %v3834
  %v3851 = vadd.f32 %v3771, %v3835
  %v3852 = vadd.f32 %v3772, %v3836
  %v3853 = vadd.f32 %v3773, %v3837
  %v3854 = vadd.f32 %v3774, %v3838
  %v3855 = vadd.f32 %v3775, %v3839
  %v3856 = vadd.f32 %v3776, %v3840
  %v3857 = vadd.f32 %v3777, %v3841
  %v3858 = vadd.f32 %v3778, %v3842
  %v3859 = vadd.f32 %v3779, %v3843
  %v3860 = vadd.f32 %v3780, %v3844
  %v3861 = vadd.f32 %v3781, %v3845
  %v3862 = vadd.f32 %v3782, %v3846
  %v3863 = vadd.f32 %v3783, %v3847
  %v3864 = vadd.f32 %v3784, %v3848
  %v3865 = vmul.f32 %v3849, 0.7978846
  %v3866 = vmul.f32 %v3850, 0.7978846
  %v3867 = vmul.f32 %v3851, 0.7978846
  %v3868 = vmul.f32 %v3852, 0.7978846
  %v3869 = vmul.f32 %v3853, 0.7978846
  %v3870 = vmul.f32 %v3854, 0.7978846
  %v3871 = vmul.f32 %v3855, 0.7978846
  %v3872 = vmul.f32 %v3856, 0.7978846
  %v3873 = vmul.f32 %v3857, 0.7978846
  %v3874 = vmul.f32 %v3858, 0.7978846
  %v3875 = vmul.f32 %v3859, 0.7978846
  %v3876 = vmul.f32 %v3860, 0.7978846
  %v3877 = vmul.f32 %v3861, 0.7978846
  %v3878 = vmul.f32 %v3862, 0.7978846
  %v3879 = vmul.f32 %v3863, 0.7978846
  %v3880 = vmul.f32 %v3864, 0.7978846
  %v3881 = vtanh.pop %v3865
  %v3882 = vtanh.pop %v3866
  %v3883 = vtanh.pop %v3867
  %v3884 = vtanh.pop %v3868
  %v3885 = vtanh.pop %v3869
  %v3886 = vtanh.pop %v3870
  %v3887 = vtanh.pop %v3871
  %v3888 = vtanh.pop %v3872
  %v3889 = vtanh.pop %v3873
  %v3890 = vtanh.pop %v3874
  %v3891 = vtanh.pop %v3875
  %v3892 = vtanh.pop %v3876
  %v3893 = vtanh.pop %v3877
  %v3894 = vtanh.pop %v3878
  %v3895 = vtanh.pop %v3879
  %v3896 = vtanh.pop %v3880
  %v3897 = vadd.f32 %v3881, 1.0
  %v3898 = vadd.f32 %v3882, 1.0
  %v3899 = vadd.f32 %v3883, 1.0
  %v3900 = vadd.f32 %v3884, 1.0
  %v3901 = vadd.f32 %v3885, 1.0
  %v3902 = vadd.f32 %v3886, 1.0
  %v3903 = vadd.f32 %v3887, 1.0
  %v3904 = vadd.f32 %v3888, 1.0
  %v3905 = vadd.f32 %v3889, 1.0
  %v3906 = vadd.f32 %v3890, 1.0
  %v3907 = vadd.f32 %v3891, 1.0
  %v3908 = vadd.f32 %v3892, 1.0
  %v3909 = vadd.f32 %v3893, 1.0
  %v3910 = vadd.f32 %v3894, 1.0
  %v3911 = vadd.f32 %v3895, 1.0
  %v3912 = vadd.f32 %v3896, 1.0
  %v3913 = vmul.f32 %v3785, %v3897
  %v3914 = vmul.f32 %v3786, %v3898
  %v3915 = vmul.f32 %v3787, %v3899
  %v3916 = vmul.f32 %v3788, %v3900
  %v3917 = vmul.f32 %v3789, %v3901
  %v3918 = vmul.f32 %v3790, %v3902
  %v3919 = vmul.f32 %v3791, %v3903
  %v3920 = vmul.f32 %v3792, %v3904
  %v3921 = vmul.f32 %v3793, %v3905
  %v3922 = vmul.f32 %v3794, %v3906
  %v3923 = vmul.f32 %v3795, %v3907
  %v3924 = vmul.f32 %v3796, %v3908
  %v3925 = vmul.f32 %v3797, %v3909
  %v3926 = vmul.f32 %v3798, %v3910
  %v3927 = vmul.f32 %v3799, %v3911
  %v3928 = vmul.f32 %v3800, %v3912
  %3929 = vst.msk [vmem:[%s168 + $0x1] sm:$0xff] %vm48, %v3913
  %3930 = vst.msk [vmem:[%s168 + $0x11] sm:$0xff] %vm48, %v3914
  %3931 = vst.msk [vmem:[%s168 + $0x21] sm:$0xff] %vm48, %v3915
  %3932 = vst.msk [vmem:[%s168 + $0x31] sm:$0xff] %vm48, %v3916
  %3933 = vst.msk [vmem:[%s168 + $0x41] sm:$0xff] %vm48, %v3917
  %3934 = vst.msk [vmem:[%s168 + $0x51] sm:$0xff] %vm48, %v3918
  %3935 = vst.msk [vmem:[%s168 + $0x61] sm:$0xff] %vm48, %v3919
  %3936 = vst.msk [vmem:[%s168 + $0x71] sm:$0xff] %vm48, %v3920
  %3937 = vst.msk [vmem:[%s168 + $0xa1] sm:$0xff] %vm48, %v3921
  %3938 = vst.msk [vmem:[%s168 + $0xb1] sm:$0xff] %vm48, %v3922
  %3939 = vst.msk [vmem:[%s168 + $0xc1] sm:$0xff] %vm48, %v3923
  %3940 = vst.msk [vmem:[%s168 + $0xd1] sm:$0xff] %vm48, %v3924
  %3941 = vst.msk [vmem:[%s168 + $0xe1] sm:$0xff] %vm48, %v3925
  %3942 = vst.msk [vmem:[%s168 + $0xf1] sm:$0xff] %vm48, %v3926
  %3943 = vst.msk [vmem:[%s168 + $0x101] sm:$0xff] %vm48, %v3927
  %3944 = vst.msk [vmem:[%s168 + $0x111] sm:$0xff] %vm48, %v3928
  %v3945 = vld [vmem:[#allocation2] sm:$0xff]
  %v3946 = vld [vmem:[#allocation2 + $0x10] sm:$0xff]
  %v3947 = vld [vmem:[#allocation2 + $0x20] sm:$0xff]
  %v3948 = vld [vmem:[#allocation2 + $0x30] sm:$0xff]
  %v3949 = vld [vmem:[#allocation2 + $0x40] sm:$0xff]
  %v3950 = vld [vmem:[#allocation2 + $0x50] sm:$0xff]
  %v3951 = vld [vmem:[#allocation2 + $0x60] sm:$0xff]
  %v3952 = vld [vmem:[#allocation2 + $0x70] sm:$0xff]
  %v3953 = vld [vmem:[#allocation2 + $0xa0] sm:$0xff]
  %v3954 = vld [vmem:[#allocation2 + $0xb0] sm:$0xff]
  %v3955 = vld [vmem:[#allocation2 + $0xc0] sm:$0xff]
  %v3956 = vld [vmem:[#allocation2 + $0xd0] sm:$0xff]
  %v3957 = vld [vmem:[#allocation2 + $0xe0] sm:$0xff]
  %v3958 = vld [vmem:[#allocation2 + $0xf0] sm:$0xff]
  %v3959 = vld [vmem:[#allocation2 + $0x100] sm:$0xff]
  %v3960 = vld [vmem:[#allocation2 + $0x110] sm:$0xff]
  %v3961 = vpack.c.bf16 %v3946, %v3945
  %v3962 = vpack.c.bf16 %v3948, %v3947
  %v3963 = vpack.c.bf16 %v3950, %v3949
  %v3964 = vpack.c.bf16 %v3952, %v3951
  %v3965 = vpack.c.bf16 %v3954, %v3953
  %v3966 = vpack.c.bf16 %v3956, %v3955
  %v3967 = vpack.c.bf16 %v3958, %v3957
  %v3968 = vpack.c.bf16 %v3960, %v3959
  %v3969 = vld [vmem:[%s7] sm:$0x3]
  %v3970 = vld [vmem:[#allocation2 + $0x1] sm:$0xff]
  %v3971 = vld [vmem:[#allocation2 + $0x11] sm:$0xff]
  %v3972 = vld [vmem:[#allocation2 + $0x21] sm:$0xff]
  %v3973 = vld [vmem:[#allocation2 + $0x31] sm:$0xff]
  %v3974 = vld [vmem:[#allocation2 + $0x41] sm:$0xff]
  %v3975 = vld [vmem:[#allocation2 + $0x51] sm:$0xff]
  %v3976 = vld [vmem:[#allocation2 + $0x61] sm:$0xff]
  %v3977 = vld [vmem:[#allocation2 + $0x71] sm:$0xff]
  %v3978 = vld [vmem:[#allocation2 + $0xa1] sm:$0xff]
  %v3979 = vld [vmem:[#allocation2 + $0xb1] sm:$0xff]
  %v3980 = vld [vmem:[#allocation2 + $0xc1] sm:$0xff]
  %v3981 = vld [vmem:[#allocation2 + $0xd1] sm:$0xff]
  %v3982 = vld [vmem:[#allocation2 + $0xe1] sm:$0xff]
  %v3983 = vld [vmem:[#allocation2 + $0xf1] sm:$0xff]
  %v3984 = vld [vmem:[#allocation2 + $0x101] sm:$0xff]
  %v3985 = vld [vmem:[#allocation2 + $0x111] sm:$0xff]
  %v3986 = vpack.c.bf16 %v3971, %v3970
  %v3987 = vpack.c.bf16 %v3973, %v3972
  %v3988 = vpack.c.bf16 %v3975, %v3974
  %v3989 = vpack.c.bf16 %v3977, %v3976
  %v3990 = vpack.c.bf16 %v3979, %v3978
  %v3991 = vpack.c.bf16 %v3981, %v3980
  %v3992 = vpack.c.bf16 %v3983, %v3982
  %v3993 = vpack.c.bf16 %v3985, %v3984
  %s3994 = scalar_lea.vmem %s7, 2
  %v3995 = vld [vmem:[%s3994] sm:$0x3]
  %v3997 = vsel %vm48, %v3986, 0
  %v4000 = vsel %vm48, %v3987, 0
  %v4003 = vsel %vm48, %v3988, 0
  %v4006 = vsel %vm48, %v3989, 0
  %v4009 = vsel %vm48, %v3990, 0
  %v4012 = vsel %vm48, %v3991, 0
  %v4015 = vsel %vm48, %v3992, 0
  %v4018 = vsel %vm48, %v3993, 0
  %v4021 = vsel %vm260, %v3995, 0
  %4023 = vmatprep.subr.bf16.mxu0 0
  %4024 = vmatpush1.bf16.msra.mxu0 0
  %4025 = vmatprep.subr.bf16.mxu0 0
  %4026 = vmatpush1.bf16.msra.mxu0 0
  %4027 = vmatprep.subr.bf16.mxu0 0
  %4028 = vmatpush1.bf16.msra.mxu0 0
  %4029 = vmatprep.subr.bf16.mxu0 0
  %4030 = vmatpush1.bf16.msra.mxu0 0
  %4031 = vmatprep.subr.bf16.mxu0 0
  %4032 = vmatpush1.bf16.msra.mxu0 0
  %4033 = vmatprep.subr.bf16.mxu0 0
  %4034 = vmatpush1.bf16.msra.mxu0 0
  %4035 = vmatprep.subr.bf16.mxu0 0
  %4036 = vmatpush1.bf16.msra.mxu0 0
  %4037 = vmatprep.subr.bf16.mxu0 0
  %4038 = vmatpush1.bf16.msra.mxu0 %v4021
  %4039 = vmatprep.subr.bf16.mxu0 0
  %4040 = vmatpush2.bf16.msra.mxu0 0
  %4041 = vmatprep.subr.bf16.mxu0 0
  %4042 = vmatpush2.bf16.msra.mxu0 0
  %4043 = vmatprep.subr.bf16.mxu0 0
  %4044 = vmatpush2.bf16.msra.mxu0 0
  %4045 = vmatprep.subr.bf16.mxu0 0
  %4046 = vmatpush2.bf16.msra.mxu0 0
  %4047 = vmatprep.subr.bf16.mxu0 0
  %4048 = vmatpush2.bf16.msra.mxu0 0
  %4049 = vmatprep.subr.bf16.mxu0 0
  %4050 = vmatpush2.bf16.msra.mxu0 0
  %4051 = vmatprep.subr.bf16.mxu0 0
  %4052 = vmatpush2.bf16.msra.mxu0 0
  %4053 = vmatprep.subr.bf16.mxu0 0
  %4054 = vmatpush2.bf16.msra.mxu0 0
  %4055 = vmatprep.mubr.bf16.mxu0 0
  %4056 = vmatmul.mubr.bf16.gmra.mxu0 %v3997
  %v4057 = vpop.f32.mrf.mxu0
  %v4058 = vadd.f32 0.0, %v4057
  %v4059 = vpop.f32.mrf.mxu0
  %v4060 = vpop.f32.mrf.mxu0
  %v4061 = vadd.f32 0.0, %v4060
  %v4062 = vpop.f32.mrf.mxu0
  %4063 = vmatprep.mubr.bf16.mxu0 0
  %4064 = vmatmul.mubr.bf16.gmra.mxu0 %v4000
  %v4065 = vpop.f32.mrf.mxu0
  %v4066 = vadd.f32 0.0, %v4065
  %v4067 = vpop.f32.mrf.mxu0
  %v4068 = vpop.f32.mrf.mxu0
  %v4069 = vadd.f32 0.0, %v4068
  %v4070 = vpop.f32.mrf.mxu0
  %4071 = vmatprep.mubr.bf16.mxu0 0
  %4072 = vmatmul.mubr.bf16.gmra.mxu0 %v4003
  %v4073 = vpop.f32.mrf.mxu0
  %v4074 = vadd.f32 0.0, %v4073
  %v4075 = vpop.f32.mrf.mxu0
  %v4076 = vpop.f32.mrf.mxu0
  %v4077 = vadd.f32 0.0, %v4076
  %v4078 = vpop.f32.mrf.mxu0
  %4079 = vmatprep.mubr.bf16.mxu0 0
  %4080 = vmatmul.mubr.bf16.gmra.mxu0 %v4006
  %v4081 = vpop.f32.mrf.mxu0
  %v4082 = vadd.f32 0.0, %v4081
  %v4083 = vpop.f32.mrf.mxu0
  %v4084 = vpop.f32.mrf.mxu0
  %v4085 = vadd.f32 0.0, %v4084
  %v4086 = vpop.f32.mrf.mxu0
  %4087 = vmatprep.mubr.bf16.mxu0 0
  %4088 = vmatmul.mubr.bf16.gmra.mxu0 %v4009
  %v4089 = vpop.f32.mrf.mxu0
  %v4090 = vadd.f32 0.0, %v4089
  %v4091 = vpop.f32.mrf.mxu0
  %v4092 = vpop.f32.mrf.mxu0
  %v4093 = vadd.f32 0.0, %v4092
  %v4094 = vpop.f32.mrf.mxu0
  %4095 = vmatprep.mubr.bf16.mxu0 0
  %4096 = vmatmul.mubr.bf16.gmra.mxu0 %v4012
  %v4097 = vpop.f32.mrf.mxu0
  %v4098 = vadd.f32 0.0, %v4097
  %v4099 = vpop.f32.mrf.mxu0
  %v4100 = vpop.f32.mrf.mxu0
  %v4101 = vadd.f32 0.0, %v4100
  %v4102 = vpop.f32.mrf.mxu0
  %4103 = vmatprep.mubr.bf16.mxu0 0
  %4104 = vmatmul.mubr.bf16.gmra.mxu0 %v4015
  %v4105 = vpop.f32.mrf.mxu0
  %v4106 = vadd.f32 0.0, %v4105
  %v4107 = vpop.f32.mrf.mxu0
  %v4108 = vpop.f32.mrf.mxu0
  %v4109 = vadd.f32 0.0, %v4108
  %v4110 = vpop.f32.mrf.mxu0
  %4111 = vmatprep.mubr.bf16.mxu0 0
  %4112 = vmatmul.mubr.bf16.gmra.mxu0 %v4018
  %v4113 = vpop.f32.mrf.mxu0
  %v4114 = vadd.f32 0.0, %v4113
  %v4115 = vpop.f32.mrf.mxu0
  %v4116 = vpop.f32.mrf.mxu0
  %v4117 = vadd.f32 0.0, %v4116
  %v4118 = vpop.f32.mrf.mxu0
  %4119 = vdwg.mxu0
  %v4121 = vsel %vm48, %v3961, 0
  %v4124 = vsel %vm48, %v3962, 0
  %v4127 = vsel %vm48, %v3963, 0
  %v4130 = vsel %vm48, %v3964, 0
  %v4133 = vsel %vm48, %v3965, 0
  %v4136 = vsel %vm48, %v3966, 0
  %v4139 = vsel %vm48, %v3967, 0
  %v4142 = vsel %vm48, %v3968, 0
  %v4145 = vsel %vm260, %v3969, 0
  %4147 = vmatprep.subr.bf16.mxu0 0
  %4148 = vmatpush1.bf16.msra.mxu0 0
  %4149 = vmatprep.subr.bf16.mxu0 0
  %4150 = vmatpush1.bf16.msra.mxu0 0
  %4151 = vmatprep.subr.bf16.mxu0 0
  %4152 = vmatpush1.bf16.msra.mxu0 0
  %4153 = vmatprep.subr.bf16.mxu0 0
  %4154 = vmatpush1.bf16.msra.mxu0 0
  %4155 = vmatprep.subr.bf16.mxu0 0
  %4156 = vmatpush1.bf16.msra.mxu0 0
  %4157 = vmatprep.subr.bf16.mxu0 0
  %4158 = vmatpush1.bf16.msra.mxu0 0
  %4159 = vmatprep.subr.bf16.mxu0 0
  %4160 = vmatpush1.bf16.msra.mxu0 0
  %4161 = vmatprep.subr.bf16.mxu0 0
  %4162 = vmatpush1.bf16.msra.mxu0 %v4145
  %4163 = vmatprep.subr.bf16.mxu0 0
  %4164 = vmatpush2.bf16.msra.mxu0 0
  %4165 = vmatprep.subr.bf16.mxu0 0
  %4166 = vmatpush2.bf16.msra.mxu0 0
  %4167 = vmatprep.subr.bf16.mxu0 0
  %4168 = vmatpush2.bf16.msra.mxu0 0
  %4169 = vmatprep.subr.bf16.mxu0 0
  %4170 = vmatpush2.bf16.msra.mxu0 0
  %4171 = vmatprep.subr.bf16.mxu0 0
  %4172 = vmatpush2.bf16.msra.mxu0 0
  %4173 = vmatprep.subr.bf16.mxu0 0
  %4174 = vmatpush2.bf16.msra.mxu0 0
  %4175 = vmatprep.subr.bf16.mxu0 0
  %4176 = vmatpush2.bf16.msra.mxu0 0
  %4177 = vmatprep.subr.bf16.mxu0 0
  %4178 = vmatpush2.bf16.msra.mxu0 0
  %4179 = vmatprep.mubr.bf16.mxu0 0
  %4180 = vmatmul.mubr.bf16.gmra.mxu0 %v4121
  %v4181 = vpop.f32.mrf.mxu0
  %v4182 = vadd.f32 %v4058, %v4181
  %v4183 = vpop.f32.mrf.mxu0
  %v4184 = vpop.f32.mrf.mxu0
  %v4185 = vadd.f32 %v4061, %v4184
  %v4186 = vpop.f32.mrf.mxu0
  %4187 = vmatprep.mubr.bf16.mxu0 0
  %4188 = vmatmul.mubr.bf16.gmra.mxu0 %v4124
  %v4189 = vpop.f32.mrf.mxu0
  %v4190 = vadd.f32 %v4066, %v4189
  %v4191 = vpop.f32.mrf.mxu0
  %v4192 = vpop.f32.mrf.mxu0
  %v4193 = vadd.f32 %v4069, %v4192
  %v4194 = vpop.f32.mrf.mxu0
  %4195 = vmatprep.mubr.bf16.mxu0 0
  %4196 = vmatmul.mubr.bf16.gmra.mxu0 %v4127
  %v4197 = vpop.f32.mrf.mxu0
  %v4198 = vadd.f32 %v4074, %v4197
  %v4199 = vpop.f32.mrf.mxu0
  %v4200 = vpop.f32.mrf.mxu0
  %v4201 = vadd.f32 %v4077, %v4200
  %v4202 = vpop.f32.mrf.mxu0
  %4203 = vmatprep.mubr.bf16.mxu0 0
  %4204 = vmatmul.mubr.bf16.gmra.mxu0 %v4130
  %v4205 = vpop.f32.mrf.mxu0
  %v4206 = vadd.f32 %v4082, %v4205
  %v4207 = vpop.f32.mrf.mxu0
  %v4208 = vpop.f32.mrf.mxu0
  %v4209 = vadd.f32 %v4085, %v4208
  %v4210 = vpop.f32.mrf.mxu0
  %4211 = vmatprep.mubr.bf16.mxu0 0
  %4212 = vmatmul.mubr.bf16.gmra.mxu0 %v4133
  %v4213 = vpop.f32.mrf.mxu0
  %v4214 = vadd.f32 %v4090, %v4213
  %v4215 = vpop.f32.mrf.mxu0
  %v4216 = vpop.f32.mrf.mxu0
  %v4217 = vadd.f32 %v4093, %v4216
  %v4218 = vpop.f32.mrf.mxu0
  %4219 = vmatprep.mubr.bf16.mxu0 0
  %4220 = vmatmul.mubr.bf16.gmra.mxu0 %v4136
  %v4221 = vpop.f32.mrf.mxu0
  %v4222 = vadd.f32 %v4098, %v4221
  %v4223 = vpop.f32.mrf.mxu0
  %v4224 = vpop.f32.mrf.mxu0
  %v4225 = vadd.f32 %v4101, %v4224
  %v4226 = vpop.f32.mrf.mxu0
  %4227 = vmatprep.mubr.bf16.mxu0 0
  %4228 = vmatmul.mubr.bf16.gmra.mxu0 %v4139
  %v4229 = vpop.f32.mrf.mxu0
  %v4230 = vadd.f32 %v4106, %v4229
  %v4231 = vpop.f32.mrf.mxu0
  %v4232 = vpop.f32.mrf.mxu0
  %v4233 = vadd.f32 %v4109, %v4232
  %v4234 = vpop.f32.mrf.mxu0
  %4235 = vmatprep.mubr.bf16.mxu0 0
  %4236 = vmatmul.mubr.bf16.gmra.mxu0 %v4142
  %v4237 = vpop.f32.mrf.mxu0
  %v4238 = vadd.f32 %v4114, %v4237
  %v4239 = vpop.f32.mrf.mxu0
  %v4240 = vpop.f32.mrf.mxu0
  %v4241 = vadd.f32 %v4117, %v4240
  %v4242 = vpop.f32.mrf.mxu0
  %4243 = vdwg.mxu0
  %v4244 = vld [vmem:[#allocation2 + $0x2] sm:$0xff]
  %v4245 = vld [vmem:[#allocation2 + $0x12] sm:$0xff]
  %v4246 = vld [vmem:[#allocation2 + $0x22] sm:$0xff]
  %v4247 = vld [vmem:[#allocation2 + $0x32] sm:$0xff]
  %v4248 = vld [vmem:[#allocation2 + $0x42] sm:$0xff]
  %v4249 = vld [vmem:[#allocation2 + $0x52] sm:$0xff]
  %v4250 = vld [vmem:[#allocation2 + $0x62] sm:$0xff]
  %v4251 = vld [vmem:[#allocation2 + $0x72] sm:$0xff]
  %v4252 = vld [vmem:[#allocation2 + $0xa2] sm:$0xff]
  %v4253 = vld [vmem:[#allocation2 + $0xb2] sm:$0xff]
  %v4254 = vld [vmem:[#allocation2 + $0xc2] sm:$0xff]
  %v4255 = vld [vmem:[#allocation2 + $0xd2] sm:$0xff]
  %v4256 = vld [vmem:[#allocation2 + $0xe2] sm:$0xff]
  %v4257 = vld [vmem:[#allocation2 + $0xf2] sm:$0xff]
  %v4258 = vld [vmem:[#allocation2 + $0x102] sm:$0xff]
  %v4259 = vld [vmem:[#allocation2 + $0x112] sm:$0xff]
  %v4260 = vpack.c.bf16 %v4245, %v4244
  %v4261 = vpack.c.bf16 %v4247, %v4246
  %v4262 = vpack.c.bf16 %v4249, %v4248
  %v4263 = vpack.c.bf16 %v4251, %v4250
  %v4264 = vpack.c.bf16 %v4253, %v4252
  %v4265 = vpack.c.bf16 %v4255, %v4254
  %v4266 = vpack.c.bf16 %v4257, %v4256
  %v4267 = vpack.c.bf16 %v4259, %v4258
  %s4268 = scalar_lea.vmem %s7, 4
  %v4269 = vld [vmem:[%s4268] sm:$0x3]
  %v4271 = vsel %vm48, %v4260, 0
  %v4274 = vsel %vm48, %v4261, 0
  %v4277 = vsel %vm48, %v4262, 0
  %v4280 = vsel %vm48, %v4263, 0
  %v4283 = vsel %vm48, %v4264, 0
  %v4286 = vsel %vm48, %v4265, 0
  %v4289 = vsel %vm48, %v4266, 0
  %v4292 = vsel %vm48, %v4267, 0
  %v4295 = vsel %vm260, %v4269, 0
  %4297 = vmatprep.subr.bf16.mxu0 0
  %4298 = vmatpush1.bf16.msra.mxu0 0
  %4299 = vmatprep.subr.bf16.mxu0 0
  %4300 = vmatpush1.bf16.msra.mxu0 0
  %4301 = vmatprep.subr.bf16.mxu0 0
  %4302 = vmatpush1.bf16.msra.mxu0 0
  %4303 = vmatprep.subr.bf16.mxu0 0
  %4304 = vmatpush1.bf16.msra.mxu0 0
  %4305 = vmatprep.subr.bf16.mxu0 0
  %4306 = vmatpush1.bf16.msra.mxu0 0
  %4307 = vmatprep.subr.bf16.mxu0 0
  %4308 = vmatpush1.bf16.msra.mxu0 0
  %4309 = vmatprep.subr.bf16.mxu0 0
  %4310 = vmatpush1.bf16.msra.mxu0 0
  %4311 = vmatprep.subr.bf16.mxu0 0
  %4312 = vmatpush1.bf16.msra.mxu0 %v4295
  %4313 = vmatprep.subr.bf16.mxu0 0
  %4314 = vmatpush2.bf16.msra.mxu0 0
  %4315 = vmatprep.subr.bf16.mxu0 0
  %4316 = vmatpush2.bf16.msra.mxu0 0
  %4317 = vmatprep.subr.bf16.mxu0 0
  %4318 = vmatpush2.bf16.msra.mxu0 0
  %4319 = vmatprep.subr.bf16.mxu0 0
  %4320 = vmatpush2.bf16.msra.mxu0 0
  %4321 = vmatprep.subr.bf16.mxu0 0
  %4322 = vmatpush2.bf16.msra.mxu0 0
  %4323 = vmatprep.subr.bf16.mxu0 0
  %4324 = vmatpush2.bf16.msra.mxu0 0
  %4325 = vmatprep.subr.bf16.mxu0 0
  %4326 = vmatpush2.bf16.msra.mxu0 0
  %4327 = vmatprep.subr.bf16.mxu0 0
  %4328 = vmatpush2.bf16.msra.mxu0 0
  %4329 = vmatprep.mubr.bf16.mxu0 0
  %4330 = vmatmul.mubr.bf16.gmra.mxu0 %v4271
  %v4331 = vpop.f32.mrf.mxu0
  %v4332 = vadd.f32 0.0, %v4331
  %v4333 = vpop.f32.mrf.mxu0
  %v4334 = vpop.f32.mrf.mxu0
  %v4335 = vadd.f32 0.0, %v4334
  %v4336 = vpop.f32.mrf.mxu0
  %4337 = vmatprep.mubr.bf16.mxu0 0
  %4338 = vmatmul.mubr.bf16.gmra.mxu0 %v4274
  %v4339 = vpop.f32.mrf.mxu0
  %v4340 = vadd.f32 0.0, %v4339
  %v4341 = vpop.f32.mrf.mxu0
  %v4342 = vpop.f32.mrf.mxu0
  %v4343 = vadd.f32 0.0, %v4342
  %v4344 = vpop.f32.mrf.mxu0
  %4345 = vmatprep.mubr.bf16.mxu0 0
  %4346 = vmatmul.mubr.bf16.gmra.mxu0 %v4277
  %v4347 = vpop.f32.mrf.mxu0
  %v4348 = vadd.f32 0.0, %v4347
  %v4349 = vpop.f32.mrf.mxu0
  %v4350 = vpop.f32.mrf.mxu0
  %v4351 = vadd.f32 0.0, %v4350
  %v4352 = vpop.f32.mrf.mxu0
  %4353 = vmatprep.mubr.bf16.mxu0 0
  %4354 = vmatmul.mubr.bf16.gmra.mxu0 %v4280
  %v4355 = vpop.f32.mrf.mxu0
  %v4356 = vadd.f32 0.0, %v4355
  %v4357 = vpop.f32.mrf.mxu0
  %v4358 = vpop.f32.mrf.mxu0
  %v4359 = vadd.f32 0.0, %v4358
  %v4360 = vpop.f32.mrf.mxu0
  %4361 = vmatprep.mubr.bf16.mxu0 0
  %4362 = vmatmul.mubr.bf16.gmra.mxu0 %v4283
  %v4363 = vpop.f32.mrf.mxu0
  %v4364 = vadd.f32 0.0, %v4363
  %v4365 = vpop.f32.mrf.mxu0
  %v4366 = vpop.f32.mrf.mxu0
  %v4367 = vadd.f32 0.0, %v4366
  %v4368 = vpop.f32.mrf.mxu0
  %4369 = vmatprep.mubr.bf16.mxu0 0
  %4370 = vmatmul.mubr.bf16.gmra.mxu0 %v4286
  %v4371 = vpop.f32.mrf.mxu0
  %v4372 = vadd.f32 0.0, %v4371
  %v4373 = vpop.f32.mrf.mxu0
  %v4374 = vpop.f32.mrf.mxu0
  %v4375 = vadd.f32 0.0, %v4374
  %v4376 = vpop.f32.mrf.mxu0
  %4377 = vmatprep.mubr.bf16.mxu0 0
  %4378 = vmatmul.mubr.bf16.gmra.mxu0 %v4289
  %v4379 = vpop.f32.mrf.mxu0
  %v4380 = vadd.f32 0.0, %v4379
  %v4381 = vpop.f32.mrf.mxu0
  %v4382 = vpop.f32.mrf.mxu0
  %v4383 = vadd.f32 0.0, %v4382
  %v4384 = vpop.f32.mrf.mxu0
  %4385 = vmatprep.mubr.bf16.mxu0 0
  %4386 = vmatmul.mubr.bf16.gmra.mxu0 %v4292
  %v4387 = vpop.f32.mrf.mxu0
  %v4388 = vadd.f32 0.0, %v4387
  %v4389 = vpop.f32.mrf.mxu0
  %v4390 = vpop.f32.mrf.mxu0
  %v4391 = vadd.f32 0.0, %v4390
  %v4392 = vpop.f32.mrf.mxu0
  %4393 = vdwg.mxu0
  %v4394 = vadd.f32 %v4182, %v4332
  %v4395 = vadd.f32 %v4185, %v4335
  %v4396 = vadd.f32 %v4190, %v4340
  %v4397 = vadd.f32 %v4193, %v4343
  %v4398 = vadd.f32 %v4198, %v4348
  %v4399 = vadd.f32 %v4201, %v4351
  %v4400 = vadd.f32 %v4206, %v4356
  %v4401 = vadd.f32 %v4209, %v4359
  %v4402 = vadd.f32 %v4214, %v4364
  %v4403 = vadd.f32 %v4217, %v4367
  %v4404 = vadd.f32 %v4222, %v4372
  %v4405 = vadd.f32 %v4225, %v4375
  %v4406 = vadd.f32 %v4230, %v4380
  %v4407 = vadd.f32 %v4233, %v4383
  %v4408 = vadd.f32 %v4238, %v4388
  %v4409 = vadd.f32 %v4241, %v4391
  %v4410 = vld [vmem:[%s168] sm:$0xff]
  %v4411 = vld [vmem:[%s168 + $0x10] sm:$0xff]
  %v4412 = vld [vmem:[%s168 + $0x20] sm:$0xff]
  %v4413 = vld [vmem:[%s168 + $0x30] sm:$0xff]
  %v4414 = vld [vmem:[%s168 + $0x40] sm:$0xff]
  %v4415 = vld [vmem:[%s168 + $0x50] sm:$0xff]
  %v4416 = vld [vmem:[%s168 + $0x60] sm:$0xff]
  %v4417 = vld [vmem:[%s168 + $0x70] sm:$0xff]
  %v4418 = vld [vmem:[%s168 + $0xa0] sm:$0xff]
  %v4419 = vld [vmem:[%s168 + $0xb0] sm:$0xff]
  %v4420 = vld [vmem:[%s168 + $0xc0] sm:$0xff]
  %v4421 = vld [vmem:[%s168 + $0xd0] sm:$0xff]
  %v4422 = vld [vmem:[%s168 + $0xe0] sm:$0xff]
  %v4423 = vld [vmem:[%s168 + $0xf0] sm:$0xff]
  %v4424 = vld [vmem:[%s168 + $0x100] sm:$0xff]
  %v4425 = vld [vmem:[%s168 + $0x110] sm:$0xff]
  %v4426 = vpack.c.bf16 %v4411, %v4410
  %v4427 = vpack.c.bf16 %v4413, %v4412
  %v4428 = vpack.c.bf16 %v4415, %v4414
  %v4429 = vpack.c.bf16 %v4417, %v4416
  %v4430 = vpack.c.bf16 %v4419, %v4418
  %v4431 = vpack.c.bf16 %v4421, %v4420
  %v4432 = vpack.c.bf16 %v4423, %v4422
  %v4433 = vpack.c.bf16 %v4425, %v4424
  %s4434 = scalar_lea.vmem %s7, 6
  %v4435 = vld [vmem:[%s4434] sm:$0x3]
  %v4437 = vsel %vm48, %v4426, 0
  %v4440 = vsel %vm48, %v4427, 0
  %v4443 = vsel %vm48, %v4428, 0
  %v4446 = vsel %vm48, %v4429, 0
  %v4449 = vsel %vm48, %v4430, 0
  %v4452 = vsel %vm48, %v4431, 0
  %v4455 = vsel %vm48, %v4432, 0
  %v4458 = vsel %vm48, %v4433, 0
  %v4461 = vsel %vm260, %v4435, 0
  %4463 = vmatprep.subr.bf16.mxu0 0
  %4464 = vmatpush1.bf16.msra.mxu0 0
  %4465 = vmatprep.subr.bf16.mxu0 0
  %4466 = vmatpush1.bf16.msra.mxu0 0
  %4467 = vmatprep.subr.bf16.mxu0 0
  %4468 = vmatpush1.bf16.msra.mxu0 0
  %4469 = vmatprep.subr.bf16.mxu0 0
  %4470 = vmatpush1.bf16.msra.mxu0 0
  %4471 = vmatprep.subr.bf16.mxu0 0
  %4472 = vmatpush1.bf16.msra.mxu0 0
  %4473 = vmatprep.subr.bf16.mxu0 0
  %4474 = vmatpush1.bf16.msra.mxu0 0
  %4475 = vmatprep.subr.bf16.mxu0 0
  %4476 = vmatpush1.bf16.msra.mxu0 0
  %4477 = vmatprep.subr.bf16.mxu0 0
  %4478 = vmatpush1.bf16.msra.mxu0 %v4461
  %4479 = vmatprep.subr.bf16.mxu0 0
  %4480 = vmatpush2.bf16.msra.mxu0 0
  %4481 = vmatprep.subr.bf16.mxu0 0
  %4482 = vmatpush2.bf16.msra.mxu0 0
  %4483 = vmatprep.subr.bf16.mxu0 0
  %4484 = vmatpush2.bf16.msra.mxu0 0
  %4485 = vmatprep.subr.bf16.mxu0 0
  %4486 = vmatpush2.bf16.msra.mxu0 0
  %4487 = vmatprep.subr.bf16.mxu0 0
  %4488 = vmatpush2.bf16.msra.mxu0 0
  %4489 = vmatprep.subr.bf16.mxu0 0
  %4490 = vmatpush2.bf16.msra.mxu0 0
  %4491 = vmatprep.subr.bf16.mxu0 0
  %4492 = vmatpush2.bf16.msra.mxu0 0
  %4493 = vmatprep.subr.bf16.mxu0 0
  %4494 = vmatpush2.bf16.msra.mxu0 0
  %4495 = vmatprep.mubr.bf16.mxu0 0
  %4496 = vmatmul.mubr.bf16.gmra.mxu0 %v4437
  %v4497 = vpop.f32.mrf.mxu0
  %v4498 = vadd.f32 0.0, %v4497
  %v4499 = vpop.f32.mrf.mxu0
  %v4500 = vpop.f32.mrf.mxu0
  %v4501 = vadd.f32 0.0, %v4500
  %v4502 = vpop.f32.mrf.mxu0
  %4503 = vmatprep.mubr.bf16.mxu0 0
  %4504 = vmatmul.mubr.bf16.gmra.mxu0 %v4440
  %v4505 = vpop.f32.mrf.mxu0
  %v4506 = vadd.f32 0.0, %v4505
  %v4507 = vpop.f32.mrf.mxu0
  %v4508 = vpop.f32.mrf.mxu0
  %v4509 = vadd.f32 0.0, %v4508
  %v4510 = vpop.f32.mrf.mxu0
  %4511 = vmatprep.mubr.bf16.mxu0 0
  %4512 = vmatmul.mubr.bf16.gmra.mxu0 %v4443
  %v4513 = vpop.f32.mrf.mxu0
  %v4514 = vadd.f32 0.0, %v4513
  %v4515 = vpop.f32.mrf.mxu0
  %v4516 = vpop.f32.mrf.mxu0
  %v4517 = vadd.f32 0.0, %v4516
  %v4518 = vpop.f32.mrf.mxu0
  %4519 = vmatprep.mubr.bf16.mxu0 0
  %4520 = vmatmul.mubr.bf16.gmra.mxu0 %v4446
  %v4521 = vpop.f32.mrf.mxu0
  %v4522 = vadd.f32 0.0, %v4521
  %v4523 = vpop.f32.mrf.mxu0
  %v4524 = vpop.f32.mrf.mxu0
  %v4525 = vadd.f32 0.0, %v4524
  %v4526 = vpop.f32.mrf.mxu0
  %4527 = vmatprep.mubr.bf16.mxu0 0
  %4528 = vmatmul.mubr.bf16.gmra.mxu0 %v4449
  %v4529 = vpop.f32.mrf.mxu0
  %v4530 = vadd.f32 0.0, %v4529
  %v4531 = vpop.f32.mrf.mxu0
  %v4532 = vpop.f32.mrf.mxu0
  %v4533 = vadd.f32 0.0, %v4532
  %v4534 = vpop.f32.mrf.mxu0
  %4535 = vmatprep.mubr.bf16.mxu0 0
  %4536 = vmatmul.mubr.bf16.gmra.mxu0 %v4452
  %v4537 = vpop.f32.mrf.mxu0
  %v4538 = vadd.f32 0.0, %v4537
  %v4539 = vpop.f32.mrf.mxu0
  %v4540 = vpop.f32.mrf.mxu0
  %v4541 = vadd.f32 0.0, %v4540
  %v4542 = vpop.f32.mrf.mxu0
  %4543 = vmatprep.mubr.bf16.mxu0 0
  %4544 = vmatmul.mubr.bf16.gmra.mxu0 %v4455
  %v4545 = vpop.f32.mrf.mxu0
  %v4546 = vadd.f32 0.0, %v4545
  %v4547 = vpop.f32.mrf.mxu0
  %v4548 = vpop.f32.mrf.mxu0
  %v4549 = vadd.f32 0.0, %v4548
  %v4550 = vpop.f32.mrf.mxu0
  %4551 = vmatprep.mubr.bf16.mxu0 0
  %4552 = vmatmul.mubr.bf16.gmra.mxu0 %v4458
  %v4553 = vpop.f32.mrf.mxu0
  %v4554 = vadd.f32 0.0, %v4553
  %v4555 = vpop.f32.mrf.mxu0
  %v4556 = vpop.f32.mrf.mxu0
  %v4557 = vadd.f32 0.0, %v4556
  %v4558 = vpop.f32.mrf.mxu0
  %4559 = vdwg.mxu0
  %v4560 = vadd.f32 %v4394, %v4498
  %v4561 = vadd.f32 %v4395, %v4501
  %v4562 = vadd.f32 %v4396, %v4506
  %v4563 = vadd.f32 %v4397, %v4509
  %v4564 = vadd.f32 %v4398, %v4514
  %v4565 = vadd.f32 %v4399, %v4517
  %v4566 = vadd.f32 %v4400, %v4522
  %v4567 = vadd.f32 %v4401, %v4525
  %v4568 = vadd.f32 %v4402, %v4530
  %v4569 = vadd.f32 %v4403, %v4533
  %v4570 = vadd.f32 %v4404, %v4538
  %v4571 = vadd.f32 %v4405, %v4541
  %v4572 = vadd.f32 %v4406, %v4546
  %v4573 = vadd.f32 %v4407, %v4549
  %v4574 = vadd.f32 %v4408, %v4554
  %v4575 = vadd.f32 %v4409, %v4557
  %v4576 = vld [vmem:[%s168 + $0x1] sm:$0xff]
  %v4577 = vld [vmem:[%s168 + $0x11] sm:$0xff]
  %v4578 = vld [vmem:[%s168 + $0x21] sm:$0xff]
  %v4579 = vld [vmem:[%s168 + $0x31] sm:$0xff]
  %v4580 = vld [vmem:[%s168 + $0x41] sm:$0xff]
  %v4581 = vld [vmem:[%s168 + $0x51] sm:$0xff]
  %v4582 = vld [vmem:[%s168 + $0x61] sm:$0xff]
  %v4583 = vld [vmem:[%s168 + $0x71] sm:$0xff]
  %v4584 = vld [vmem:[%s168 + $0xa1] sm:$0xff]
  %v4585 = vld [vmem:[%s168 + $0xb1] sm:$0xff]
  %v4586 = vld [vmem:[%s168 + $0xc1] sm:$0xff]
  %v4587 = vld [vmem:[%s168 + $0xd1] sm:$0xff]
  %v4588 = vld [vmem:[%s168 + $0xe1] sm:$0xff]
  %v4589 = vld [vmem:[%s168 + $0xf1] sm:$0xff]
  %v4590 = vld [vmem:[%s168 + $0x101] sm:$0xff]
  %v4591 = vld [vmem:[%s168 + $0x111] sm:$0xff]
  %v4592 = vpack.c.bf16 %v4577, %v4576
  %v4593 = vpack.c.bf16 %v4579, %v4578
  %v4594 = vpack.c.bf16 %v4581, %v4580
  %v4595 = vpack.c.bf16 %v4583, %v4582
  %v4596 = vpack.c.bf16 %v4585, %v4584
  %v4597 = vpack.c.bf16 %v4587, %v4586
  %v4598 = vpack.c.bf16 %v4589, %v4588
  %v4599 = vpack.c.bf16 %v4591, %v4590
  %s4600 = scalar_lea.vmem %s7, 8
  %v4601 = vld [vmem:[%s4600] sm:$0x3]
  %v4603 = vsel %vm48, %v4592, 0
  %v4606 = vsel %vm48, %v4593, 0
  %v4609 = vsel %vm48, %v4594, 0
  %v4612 = vsel %vm48, %v4595, 0
  %v4615 = vsel %vm48, %v4596, 0
  %v4618 = vsel %vm48, %v4597, 0
  %v4621 = vsel %vm48, %v4598, 0
  %v4624 = vsel %vm48, %v4599, 0
  %v4627 = vsel %vm260, %v4601, 0
  %4629 = vmatprep.subr.bf16.mxu0 0
  %4630 = vmatpush1.bf16.msra.mxu0 0
  %4631 = vmatprep.subr.bf16.mxu0 0
  %4632 = vmatpush1.bf16.msra.mxu0 0
  %4633 = vmatprep.subr.bf16.mxu0 0
  %4634 = vmatpush1.bf16.msra.mxu0 0
  %4635 = vmatprep.subr.bf16.mxu0 0
  %4636 = vmatpush1.bf16.msra.mxu0 0
  %4637 = vmatprep.subr.bf16.mxu0 0
  %4638 = vmatpush1.bf16.msra.mxu0 0
  %4639 = vmatprep.subr.bf16.mxu0 0
  %4640 = vmatpush1.bf16.msra.mxu0 0
  %4641 = vmatprep.subr.bf16.mxu0 0
  %4642 = vmatpush1.bf16.msra.mxu0 0
  %4643 = vmatprep.subr.bf16.mxu0 0
  %4644 = vmatpush1.bf16.msra.mxu0 %v4627
  %4645 = vmatprep.subr.bf16.mxu0 0
  %4646 = vmatpush2.bf16.msra.mxu0 0
  %4647 = vmatprep.subr.bf16.mxu0 0
  %4648 = vmatpush2.bf16.msra.mxu0 0
  %4649 = vmatprep.subr.bf16.mxu0 0
  %4650 = vmatpush2.bf16.msra.mxu0 0
  %4651 = vmatprep.subr.bf16.mxu0 0
  %4652 = vmatpush2.bf16.msra.mxu0 0
  %4653 = vmatprep.subr.bf16.mxu0 0
  %4654 = vmatpush2.bf16.msra.mxu0 0
  %4655 = vmatprep.subr.bf16.mxu0 0
  %4656 = vmatpush2.bf16.msra.mxu0 0
  %4657 = vmatprep.subr.bf16.mxu0 0
  %4658 = vmatpush2.bf16.msra.mxu0 0
  %4659 = vmatprep.subr.bf16.mxu0 0
  %4660 = vmatpush2.bf16.msra.mxu0 0
  %4661 = vmatprep.mubr.bf16.mxu0 0
  %4662 = vmatmul.mubr.bf16.gmra.mxu0 %v4603
  %v4663 = vpop.f32.mrf.mxu0
  %v4664 = vadd.f32 0.0, %v4663
  %v4665 = vpop.f32.mrf.mxu0
  %v4666 = vpop.f32.mrf.mxu0
  %v4667 = vadd.f32 0.0, %v4666
  %v4668 = vpop.f32.mrf.mxu0
  %4669 = vmatprep.mubr.bf16.mxu0 0
  %4670 = vmatmul.mubr.bf16.gmra.mxu0 %v4606
  %v4671 = vpop.f32.mrf.mxu0
  %v4672 = vadd.f32 0.0, %v4671
  %v4673 = vpop.f32.mrf.mxu0
  %v4674 = vpop.f32.mrf.mxu0
  %v4675 = vadd.f32 0.0, %v4674
  %v4676 = vpop.f32.mrf.mxu0
  %4677 = vmatprep.mubr.bf16.mxu0 0
  %4678 = vmatmul.mubr.bf16.gmra.mxu0 %v4609
  %v4679 = vpop.f32.mrf.mxu0
  %v4680 = vadd.f32 0.0, %v4679
  %v4681 = vpop.f32.mrf.mxu0
  %v4682 = vpop.f32.mrf.mxu0
  %v4683 = vadd.f32 0.0, %v4682
  %v4684 = vpop.f32.mrf.mxu0
  %4685 = vmatprep.mubr.bf16.mxu0 0
  %4686 = vmatmul.mubr.bf16.gmra.mxu0 %v4612
  %v4687 = vpop.f32.mrf.mxu0
  %v4688 = vadd.f32 0.0, %v4687
  %v4689 = vpop.f32.mrf.mxu0
  %v4690 = vpop.f32.mrf.mxu0
  %v4691 = vadd.f32 0.0, %v4690
  %v4692 = vpop.f32.mrf.mxu0
  %4693 = vmatprep.mubr.bf16.mxu0 0
  %4694 = vmatmul.mubr.bf16.gmra.mxu0 %v4615
  %v4695 = vpop.f32.mrf.mxu0
  %v4696 = vadd.f32 0.0, %v4695
  %v4697 = vpop.f32.mrf.mxu0
  %v4698 = vpop.f32.mrf.mxu0
  %v4699 = vadd.f32 0.0, %v4698
  %v4700 = vpop.f32.mrf.mxu0
  %4701 = vmatprep.mubr.bf16.mxu0 0
  %4702 = vmatmul.mubr.bf16.gmra.mxu0 %v4618
  %v4703 = vpop.f32.mrf.mxu0
  %v4704 = vadd.f32 0.0, %v4703
  %v4705 = vpop.f32.mrf.mxu0
  %v4706 = vpop.f32.mrf.mxu0
  %v4707 = vadd.f32 0.0, %v4706
  %v4708 = vpop.f32.mrf.mxu0
  %4709 = vmatprep.mubr.bf16.mxu0 0
  %4710 = vmatmul.mubr.bf16.gmra.mxu0 %v4621
  %v4711 = vpop.f32.mrf.mxu0
  %v4712 = vadd.f32 0.0, %v4711
  %v4713 = vpop.f32.mrf.mxu0
  %v4714 = vpop.f32.mrf.mxu0
  %v4715 = vadd.f32 0.0, %v4714
  %v4716 = vpop.f32.mrf.mxu0
  %4717 = vmatprep.mubr.bf16.mxu0 0
  %4718 = vmatmul.mubr.bf16.gmra.mxu0 %v4624
  %v4719 = vpop.f32.mrf.mxu0
  %v4720 = vadd.f32 0.0, %v4719
  %v4721 = vpop.f32.mrf.mxu0
  %v4722 = vpop.f32.mrf.mxu0
  %v4723 = vadd.f32 0.0, %v4722
  %v4724 = vpop.f32.mrf.mxu0
  %4725 = vdwg.mxu0
  %v4726 = vadd.f32 %v4560, %v4664
  %v4727 = vadd.f32 %v4561, %v4667
  %v4728 = vadd.f32 %v4562, %v4672
  %v4729 = vadd.f32 %v4563, %v4675
  %v4730 = vadd.f32 %v4564, %v4680
  %v4731 = vadd.f32 %v4565, %v4683
  %v4732 = vadd.f32 %v4566, %v4688
  %v4733 = vadd.f32 %v4567, %v4691
  %v4734 = vadd.f32 %v4568, %v4696
  %v4735 = vadd.f32 %v4569, %v4699
  %v4736 = vadd.f32 %v4570, %v4704
  %v4737 = vadd.f32 %v4571, %v4707
  %v4738 = vadd.f32 %v4572, %v4712
  %v4739 = vadd.f32 %v4573, %v4715
  %v4740 = vadd.f32 %v4574, %v4720
  %v4741 = vadd.f32 %v4575, %v4723
  %v4742 = vld [vmem:[%s168 + $0x2] sm:$0xff]
  %v4743 = vld [vmem:[%s168 + $0x12] sm:$0xff]
  %v4744 = vld [vmem:[%s168 + $0x22] sm:$0xff]
  %v4745 = vld [vmem:[%s168 + $0x32] sm:$0xff]
  %v4746 = vld [vmem:[%s168 + $0x42] sm:$0xff]
  %v4747 = vld [vmem:[%s168 + $0x52] sm:$0xff]
  %v4748 = vld [vmem:[%s168 + $0x62] sm:$0xff]
  %v4749 = vld [vmem:[%s168 + $0x72] sm:$0xff]
  %v4750 = vld [vmem:[%s168 + $0xa2] sm:$0xff]
  %v4751 = vld [vmem:[%s168 + $0xb2] sm:$0xff]
  %v4752 = vld [vmem:[%s168 + $0xc2] sm:$0xff]
  %v4753 = vld [vmem:[%s168 + $0xd2] sm:$0xff]
  %v4754 = vld [vmem:[%s168 + $0xe2] sm:$0xff]
  %v4755 = vld [vmem:[%s168 + $0xf2] sm:$0xff]
  %v4756 = vld [vmem:[%s168 + $0x102] sm:$0xff]
  %v4757 = vld [vmem:[%s168 + $0x112] sm:$0xff]
  %v4758 = vpack.c.bf16 %v4743, %v4742
  %v4759 = vpack.c.bf16 %v4745, %v4744
  %v4760 = vpack.c.bf16 %v4747, %v4746
  %v4761 = vpack.c.bf16 %v4749, %v4748
  %v4762 = vpack.c.bf16 %v4751, %v4750
  %v4763 = vpack.c.bf16 %v4753, %v4752
  %v4764 = vpack.c.bf16 %v4755, %v4754
  %v4765 = vpack.c.bf16 %v4757, %v4756
  %s4766 = scalar_lea.vmem %s7, 10
  %v4767 = vld [vmem:[%s4766] sm:$0x3]
  %v4769 = vsel %vm48, %v4758, 0
  %v4772 = vsel %vm48, %v4759, 0
  %v4775 = vsel %vm48, %v4760, 0
  %v4778 = vsel %vm48, %v4761, 0
  %v4781 = vsel %vm48, %v4762, 0
  %v4784 = vsel %vm48, %v4763, 0
  %v4787 = vsel %vm48, %v4764, 0
  %v4790 = vsel %vm48, %v4765, 0
  %v4793 = vsel %vm260, %v4767, 0
  %4795 = vmatprep.subr.bf16.mxu0 0
  %4796 = vmatpush1.bf16.msra.mxu0 0
  %4797 = vmatprep.subr.bf16.mxu0 0
  %4798 = vmatpush1.bf16.msra.mxu0 0
  %4799 = vmatprep.subr.bf16.mxu0 0
  %4800 = vmatpush1.bf16.msra.mxu0 0
  %4801 = vmatprep.subr.bf16.mxu0 0
  %4802 = vmatpush1.bf16.msra.mxu0 0
  %4803 = vmatprep.subr.bf16.mxu0 0
  %4804 = vmatpush1.bf16.msra.mxu0 0
  %4805 = vmatprep.subr.bf16.mxu0 0
  %4806 = vmatpush1.bf16.msra.mxu0 0
  %4807 = vmatprep.subr.bf16.mxu0 0
  %4808 = vmatpush1.bf16.msra.mxu0 0
  %4809 = vmatprep.subr.bf16.mxu0 0
  %4810 = vmatpush1.bf16.msra.mxu0 %v4793
  %4811 = vmatprep.subr.bf16.mxu0 0
  %4812 = vmatpush2.bf16.msra.mxu0 0
  %4813 = vmatprep.subr.bf16.mxu0 0
  %4814 = vmatpush2.bf16.msra.mxu0 0
  %4815 = vmatprep.subr.bf16.mxu0 0
  %4816 = vmatpush2.bf16.msra.mxu0 0
  %4817 = vmatprep.subr.bf16.mxu0 0
  %4818 = vmatpush2.bf16.msra.mxu0 0
  %4819 = vmatprep.subr.bf16.mxu0 0
  %4820 = vmatpush2.bf16.msra.mxu0 0
  %4821 = vmatprep.subr.bf16.mxu0 0
  %4822 = vmatpush2.bf16.msra.mxu0 0
  %4823 = vmatprep.subr.bf16.mxu0 0
  %4824 = vmatpush2.bf16.msra.mxu0 0
  %4825 = vmatprep.subr.bf16.mxu0 0
  %4826 = vmatpush2.bf16.msra.mxu0 0
  %4827 = vmatprep.mubr.bf16.mxu0 0
  %4828 = vmatmul.mubr.bf16.gmra.mxu0 %v4769
  %v4829 = vpop.f32.mrf.mxu0
  %v4830 = vadd.f32 0.0, %v4829
  %v4831 = vpop.f32.mrf.mxu0
  %v4832 = vpop.f32.mrf.mxu0
  %v4833 = vadd.f32 0.0, %v4832
  %v4834 = vpop.f32.mrf.mxu0
  %4835 = vmatprep.mubr.bf16.mxu0 0
  %4836 = vmatmul.mubr.bf16.gmra.mxu0 %v4772
  %v4837 = vpop.f32.mrf.mxu0
  %v4838 = vadd.f32 0.0, %v4837
  %v4839 = vpop.f32.mrf.mxu0
  %v4840 = vpop.f32.mrf.mxu0
  %v4841 = vadd.f32 0.0, %v4840
  %v4842 = vpop.f32.mrf.mxu0
  %4843 = vmatprep.mubr.bf16.mxu0 0
  %4844 = vmatmul.mubr.bf16.gmra.mxu0 %v4775
  %v4845 = vpop.f32.mrf.mxu0
  %v4846 = vadd.f32 0.0, %v4845
  %v4847 = vpop.f32.mrf.mxu0
  %v4848 = vpop.f32.mrf.mxu0
  %v4849 = vadd.f32 0.0, %v4848
  %v4850 = vpop.f32.mrf.mxu0
  %4851 = vmatprep.mubr.bf16.mxu0 0
  %4852 = vmatmul.mubr.bf16.gmra.mxu0 %v4778
  %v4853 = vpop.f32.mrf.mxu0
  %v4854 = vadd.f32 0.0, %v4853
  %v4855 = vpop.f32.mrf.mxu0
  %v4856 = vpop.f32.mrf.mxu0
  %v4857 = vadd.f32 0.0, %v4856
  %v4858 = vpop.f32.mrf.mxu0
  %4859 = vmatprep.mubr.bf16.mxu0 0
  %4860 = vmatmul.mubr.bf16.gmra.mxu0 %v4781
  %v4861 = vpop.f32.mrf.mxu0
  %v4862 = vadd.f32 0.0, %v4861
  %v4863 = vpop.f32.mrf.mxu0
  %v4864 = vpop.f32.mrf.mxu0
  %v4865 = vadd.f32 0.0, %v4864
  %v4866 = vpop.f32.mrf.mxu0
  %4867 = vmatprep.mubr.bf16.mxu0 0
  %4868 = vmatmul.mubr.bf16.gmra.mxu0 %v4784
  %v4869 = vpop.f32.mrf.mxu0
  %v4870 = vadd.f32 0.0, %v4869
  %v4871 = vpop.f32.mrf.mxu0
  %v4872 = vpop.f32.mrf.mxu0
  %v4873 = vadd.f32 0.0, %v4872
  %v4874 = vpop.f32.mrf.mxu0
  %4875 = vmatprep.mubr.bf16.mxu0 0
  %4876 = vmatmul.mubr.bf16.gmra.mxu0 %v4787
  %v4877 = vpop.f32.mrf.mxu0
  %v4878 = vadd.f32 0.0, %v4877
  %v4879 = vpop.f32.mrf.mxu0
  %v4880 = vpop.f32.mrf.mxu0
  %v4881 = vadd.f32 0.0, %v4880
  %v4882 = vpop.f32.mrf.mxu0
  %4883 = vmatprep.mubr.bf16.mxu0 0
  %4884 = vmatmul.mubr.bf16.gmra.mxu0 %v4790
  %v4885 = vpop.f32.mrf.mxu0
  %v4886 = vadd.f32 0.0, %v4885
  %v4887 = vpop.f32.mrf.mxu0
  %v4888 = vpop.f32.mrf.mxu0
  %v4889 = vadd.f32 0.0, %v4888
  %v4890 = vpop.f32.mrf.mxu0
  %4891 = vdwg.mxu0
  %v4892 = vadd.f32 %v4726, %v4830
  %v4893 = vadd.f32 %v4727, %v4833
  %v4894 = vadd.f32 %v4728, %v4838
  %v4895 = vadd.f32 %v4729, %v4841
  %v4896 = vadd.f32 %v4730, %v4846
  %v4897 = vadd.f32 %v4731, %v4849
  %v4898 = vadd.f32 %v4732, %v4854
  %v4899 = vadd.f32 %v4733, %v4857
  %v4900 = vadd.f32 %v4734, %v4862
  %v4901 = vadd.f32 %v4735, %v4865
  %v4902 = vadd.f32 %v4736, %v4870
  %v4903 = vadd.f32 %v4737, %v4873
  %v4904 = vadd.f32 %v4738, %v4878
  %v4905 = vadd.f32 %v4739, %v4881
  %v4906 = vadd.f32 %v4740, %v4886
  %v4907 = vadd.f32 %v4741, %v4889
  %v4908 = vld [vmem:[%s1149] sm:$0xff]
  %v4909 = vld [vmem:[%s1149 + $0x10] sm:$0xff]
  %v4910 = vld [vmem:[%s1149 + $0x20] sm:$0xff]
  %v4911 = vld [vmem:[%s1149 + $0x30] sm:$0xff]
  %v4912 = vld [vmem:[%s1149 + $0x40] sm:$0xff]
  %v4913 = vld [vmem:[%s1149 + $0x50] sm:$0xff]
  %v4914 = vld [vmem:[%s1149 + $0x60] sm:$0xff]
  %v4915 = vld [vmem:[%s1149 + $0x70] sm:$0xff]
  %v4916 = vld [vmem:[%s1149 + $0xa0] sm:$0xff]
  %v4917 = vld [vmem:[%s1149 + $0xb0] sm:$0xff]
  %v4918 = vld [vmem:[%s1149 + $0xc0] sm:$0xff]
  %v4919 = vld [vmem:[%s1149 + $0xd0] sm:$0xff]
  %v4920 = vld [vmem:[%s1149 + $0xe0] sm:$0xff]
  %v4921 = vld [vmem:[%s1149 + $0xf0] sm:$0xff]
  %v4922 = vld [vmem:[%s1149 + $0x100] sm:$0xff]
  %v4923 = vld [vmem:[%s1149 + $0x110] sm:$0xff]
  %v4924 = vpack.c.bf16 %v4909, %v4908
  %v4925 = vpack.c.bf16 %v4911, %v4910
  %v4926 = vpack.c.bf16 %v4913, %v4912
  %v4927 = vpack.c.bf16 %v4915, %v4914
  %v4928 = vpack.c.bf16 %v4917, %v4916
  %v4929 = vpack.c.bf16 %v4919, %v4918
  %v4930 = vpack.c.bf16 %v4921, %v4920
  %v4931 = vpack.c.bf16 %v4923, %v4922
  %s4932 = scalar_lea.vmem %s7, 12
  %v4933 = vld [vmem:[%s4932] sm:$0x3]
  %v4935 = vsel %vm48, %v4924, 0
  %v4938 = vsel %vm48, %v4925, 0
  %v4941 = vsel %vm48, %v4926, 0
  %v4944 = vsel %vm48, %v4927, 0
  %v4947 = vsel %vm48, %v4928, 0
  %v4950 = vsel %vm48, %v4929, 0
  %v4953 = vsel %vm48, %v4930, 0
  %v4956 = vsel %vm48, %v4931, 0
  %v4959 = vsel %vm260, %v4933, 0
  %4961 = vmatprep.subr.bf16.mxu0 0
  %4962 = vmatpush1.bf16.msra.mxu0 0
  %4963 = vmatprep.subr.bf16.mxu0 0
  %4964 = vmatpush1.bf16.msra.mxu0 0
  %4965 = vmatprep.subr.bf16.mxu0 0
  %4966 = vmatpush1.bf16.msra.mxu0 0
  %4967 = vmatprep.subr.bf16.mxu0 0
  %4968 = vmatpush1.bf16.msra.mxu0 0
  %4969 = vmatprep.subr.bf16.mxu0 0
  %4970 = vmatpush1.bf16.msra.mxu0 0
  %4971 = vmatprep.subr.bf16.mxu0 0
  %4972 = vmatpush1.bf16.msra.mxu0 0
  %4973 = vmatprep.subr.bf16.mxu0 0
  %4974 = vmatpush1.bf16.msra.mxu0 0
  %4975 = vmatprep.subr.bf16.mxu0 0
  %4976 = vmatpush1.bf16.msra.mxu0 %v4959
  %4977 = vmatprep.subr.bf16.mxu0 0
  %4978 = vmatpush2.bf16.msra.mxu0 0
  %4979 = vmatprep.subr.bf16.mxu0 0
  %4980 = vmatpush2.bf16.msra.mxu0 0
  %4981 = vmatprep.subr.bf16.mxu0 0
  %4982 = vmatpush2.bf16.msra.mxu0 0
  %4983 = vmatprep.subr.bf16.mxu0 0
  %4984 = vmatpush2.bf16.msra.mxu0 0
  %4985 = vmatprep.subr.bf16.mxu0 0
  %4986 = vmatpush2.bf16.msra.mxu0 0
  %4987 = vmatprep.subr.bf16.mxu0 0
  %4988 = vmatpush2.bf16.msra.mxu0 0
  %4989 = vmatprep.subr.bf16.mxu0 0
  %4990 = vmatpush2.bf16.msra.mxu0 0
  %4991 = vmatprep.subr.bf16.mxu0 0
  %4992 = vmatpush2.bf16.msra.mxu0 0
  %4993 = vmatprep.mubr.bf16.mxu0 0
  %4994 = vmatmul.mubr.bf16.gmra.mxu0 %v4935
  %v4995 = vpop.f32.mrf.mxu0
  %v4996 = vadd.f32 0.0, %v4995
  %v4997 = vpop.f32.mrf.mxu0
  %v4998 = vpop.f32.mrf.mxu0
  %v4999 = vadd.f32 0.0, %v4998
  %v5000 = vpop.f32.mrf.mxu0
  %5001 = vmatprep.mubr.bf16.mxu0 0
  %5002 = vmatmul.mubr.bf16.gmra.mxu0 %v4938
  %v5003 = vpop.f32.mrf.mxu0
  %v5004 = vadd.f32 0.0, %v5003
  %v5005 = vpop.f32.mrf.mxu0
  %v5006 = vpop.f32.mrf.mxu0
  %v5007 = vadd.f32 0.0, %v5006
  %v5008 = vpop.f32.mrf.mxu0
  %5009 = vmatprep.mubr.bf16.mxu0 0
  %5010 = vmatmul.mubr.bf16.gmra.mxu0 %v4941
  %v5011 = vpop.f32.mrf.mxu0
  %v5012 = vadd.f32 0.0, %v5011
  %v5013 = vpop.f32.mrf.mxu0
  %v5014 = vpop.f32.mrf.mxu0
  %v5015 = vadd.f32 0.0, %v5014
  %v5016 = vpop.f32.mrf.mxu0
  %5017 = vmatprep.mubr.bf16.mxu0 0
  %5018 = vmatmul.mubr.bf16.gmra.mxu0 %v4944
  %v5019 = vpop.f32.mrf.mxu0
  %v5020 = vadd.f32 0.0, %v5019
  %v5021 = vpop.f32.mrf.mxu0
  %v5022 = vpop.f32.mrf.mxu0
  %v5023 = vadd.f32 0.0, %v5022
  %v5024 = vpop.f32.mrf.mxu0
  %5025 = vmatprep.mubr.bf16.mxu0 0
  %5026 = vmatmul.mubr.bf16.gmra.mxu0 %v4947
  %v5027 = vpop.f32.mrf.mxu0
  %v5028 = vadd.f32 0.0, %v5027
  %v5029 = vpop.f32.mrf.mxu0
  %v5030 = vpop.f32.mrf.mxu0
  %v5031 = vadd.f32 0.0, %v5030
  %v5032 = vpop.f32.mrf.mxu0
  %5033 = vmatprep.mubr.bf16.mxu0 0
  %5034 = vmatmul.mubr.bf16.gmra.mxu0 %v4950
  %v5035 = vpop.f32.mrf.mxu0
  %v5036 = vadd.f32 0.0, %v5035
  %v5037 = vpop.f32.mrf.mxu0
  %v5038 = vpop.f32.mrf.mxu0
  %v5039 = vadd.f32 0.0, %v5038
  %v5040 = vpop.f32.mrf.mxu0
  %5041 = vmatprep.mubr.bf16.mxu0 0
  %5042 = vmatmul.mubr.bf16.gmra.mxu0 %v4953
  %v5043 = vpop.f32.mrf.mxu0
  %v5044 = vadd.f32 0.0, %v5043
  %v5045 = vpop.f32.mrf.mxu0
  %v5046 = vpop.f32.mrf.mxu0
  %v5047 = vadd.f32 0.0, %v5046
  %v5048 = vpop.f32.mrf.mxu0
  %5049 = vmatprep.mubr.bf16.mxu0 0
  %5050 = vmatmul.mubr.bf16.gmra.mxu0 %v4956
  %v5051 = vpop.f32.mrf.mxu0
  %v5052 = vadd.f32 0.0, %v5051
  %v5053 = vpop.f32.mrf.mxu0
  %v5054 = vpop.f32.mrf.mxu0
  %v5055 = vadd.f32 0.0, %v5054
  %v5056 = vpop.f32.mrf.mxu0
  %5057 = vdwg.mxu0
  %v5058 = vadd.f32 %v4892, %v4996
  %v5059 = vadd.f32 %v4893, %v4999
  %v5060 = vadd.f32 %v4894, %v5004
  %v5061 = vadd.f32 %v4895, %v5007
  %v5062 = vadd.f32 %v4896, %v5012
  %v5063 = vadd.f32 %v4897, %v5015
  %v5064 = vadd.f32 %v4898, %v5020
  %v5065 = vadd.f32 %v4899, %v5023
  %v5066 = vadd.f32 %v4900, %v5028
  %v5067 = vadd.f32 %v4901, %v5031
  %v5068 = vadd.f32 %v4902, %v5036
  %v5069 = vadd.f32 %v4903, %v5039
  %v5070 = vadd.f32 %v4904, %v5044
  %v5071 = vadd.f32 %v4905, %v5047
  %v5072 = vadd.f32 %v4906, %v5052
  %v5073 = vadd.f32 %v4907, %v5055
  %v5074 = vld [vmem:[%s1149 + $0x1] sm:$0xff]
  %v5075 = vld [vmem:[%s1149 + $0x11] sm:$0xff]
  %v5076 = vld [vmem:[%s1149 + $0x21] sm:$0xff]
  %v5077 = vld [vmem:[%s1149 + $0x31] sm:$0xff]
  %v5078 = vld [vmem:[%s1149 + $0x41] sm:$0xff]
  %v5079 = vld [vmem:[%s1149 + $0x51] sm:$0xff]
  %v5080 = vld [vmem:[%s1149 + $0x61] sm:$0xff]
  %v5081 = vld [vmem:[%s1149 + $0x71] sm:$0xff]
  %v5082 = vld [vmem:[%s1149 + $0xa1] sm:$0xff]
  %v5083 = vld [vmem:[%s1149 + $0xb1] sm:$0xff]
  %v5084 = vld [vmem:[%s1149 + $0xc1] sm:$0xff]
  %v5085 = vld [vmem:[%s1149 + $0xd1] sm:$0xff]
  %v5086 = vld [vmem:[%s1149 + $0xe1] sm:$0xff]
  %v5087 = vld [vmem:[%s1149 + $0xf1] sm:$0xff]
  %v5088 = vld [vmem:[%s1149 + $0x101] sm:$0xff]
  %v5089 = vld [vmem:[%s1149 + $0x111] sm:$0xff]
  %v5090 = vpack.c.bf16 %v5075, %v5074
  %v5091 = vpack.c.bf16 %v5077, %v5076
  %v5092 = vpack.c.bf16 %v5079, %v5078
  %v5093 = vpack.c.bf16 %v5081, %v5080
  %v5094 = vpack.c.bf16 %v5083, %v5082
  %v5095 = vpack.c.bf16 %v5085, %v5084
  %v5096 = vpack.c.bf16 %v5087, %v5086
  %v5097 = vpack.c.bf16 %v5089, %v5088
  %s5098 = scalar_lea.vmem %s7, 14
  %v5099 = vld [vmem:[%s5098] sm:$0x3]
  %v5101 = vsel %vm48, %v5090, 0
  %v5104 = vsel %vm48, %v5091, 0
  %v5107 = vsel %vm48, %v5092, 0
  %v5110 = vsel %vm48, %v5093, 0
  %v5113 = vsel %vm48, %v5094, 0
  %v5116 = vsel %vm48, %v5095, 0
  %v5119 = vsel %vm48, %v5096, 0
  %v5122 = vsel %vm48, %v5097, 0
  %v5125 = vsel %vm260, %v5099, 0
  %5127 = vmatprep.subr.bf16.mxu0 0
  %5128 = vmatpush1.bf16.msra.mxu0 0
  %5129 = vmatprep.subr.bf16.mxu0 0
  %5130 = vmatpush1.bf16.msra.mxu0 0
  %5131 = vmatprep.subr.bf16.mxu0 0
  %5132 = vmatpush1.bf16.msra.mxu0 0
  %5133 = vmatprep.subr.bf16.mxu0 0
  %5134 = vmatpush1.bf16.msra.mxu0 0
  %5135 = vmatprep.subr.bf16.mxu0 0
  %5136 = vmatpush1.bf16.msra.mxu0 0
  %5137 = vmatprep.subr.bf16.mxu0 0
  %5138 = vmatpush1.bf16.msra.mxu0 0
  %5139 = vmatprep.subr.bf16.mxu0 0
  %5140 = vmatpush1.bf16.msra.mxu0 0
  %5141 = vmatprep.subr.bf16.mxu0 0
  %5142 = vmatpush1.bf16.msra.mxu0 %v5125
  %5143 = vmatprep.subr.bf16.mxu0 0
  %5144 = vmatpush2.bf16.msra.mxu0 0
  %5145 = vmatprep.subr.bf16.mxu0 0
  %5146 = vmatpush2.bf16.msra.mxu0 0
  %5147 = vmatprep.subr.bf16.mxu0 0
  %5148 = vmatpush2.bf16.msra.mxu0 0
  %5149 = vmatprep.subr.bf16.mxu0 0
  %5150 = vmatpush2.bf16.msra.mxu0 0
  %5151 = vmatprep.subr.bf16.mxu0 0
  %5152 = vmatpush2.bf16.msra.mxu0 0
  %5153 = vmatprep.subr.bf16.mxu0 0
  %5154 = vmatpush2.bf16.msra.mxu0 0
  %5155 = vmatprep.subr.bf16.mxu0 0
  %5156 = vmatpush2.bf16.msra.mxu0 0
  %5157 = vmatprep.subr.bf16.mxu0 0
  %5158 = vmatpush2.bf16.msra.mxu0 0
  %5159 = vmatprep.mubr.bf16.mxu0 0
  %5160 = vmatmul.mubr.bf16.gmra.mxu0 %v5101
  %v5161 = vpop.f32.mrf.mxu0
  %v5162 = vadd.f32 0.0, %v5161
  %v5163 = vpop.f32.mrf.mxu0
  %v5164 = vpop.f32.mrf.mxu0
  %v5165 = vadd.f32 0.0, %v5164
  %v5166 = vpop.f32.mrf.mxu0
  %5167 = vmatprep.mubr.bf16.mxu0 0
  %5168 = vmatmul.mubr.bf16.gmra.mxu0 %v5104
  %v5169 = vpop.f32.mrf.mxu0
  %v5170 = vadd.f32 0.0, %v5169
  %v5171 = vpop.f32.mrf.mxu0
  %v5172 = vpop.f32.mrf.mxu0
  %v5173 = vadd.f32 0.0, %v5172
  %v5174 = vpop.f32.mrf.mxu0
  %5175 = vmatprep.mubr.bf16.mxu0 0
  %5176 = vmatmul.mubr.bf16.gmra.mxu0 %v5107
  %v5177 = vpop.f32.mrf.mxu0
  %v5178 = vadd.f32 0.0, %v5177
  %v5179 = vpop.f32.mrf.mxu0
  %v5180 = vpop.f32.mrf.mxu0
  %v5181 = vadd.f32 0.0, %v5180
  %v5182 = vpop.f32.mrf.mxu0
  %5183 = vmatprep.mubr.bf16.mxu0 0
  %5184 = vmatmul.mubr.bf16.gmra.mxu0 %v5110
  %v5185 = vpop.f32.mrf.mxu0
  %v5186 = vadd.f32 0.0, %v5185
  %v5187 = vpop.f32.mrf.mxu0
  %v5188 = vpop.f32.mrf.mxu0
  %v5189 = vadd.f32 0.0, %v5188
  %v5190 = vpop.f32.mrf.mxu0
  %5191 = vmatprep.mubr.bf16.mxu0 0
  %5192 = vmatmul.mubr.bf16.gmra.mxu0 %v5113
  %v5193 = vpop.f32.mrf.mxu0
  %v5194 = vadd.f32 0.0, %v5193
  %v5195 = vpop.f32.mrf.mxu0
  %v5196 = vpop.f32.mrf.mxu0
  %v5197 = vadd.f32 0.0, %v5196
  %v5198 = vpop.f32.mrf.mxu0
  %5199 = vmatprep.mubr.bf16.mxu0 0
  %5200 = vmatmul.mubr.bf16.gmra.mxu0 %v5116
  %v5201 = vpop.f32.mrf.mxu0
  %v5202 = vadd.f32 0.0, %v5201
  %v5203 = vpop.f32.mrf.mxu0
  %v5204 = vpop.f32.mrf.mxu0
  %v5205 = vadd.f32 0.0, %v5204
  %v5206 = vpop.f32.mrf.mxu0
  %5207 = vmatprep.mubr.bf16.mxu0 0
  %5208 = vmatmul.mubr.bf16.gmra.mxu0 %v5119
  %v5209 = vpop.f32.mrf.mxu0
  %v5210 = vadd.f32 0.0, %v5209
  %v5211 = vpop.f32.mrf.mxu0
  %v5212 = vpop.f32.mrf.mxu0
  %v5213 = vadd.f32 0.0, %v5212
  %v5214 = vpop.f32.mrf.mxu0
  %5215 = vmatprep.mubr.bf16.mxu0 0
  %5216 = vmatmul.mubr.bf16.gmra.mxu0 %v5122
  %v5217 = vpop.f32.mrf.mxu0
  %v5218 = vadd.f32 0.0, %v5217
  %v5219 = vpop.f32.mrf.mxu0
  %v5220 = vpop.f32.mrf.mxu0
  %v5221 = vadd.f32 0.0, %v5220
  %v5222 = vpop.f32.mrf.mxu0
  %5223 = vdwg.mxu0
  %v5224 = vadd.f32 %v5058, %v5162
  %v5225 = vadd.f32 %v5059, %v5165
  %v5226 = vadd.f32 %v5060, %v5170
  %v5227 = vadd.f32 %v5061, %v5173
  %v5228 = vadd.f32 %v5062, %v5178
  %v5229 = vadd.f32 %v5063, %v5181
  %v5230 = vadd.f32 %v5064, %v5186
  %v5231 = vadd.f32 %v5065, %v5189
  %v5232 = vadd.f32 %v5066, %v5194
  %v5233 = vadd.f32 %v5067, %v5197
  %v5234 = vadd.f32 %v5068, %v5202
  %v5235 = vadd.f32 %v5069, %v5205
  %v5236 = vadd.f32 %v5070, %v5210
  %v5237 = vadd.f32 %v5071, %v5213
  %v5238 = vadd.f32 %v5072, %v5218
  %v5239 = vadd.f32 %v5073, %v5221
  %v5240 = vld [vmem:[%s1149 + $0x2] sm:$0xff]
  %v5241 = vld [vmem:[%s1149 + $0x12] sm:$0xff]
  %v5242 = vld [vmem:[%s1149 + $0x22] sm:$0xff]
  %v5243 = vld [vmem:[%s1149 + $0x32] sm:$0xff]
  %v5244 = vld [vmem:[%s1149 + $0x42] sm:$0xff]
  %v5245 = vld [vmem:[%s1149 + $0x52] sm:$0xff]
  %v5246 = vld [vmem:[%s1149 + $0x62] sm:$0xff]
  %v5247 = vld [vmem:[%s1149 + $0x72] sm:$0xff]
  %v5248 = vld [vmem:[%s1149 + $0xa2] sm:$0xff]
  %v5249 = vld [vmem:[%s1149 + $0xb2] sm:$0xff]
  %v5250 = vld [vmem:[%s1149 + $0xc2] sm:$0xff]
  %v5251 = vld [vmem:[%s1149 + $0xd2] sm:$0xff]
  %v5252 = vld [vmem:[%s1149 + $0xe2] sm:$0xff]
  %v5253 = vld [vmem:[%s1149 + $0xf2] sm:$0xff]
  %v5254 = vld [vmem:[%s1149 + $0x102] sm:$0xff]
  %v5255 = vld [vmem:[%s1149 + $0x112] sm:$0xff]
  %v5256 = vpack.c.bf16 %v5241, %v5240
  %v5257 = vpack.c.bf16 %v5243, %v5242
  %v5258 = vpack.c.bf16 %v5245, %v5244
  %v5259 = vpack.c.bf16 %v5247, %v5246
  %v5260 = vpack.c.bf16 %v5249, %v5248
  %v5261 = vpack.c.bf16 %v5251, %v5250
  %v5262 = vpack.c.bf16 %v5253, %v5252
  %v5263 = vpack.c.bf16 %v5255, %v5254
  %s5264 = scalar_lea.vmem %s7, 16
  %v5265 = vld [vmem:[%s5264] sm:$0x3]
  %v5267 = vsel %vm48, %v5256, 0
  %v5270 = vsel %vm48, %v5257, 0
  %v5273 = vsel %vm48, %v5258, 0
  %v5276 = vsel %vm48, %v5259, 0
  %v5279 = vsel %vm48, %v5260, 0
  %v5282 = vsel %vm48, %v5261, 0
  %v5285 = vsel %vm48, %v5262, 0
  %v5288 = vsel %vm48, %v5263, 0
  %v5291 = vsel %vm260, %v5265, 0
  %5293 = vmatprep.subr.bf16.mxu0 0
  %5294 = vmatpush1.bf16.msra.mxu0 0
  %5295 = vmatprep.subr.bf16.mxu0 0
  %5296 = vmatpush1.bf16.msra.mxu0 0
  %5297 = vmatprep.subr.bf16.mxu0 0
  %5298 = vmatpush1.bf16.msra.mxu0 0
  %5299 = vmatprep.subr.bf16.mxu0 0
  %5300 = vmatpush1.bf16.msra.mxu0 0
  %5301 = vmatprep.subr.bf16.mxu0 0
  %5302 = vmatpush1.bf16.msra.mxu0 0
  %5303 = vmatprep.subr.bf16.mxu0 0
  %5304 = vmatpush1.bf16.msra.mxu0 0
  %5305 = vmatprep.subr.bf16.mxu0 0
  %5306 = vmatpush1.bf16.msra.mxu0 0
  %5307 = vmatprep.subr.bf16.mxu0 0
  %5308 = vmatpush1.bf16.msra.mxu0 %v5291
  %5309 = vmatprep.subr.bf16.mxu0 0
  %5310 = vmatpush2.bf16.msra.mxu0 0
  %5311 = vmatprep.subr.bf16.mxu0 0
  %5312 = vmatpush2.bf16.msra.mxu0 0
  %5313 = vmatprep.subr.bf16.mxu0 0
  %5314 = vmatpush2.bf16.msra.mxu0 0
  %5315 = vmatprep.subr.bf16.mxu0 0
  %5316 = vmatpush2.bf16.msra.mxu0 0
  %5317 = vmatprep.subr.bf16.mxu0 0
  %5318 = vmatpush2.bf16.msra.mxu0 0
  %5319 = vmatprep.subr.bf16.mxu0 0
  %5320 = vmatpush2.bf16.msra.mxu0 0
  %5321 = vmatprep.subr.bf16.mxu0 0
  %5322 = vmatpush2.bf16.msra.mxu0 0
  %5323 = vmatprep.subr.bf16.mxu0 0
  %5324 = vmatpush2.bf16.msra.mxu0 0
  %5325 = vmatprep.mubr.bf16.mxu0 0
  %5326 = vmatmul.mubr.bf16.gmra.mxu0 %v5267
  %v5327 = vpop.f32.mrf.mxu0
  %v5328 = vadd.f32 0.0, %v5327
  %v5329 = vpop.f32.mrf.mxu0
  %v5330 = vpop.f32.mrf.mxu0
  %v5331 = vadd.f32 0.0, %v5330
  %v5332 = vpop.f32.mrf.mxu0
  %5333 = vmatprep.mubr.bf16.mxu0 0
  %5334 = vmatmul.mubr.bf16.gmra.mxu0 %v5270
  %v5335 = vpop.f32.mrf.mxu0
  %v5336 = vadd.f32 0.0, %v5335
  %v5337 = vpop.f32.mrf.mxu0
  %v5338 = vpop.f32.mrf.mxu0
  %v5339 = vadd.f32 0.0, %v5338
  %v5340 = vpop.f32.mrf.mxu0
  %5341 = vmatprep.mubr.bf16.mxu0 0
  %5342 = vmatmul.mubr.bf16.gmra.mxu0 %v5273
  %v5343 = vpop.f32.mrf.mxu0
  %v5344 = vadd.f32 0.0, %v5343
  %v5345 = vpop.f32.mrf.mxu0
  %v5346 = vpop.f32.mrf.mxu0
  %v5347 = vadd.f32 0.0, %v5346
  %v5348 = vpop.f32.mrf.mxu0
  %5349 = vmatprep.mubr.bf16.mxu0 0
  %5350 = vmatmul.mubr.bf16.gmra.mxu0 %v5276
  %v5351 = vpop.f32.mrf.mxu0
  %v5352 = vadd.f32 0.0, %v5351
  %v5353 = vpop.f32.mrf.mxu0
  %v5354 = vpop.f32.mrf.mxu0
  %v5355 = vadd.f32 0.0, %v5354
  %v5356 = vpop.f32.mrf.mxu0
  %5357 = vmatprep.mubr.bf16.mxu0 0
  %5358 = vmatmul.mubr.bf16.gmra.mxu0 %v5279
  %v5359 = vpop.f32.mrf.mxu0
  %v5360 = vadd.f32 0.0, %v5359
  %v5361 = vpop.f32.mrf.mxu0
  %v5362 = vpop.f32.mrf.mxu0
  %v5363 = vadd.f32 0.0, %v5362
  %v5364 = vpop.f32.mrf.mxu0
  %5365 = vmatprep.mubr.bf16.mxu0 0
  %5366 = vmatmul.mubr.bf16.gmra.mxu0 %v5282
  %v5367 = vpop.f32.mrf.mxu0
  %v5368 = vadd.f32 0.0, %v5367
  %v5369 = vpop.f32.mrf.mxu0
  %v5370 = vpop.f32.mrf.mxu0
  %v5371 = vadd.f32 0.0, %v5370
  %v5372 = vpop.f32.mrf.mxu0
  %5373 = vmatprep.mubr.bf16.mxu0 0
  %5374 = vmatmul.mubr.bf16.gmra.mxu0 %v5285
  %v5375 = vpop.f32.mrf.mxu0
  %v5376 = vadd.f32 0.0, %v5375
  %v5377 = vpop.f32.mrf.mxu0
  %v5378 = vpop.f32.mrf.mxu0
  %v5379 = vadd.f32 0.0, %v5378
  %v5380 = vpop.f32.mrf.mxu0
  %5381 = vmatprep.mubr.bf16.mxu0 0
  %5382 = vmatmul.mubr.bf16.gmra.mxu0 %v5288
  %v5383 = vpop.f32.mrf.mxu0
  %v5384 = vadd.f32 0.0, %v5383
  %v5385 = vpop.f32.mrf.mxu0
  %v5386 = vpop.f32.mrf.mxu0
  %v5387 = vadd.f32 0.0, %v5386
  %v5388 = vpop.f32.mrf.mxu0
  %5389 = vdwg.mxu0
  %v5390 = vadd.f32 %v5224, %v5328
  %v5391 = vadd.f32 %v5225, %v5331
  %v5392 = vadd.f32 %v5226, %v5336
  %v5393 = vadd.f32 %v5227, %v5339
  %v5394 = vadd.f32 %v5228, %v5344
  %v5395 = vadd.f32 %v5229, %v5347
  %v5396 = vadd.f32 %v5230, %v5352
  %v5397 = vadd.f32 %v5231, %v5355
  %v5398 = vadd.f32 %v5232, %v5360
  %v5399 = vadd.f32 %v5233, %v5363
  %v5400 = vadd.f32 %v5234, %v5368
  %v5401 = vadd.f32 %v5235, %v5371
  %v5402 = vadd.f32 %v5236, %v5376
  %v5403 = vadd.f32 %v5237, %v5379
  %v5404 = vadd.f32 %v5238, %v5384
  %v5405 = vadd.f32 %v5239, %v5387
  %v5406 = vsel %vm100, %v5390, 0.0
  %5407 = vadd.xlane.f32.xlu0 %v5406
  %v5408 = vpop.xlane.xlu0 %5407
  %v5409 = vsel %vm100, %v5391, 0.0
  %5410 = vadd.xlane.f32.xlu0 %v5409
  %v5411 = vpop.xlane.xlu0 %5410
  %v5412 = vsel %vm100, %v5392, 0.0
  %5413 = vadd.xlane.f32.xlu0 %v5412
  %v5414 = vpop.xlane.xlu0 %5413
  %v5415 = vsel %vm100, %v5393, 0.0
  %5416 = vadd.xlane.f32.xlu0 %v5415
  %v5417 = vpop.xlane.xlu0 %5416
  %v5418 = vsel %vm100, %v5394, 0.0
  %5419 = vadd.xlane.f32.xlu0 %v5418
  %v5420 = vpop.xlane.xlu0 %5419
  %v5421 = vsel %vm100, %v5395, 0.0
  %5422 = vadd.xlane.f32.xlu0 %v5421
  %v5423 = vpop.xlane.xlu0 %5422
  %v5424 = vsel %vm100, %v5396, 0.0
  %5425 = vadd.xlane.f32.xlu0 %v5424
  %v5426 = vpop.xlane.xlu0 %5425
  %v5427 = vsel %vm100, %v5397, 0.0
  %5428 = vadd.xlane.f32.xlu0 %v5427
  %v5429 = vpop.xlane.xlu0 %5428
  %v5430 = vsel %vm100, %v5398, 0.0
  %5431 = vadd.xlane.f32.xlu0 %v5430
  %v5432 = vpop.xlane.xlu0 %5431
  %v5433 = vsel %vm100, %v5399, 0.0
  %5434 = vadd.xlane.f32.xlu0 %v5433
  %v5435 = vpop.xlane.xlu0 %5434
  %v5436 = vsel %vm100, %v5400, 0.0
  %5437 = vadd.xlane.f32.xlu0 %v5436
  %v5438 = vpop.xlane.xlu0 %5437
  %v5439 = vsel %vm100, %v5401, 0.0
  %5440 = vadd.xlane.f32.xlu0 %v5439
  %v5441 = vpop.xlane.xlu0 %5440
  %v5442 = vsel %vm100, %v5402, 0.0
  %5443 = vadd.xlane.f32.xlu0 %v5442
  %v5444 = vpop.xlane.xlu0 %5443
  %v5445 = vsel %vm100, %v5403, 0.0
  %5446 = vadd.xlane.f32.xlu0 %v5445
  %v5447 = vpop.xlane.xlu0 %5446
  %v5448 = vsel %vm100, %v5404, 0.0
  %5449 = vadd.xlane.f32.xlu0 %v5448
  %v5450 = vpop.xlane.xlu0 %5449
  %v5451 = vsel %vm100, %v5405, 0.0
  %5452 = vadd.xlane.f32.xlu0 %v5451
  %v5453 = vpop.xlane.xlu0 %5452
  %v5454 = vadd.f32 %v5408, %v5411
  %v5455 = vadd.f32 %v5454, %v5414
  %v5456 = vadd.f32 %v5455, %v5417
  %v5457 = vadd.f32 %v5456, %v5420
  %v5458 = vadd.f32 %v5457, %v5423
  %v5459 = vadd.f32 %v5458, %v5426
  %v5460 = vadd.f32 %v5459, %v5429
  %v5461 = vrot.slane %v5460, 4
  %v5462 = vadd.f32 %v5460, %v5461
  %v5463 = vrot.slane %v5462, 2
  %v5464 = vadd.f32 %v5462, %v5463
  %v5465 = vrot.slane %v5464, 1
  %v5466 = vadd.f32 %v5464, %v5465
  %v5467 = vadd.f32 %v5432, %v5435
  %v5468 = vadd.f32 %v5467, %v5438
  %v5469 = vadd.f32 %v5468, %v5441
  %v5470 = vadd.f32 %v5469, %v5444
  %v5471 = vadd.f32 %v5470, %v5447
  %v5472 = vadd.f32 %v5471, %v5450
  %v5473 = vadd.f32 %v5472, %v5453
  %v5474 = vrot.slane %v5473, 4
  %v5475 = vadd.f32 %v5473, %v5474
  %v5476 = vrot.slane %v5475, 2
  %v5477 = vadd.f32 %v5475, %v5476
  %v5478 = vrot.slane %v5477, 1
  %v5479 = vadd.f32 %v5477, %v5478
  %v5480 = vmul.f32 %v5466, 0.001953125
  %v5481 = vmul.f32 %v5479, 0.001953125
  %v5482 = vsub.f32 %v5390, %v5480
  %v5483 = vsub.f32 %v5391, %v5480
  %v5484 = vsub.f32 %v5392, %v5480
  %v5485 = vsub.f32 %v5393, %v5480
  %v5486 = vsub.f32 %v5394, %v5480
  %v5487 = vsub.f32 %v5395, %v5480
  %v5488 = vsub.f32 %v5396, %v5480
  %v5489 = vsub.f32 %v5397, %v5480
  %v5490 = vsub.f32 %v5398, %v5481
  %v5491 = vsub.f32 %v5399, %v5481
  %v5492 = vsub.f32 %v5400, %v5481
  %v5493 = vsub.f32 %v5401, %v5481
  %v5494 = vsub.f32 %v5402, %v5481
  %v5495 = vsub.f32 %v5403, %v5481
  %v5496 = vsub.f32 %v5404, %v5481
  %v5497 = vsub.f32 %v5405, %v5481
  %v5498 = vmul.f32 %v5482, %v5482
  %v5499 = vmul.f32 %v5483, %v5483
  %v5500 = vmul.f32 %v5484, %v5484
  %v5501 = vmul.f32 %v5485, %v5485
  %v5502 = vmul.f32 %v5486, %v5486
  %v5503 = vmul.f32 %v5487, %v5487
  %v5504 = vmul.f32 %v5488, %v5488
  %v5505 = vmul.f32 %v5489, %v5489
  %v5506 = vmul.f32 %v5490, %v5490
  %v5507 = vmul.f32 %v5491, %v5491
  %v5508 = vmul.f32 %v5492, %v5492
  %v5509 = vmul.f32 %v5493, %v5493
  %v5510 = vmul.f32 %v5494, %v5494
  %v5511 = vmul.f32 %v5495, %v5495
  %v5512 = vmul.f32 %v5496, %v5496
  %v5513 = vmul.f32 %v5497, %v5497
  %v5514 = vsel %vm100, %v5498, 0.0
  %5515 = vadd.xlane.f32.xlu0 %v5514
  %v5516 = vpop.xlane.xlu0 %5515
  %v5517 = vsel %vm100, %v5499, 0.0
  %5518 = vadd.xlane.f32.xlu0 %v5517
  %v5519 = vpop.xlane.xlu0 %5518
  %v5520 = vsel %vm100, %v5500, 0.0
  %5521 = vadd.xlane.f32.xlu0 %v5520
  %v5522 = vpop.xlane.xlu0 %5521
  %v5523 = vsel %vm100, %v5501, 0.0
  %5524 = vadd.xlane.f32.xlu0 %v5523
  %v5525 = vpop.xlane.xlu0 %5524
  %v5526 = vsel %vm100, %v5502, 0.0
  %5527 = vadd.xlane.f32.xlu0 %v5526
  %v5528 = vpop.xlane.xlu0 %5527
  %v5529 = vsel %vm100, %v5503, 0.0
  %5530 = vadd.xlane.f32.xlu0 %v5529
  %v5531 = vpop.xlane.xlu0 %5530
  %v5532 = vsel %vm100, %v5504, 0.0
  %5533 = vadd.xlane.f32.xlu0 %v5532
  %v5534 = vpop.xlane.xlu0 %5533
  %v5535 = vsel %vm100, %v5505, 0.0
  %5536 = vadd.xlane.f32.xlu0 %v5535
  %v5537 = vpop.xlane.xlu0 %5536
  %v5538 = vsel %vm100, %v5506, 0.0
  %5539 = vadd.xlane.f32.xlu0 %v5538
  %v5540 = vpop.xlane.xlu0 %5539
  %v5541 = vsel %vm100, %v5507, 0.0
  %5542 = vadd.xlane.f32.xlu0 %v5541
  %v5543 = vpop.xlane.xlu0 %5542
  %v5544 = vsel %vm100, %v5508, 0.0
  %5545 = vadd.xlane.f32.xlu0 %v5544
  %v5546 = vpop.xlane.xlu0 %5545
  %v5547 = vsel %vm100, %v5509, 0.0
  %5548 = vadd.xlane.f32.xlu0 %v5547
  %v5549 = vpop.xlane.xlu0 %5548
  %v5550 = vsel %vm100, %v5510, 0.0
  %5551 = vadd.xlane.f32.xlu0 %v5550
  %v5552 = vpop.xlane.xlu0 %5551
  %v5553 = vsel %vm100, %v5511, 0.0
  %5554 = vadd.xlane.f32.xlu0 %v5553
  %v5555 = vpop.xlane.xlu0 %5554
  %v5556 = vsel %vm100, %v5512, 0.0
  %5557 = vadd.xlane.f32.xlu0 %v5556
  %v5558 = vpop.xlane.xlu0 %5557
  %v5559 = vsel %vm100, %v5513, 0.0
  %5560 = vadd.xlane.f32.xlu0 %v5559
  %v5561 = vpop.xlane.xlu0 %5560
  %v5562 = vadd.f32 %v5516, %v5519
  %v5563 = vadd.f32 %v5562, %v5522
  %v5564 = vadd.f32 %v5563, %v5525
  %v5565 = vadd.f32 %v5564, %v5528
  %v5566 = vadd.f32 %v5565, %v5531
  %v5567 = vadd.f32 %v5566, %v5534
  %v5568 = vadd.f32 %v5567, %v5537
  %v5569 = vrot.slane %v5568, 4
  %v5570 = vadd.f32 %v5568, %v5569
  %v5571 = vrot.slane %v5570, 2
  %v5572 = vadd.f32 %v5570, %v5571
  %v5573 = vrot.slane %v5572, 1
  %v5574 = vadd.f32 %v5572, %v5573
  %v5575 = vadd.f32 %v5540, %v5543
  %v5576 = vadd.f32 %v5575, %v5546
  %v5577 = vadd.f32 %v5576, %v5549
  %v5578 = vadd.f32 %v5577, %v5552
  %v5579 = vadd.f32 %v5578, %v5555
  %v5580 = vadd.f32 %v5579, %v5558
  %v5581 = vadd.f32 %v5580, %v5561
  %v5582 = vrot.slane %v5581, 4
  %v5583 = vadd.f32 %v5581, %v5582
  %v5584 = vrot.slane %v5583, 2
  %v5585 = vadd.f32 %v5583, %v5584
  %v5586 = vrot.slane %v5585, 1
  %v5587 = vadd.f32 %v5585, %v5586
  %v5588 = vmul.f32 %v5574, 0.001953125
  %v5589 = vmul.f32 %v5587, 0.001953125
  %v5590 = vadd.f32 %v5588, 1e-05
  %v5591 = vadd.f32 %v5589, 1e-05
  %v5592 = vrsqrt.pop %v5590
  %v5593 = vrsqrt.pop %v5591
  %v5594 = vmul.f32 %v5482, %v5592
  %v5595 = vmul.f32 %v5483, %v5592
  %v5596 = vmul.f32 %v5484, %v5592
  %v5597 = vmul.f32 %v5485, %v5592
  %v5598 = vmul.f32 %v5486, %v5592
  %v5599 = vmul.f32 %v5487, %v5592
  %v5600 = vmul.f32 %v5488, %v5592
  %v5601 = vmul.f32 %v5489, %v5592
  %v5602 = vmul.f32 %v5490, %v5593
  %v5603 = vmul.f32 %v5491, %v5593
  %v5604 = vmul.f32 %v5492, %v5593
  %v5605 = vmul.f32 %v5493, %v5593
  %v5606 = vmul.f32 %v5494, %v5593
  %v5607 = vmul.f32 %v5495, %v5593
  %v5608 = vmul.f32 %v5496, %v5593
  %v5609 = vmul.f32 %v5497, %v5593
  %v5610 = vld [vmem:[%s8] sm:$0x1]
  %v5612 = vlaneseq
  %v5613 = vshrl.u32 %v5612, 7
  %v5614 = vsub.s32 0, %v5613
  %v5615 = vrot.slane %v5610, %v5614
  %v5617 = vmul.f32 %v5594, %v5615
  %v5618 = vmul.f32 %v5595, %v5615
  %v5619 = vmul.f32 %v5596, %v5615
  %v5620 = vmul.f32 %v5597, %v5615
  %v5621 = vmul.f32 %v5598, %v5615
  %v5622 = vmul.f32 %v5599, %v5615
  %v5623 = vmul.f32 %v5600, %v5615
  %v5624 = vmul.f32 %v5601, %v5615
  %v5625 = vmul.f32 %v5602, %v5615
  %v5626 = vmul.f32 %v5603, %v5615
  %v5627 = vmul.f32 %v5604, %v5615
  %v5628 = vmul.f32 %v5605, %v5615
  %v5629 = vmul.f32 %v5606, %v5615
  %v5630 = vmul.f32 %v5607, %v5615
  %v5631 = vmul.f32 %v5608, %v5615
  %v5632 = vmul.f32 %v5609, %v5615
  %v5633 = vld [vmem:[%s9] sm:$0x1]
  %v5635 = vlaneseq
  %v5636 = vshrl.u32 %v5635, 7
  %v5637 = vsub.s32 0, %v5636
  %v5638 = vrot.slane %v5633, %v5637
  %v5640 = vadd.f32 %v5617, %v5638
  %v5641 = vadd.f32 %v5618, %v5638
  %v5642 = vadd.f32 %v5619, %v5638
  %v5643 = vadd.f32 %v5620, %v5638
  %v5644 = vadd.f32 %v5621, %v5638
  %v5645 = vadd.f32 %v5622, %v5638
  %v5646 = vadd.f32 %v5623, %v5638
  %v5647 = vadd.f32 %v5624, %v5638
  %v5648 = vadd.f32 %v5625, %v5638
  %v5649 = vadd.f32 %v5626, %v5638
  %v5650 = vadd.f32 %v5627, %v5638
  %v5651 = vadd.f32 %v5628, %v5638
  %v5652 = vadd.f32 %v5629, %v5638
  %v5653 = vadd.f32 %v5630, %v5638
  %v5654 = vadd.f32 %v5631, %v5638
  %v5655 = vadd.f32 %v5632, %v5638
  %v5656 = vmul.f32 %v5640, 0.5
  %v5657 = vmul.f32 %v5641, 0.5
  %v5658 = vmul.f32 %v5642, 0.5
  %v5659 = vmul.f32 %v5643, 0.5
  %v5660 = vmul.f32 %v5644, 0.5
  %v5661 = vmul.f32 %v5645, 0.5
  %v5662 = vmul.f32 %v5646, 0.5
  %v5663 = vmul.f32 %v5647, 0.5
  %v5664 = vmul.f32 %v5648, 0.5
  %v5665 = vmul.f32 %v5649, 0.5
  %v5666 = vmul.f32 %v5650, 0.5
  %v5667 = vmul.f32 %v5651, 0.5
  %v5668 = vmul.f32 %v5652, 0.5
  %v5669 = vmul.f32 %v5653, 0.5
  %v5670 = vmul.f32 %v5654, 0.5
  %v5671 = vmul.f32 %v5655, 0.5
  %v5672 = vmul.f32 %v5640, 0.044715
  %v5673 = vmul.f32 %v5641, 0.044715
  %v5674 = vmul.f32 %v5642, 0.044715
  %v5675 = vmul.f32 %v5643, 0.044715
  %v5676 = vmul.f32 %v5644, 0.044715
  %v5677 = vmul.f32 %v5645, 0.044715
  %v5678 = vmul.f32 %v5646, 0.044715
  %v5679 = vmul.f32 %v5647, 0.044715
  %v5680 = vmul.f32 %v5648, 0.044715
  %v5681 = vmul.f32 %v5649, 0.044715
  %v5682 = vmul.f32 %v5650, 0.044715
  %v5683 = vmul.f32 %v5651, 0.044715
  %v5684 = vmul.f32 %v5652, 0.044715
  %v5685 = vmul.f32 %v5653, 0.044715
  %v5686 = vmul.f32 %v5654, 0.044715
  %v5687 = vmul.f32 %v5655, 0.044715
  %v5688 = vmul.f32 %v5672, %v5640
  %v5689 = vmul.f32 %v5673, %v5641
  %v5690 = vmul.f32 %v5674, %v5642
  %v5691 = vmul.f32 %v5675, %v5643
  %v5692 = vmul.f32 %v5676, %v5644
  %v5693 = vmul.f32 %v5677, %v5645
  %v5694 = vmul.f32 %v5678, %v5646
  %v5695 = vmul.f32 %v5679, %v5647
  %v5696 = vmul.f32 %v5680, %v5648
  %v5697 = vmul.f32 %v5681, %v5649
  %v5698 = vmul.f32 %v5682, %v5650
  %v5699 = vmul.f32 %v5683, %v5651
  %v5700 = vmul.f32 %v5684, %v5652
  %v5701 = vmul.f32 %v5685, %v5653
  %v5702 = vmul.f32 %v5686, %v5654
  %v5703 = vmul.f32 %v5687, %v5655
  %v5704 = vmul.f32 %v5688, %v5640
  %v5705 = vmul.f32 %v5689, %v5641
  %v5706 = vmul.f32 %v5690, %v5642
  %v5707 = vmul.f32 %v5691, %v5643
  %v5708 = vmul.f32 %v5692, %v5644
  %v5709 = vmul.f32 %v5693, %v5645
  %v5710 = vmul.f32 %v5694, %v5646
  %v5711 = vmul.f32 %v5695, %v5647
  %v5712 = vmul.f32 %v5696, %v5648
  %v5713 = vmul.f32 %v5697, %v5649
  %v5714 = vmul.f32 %v5698, %v5650
  %v5715 = vmul.f32 %v5699, %v5651
  %v5716 = vmul.f32 %v5700, %v5652
  %v5717 = vmul.f32 %v5701, %v5653
  %v5718 = vmul.f32 %v5702, %v5654
  %v5719 = vmul.f32 %v5703, %v5655
  %v5720 = vadd.f32 %v5640, %v5704
  %v5721 = vadd.f32 %v5641, %v5705
  %v5722 = vadd.f32 %v5642, %v5706
  %v5723 = vadd.f32 %v5643, %v5707
  %v5724 = vadd.f32 %v5644, %v5708
  %v5725 = vadd.f32 %v5645, %v5709
  %v5726 = vadd.f32 %v5646, %v5710
  %v5727 = vadd.f32 %v5647, %v5711
  %v5728 = vadd.f32 %v5648, %v5712
  %v5729 = vadd.f32 %v5649, %v5713
  %v5730 = vadd.f32 %v5650, %v5714
  %v5731 = vadd.f32 %v5651, %v5715
  %v5732 = vadd.f32 %v5652, %v5716
  %v5733 = vadd.f32 %v5653, %v5717
  %v5734 = vadd.f32 %v5654, %v5718
  %v5735 = vadd.f32 %v5655, %v5719
  %v5736 = vmul.f32 %v5720, 0.7978846
  %v5737 = vmul.f32 %v5721, 0.7978846
  %v5738 = vmul.f32 %v5722, 0.7978846
  %v5739 = vmul.f32 %v5723, 0.7978846
  %v5740 = vmul.f32 %v5724, 0.7978846
  %v5741 = vmul.f32 %v5725, 0.7978846
  %v5742 = vmul.f32 %v5726, 0.7978846
  %v5743 = vmul.f32 %v5727, 0.7978846
  %v5744 = vmul.f32 %v5728, 0.7978846
  %v5745 = vmul.f32 %v5729, 0.7978846
  %v5746 = vmul.f32 %v5730, 0.7978846
  %v5747 = vmul.f32 %v5731, 0.7978846
  %v5748 = vmul.f32 %v5732, 0.7978846
  %v5749 = vmul.f32 %v5733, 0.7978846
  %v5750 = vmul.f32 %v5734, 0.7978846
  %v5751 = vmul.f32 %v5735, 0.7978846
  %v5752 = vtanh.pop %v5736
  %v5753 = vtanh.pop %v5737
  %v5754 = vtanh.pop %v5738
  %v5755 = vtanh.pop %v5739
  %v5756 = vtanh.pop %v5740
  %v5757 = vtanh.pop %v5741
  %v5758 = vtanh.pop %v5742
  %v5759 = vtanh.pop %v5743
  %v5760 = vtanh.pop %v5744
  %v5761 = vtanh.pop %v5745
  %v5762 = vtanh.pop %v5746
  %v5763 = vtanh.pop %v5747
  %v5764 = vtanh.pop %v5748
  %v5765 = vtanh.pop %v5749
  %v5766 = vtanh.pop %v5750
  %v5767 = vtanh.pop %v5751
  %v5768 = vadd.f32 %v5752, 1.0
  %v5769 = vadd.f32 %v5753, 1.0
  %v5770 = vadd.f32 %v5754, 1.0
  %v5771 = vadd.f32 %v5755, 1.0
  %v5772 = vadd.f32 %v5756, 1.0
  %v5773 = vadd.f32 %v5757, 1.0
  %v5774 = vadd.f32 %v5758, 1.0
  %v5775 = vadd.f32 %v5759, 1.0
  %v5776 = vadd.f32 %v5760, 1.0
  %v5777 = vadd.f32 %v5761, 1.0
  %v5778 = vadd.f32 %v5762, 1.0
  %v5779 = vadd.f32 %v5763, 1.0
  %v5780 = vadd.f32 %v5764, 1.0
  %v5781 = vadd.f32 %v5765, 1.0
  %v5782 = vadd.f32 %v5766, 1.0
  %v5783 = vadd.f32 %v5767, 1.0
  %v5784 = vmul.f32 %v5656, %v5768
  %v5785 = vmul.f32 %v5657, %v5769
  %v5786 = vmul.f32 %v5658, %v5770
  %v5787 = vmul.f32 %v5659, %v5771
  %v5788 = vmul.f32 %v5660, %v5772
  %v5789 = vmul.f32 %v5661, %v5773
  %v5790 = vmul.f32 %v5662, %v5774
  %v5791 = vmul.f32 %v5663, %v5775
  %v5792 = vmul.f32 %v5664, %v5776
  %v5793 = vmul.f32 %v5665, %v5777
  %v5794 = vmul.f32 %v5666, %v5778
  %v5795 = vmul.f32 %v5667, %v5779
  %v5796 = vmul.f32 %v5668, %v5780
  %v5797 = vmul.f32 %v5669, %v5781
  %v5798 = vmul.f32 %v5670, %v5782
  %v5799 = vmul.f32 %v5671, %v5783
  %s5800 = scalar_lea.vmem [#allocation3], 16
  %5801 = vst.msk [vmem:[%s5800 + $0x1] sm:$0xff] %vm100, %v5784
  %5802 = vst.msk [vmem:[%s5800 + $0x11] sm:$0xff] %vm100, %v5785
  %5803 = vst.msk [vmem:[%s5800 + $0x21] sm:$0xff] %vm100, %v5786
  %5804 = vst.msk [vmem:[%s5800 + $0x31] sm:$0xff] %vm100, %v5787
  %5805 = vst.msk [vmem:[%s5800 + $0x41] sm:$0xff] %vm100, %v5788
  %5806 = vst.msk [vmem:[%s5800 + $0x51] sm:$0xff] %vm100, %v5789
  %5807 = vst.msk [vmem:[%s5800 + $0x61] sm:$0xff] %vm100, %v5790
  %5808 = vst.msk [vmem:[%s5800 + $0x71] sm:$0xff] %vm100, %v5791
  %5809 = vst.msk [vmem:[%s5800 + $0xa1] sm:$0xff] %vm100, %v5792
  %5810 = vst.msk [vmem:[%s5800 + $0xb1] sm:$0xff] %vm100, %v5793
  %5811 = vst.msk [vmem:[%s5800 + $0xc1] sm:$0xff] %vm100, %v5794
  %5812 = vst.msk [vmem:[%s5800 + $0xd1] sm:$0xff] %vm100, %v5795
  %5813 = vst.msk [vmem:[%s5800 + $0xe1] sm:$0xff] %vm100, %v5796
  %5814 = vst.msk [vmem:[%s5800 + $0xf1] sm:$0xff] %vm100, %v5797
  %5815 = vst.msk [vmem:[%s5800 + $0x101] sm:$0xff] %vm100, %v5798
  %5816 = vst.msk [vmem:[%s5800 + $0x111] sm:$0xff] %vm100, %v5799
  %v5817 = vld [vmem:[#allocation3] sm:$0xff]
  %v5818 = vld [vmem:[#allocation3 + $0x10] sm:$0xff]
  %v5819 = vld [vmem:[#allocation3 + $0x20] sm:$0xff]
  %v5820 = vld [vmem:[#allocation3 + $0x30] sm:$0xff]
  %v5821 = vld [vmem:[#allocation3 + $0x40] sm:$0xff]
  %v5822 = vld [vmem:[#allocation3 + $0x50] sm:$0xff]
  %v5823 = vld [vmem:[#allocation3 + $0x60] sm:$0xff]
  %v5824 = vld [vmem:[#allocation3 + $0x70] sm:$0xff]
  %v5825 = vld [vmem:[#allocation3 + $0xa0] sm:$0xff]
  %v5826 = vld [vmem:[#allocation3 + $0xb0] sm:$0xff]
  %v5827 = vld [vmem:[#allocation3 + $0xc0] sm:$0xff]
  %v5828 = vld [vmem:[#allocation3 + $0xd0] sm:$0xff]
  %v5829 = vld [vmem:[#allocation3 + $0xe0] sm:$0xff]
  %v5830 = vld [vmem:[#allocation3 + $0xf0] sm:$0xff]
  %v5831 = vld [vmem:[#allocation3 + $0x100] sm:$0xff]
  %v5832 = vld [vmem:[#allocation3 + $0x110] sm:$0xff]
  %v5833 = vpack.c.bf16 %v5818, %v5817
  %v5834 = vpack.c.bf16 %v5820, %v5819
  %v5835 = vpack.c.bf16 %v5822, %v5821
  %v5836 = vpack.c.bf16 %v5824, %v5823
  %v5837 = vpack.c.bf16 %v5826, %v5825
  %v5838 = vpack.c.bf16 %v5828, %v5827
  %v5839 = vpack.c.bf16 %v5830, %v5829
  %v5840 = vpack.c.bf16 %v5832, %v5831
  %v5841 = vld [vmem:[%s10] sm:$0xf]
  %v5842 = vld [vmem:[#allocation3 + $0x1] sm:$0xff]
  %v5843 = vld [vmem:[#allocation3 + $0x11] sm:$0xff]
  %v5844 = vld [vmem:[#allocation3 + $0x21] sm:$0xff]
  %v5845 = vld [vmem:[#allocation3 + $0x31] sm:$0xff]
  %v5846 = vld [vmem:[#allocation3 + $0x41] sm:$0xff]
  %v5847 = vld [vmem:[#allocation3 + $0x51] sm:$0xff]
  %v5848 = vld [vmem:[#allocation3 + $0x61] sm:$0xff]
  %v5849 = vld [vmem:[#allocation3 + $0x71] sm:$0xff]
  %v5850 = vld [vmem:[#allocation3 + $0xa1] sm:$0xff]
  %v5851 = vld [vmem:[#allocation3 + $0xb1] sm:$0xff]
  %v5852 = vld [vmem:[#allocation3 + $0xc1] sm:$0xff]
  %v5853 = vld [vmem:[#allocation3 + $0xd1] sm:$0xff]
  %v5854 = vld [vmem:[#allocation3 + $0xe1] sm:$0xff]
  %v5855 = vld [vmem:[#allocation3 + $0xf1] sm:$0xff]
  %v5856 = vld [vmem:[#allocation3 + $0x101] sm:$0xff]
  %v5857 = vld [vmem:[#allocation3 + $0x111] sm:$0xff]
  %v5858 = vpack.c.bf16 %v5843, %v5842
  %v5859 = vpack.c.bf16 %v5845, %v5844
  %v5860 = vpack.c.bf16 %v5847, %v5846
  %v5861 = vpack.c.bf16 %v5849, %v5848
  %v5862 = vpack.c.bf16 %v5851, %v5850
  %v5863 = vpack.c.bf16 %v5853, %v5852
  %v5864 = vpack.c.bf16 %v5855, %v5854
  %v5865 = vpack.c.bf16 %v5857, %v5856
  %s5866 = scalar_lea.vmem %s10, 4
  %v5867 = vld [vmem:[%s5866] sm:$0xf]
  %v5869 = vsel %vm100, %v5858, 0
  %v5872 = vsel %vm100, %v5859, 0
  %v5875 = vsel %vm100, %v5860, 0
  %v5878 = vsel %vm100, %v5861, 0
  %v5881 = vsel %vm100, %v5862, 0
  %v5884 = vsel %vm100, %v5863, 0
  %v5887 = vsel %vm100, %v5864, 0
  %v5890 = vsel %vm100, %v5865, 0
  %vm5892 = vcmask 1043456
  %v5894 = vsel %vm5892, %v5867, 0
  %5896 = vmatprep.subr.bf16.mxu0 0
  %5897 = vmatpush1.bf16.msra.mxu0 0
  %5898 = vmatprep.subr.bf16.mxu0 0
  %5899 = vmatpush1.bf16.msra.mxu0 0
  %5900 = vmatprep.subr.bf16.mxu0 0
  %5901 = vmatpush1.bf16.msra.mxu0 0
  %5902 = vmatprep.subr.bf16.mxu0 0
  %5903 = vmatpush1.bf16.msra.mxu0 0
  %5904 = vmatprep.subr.bf16.mxu0 0
  %5905 = vmatpush1.bf16.msra.mxu0 0
  %5906 = vmatprep.subr.bf16.mxu0 0
  %5907 = vmatpush1.bf16.msra.mxu0 0
  %5908 = vmatprep.subr.bf16.mxu0 0
  %5909 = vmatpush1.bf16.msra.mxu0 0
  %5910 = vmatprep.subr.bf16.mxu0 0
  %5911 = vmatpush1.bf16.msra.mxu0 %v5894
  %5912 = vmatprep.subr.bf16.mxu0 0
  %5913 = vmatpush2.bf16.msra.mxu0 0
  %5914 = vmatprep.subr.bf16.mxu0 0
  %5915 = vmatpush2.bf16.msra.mxu0 0
  %5916 = vmatprep.subr.bf16.mxu0 0
  %5917 = vmatpush2.bf16.msra.mxu0 0
  %5918 = vmatprep.subr.bf16.mxu0 0
  %5919 = vmatpush2.bf16.msra.mxu0 0
  %5920 = vmatprep.subr.bf16.mxu0 0
  %5921 = vmatpush2.bf16.msra.mxu0 0
  %5922 = vmatprep.subr.bf16.mxu0 0
  %5923 = vmatpush2.bf16.msra.mxu0 0
  %5924 = vmatprep.subr.bf16.mxu0 0
  %5925 = vmatpush2.bf16.msra.mxu0 0
  %5926 = vmatprep.subr.bf16.mxu0 0
  %5927 = vmatpush2.bf16.msra.mxu0 0
  %5928 = vmatprep.mubr.bf16.mxu0 0
  %5929 = vmatmul.mubr.bf16.gmra.mxu0 %v5869
  %v5930 = vpop.f32.mrf.mxu0
  %v5931 = vadd.f32 0.0, %v5930
  %v5932 = vpop.f32.mrf.mxu0
  %v5933 = vpop.f32.mrf.mxu0
  %v5934 = vadd.f32 0.0, %v5933
  %v5935 = vpop.f32.mrf.mxu0
  %5936 = vmatprep.mubr.bf16.mxu0 0
  %5937 = vmatmul.mubr.bf16.gmra.mxu0 %v5872
  %v5938 = vpop.f32.mrf.mxu0
  %v5939 = vadd.f32 0.0, %v5938
  %v5940 = vpop.f32.mrf.mxu0
  %v5941 = vpop.f32.mrf.mxu0
  %v5942 = vadd.f32 0.0, %v5941
  %v5943 = vpop.f32.mrf.mxu0
  %5944 = vmatprep.mubr.bf16.mxu0 0
  %5945 = vmatmul.mubr.bf16.gmra.mxu0 %v5875
  %v5946 = vpop.f32.mrf.mxu0
  %v5947 = vadd.f32 0.0, %v5946
  %v5948 = vpop.f32.mrf.mxu0
  %v5949 = vpop.f32.mrf.mxu0
  %v5950 = vadd.f32 0.0, %v5949
  %v5951 = vpop.f32.mrf.mxu0
  %5952 = vmatprep.mubr.bf16.mxu0 0
  %5953 = vmatmul.mubr.bf16.gmra.mxu0 %v5878
  %v5954 = vpop.f32.mrf.mxu0
  %v5955 = vadd.f32 0.0, %v5954
  %v5956 = vpop.f32.mrf.mxu0
  %v5957 = vpop.f32.mrf.mxu0
  %v5958 = vadd.f32 0.0, %v5957
  %v5959 = vpop.f32.mrf.mxu0
  %5960 = vmatprep.mubr.bf16.mxu0 0
  %5961 = vmatmul.mubr.bf16.gmra.mxu0 %v5881
  %v5962 = vpop.f32.mrf.mxu0
  %v5963 = vadd.f32 0.0, %v5962
  %v5964 = vpop.f32.mrf.mxu0
  %v5965 = vpop.f32.mrf.mxu0
  %v5966 = vadd.f32 0.0, %v5965
  %v5967 = vpop.f32.mrf.mxu0
  %5968 = vmatprep.mubr.bf16.mxu0 0
  %5969 = vmatmul.mubr.bf16.gmra.mxu0 %v5884
  %v5970 = vpop.f32.mrf.mxu0
  %v5971 = vadd.f32 0.0, %v5970
  %v5972 = vpop.f32.mrf.mxu0
  %v5973 = vpop.f32.mrf.mxu0
  %v5974 = vadd.f32 0.0, %v5973
  %v5975 = vpop.f32.mrf.mxu0
  %5976 = vmatprep.mubr.bf16.mxu0 0
  %5977 = vmatmul.mubr.bf16.gmra.mxu0 %v5887
  %v5978 = vpop.f32.mrf.mxu0
  %v5979 = vadd.f32 0.0, %v5978
  %v5980 = vpop.f32.mrf.mxu0
  %v5981 = vpop.f32.mrf.mxu0
  %v5982 = vadd.f32 0.0, %v5981
  %v5983 = vpop.f32.mrf.mxu0
  %5984 = vmatprep.mubr.bf16.mxu0 0
  %5985 = vmatmul.mubr.bf16.gmra.mxu0 %v5890
  %v5986 = vpop.f32.mrf.mxu0
  %v5987 = vadd.f32 0.0, %v5986
  %v5988 = vpop.f32.mrf.mxu0
  %v5989 = vpop.f32.mrf.mxu0
  %v5990 = vadd.f32 0.0, %v5989
  %v5991 = vpop.f32.mrf.mxu0
  %5992 = vdwg.mxu0
  %v5994 = vsel %vm100, %v5833, 0
  %v5997 = vsel %vm100, %v5834, 0
  %v6000 = vsel %vm100, %v5835, 0
  %v6003 = vsel %vm100, %v5836, 0
  %v6006 = vsel %vm100, %v5837, 0
  %v6009 = vsel %vm100, %v5838, 0
  %v6012 = vsel %vm100, %v5839, 0
  %v6015 = vsel %vm100, %v5840, 0
  %v6018 = vsel %vm5892, %v5841, 0
  %6020 = vmatprep.subr.bf16.mxu0 0
  %6021 = vmatpush1.bf16.msra.mxu0 0
  %6022 = vmatprep.subr.bf16.mxu0 0
  %6023 = vmatpush1.bf16.msra.mxu0 0
  %6024 = vmatprep.subr.bf16.mxu0 0
  %6025 = vmatpush1.bf16.msra.mxu0 0
  %6026 = vmatprep.subr.bf16.mxu0 0
  %6027 = vmatpush1.bf16.msra.mxu0 0
  %6028 = vmatprep.subr.bf16.mxu0 0
  %6029 = vmatpush1.bf16.msra.mxu0 0
  %6030 = vmatprep.subr.bf16.mxu0 0
  %6031 = vmatpush1.bf16.msra.mxu0 0
  %6032 = vmatprep.subr.bf16.mxu0 0
  %6033 = vmatpush1.bf16.msra.mxu0 0
  %6034 = vmatprep.subr.bf16.mxu0 0
  %6035 = vmatpush1.bf16.msra.mxu0 %v6018
  %6036 = vmatprep.subr.bf16.mxu0 0
  %6037 = vmatpush2.bf16.msra.mxu0 0
  %6038 = vmatprep.subr.bf16.mxu0 0
  %6039 = vmatpush2.bf16.msra.mxu0 0
  %6040 = vmatprep.subr.bf16.mxu0 0
  %6041 = vmatpush2.bf16.msra.mxu0 0
  %6042 = vmatprep.subr.bf16.mxu0 0
  %6043 = vmatpush2.bf16.msra.mxu0 0
  %6044 = vmatprep.subr.bf16.mxu0 0
  %6045 = vmatpush2.bf16.msra.mxu0 0
  %6046 = vmatprep.subr.bf16.mxu0 0
  %6047 = vmatpush2.bf16.msra.mxu0 0
  %6048 = vmatprep.subr.bf16.mxu0 0
  %6049 = vmatpush2.bf16.msra.mxu0 0
  %6050 = vmatprep.subr.bf16.mxu0 0
  %6051 = vmatpush2.bf16.msra.mxu0 0
  %6052 = vmatprep.mubr.bf16.mxu0 0
  %6053 = vmatmul.mubr.bf16.gmra.mxu0 %v5994
  %v6054 = vpop.f32.mrf.mxu0
  %v6055 = vadd.f32 %v5931, %v6054
  %v6056 = vpop.f32.mrf.mxu0
  %v6057 = vpop.f32.mrf.mxu0
  %v6058 = vadd.f32 %v5934, %v6057
  %v6059 = vpop.f32.mrf.mxu0
  %6060 = vmatprep.mubr.bf16.mxu0 0
  %6061 = vmatmul.mubr.bf16.gmra.mxu0 %v5997
  %v6062 = vpop.f32.mrf.mxu0
  %v6063 = vadd.f32 %v5939, %v6062
  %v6064 = vpop.f32.mrf.mxu0
  %v6065 = vpop.f32.mrf.mxu0
  %v6066 = vadd.f32 %v5942, %v6065
  %v6067 = vpop.f32.mrf.mxu0
  %6068 = vmatprep.mubr.bf16.mxu0 0
  %6069 = vmatmul.mubr.bf16.gmra.mxu0 %v6000
  %v6070 = vpop.f32.mrf.mxu0
  %v6071 = vadd.f32 %v5947, %v6070
  %v6072 = vpop.f32.mrf.mxu0
  %v6073 = vpop.f32.mrf.mxu0
  %v6074 = vadd.f32 %v5950, %v6073
  %v6075 = vpop.f32.mrf.mxu0
  %6076 = vmatprep.mubr.bf16.mxu0 0
  %6077 = vmatmul.mubr.bf16.gmra.mxu0 %v6003
  %v6078 = vpop.f32.mrf.mxu0
  %v6079 = vadd.f32 %v5955, %v6078
  %v6080 = vpop.f32.mrf.mxu0
  %v6081 = vpop.f32.mrf.mxu0
  %v6082 = vadd.f32 %v5958, %v6081
  %v6083 = vpop.f32.mrf.mxu0
  %6084 = vmatprep.mubr.bf16.mxu0 0
  %6085 = vmatmul.mubr.bf16.gmra.mxu0 %v6006
  %v6086 = vpop.f32.mrf.mxu0
  %v6087 = vadd.f32 %v5963, %v6086
  %v6088 = vpop.f32.mrf.mxu0
  %v6089 = vpop.f32.mrf.mxu0
  %v6090 = vadd.f32 %v5966, %v6089
  %v6091 = vpop.f32.mrf.mxu0
  %6092 = vmatprep.mubr.bf16.mxu0 0
  %6093 = vmatmul.mubr.bf16.gmra.mxu0 %v6009
  %v6094 = vpop.f32.mrf.mxu0
  %v6095 = vadd.f32 %v5971, %v6094
  %v6096 = vpop.f32.mrf.mxu0
  %v6097 = vpop.f32.mrf.mxu0
  %v6098 = vadd.f32 %v5974, %v6097
  %v6099 = vpop.f32.mrf.mxu0
  %6100 = vmatprep.mubr.bf16.mxu0 0
  %6101 = vmatmul.mubr.bf16.gmra.mxu0 %v6012
  %v6102 = vpop.f32.mrf.mxu0
  %v6103 = vadd.f32 %v5979, %v6102
  %v6104 = vpop.f32.mrf.mxu0
  %v6105 = vpop.f32.mrf.mxu0
  %v6106 = vadd.f32 %v5982, %v6105
  %v6107 = vpop.f32.mrf.mxu0
  %6108 = vmatprep.mubr.bf16.mxu0 0
  %6109 = vmatmul.mubr.bf16.gmra.mxu0 %v6015
  %v6110 = vpop.f32.mrf.mxu0
  %v6111 = vadd.f32 %v5987, %v6110
  %v6112 = vpop.f32.mrf.mxu0
  %v6113 = vpop.f32.mrf.mxu0
  %v6114 = vadd.f32 %v5990, %v6113
  %v6115 = vpop.f32.mrf.mxu0
  %6116 = vdwg.mxu0
  %v6117 = vld [vmem:[#allocation3 + $0x2] sm:$0xff]
  %v6118 = vld [vmem:[#allocation3 + $0x12] sm:$0xff]
  %v6119 = vld [vmem:[#allocation3 + $0x22] sm:$0xff]
  %v6120 = vld [vmem:[#allocation3 + $0x32] sm:$0xff]
  %v6121 = vld [vmem:[#allocation3 + $0x42] sm:$0xff]
  %v6122 = vld [vmem:[#allocation3 + $0x52] sm:$0xff]
  %v6123 = vld [vmem:[#allocation3 + $0x62] sm:$0xff]
  %v6124 = vld [vmem:[#allocation3 + $0x72] sm:$0xff]
  %v6125 = vld [vmem:[#allocation3 + $0xa2] sm:$0xff]
  %v6126 = vld [vmem:[#allocation3 + $0xb2] sm:$0xff]
  %v6127 = vld [vmem:[#allocation3 + $0xc2] sm:$0xff]
  %v6128 = vld [vmem:[#allocation3 + $0xd2] sm:$0xff]
  %v6129 = vld [vmem:[#allocation3 + $0xe2] sm:$0xff]
  %v6130 = vld [vmem:[#allocation3 + $0xf2] sm:$0xff]
  %v6131 = vld [vmem:[#allocation3 + $0x102] sm:$0xff]
  %v6132 = vld [vmem:[#allocation3 + $0x112] sm:$0xff]
  %v6133 = vpack.c.bf16 %v6118, %v6117
  %v6134 = vpack.c.bf16 %v6120, %v6119
  %v6135 = vpack.c.bf16 %v6122, %v6121
  %v6136 = vpack.c.bf16 %v6124, %v6123
  %v6137 = vpack.c.bf16 %v6126, %v6125
  %v6138 = vpack.c.bf16 %v6128, %v6127
  %v6139 = vpack.c.bf16 %v6130, %v6129
  %v6140 = vpack.c.bf16 %v6132, %v6131
  %s6141 = scalar_lea.vmem %s10, 8
  %v6142 = vld [vmem:[%s6141] sm:$0xf]
  %v6144 = vsel %vm100, %v6133, 0
  %v6147 = vsel %vm100, %v6134, 0
  %v6150 = vsel %vm100, %v6135, 0
  %v6153 = vsel %vm100, %v6136, 0
  %v6156 = vsel %vm100, %v6137, 0
  %v6159 = vsel %vm100, %v6138, 0
  %v6162 = vsel %vm100, %v6139, 0
  %v6165 = vsel %vm100, %v6140, 0
  %v6168 = vsel %vm5892, %v6142, 0
  %6170 = vmatprep.subr.bf16.mxu0 0
  %6171 = vmatpush1.bf16.msra.mxu0 0
  %6172 = vmatprep.subr.bf16.mxu0 0
  %6173 = vmatpush1.bf16.msra.mxu0 0
  %6174 = vmatprep.subr.bf16.mxu0 0
  %6175 = vmatpush1.bf16.msra.mxu0 0
  %6176 = vmatprep.subr.bf16.mxu0 0
  %6177 = vmatpush1.bf16.msra.mxu0 0
  %6178 = vmatprep.subr.bf16.mxu0 0
  %6179 = vmatpush1.bf16.msra.mxu0 0
  %6180 = vmatprep.subr.bf16.mxu0 0
  %6181 = vmatpush1.bf16.msra.mxu0 0
  %6182 = vmatprep.subr.bf16.mxu0 0
  %6183 = vmatpush1.bf16.msra.mxu0 0
  %6184 = vmatprep.subr.bf16.mxu0 0
  %6185 = vmatpush1.bf16.msra.mxu0 %v6168
  %6186 = vmatprep.subr.bf16.mxu0 0
  %6187 = vmatpush2.bf16.msra.mxu0 0
  %6188 = vmatprep.subr.bf16.mxu0 0
  %6189 = vmatpush2.bf16.msra.mxu0 0
  %6190 = vmatprep.subr.bf16.mxu0 0
  %6191 = vmatpush2.bf16.msra.mxu0 0
  %6192 = vmatprep.subr.bf16.mxu0 0
  %6193 = vmatpush2.bf16.msra.mxu0 0
  %6194 = vmatprep.subr.bf16.mxu0 0
  %6195 = vmatpush2.bf16.msra.mxu0 0
  %6196 = vmatprep.subr.bf16.mxu0 0
  %6197 = vmatpush2.bf16.msra.mxu0 0
  %6198 = vmatprep.subr.bf16.mxu0 0
  %6199 = vmatpush2.bf16.msra.mxu0 0
  %6200 = vmatprep.subr.bf16.mxu0 0
  %6201 = vmatpush2.bf16.msra.mxu0 0
  %6202 = vmatprep.mubr.bf16.mxu0 0
  %6203 = vmatmul.mubr.bf16.gmra.mxu0 %v6144
  %v6204 = vpop.f32.mrf.mxu0
  %v6205 = vadd.f32 0.0, %v6204
  %v6206 = vpop.f32.mrf.mxu0
  %v6207 = vpop.f32.mrf.mxu0
  %v6208 = vadd.f32 0.0, %v6207
  %v6209 = vpop.f32.mrf.mxu0
  %6210 = vmatprep.mubr.bf16.mxu0 0
  %6211 = vmatmul.mubr.bf16.gmra.mxu0 %v6147
  %v6212 = vpop.f32.mrf.mxu0
  %v6213 = vadd.f32 0.0, %v6212
  %v6214 = vpop.f32.mrf.mxu0
  %v6215 = vpop.f32.mrf.mxu0
  %v6216 = vadd.f32 0.0, %v6215
  %v6217 = vpop.f32.mrf.mxu0
  %6218 = vmatprep.mubr.bf16.mxu0 0
  %6219 = vmatmul.mubr.bf16.gmra.mxu0 %v6150
  %v6220 = vpop.f32.mrf.mxu0
  %v6221 = vadd.f32 0.0, %v6220
  %v6222 = vpop.f32.mrf.mxu0
  %v6223 = vpop.f32.mrf.mxu0
  %v6224 = vadd.f32 0.0, %v6223
  %v6225 = vpop.f32.mrf.mxu0
  %6226 = vmatprep.mubr.bf16.mxu0 0
  %6227 = vmatmul.mubr.bf16.gmra.mxu0 %v6153
  %v6228 = vpop.f32.mrf.mxu0
  %v6229 = vadd.f32 0.0, %v6228
  %v6230 = vpop.f32.mrf.mxu0
  %v6231 = vpop.f32.mrf.mxu0
  %v6232 = vadd.f32 0.0, %v6231
  %v6233 = vpop.f32.mrf.mxu0
  %6234 = vmatprep.mubr.bf16.mxu0 0
  %6235 = vmatmul.mubr.bf16.gmra.mxu0 %v6156
  %v6236 = vpop.f32.mrf.mxu0
  %v6237 = vadd.f32 0.0, %v6236
  %v6238 = vpop.f32.mrf.mxu0
  %v6239 = vpop.f32.mrf.mxu0
  %v6240 = vadd.f32 0.0, %v6239
  %v6241 = vpop.f32.mrf.mxu0
  %6242 = vmatprep.mubr.bf16.mxu0 0
  %6243 = vmatmul.mubr.bf16.gmra.mxu0 %v6159
  %v6244 = vpop.f32.mrf.mxu0
  %v6245 = vadd.f32 0.0, %v6244
  %v6246 = vpop.f32.mrf.mxu0
  %v6247 = vpop.f32.mrf.mxu0
  %v6248 = vadd.f32 0.0, %v6247
  %v6249 = vpop.f32.mrf.mxu0
  %6250 = vmatprep.mubr.bf16.mxu0 0
  %6251 = vmatmul.mubr.bf16.gmra.mxu0 %v6162
  %v6252 = vpop.f32.mrf.mxu0
  %v6253 = vadd.f32 0.0, %v6252
  %v6254 = vpop.f32.mrf.mxu0
  %v6255 = vpop.f32.mrf.mxu0
  %v6256 = vadd.f32 0.0, %v6255
  %v6257 = vpop.f32.mrf.mxu0
  %6258 = vmatprep.mubr.bf16.mxu0 0
  %6259 = vmatmul.mubr.bf16.gmra.mxu0 %v6165
  %v6260 = vpop.f32.mrf.mxu0
  %v6261 = vadd.f32 0.0, %v6260
  %v6262 = vpop.f32.mrf.mxu0
  %v6263 = vpop.f32.mrf.mxu0
  %v6264 = vadd.f32 0.0, %v6263
  %v6265 = vpop.f32.mrf.mxu0
  %6266 = vdwg.mxu0
  %v6267 = vadd.f32 %v6055, %v6205
  %v6268 = vadd.f32 %v6058, %v6208
  %v6269 = vadd.f32 %v6063, %v6213
  %v6270 = vadd.f32 %v6066, %v6216
  %v6271 = vadd.f32 %v6071, %v6221
  %v6272 = vadd.f32 %v6074, %v6224
  %v6273 = vadd.f32 %v6079, %v6229
  %v6274 = vadd.f32 %v6082, %v6232
  %v6275 = vadd.f32 %v6087, %v6237
  %v6276 = vadd.f32 %v6090, %v6240
  %v6277 = vadd.f32 %v6095, %v6245
  %v6278 = vadd.f32 %v6098, %v6248
  %v6279 = vadd.f32 %v6103, %v6253
  %v6280 = vadd.f32 %v6106, %v6256
  %v6281 = vadd.f32 %v6111, %v6261
  %v6282 = vadd.f32 %v6114, %v6264
  %v6283 = vld [vmem:[%s5800] sm:$0xff]
  %v6284 = vld [vmem:[%s5800 + $0x10] sm:$0xff]
  %v6285 = vld [vmem:[%s5800 + $0x20] sm:$0xff]
  %v6286 = vld [vmem:[%s5800 + $0x30] sm:$0xff]
  %v6287 = vld [vmem:[%s5800 + $0x40] sm:$0xff]
  %v6288 = vld [vmem:[%s5800 + $0x50] sm:$0xff]
  %v6289 = vld [vmem:[%s5800 + $0x60] sm:$0xff]
  %v6290 = vld [vmem:[%s5800 + $0x70] sm:$0xff]
  %v6291 = vld [vmem:[%s5800 + $0xa0] sm:$0xff]
  %v6292 = vld [vmem:[%s5800 + $0xb0] sm:$0xff]
  %v6293 = vld [vmem:[%s5800 + $0xc0] sm:$0xff]
  %v6294 = vld [vmem:[%s5800 + $0xd0] sm:$0xff]
  %v6295 = vld [vmem:[%s5800 + $0xe0] sm:$0xff]
  %v6296 = vld [vmem:[%s5800 + $0xf0] sm:$0xff]
  %v6297 = vld [vmem:[%s5800 + $0x100] sm:$0xff]
  %v6298 = vld [vmem:[%s5800 + $0x110] sm:$0xff]
  %v6299 = vpack.c.bf16 %v6284, %v6283
  %v6300 = vpack.c.bf16 %v6286, %v6285
  %v6301 = vpack.c.bf16 %v6288, %v6287
  %v6302 = vpack.c.bf16 %v6290, %v6289
  %v6303 = vpack.c.bf16 %v6292, %v6291
  %v6304 = vpack.c.bf16 %v6294, %v6293
  %v6305 = vpack.c.bf16 %v6296, %v6295
  %v6306 = vpack.c.bf16 %v6298, %v6297
  %s6307 = scalar_lea.vmem %s10, 12
  %v6308 = vld [vmem:[%s6307] sm:$0xf]
  %v6310 = vsel %vm100, %v6299, 0
  %v6313 = vsel %vm100, %v6300, 0
  %v6316 = vsel %vm100, %v6301, 0
  %v6319 = vsel %vm100, %v6302, 0
  %v6322 = vsel %vm100, %v6303, 0
  %v6325 = vsel %vm100, %v6304, 0
  %v6328 = vsel %vm100, %v6305, 0
  %v6331 = vsel %vm100, %v6306, 0
  %v6334 = vsel %vm5892, %v6308, 0
  %6336 = vmatprep.subr.bf16.mxu0 0
  %6337 = vmatpush1.bf16.msra.mxu0 0
  %6338 = vmatprep.subr.bf16.mxu0 0
  %6339 = vmatpush1.bf16.msra.mxu0 0
  %6340 = vmatprep.subr.bf16.mxu0 0
  %6341 = vmatpush1.bf16.msra.mxu0 0
  %6342 = vmatprep.subr.bf16.mxu0 0
  %6343 = vmatpush1.bf16.msra.mxu0 0
  %6344 = vmatprep.subr.bf16.mxu0 0
  %6345 = vmatpush1.bf16.msra.mxu0 0
  %6346 = vmatprep.subr.bf16.mxu0 0
  %6347 = vmatpush1.bf16.msra.mxu0 0
  %6348 = vmatprep.subr.bf16.mxu0 0
  %6349 = vmatpush1.bf16.msra.mxu0 0
  %6350 = vmatprep.subr.bf16.mxu0 0
  %6351 = vmatpush1.bf16.msra.mxu0 %v6334
  %6352 = vmatprep.subr.bf16.mxu0 0
  %6353 = vmatpush2.bf16.msra.mxu0 0
  %6354 = vmatprep.subr.bf16.mxu0 0
  %6355 = vmatpush2.bf16.msra.mxu0 0
  %6356 = vmatprep.subr.bf16.mxu0 0
  %6357 = vmatpush2.bf16.msra.mxu0 0
  %6358 = vmatprep.subr.bf16.mxu0 0
  %6359 = vmatpush2.bf16.msra.mxu0 0
  %6360 = vmatprep.subr.bf16.mxu0 0
  %6361 = vmatpush2.bf16.msra.mxu0 0
  %6362 = vmatprep.subr.bf16.mxu0 0
  %6363 = vmatpush2.bf16.msra.mxu0 0
  %6364 = vmatprep.subr.bf16.mxu0 0
  %6365 = vmatpush2.bf16.msra.mxu0 0
  %6366 = vmatprep.subr.bf16.mxu0 0
  %6367 = vmatpush2.bf16.msra.mxu0 0
  %6368 = vmatprep.mubr.bf16.mxu0 0
  %6369 = vmatmul.mubr.bf16.gmra.mxu0 %v6310
  %v6370 = vpop.f32.mrf.mxu0
  %v6371 = vadd.f32 0.0, %v6370
  %v6372 = vpop.f32.mrf.mxu0
  %v6373 = vpop.f32.mrf.mxu0
  %v6374 = vadd.f32 0.0, %v6373
  %v6375 = vpop.f32.mrf.mxu0
  %6376 = vmatprep.mubr.bf16.mxu0 0
  %6377 = vmatmul.mubr.bf16.gmra.mxu0 %v6313
  %v6378 = vpop.f32.mrf.mxu0
  %v6379 = vadd.f32 0.0, %v6378
  %v6380 = vpop.f32.mrf.mxu0
  %v6381 = vpop.f32.mrf.mxu0
  %v6382 = vadd.f32 0.0, %v6381
  %v6383 = vpop.f32.mrf.mxu0
  %6384 = vmatprep.mubr.bf16.mxu0 0
  %6385 = vmatmul.mubr.bf16.gmra.mxu0 %v6316
  %v6386 = vpop.f32.mrf.mxu0
  %v6387 = vadd.f32 0.0, %v6386
  %v6388 = vpop.f32.mrf.mxu0
  %v6389 = vpop.f32.mrf.mxu0
  %v6390 = vadd.f32 0.0, %v6389
  %v6391 = vpop.f32.mrf.mxu0
  %6392 = vmatprep.mubr.bf16.mxu0 0
  %6393 = vmatmul.mubr.bf16.gmra.mxu0 %v6319
  %v6394 = vpop.f32.mrf.mxu0
  %v6395 = vadd.f32 0.0, %v6394
  %v6396 = vpop.f32.mrf.mxu0
  %v6397 = vpop.f32.mrf.mxu0
  %v6398 = vadd.f32 0.0, %v6397
  %v6399 = vpop.f32.mrf.mxu0
  %6400 = vmatprep.mubr.bf16.mxu0 0
  %6401 = vmatmul.mubr.bf16.gmra.mxu0 %v6322
  %v6402 = vpop.f32.mrf.mxu0
  %v6403 = vadd.f32 0.0, %v6402
  %v6404 = vpop.f32.mrf.mxu0
  %v6405 = vpop.f32.mrf.mxu0
  %v6406 = vadd.f32 0.0, %v6405
  %v6407 = vpop.f32.mrf.mxu0
  %6408 = vmatprep.mubr.bf16.mxu0 0
  %6409 = vmatmul.mubr.bf16.gmra.mxu0 %v6325
  %v6410 = vpop.f32.mrf.mxu0
  %v6411 = vadd.f32 0.0, %v6410
  %v6412 = vpop.f32.mrf.mxu0
  %v6413 = vpop.f32.mrf.mxu0
  %v6414 = vadd.f32 0.0, %v6413
  %v6415 = vpop.f32.mrf.mxu0
  %6416 = vmatprep.mubr.bf16.mxu0 0
  %6417 = vmatmul.mubr.bf16.gmra.mxu0 %v6328
  %v6418 = vpop.f32.mrf.mxu0
  %v6419 = vadd.f32 0.0, %v6418
  %v6420 = vpop.f32.mrf.mxu0
  %v6421 = vpop.f32.mrf.mxu0
  %v6422 = vadd.f32 0.0, %v6421
  %v6423 = vpop.f32.mrf.mxu0
  %6424 = vmatprep.mubr.bf16.mxu0 0
  %6425 = vmatmul.mubr.bf16.gmra.mxu0 %v6331
  %v6426 = vpop.f32.mrf.mxu0
  %v6427 = vadd.f32 0.0, %v6426
  %v6428 = vpop.f32.mrf.mxu0
  %v6429 = vpop.f32.mrf.mxu0
  %v6430 = vadd.f32 0.0, %v6429
  %v6431 = vpop.f32.mrf.mxu0
  %6432 = vdwg.mxu0
  %v6433 = vadd.f32 %v6267, %v6371
  %v6434 = vadd.f32 %v6268, %v6374
  %v6435 = vadd.f32 %v6269, %v6379
  %v6436 = vadd.f32 %v6270, %v6382
  %v6437 = vadd.f32 %v6271, %v6387
  %v6438 = vadd.f32 %v6272, %v6390
  %v6439 = vadd.f32 %v6273, %v6395
  %v6440 = vadd.f32 %v6274, %v6398
  %v6441 = vadd.f32 %v6275, %v6403
  %v6442 = vadd.f32 %v6276, %v6406
  %v6443 = vadd.f32 %v6277, %v6411
  %v6444 = vadd.f32 %v6278, %v6414
  %v6445 = vadd.f32 %v6279, %v6419
  %v6446 = vadd.f32 %v6280, %v6422
  %v6447 = vadd.f32 %v6281, %v6427
  %v6448 = vadd.f32 %v6282, %v6430
  %v6449 = vld [vmem:[%s5800 + $0x1] sm:$0xff]
  %v6450 = vld [vmem:[%s5800 + $0x11] sm:$0xff]
  %v6451 = vld [vmem:[%s5800 + $0x21] sm:$0xff]
  %v6452 = vld [vmem:[%s5800 + $0x31] sm:$0xff]
  %v6453 = vld [vmem:[%s5800 + $0x41] sm:$0xff]
  %v6454 = vld [vmem:[%s5800 + $0x51] sm:$0xff]
  %v6455 = vld [vmem:[%s5800 + $0x61] sm:$0xff]
  %v6456 = vld [vmem:[%s5800 + $0x71] sm:$0xff]
  %v6457 = vld [vmem:[%s5800 + $0xa1] sm:$0xff]
  %v6458 = vld [vmem:[%s5800 + $0xb1] sm:$0xff]
  %v6459 = vld [vmem:[%s5800 + $0xc1] sm:$0xff]
  %v6460 = vld [vmem:[%s5800 + $0xd1] sm:$0xff]
  %v6461 = vld [vmem:[%s5800 + $0xe1] sm:$0xff]
  %v6462 = vld [vmem:[%s5800 + $0xf1] sm:$0xff]
  %v6463 = vld [vmem:[%s5800 + $0x101] sm:$0xff]
  %v6464 = vld [vmem:[%s5800 + $0x111] sm:$0xff]
  %v6465 = vpack.c.bf16 %v6450, %v6449
  %v6466 = vpack.c.bf16 %v6452, %v6451
  %v6467 = vpack.c.bf16 %v6454, %v6453
  %v6468 = vpack.c.bf16 %v6456, %v6455
  %v6469 = vpack.c.bf16 %v6458, %v6457
  %v6470 = vpack.c.bf16 %v6460, %v6459
  %v6471 = vpack.c.bf16 %v6462, %v6461
  %v6472 = vpack.c.bf16 %v6464, %v6463
  %s6473 = scalar_lea.vmem %s10, 16
  %v6474 = vld [vmem:[%s6473] sm:$0xf]
  %v6476 = vsel %vm100, %v6465, 0
  %v6479 = vsel %vm100, %v6466, 0
  %v6482 = vsel %vm100, %v6467, 0
  %v6485 = vsel %vm100, %v6468, 0
  %v6488 = vsel %vm100, %v6469, 0
  %v6491 = vsel %vm100, %v6470, 0
  %v6494 = vsel %vm100, %v6471, 0
  %v6497 = vsel %vm100, %v6472, 0
  %v6500 = vsel %vm5892, %v6474, 0
  %6502 = vmatprep.subr.bf16.mxu0 0
  %6503 = vmatpush1.bf16.msra.mxu0 0
  %6504 = vmatprep.subr.bf16.mxu0 0
  %6505 = vmatpush1.bf16.msra.mxu0 0
  %6506 = vmatprep.subr.bf16.mxu0 0
  %6507 = vmatpush1.bf16.msra.mxu0 0
  %6508 = vmatprep.subr.bf16.mxu0 0
  %6509 = vmatpush1.bf16.msra.mxu0 0
  %6510 = vmatprep.subr.bf16.mxu0 0
  %6511 = vmatpush1.bf16.msra.mxu0 0
  %6512 = vmatprep.subr.bf16.mxu0 0
  %6513 = vmatpush1.bf16.msra.mxu0 0
  %6514 = vmatprep.subr.bf16.mxu0 0
  %6515 = vmatpush1.bf16.msra.mxu0 0
  %6516 = vmatprep.subr.bf16.mxu0 0
  %6517 = vmatpush1.bf16.msra.mxu0 %v6500
  %6518 = vmatprep.subr.bf16.mxu0 0
  %6519 = vmatpush2.bf16.msra.mxu0 0
  %6520 = vmatprep.subr.bf16.mxu0 0
  %6521 = vmatpush2.bf16.msra.mxu0 0
  %6522 = vmatprep.subr.bf16.mxu0 0
  %6523 = vmatpush2.bf16.msra.mxu0 0
  %6524 = vmatprep.subr.bf16.mxu0 0
  %6525 = vmatpush2.bf16.msra.mxu0 0
  %6526 = vmatprep.subr.bf16.mxu0 0
  %6527 = vmatpush2.bf16.msra.mxu0 0
  %6528 = vmatprep.subr.bf16.mxu0 0
  %6529 = vmatpush2.bf16.msra.mxu0 0
  %6530 = vmatprep.subr.bf16.mxu0 0
  %6531 = vmatpush2.bf16.msra.mxu0 0
  %6532 = vmatprep.subr.bf16.mxu0 0
  %6533 = vmatpush2.bf16.msra.mxu0 0
  %6534 = vmatprep.mubr.bf16.mxu0 0
  %6535 = vmatmul.mubr.bf16.gmra.mxu0 %v6476
  %v6536 = vpop.f32.mrf.mxu0
  %v6537 = vadd.f32 0.0, %v6536
  %v6538 = vpop.f32.mrf.mxu0
  %v6539 = vpop.f32.mrf.mxu0
  %v6540 = vadd.f32 0.0, %v6539
  %v6541 = vpop.f32.mrf.mxu0
  %6542 = vmatprep.mubr.bf16.mxu0 0
  %6543 = vmatmul.mubr.bf16.gmra.mxu0 %v6479
  %v6544 = vpop.f32.mrf.mxu0
  %v6545 = vadd.f32 0.0, %v6544
  %v6546 = vpop.f32.mrf.mxu0
  %v6547 = vpop.f32.mrf.mxu0
  %v6548 = vadd.f32 0.0, %v6547
  %v6549 = vpop.f32.mrf.mxu0
  %6550 = vmatprep.mubr.bf16.mxu0 0
  %6551 = vmatmul.mubr.bf16.gmra.mxu0 %v6482
  %v6552 = vpop.f32.mrf.mxu0
  %v6553 = vadd.f32 0.0, %v6552
  %v6554 = vpop.f32.mrf.mxu0
  %v6555 = vpop.f32.mrf.mxu0
  %v6556 = vadd.f32 0.0, %v6555
  %v6557 = vpop.f32.mrf.mxu0
  %6558 = vmatprep.mubr.bf16.mxu0 0
  %6559 = vmatmul.mubr.bf16.gmra.mxu0 %v6485
  %v6560 = vpop.f32.mrf.mxu0
  %v6561 = vadd.f32 0.0, %v6560
  %v6562 = vpop.f32.mrf.mxu0
  %v6563 = vpop.f32.mrf.mxu0
  %v6564 = vadd.f32 0.0, %v6563
  %v6565 = vpop.f32.mrf.mxu0
  %6566 = vmatprep.mubr.bf16.mxu0 0
  %6567 = vmatmul.mubr.bf16.gmra.mxu0 %v6488
  %v6568 = vpop.f32.mrf.mxu0
  %v6569 = vadd.f32 0.0, %v6568
  %v6570 = vpop.f32.mrf.mxu0
  %v6571 = vpop.f32.mrf.mxu0
  %v6572 = vadd.f32 0.0, %v6571
  %v6573 = vpop.f32.mrf.mxu0
  %6574 = vmatprep.mubr.bf16.mxu0 0
  %6575 = vmatmul.mubr.bf16.gmra.mxu0 %v6491
  %v6576 = vpop.f32.mrf.mxu0
  %v6577 = vadd.f32 0.0, %v6576
  %v6578 = vpop.f32.mrf.mxu0
  %v6579 = vpop.f32.mrf.mxu0
  %v6580 = vadd.f32 0.0, %v6579
  %v6581 = vpop.f32.mrf.mxu0
  %6582 = vmatprep.mubr.bf16.mxu0 0
  %6583 = vmatmul.mubr.bf16.gmra.mxu0 %v6494
  %v6584 = vpop.f32.mrf.mxu0
  %v6585 = vadd.f32 0.0, %v6584
  %v6586 = vpop.f32.mrf.mxu0
  %v6587 = vpop.f32.mrf.mxu0
  %v6588 = vadd.f32 0.0, %v6587
  %v6589 = vpop.f32.mrf.mxu0
  %6590 = vmatprep.mubr.bf16.mxu0 0
  %6591 = vmatmul.mubr.bf16.gmra.mxu0 %v6497
  %v6592 = vpop.f32.mrf.mxu0
  %v6593 = vadd.f32 0.0, %v6592
  %v6594 = vpop.f32.mrf.mxu0
  %v6595 = vpop.f32.mrf.mxu0
  %v6596 = vadd.f32 0.0, %v6595
  %v6597 = vpop.f32.mrf.mxu0
  %6598 = vdwg.mxu0
  %v6599 = vadd.f32 %v6433, %v6537
  %v6600 = vadd.f32 %v6434, %v6540
  %v6601 = vadd.f32 %v6435, %v6545
  %v6602 = vadd.f32 %v6436, %v6548
  %v6603 = vadd.f32 %v6437, %v6553
  %v6604 = vadd.f32 %v6438, %v6556
  %v6605 = vadd.f32 %v6439, %v6561
  %v6606 = vadd.f32 %v6440, %v6564
  %v6607 = vadd.f32 %v6441, %v6569
  %v6608 = vadd.f32 %v6442, %v6572
  %v6609 = vadd.f32 %v6443, %v6577
  %v6610 = vadd.f32 %v6444, %v6580
  %v6611 = vadd.f32 %v6445, %v6585
  %v6612 = vadd.f32 %v6446, %v6588
  %v6613 = vadd.f32 %v6447, %v6593
  %v6614 = vadd.f32 %v6448, %v6596
  %v6615 = vld [vmem:[%s5800 + $0x2] sm:$0xff]
  %v6616 = vld [vmem:[%s5800 + $0x12] sm:$0xff]
  %v6617 = vld [vmem:[%s5800 + $0x22] sm:$0xff]
  %v6618 = vld [vmem:[%s5800 + $0x32] sm:$0xff]
  %v6619 = vld [vmem:[%s5800 + $0x42] sm:$0xff]
  %v6620 = vld [vmem:[%s5800 + $0x52] sm:$0xff]
  %v6621 = vld [vmem:[%s5800 + $0x62] sm:$0xff]
  %v6622 = vld [vmem:[%s5800 + $0x72] sm:$0xff]
  %v6623 = vld [vmem:[%s5800 + $0xa2] sm:$0xff]
  %v6624 = vld [vmem:[%s5800 + $0xb2] sm:$0xff]
  %v6625 = vld [vmem:[%s5800 + $0xc2] sm:$0xff]
  %v6626 = vld [vmem:[%s5800 + $0xd2] sm:$0xff]
  %v6627 = vld [vmem:[%s5800 + $0xe2] sm:$0xff]
  %v6628 = vld [vmem:[%s5800 + $0xf2] sm:$0xff]
  %v6629 = vld [vmem:[%s5800 + $0x102] sm:$0xff]
  %v6630 = vld [vmem:[%s5800 + $0x112] sm:$0xff]
  %v6631 = vpack.c.bf16 %v6616, %v6615
  %v6632 = vpack.c.bf16 %v6618, %v6617
  %v6633 = vpack.c.bf16 %v6620, %v6619
  %v6634 = vpack.c.bf16 %v6622, %v6621
  %v6635 = vpack.c.bf16 %v6624, %v6623
  %v6636 = vpack.c.bf16 %v6626, %v6625
  %v6637 = vpack.c.bf16 %v6628, %v6627
  %v6638 = vpack.c.bf16 %v6630, %v6629
  %s6639 = scalar_lea.vmem %s10, 20
  %v6640 = vld [vmem:[%s6639] sm:$0xf]
  %v6642 = vsel %vm100, %v6631, 0
  %v6645 = vsel %vm100, %v6632, 0
  %v6648 = vsel %vm100, %v6633, 0
  %v6651 = vsel %vm100, %v6634, 0
  %v6654 = vsel %vm100, %v6635, 0
  %v6657 = vsel %vm100, %v6636, 0
  %v6660 = vsel %vm100, %v6637, 0
  %v6663 = vsel %vm100, %v6638, 0
  %v6666 = vsel %vm5892, %v6640, 0
  %6668 = vmatprep.subr.bf16.mxu0 0
  %6669 = vmatpush1.bf16.msra.mxu0 0
  %6670 = vmatprep.subr.bf16.mxu0 0
  %6671 = vmatpush1.bf16.msra.mxu0 0
  %6672 = vmatprep.subr.bf16.mxu0 0
  %6673 = vmatpush1.bf16.msra.mxu0 0
  %6674 = vmatprep.subr.bf16.mxu0 0
  %6675 = vmatpush1.bf16.msra.mxu0 0
  %6676 = vmatprep.subr.bf16.mxu0 0
  %6677 = vmatpush1.bf16.msra.mxu0 0
  %6678 = vmatprep.subr.bf16.mxu0 0
  %6679 = vmatpush1.bf16.msra.mxu0 0
  %6680 = vmatprep.subr.bf16.mxu0 0
  %6681 = vmatpush1.bf16.msra.mxu0 0
  %6682 = vmatprep.subr.bf16.mxu0 0
  %6683 = vmatpush1.bf16.msra.mxu0 %v6666
  %6684 = vmatprep.subr.bf16.mxu0 0
  %6685 = vmatpush2.bf16.msra.mxu0 0
  %6686 = vmatprep.subr.bf16.mxu0 0
  %6687 = vmatpush2.bf16.msra.mxu0 0
  %6688 = vmatprep.subr.bf16.mxu0 0
  %6689 = vmatpush2.bf16.msra.mxu0 0
  %6690 = vmatprep.subr.bf16.mxu0 0
  %6691 = vmatpush2.bf16.msra.mxu0 0
  %6692 = vmatprep.subr.bf16.mxu0 0
  %6693 = vmatpush2.bf16.msra.mxu0 0
  %6694 = vmatprep.subr.bf16.mxu0 0
  %6695 = vmatpush2.bf16.msra.mxu0 0
  %6696 = vmatprep.subr.bf16.mxu0 0
  %6697 = vmatpush2.bf16.msra.mxu0 0
  %6698 = vmatprep.subr.bf16.mxu0 0
  %6699 = vmatpush2.bf16.msra.mxu0 0
  %6700 = vmatprep.mubr.bf16.mxu0 0
  %6701 = vmatmul.mubr.bf16.gmra.mxu0 %v6642
  %v6702 = vpop.f32.mrf.mxu0
  %v6703 = vadd.f32 0.0, %v6702
  %v6704 = vpop.f32.mrf.mxu0
  %v6705 = vpop.f32.mrf.mxu0
  %v6706 = vadd.f32 0.0, %v6705
  %v6707 = vpop.f32.mrf.mxu0
  %6708 = vmatprep.mubr.bf16.mxu0 0
  %6709 = vmatmul.mubr.bf16.gmra.mxu0 %v6645
  %v6710 = vpop.f32.mrf.mxu0
  %v6711 = vadd.f32 0.0, %v6710
  %v6712 = vpop.f32.mrf.mxu0
  %v6713 = vpop.f32.mrf.mxu0
  %v6714 = vadd.f32 0.0, %v6713
  %v6715 = vpop.f32.mrf.mxu0
  %6716 = vmatprep.mubr.bf16.mxu0 0
  %6717 = vmatmul.mubr.bf16.gmra.mxu0 %v6648
  %v6718 = vpop.f32.mrf.mxu0
  %v6719 = vadd.f32 0.0, %v6718
  %v6720 = vpop.f32.mrf.mxu0
  %v6721 = vpop.f32.mrf.mxu0
  %v6722 = vadd.f32 0.0, %v6721
  %v6723 = vpop.f32.mrf.mxu0
  %6724 = vmatprep.mubr.bf16.mxu0 0
  %6725 = vmatmul.mubr.bf16.gmra.mxu0 %v6651
  %v6726 = vpop.f32.mrf.mxu0
  %v6727 = vadd.f32 0.0, %v6726
  %v6728 = vpop.f32.mrf.mxu0
  %v6729 = vpop.f32.mrf.mxu0
  %v6730 = vadd.f32 0.0, %v6729
  %v6731 = vpop.f32.mrf.mxu0
  %6732 = vmatprep.mubr.bf16.mxu0 0
  %6733 = vmatmul.mubr.bf16.gmra.mxu0 %v6654
  %v6734 = vpop.f32.mrf.mxu0
  %v6735 = vadd.f32 0.0, %v6734
  %v6736 = vpop.f32.mrf.mxu0
  %v6737 = vpop.f32.mrf.mxu0
  %v6738 = vadd.f32 0.0, %v6737
  %v6739 = vpop.f32.mrf.mxu0
  %6740 = vmatprep.mubr.bf16.mxu0 0
  %6741 = vmatmul.mubr.bf16.gmra.mxu0 %v6657
  %v6742 = vpop.f32.mrf.mxu0
  %v6743 = vadd.f32 0.0, %v6742
  %v6744 = vpop.f32.mrf.mxu0
  %v6745 = vpop.f32.mrf.mxu0
  %v6746 = vadd.f32 0.0, %v6745
  %v6747 = vpop.f32.mrf.mxu0
  %6748 = vmatprep.mubr.bf16.mxu0 0
  %6749 = vmatmul.mubr.bf16.gmra.mxu0 %v6660
  %v6750 = vpop.f32.mrf.mxu0
  %v6751 = vadd.f32 0.0, %v6750
  %v6752 = vpop.f32.mrf.mxu0
  %v6753 = vpop.f32.mrf.mxu0
  %v6754 = vadd.f32 0.0, %v6753
  %v6755 = vpop.f32.mrf.mxu0
  %6756 = vmatprep.mubr.bf16.mxu0 0
  %6757 = vmatmul.mubr.bf16.gmra.mxu0 %v6663
  %v6758 = vpop.f32.mrf.mxu0
  %v6759 = vadd.f32 0.0, %v6758
  %v6760 = vpop.f32.mrf.mxu0
  %v6761 = vpop.f32.mrf.mxu0
  %v6762 = vadd.f32 0.0, %v6761
  %v6763 = vpop.f32.mrf.mxu0
  %6764 = vdwg.mxu0
  %v6765 = vadd.f32 %v6599, %v6703
  %v6766 = vadd.f32 %v6600, %v6706
  %v6767 = vadd.f32 %v6601, %v6711
  %v6768 = vadd.f32 %v6602, %v6714
  %v6769 = vadd.f32 %v6603, %v6719
  %v6770 = vadd.f32 %v6604, %v6722
  %v6771 = vadd.f32 %v6605, %v6727
  %v6772 = vadd.f32 %v6606, %v6730
  %v6773 = vadd.f32 %v6607, %v6735
  %v6774 = vadd.f32 %v6608, %v6738
  %v6775 = vadd.f32 %v6609, %v6743
  %v6776 = vadd.f32 %v6610, %v6746
  %v6777 = vadd.f32 %v6611, %v6751
  %v6778 = vadd.f32 %v6612, %v6754
  %v6779 = vadd.f32 %v6613, %v6759
  %v6780 = vadd.f32 %v6614, %v6762
  %s6781 = scalar_lea.vmem [#allocation3], 32
  %v6782 = vld [vmem:[%s6781] sm:$0xff]
  %v6783 = vld [vmem:[%s6781 + $0x10] sm:$0xff]
  %v6784 = vld [vmem:[%s6781 + $0x20] sm:$0xff]
  %v6785 = vld [vmem:[%s6781 + $0x30] sm:$0xff]
  %v6786 = vld [vmem:[%s6781 + $0x40] sm:$0xff]
  %v6787 = vld [vmem:[%s6781 + $0x50] sm:$0xff]
  %v6788 = vld [vmem:[%s6781 + $0x60] sm:$0xff]
  %v6789 = vld [vmem:[%s6781 + $0x70] sm:$0xff]
  %v6790 = vld [vmem:[%s6781 + $0xa0] sm:$0xff]
  %v6791 = vld [vmem:[%s6781 + $0xb0] sm:$0xff]
  %v6792 = vld [vmem:[%s6781 + $0xc0] sm:$0xff]
  %v6793 = vld [vmem:[%s6781 + $0xd0] sm:$0xff]
  %v6794 = vld [vmem:[%s6781 + $0xe0] sm:$0xff]
  %v6795 = vld [vmem:[%s6781 + $0xf0] sm:$0xff]
  %v6796 = vld [vmem:[%s6781 + $0x100] sm:$0xff]
  %v6797 = vld [vmem:[%s6781 + $0x110] sm:$0xff]
  %v6798 = vpack.c.bf16 %v6783, %v6782
  %v6799 = vpack.c.bf16 %v6785, %v6784
  %v6800 = vpack.c.bf16 %v6787, %v6786
  %v6801 = vpack.c.bf16 %v6789, %v6788
  %v6802 = vpack.c.bf16 %v6791, %v6790
  %v6803 = vpack.c.bf16 %v6793, %v6792
  %v6804 = vpack.c.bf16 %v6795, %v6794
  %v6805 = vpack.c.bf16 %v6797, %v6796
  %s6806 = scalar_lea.vmem %s10, 24
  %v6807 = vld [vmem:[%s6806] sm:$0xf]
  %v6809 = vsel %vm100, %v6798, 0
  %v6812 = vsel %vm100, %v6799, 0
  %v6815 = vsel %vm100, %v6800, 0
  %v6818 = vsel %vm100, %v6801, 0
  %v6821 = vsel %vm100, %v6802, 0
  %v6824 = vsel %vm100, %v6803, 0
  %v6827 = vsel %vm100, %v6804, 0
  %v6830 = vsel %vm100, %v6805, 0
  %v6833 = vsel %vm5892, %v6807, 0
  %6835 = vmatprep.subr.bf16.mxu0 0
  %6836 = vmatpush1.bf16.msra.mxu0 0
  %6837 = vmatprep.subr.bf16.mxu0 0
  %6838 = vmatpush1.bf16.msra.mxu0 0
  %6839 = vmatprep.subr.bf16.mxu0 0
  %6840 = vmatpush1.bf16.msra.mxu0 0
  %6841 = vmatprep.subr.bf16.mxu0 0
  %6842 = vmatpush1.bf16.msra.mxu0 0
  %6843 = vmatprep.subr.bf16.mxu0 0
  %6844 = vmatpush1.bf16.msra.mxu0 0
  %6845 = vmatprep.subr.bf16.mxu0 0
  %6846 = vmatpush1.bf16.msra.mxu0 0
  %6847 = vmatprep.subr.bf16.mxu0 0
  %6848 = vmatpush1.bf16.msra.mxu0 0
  %6849 = vmatprep.subr.bf16.mxu0 0
  %6850 = vmatpush1.bf16.msra.mxu0 %v6833
  %6851 = vmatprep.subr.bf16.mxu0 0
  %6852 = vmatpush2.bf16.msra.mxu0 0
  %6853 = vmatprep.subr.bf16.mxu0 0
  %6854 = vmatpush2.bf16.msra.mxu0 0
  %6855 = vmatprep.subr.bf16.mxu0 0
  %6856 = vmatpush2.bf16.msra.mxu0 0
  %6857 = vmatprep.subr.bf16.mxu0 0
  %6858 = vmatpush2.bf16.msra.mxu0 0
  %6859 = vmatprep.subr.bf16.mxu0 0
  %6860 = vmatpush2.bf16.msra.mxu0 0
  %6861 = vmatprep.subr.bf16.mxu0 0
  %6862 = vmatpush2.bf16.msra.mxu0 0
  %6863 = vmatprep.subr.bf16.mxu0 0
  %6864 = vmatpush2.bf16.msra.mxu0 0
  %6865 = vmatprep.subr.bf16.mxu0 0
  %6866 = vmatpush2.bf16.msra.mxu0 0
  %6867 = vmatprep.mubr.bf16.mxu0 0
  %6868 = vmatmul.mubr.bf16.gmra.mxu0 %v6809
  %v6869 = vpop.f32.mrf.mxu0
  %v6870 = vadd.f32 0.0, %v6869
  %v6871 = vpop.f32.mrf.mxu0
  %v6872 = vpop.f32.mrf.mxu0
  %v6873 = vadd.f32 0.0, %v6872
  %v6874 = vpop.f32.mrf.mxu0
  %6875 = vmatprep.mubr.bf16.mxu0 0
  %6876 = vmatmul.mubr.bf16.gmra.mxu0 %v6812
  %v6877 = vpop.f32.mrf.mxu0
  %v6878 = vadd.f32 0.0, %v6877
  %v6879 = vpop.f32.mrf.mxu0
  %v6880 = vpop.f32.mrf.mxu0
  %v6881 = vadd.f32 0.0, %v6880
  %v6882 = vpop.f32.mrf.mxu0
  %6883 = vmatprep.mubr.bf16.mxu0 0
  %6884 = vmatmul.mubr.bf16.gmra.mxu0 %v6815
  %v6885 = vpop.f32.mrf.mxu0
  %v6886 = vadd.f32 0.0, %v6885
  %v6887 = vpop.f32.mrf.mxu0
  %v6888 = vpop.f32.mrf.mxu0
  %v6889 = vadd.f32 0.0, %v6888
  %v6890 = vpop.f32.mrf.mxu0
  %6891 = vmatprep.mubr.bf16.mxu0 0
  %6892 = vmatmul.mubr.bf16.gmra.mxu0 %v6818
  %v6893 = vpop.f32.mrf.mxu0
  %v6894 = vadd.f32 0.0, %v6893
  %v6895 = vpop.f32.mrf.mxu0
  %v6896 = vpop.f32.mrf.mxu0
  %v6897 = vadd.f32 0.0, %v6896
  %v6898 = vpop.f32.mrf.mxu0
  %6899 = vmatprep.mubr.bf16.mxu0 0
  %6900 = vmatmul.mubr.bf16.gmra.mxu0 %v6821
  %v6901 = vpop.f32.mrf.mxu0
  %v6902 = vadd.f32 0.0, %v6901
  %v6903 = vpop.f32.mrf.mxu0
  %v6904 = vpop.f32.mrf.mxu0
  %v6905 = vadd.f32 0.0, %v6904
  %v6906 = vpop.f32.mrf.mxu0
  %6907 = vmatprep.mubr.bf16.mxu0 0
  %6908 = vmatmul.mubr.bf16.gmra.mxu0 %v6824
  %v6909 = vpop.f32.mrf.mxu0
  %v6910 = vadd.f32 0.0, %v6909
  %v6911 = vpop.f32.mrf.mxu0
  %v6912 = vpop.f32.mrf.mxu0
  %v6913 = vadd.f32 0.0, %v6912
  %v6914 = vpop.f32.mrf.mxu0
  %6915 = vmatprep.mubr.bf16.mxu0 0
  %6916 = vmatmul.mubr.bf16.gmra.mxu0 %v6827
  %v6917 = vpop.f32.mrf.mxu0
  %v6918 = vadd.f32 0.0, %v6917
  %v6919 = vpop.f32.mrf.mxu0
  %v6920 = vpop.f32.mrf.mxu0
  %v6921 = vadd.f32 0.0, %v6920
  %v6922 = vpop.f32.mrf.mxu0
  %6923 = vmatprep.mubr.bf16.mxu0 0
  %6924 = vmatmul.mubr.bf16.gmra.mxu0 %v6830
  %v6925 = vpop.f32.mrf.mxu0
  %v6926 = vadd.f32 0.0, %v6925
  %v6927 = vpop.f32.mrf.mxu0
  %v6928 = vpop.f32.mrf.mxu0
  %v6929 = vadd.f32 0.0, %v6928
  %v6930 = vpop.f32.mrf.mxu0
  %6931 = vdwg.mxu0
  %v6932 = vadd.f32 %v6765, %v6870
  %v6933 = vadd.f32 %v6766, %v6873
  %v6934 = vadd.f32 %v6767, %v6878
  %v6935 = vadd.f32 %v6768, %v6881
  %v6936 = vadd.f32 %v6769, %v6886
  %v6937 = vadd.f32 %v6770, %v6889
  %v6938 = vadd.f32 %v6771, %v6894
  %v6939 = vadd.f32 %v6772, %v6897
  %v6940 = vadd.f32 %v6773, %v6902
  %v6941 = vadd.f32 %v6774, %v6905
  %v6942 = vadd.f32 %v6775, %v6910
  %v6943 = vadd.f32 %v6776, %v6913
  %v6944 = vadd.f32 %v6777, %v6918
  %v6945 = vadd.f32 %v6778, %v6921
  %v6946 = vadd.f32 %v6779, %v6926
  %v6947 = vadd.f32 %v6780, %v6929
  %v6948 = vld [vmem:[%s6781 + $0x1] sm:$0xff]
  %v6949 = vld [vmem:[%s6781 + $0x11] sm:$0xff]
  %v6950 = vld [vmem:[%s6781 + $0x21] sm:$0xff]
  %v6951 = vld [vmem:[%s6781 + $0x31] sm:$0xff]
  %v6952 = vld [vmem:[%s6781 + $0x41] sm:$0xff]
  %v6953 = vld [vmem:[%s6781 + $0x51] sm:$0xff]
  %v6954 = vld [vmem:[%s6781 + $0x61] sm:$0xff]
  %v6955 = vld [vmem:[%s6781 + $0x71] sm:$0xff]
  %v6956 = vld [vmem:[%s6781 + $0xa1] sm:$0xff]
  %v6957 = vld [vmem:[%s6781 + $0xb1] sm:$0xff]
  %v6958 = vld [vmem:[%s6781 + $0xc1] sm:$0xff]
  %v6959 = vld [vmem:[%s6781 + $0xd1] sm:$0xff]
  %v6960 = vld [vmem:[%s6781 + $0xe1] sm:$0xff]
  %v6961 = vld [vmem:[%s6781 + $0xf1] sm:$0xff]
  %v6962 = vld [vmem:[%s6781 + $0x101] sm:$0xff]
  %v6963 = vld [vmem:[%s6781 + $0x111] sm:$0xff]
  %v6964 = vpack.c.bf16 %v6949, %v6948
  %v6965 = vpack.c.bf16 %v6951, %v6950
  %v6966 = vpack.c.bf16 %v6953, %v6952
  %v6967 = vpack.c.bf16 %v6955, %v6954
  %v6968 = vpack.c.bf16 %v6957, %v6956
  %v6969 = vpack.c.bf16 %v6959, %v6958
  %v6970 = vpack.c.bf16 %v6961, %v6960
  %v6971 = vpack.c.bf16 %v6963, %v6962
  %s6972 = scalar_lea.vmem %s10, 28
  %v6973 = vld [vmem:[%s6972] sm:$0xf]
  %v6975 = vsel %vm100, %v6964, 0
  %v6978 = vsel %vm100, %v6965, 0
  %v6981 = vsel %vm100, %v6966, 0
  %v6984 = vsel %vm100, %v6967, 0
  %v6987 = vsel %vm100, %v6968, 0
  %v6990 = vsel %vm100, %v6969, 0
  %v6993 = vsel %vm100, %v6970, 0
  %v6996 = vsel %vm100, %v6971, 0
  %v6999 = vsel %vm5892, %v6973, 0
  %7001 = vmatprep.subr.bf16.mxu0 0
  %7002 = vmatpush1.bf16.msra.mxu0 0
  %7003 = vmatprep.subr.bf16.mxu0 0
  %7004 = vmatpush1.bf16.msra.mxu0 0
  %7005 = vmatprep.subr.bf16.mxu0 0
  %7006 = vmatpush1.bf16.msra.mxu0 0
  %7007 = vmatprep.subr.bf16.mxu0 0
  %7008 = vmatpush1.bf16.msra.mxu0 0
  %7009 = vmatprep.subr.bf16.mxu0 0
  %7010 = vmatpush1.bf16.msra.mxu0 0
  %7011 = vmatprep.subr.bf16.mxu0 0
  %7012 = vmatpush1.bf16.msra.mxu0 0
  %7013 = vmatprep.subr.bf16.mxu0 0
  %7014 = vmatpush1.bf16.msra.mxu0 0
  %7015 = vmatprep.subr.bf16.mxu0 0
  %7016 = vmatpush1.bf16.msra.mxu0 %v6999
  %7017 = vmatprep.subr.bf16.mxu0 0
  %7018 = vmatpush2.bf16.msra.mxu0 0
  %7019 = vmatprep.subr.bf16.mxu0 0
  %7020 = vmatpush2.bf16.msra.mxu0 0
  %7021 = vmatprep.subr.bf16.mxu0 0
  %7022 = vmatpush2.bf16.msra.mxu0 0
  %7023 = vmatprep.subr.bf16.mxu0 0
  %7024 = vmatpush2.bf16.msra.mxu0 0
  %7025 = vmatprep.subr.bf16.mxu0 0
  %7026 = vmatpush2.bf16.msra.mxu0 0
  %7027 = vmatprep.subr.bf16.mxu0 0
  %7028 = vmatpush2.bf16.msra.mxu0 0
  %7029 = vmatprep.subr.bf16.mxu0 0
  %7030 = vmatpush2.bf16.msra.mxu0 0
  %7031 = vmatprep.subr.bf16.mxu0 0
  %7032 = vmatpush2.bf16.msra.mxu0 0
  %7033 = vmatprep.mubr.bf16.mxu0 0
  %7034 = vmatmul.mubr.bf16.gmra.mxu0 %v6975
  %v7035 = vpop.f32.mrf.mxu0
  %v7036 = vadd.f32 0.0, %v7035
  %v7037 = vpop.f32.mrf.mxu0
  %v7038 = vpop.f32.mrf.mxu0
  %v7039 = vadd.f32 0.0, %v7038
  %v7040 = vpop.f32.mrf.mxu0
  %7041 = vmatprep.mubr.bf16.mxu0 0
  %7042 = vmatmul.mubr.bf16.gmra.mxu0 %v6978
  %v7043 = vpop.f32.mrf.mxu0
  %v7044 = vadd.f32 0.0, %v7043
  %v7045 = vpop.f32.mrf.mxu0
  %v7046 = vpop.f32.mrf.mxu0
  %v7047 = vadd.f32 0.0, %v7046
  %v7048 = vpop.f32.mrf.mxu0
  %7049 = vmatprep.mubr.bf16.mxu0 0
  %7050 = vmatmul.mubr.bf16.gmra.mxu0 %v6981
  %v7051 = vpop.f32.mrf.mxu0
  %v7052 = vadd.f32 0.0, %v7051
  %v7053 = vpop.f32.mrf.mxu0
  %v7054 = vpop.f32.mrf.mxu0
  %v7055 = vadd.f32 0.0, %v7054
  %v7056 = vpop.f32.mrf.mxu0
  %7057 = vmatprep.mubr.bf16.mxu0 0
  %7058 = vmatmul.mubr.bf16.gmra.mxu0 %v6984
  %v7059 = vpop.f32.mrf.mxu0
  %v7060 = vadd.f32 0.0, %v7059
  %v7061 = vpop.f32.mrf.mxu0
  %v7062 = vpop.f32.mrf.mxu0
  %v7063 = vadd.f32 0.0, %v7062
  %v7064 = vpop.f32.mrf.mxu0
  %7065 = vmatprep.mubr.bf16.mxu0 0
  %7066 = vmatmul.mubr.bf16.gmra.mxu0 %v6987
  %v7067 = vpop.f32.mrf.mxu0
  %v7068 = vadd.f32 0.0, %v7067
  %v7069 = vpop.f32.mrf.mxu0
  %v7070 = vpop.f32.mrf.mxu0
  %v7071 = vadd.f32 0.0, %v7070
  %v7072 = vpop.f32.mrf.mxu0
  %7073 = vmatprep.mubr.bf16.mxu0 0
  %7074 = vmatmul.mubr.bf16.gmra.mxu0 %v6990
  %v7075 = vpop.f32.mrf.mxu0
  %v7076 = vadd.f32 0.0, %v7075
  %v7077 = vpop.f32.mrf.mxu0
  %v7078 = vpop.f32.mrf.mxu0
  %v7079 = vadd.f32 0.0, %v7078
  %v7080 = vpop.f32.mrf.mxu0
  %7081 = vmatprep.mubr.bf16.mxu0 0
  %7082 = vmatmul.mubr.bf16.gmra.mxu0 %v6993
  %v7083 = vpop.f32.mrf.mxu0
  %v7084 = vadd.f32 0.0, %v7083
  %v7085 = vpop.f32.mrf.mxu0
  %v7086 = vpop.f32.mrf.mxu0
  %v7087 = vadd.f32 0.0, %v7086
  %v7088 = vpop.f32.mrf.mxu0
  %7089 = vmatprep.mubr.bf16.mxu0 0
  %7090 = vmatmul.mubr.bf16.gmra.mxu0 %v6996
  %v7091 = vpop.f32.mrf.mxu0
  %v7092 = vadd.f32 0.0, %v7091
  %v7093 = vpop.f32.mrf.mxu0
  %v7094 = vpop.f32.mrf.mxu0
  %v7095 = vadd.f32 0.0, %v7094
  %v7096 = vpop.f32.mrf.mxu0
  %7097 = vdwg.mxu0
  %v7098 = vadd.f32 %v6932, %v7036
  %v7099 = vadd.f32 %v6933, %v7039
  %v7100 = vadd.f32 %v6934, %v7044
  %v7101 = vadd.f32 %v6935, %v7047
  %v7102 = vadd.f32 %v6936, %v7052
  %v7103 = vadd.f32 %v6937, %v7055
  %v7104 = vadd.f32 %v6938, %v7060
  %v7105 = vadd.f32 %v6939, %v7063
  %v7106 = vadd.f32 %v6940, %v7068
  %v7107 = vadd.f32 %v6941, %v7071
  %v7108 = vadd.f32 %v6942, %v7076
  %v7109 = vadd.f32 %v6943, %v7079
  %v7110 = vadd.f32 %v6944, %v7084
  %v7111 = vadd.f32 %v6945, %v7087
  %v7112 = vadd.f32 %v6946, %v7092
  %v7113 = vadd.f32 %v6947, %v7095
  %v7114 = vld [vmem:[%s6781 + $0x2] sm:$0xff]
  %v7115 = vld [vmem:[%s6781 + $0x12] sm:$0xff]
  %v7116 = vld [vmem:[%s6781 + $0x22] sm:$0xff]
  %v7117 = vld [vmem:[%s6781 + $0x32] sm:$0xff]
  %v7118 = vld [vmem:[%s6781 + $0x42] sm:$0xff]
  %v7119 = vld [vmem:[%s6781 + $0x52] sm:$0xff]
  %v7120 = vld [vmem:[%s6781 + $0x62] sm:$0xff]
  %v7121 = vld [vmem:[%s6781 + $0x72] sm:$0xff]
  %v7122 = vld [vmem:[%s6781 + $0xa2] sm:$0xff]
  %v7123 = vld [vmem:[%s6781 + $0xb2] sm:$0xff]
  %v7124 = vld [vmem:[%s6781 + $0xc2] sm:$0xff]
  %v7125 = vld [vmem:[%s6781 + $0xd2] sm:$0xff]
  %v7126 = vld [vmem:[%s6781 + $0xe2] sm:$0xff]
  %v7127 = vld [vmem:[%s6781 + $0xf2] sm:$0xff]
  %v7128 = vld [vmem:[%s6781 + $0x102] sm:$0xff]
  %v7129 = vld [vmem:[%s6781 + $0x112] sm:$0xff]
  %v7130 = vpack.c.bf16 %v7115, %v7114
  %v7131 = vpack.c.bf16 %v7117, %v7116
  %v7132 = vpack.c.bf16 %v7119, %v7118
  %v7133 = vpack.c.bf16 %v7121, %v7120
  %v7134 = vpack.c.bf16 %v7123, %v7122
  %v7135 = vpack.c.bf16 %v7125, %v7124
  %v7136 = vpack.c.bf16 %v7127, %v7126
  %v7137 = vpack.c.bf16 %v7129, %v7128
  %s7138 = scalar_lea.vmem %s10, 32
  %v7139 = vld [vmem:[%s7138] sm:$0xf]
  %v7141 = vsel %vm100, %v7130, 0
  %v7144 = vsel %vm100, %v7131, 0
  %v7147 = vsel %vm100, %v7132, 0
  %v7150 = vsel %vm100, %v7133, 0
  %v7153 = vsel %vm100, %v7134, 0
  %v7156 = vsel %vm100, %v7135, 0
  %v7159 = vsel %vm100, %v7136, 0
  %v7162 = vsel %vm100, %v7137, 0
  %v7165 = vsel %vm5892, %v7139, 0
  %7167 = vmatprep.subr.bf16.mxu0 0
  %7168 = vmatpush1.bf16.msra.mxu0 0
  %7169 = vmatprep.subr.bf16.mxu0 0
  %7170 = vmatpush1.bf16.msra.mxu0 0
  %7171 = vmatprep.subr.bf16.mxu0 0
  %7172 = vmatpush1.bf16.msra.mxu0 0
  %7173 = vmatprep.subr.bf16.mxu0 0
  %7174 = vmatpush1.bf16.msra.mxu0 0
  %7175 = vmatprep.subr.bf16.mxu0 0
  %7176 = vmatpush1.bf16.msra.mxu0 0
  %7177 = vmatprep.subr.bf16.mxu0 0
  %7178 = vmatpush1.bf16.msra.mxu0 0
  %7179 = vmatprep.subr.bf16.mxu0 0
  %7180 = vmatpush1.bf16.msra.mxu0 0
  %7181 = vmatprep.subr.bf16.mxu0 0
  %7182 = vmatpush1.bf16.msra.mxu0 %v7165
  %7183 = vmatprep.subr.bf16.mxu0 0
  %7184 = vmatpush2.bf16.msra.mxu0 0
  %7185 = vmatprep.subr.bf16.mxu0 0
  %7186 = vmatpush2.bf16.msra.mxu0 0
  %7187 = vmatprep.subr.bf16.mxu0 0
  %7188 = vmatpush2.bf16.msra.mxu0 0
  %7189 = vmatprep.subr.bf16.mxu0 0
  %7190 = vmatpush2.bf16.msra.mxu0 0
  %7191 = vmatprep.subr.bf16.mxu0 0
  %7192 = vmatpush2.bf16.msra.mxu0 0
  %7193 = vmatprep.subr.bf16.mxu0 0
  %7194 = vmatpush2.bf16.msra.mxu0 0
  %7195 = vmatprep.subr.bf16.mxu0 0
  %7196 = vmatpush2.bf16.msra.mxu0 0
  %7197 = vmatprep.subr.bf16.mxu0 0
  %7198 = vmatpush2.bf16.msra.mxu0 0
  %7199 = vmatprep.mubr.bf16.mxu0 0
  %7200 = vmatmul.mubr.bf16.gmra.mxu0 %v7141
  %v7201 = vpop.f32.mrf.mxu0
  %v7202 = vadd.f32 0.0, %v7201
  %v7203 = vpop.f32.mrf.mxu0
  %v7204 = vpop.f32.mrf.mxu0
  %v7205 = vadd.f32 0.0, %v7204
  %v7206 = vpop.f32.mrf.mxu0
  %7207 = vmatprep.mubr.bf16.mxu0 0
  %7208 = vmatmul.mubr.bf16.gmra.mxu0 %v7144
  %v7209 = vpop.f32.mrf.mxu0
  %v7210 = vadd.f32 0.0, %v7209
  %v7211 = vpop.f32.mrf.mxu0
  %v7212 = vpop.f32.mrf.mxu0
  %v7213 = vadd.f32 0.0, %v7212
  %v7214 = vpop.f32.mrf.mxu0
  %7215 = vmatprep.mubr.bf16.mxu0 0
  %7216 = vmatmul.mubr.bf16.gmra.mxu0 %v7147
  %v7217 = vpop.f32.mrf.mxu0
  %v7218 = vadd.f32 0.0, %v7217
  %v7219 = vpop.f32.mrf.mxu0
  %v7220 = vpop.f32.mrf.mxu0
  %v7221 = vadd.f32 0.0, %v7220
  %v7222 = vpop.f32.mrf.mxu0
  %7223 = vmatprep.mubr.bf16.mxu0 0
  %7224 = vmatmul.mubr.bf16.gmra.mxu0 %v7150
  %v7225 = vpop.f32.mrf.mxu0
  %v7226 = vadd.f32 0.0, %v7225
  %v7227 = vpop.f32.mrf.mxu0
  %v7228 = vpop.f32.mrf.mxu0
  %v7229 = vadd.f32 0.0, %v7228
  %v7230 = vpop.f32.mrf.mxu0
  %7231 = vmatprep.mubr.bf16.mxu0 0
  %7232 = vmatmul.mubr.bf16.gmra.mxu0 %v7153
  %v7233 = vpop.f32.mrf.mxu0
  %v7234 = vadd.f32 0.0, %v7233
  %v7235 = vpop.f32.mrf.mxu0
  %v7236 = vpop.f32.mrf.mxu0
  %v7237 = vadd.f32 0.0, %v7236
  %v7238 = vpop.f32.mrf.mxu0
  %7239 = vmatprep.mubr.bf16.mxu0 0
  %7240 = vmatmul.mubr.bf16.gmra.mxu0 %v7156
  %v7241 = vpop.f32.mrf.mxu0
  %v7242 = vadd.f32 0.0, %v7241
  %v7243 = vpop.f32.mrf.mxu0
  %v7244 = vpop.f32.mrf.mxu0
  %v7245 = vadd.f32 0.0, %v7244
  %v7246 = vpop.f32.mrf.mxu0
  %7247 = vmatprep.mubr.bf16.mxu0 0
  %7248 = vmatmul.mubr.bf16.gmra.mxu0 %v7159
  %v7249 = vpop.f32.mrf.mxu0
  %v7250 = vadd.f32 0.0, %v7249
  %v7251 = vpop.f32.mrf.mxu0
  %v7252 = vpop.f32.mrf.mxu0
  %v7253 = vadd.f32 0.0, %v7252
  %v7254 = vpop.f32.mrf.mxu0
  %7255 = vmatprep.mubr.bf16.mxu0 0
  %7256 = vmatmul.mubr.bf16.gmra.mxu0 %v7162
  %v7257 = vpop.f32.mrf.mxu0
  %v7258 = vadd.f32 0.0, %v7257
  %v7259 = vpop.f32.mrf.mxu0
  %v7260 = vpop.f32.mrf.mxu0
  %v7261 = vadd.f32 0.0, %v7260
  %v7262 = vpop.f32.mrf.mxu0
  %7263 = vdwg.mxu0
  %v7264 = vadd.f32 %v7098, %v7202
  %v7265 = vadd.f32 %v7099, %v7205
  %v7266 = vadd.f32 %v7100, %v7210
  %v7267 = vadd.f32 %v7101, %v7213
  %v7268 = vadd.f32 %v7102, %v7218
  %v7269 = vadd.f32 %v7103, %v7221
  %v7270 = vadd.f32 %v7104, %v7226
  %v7271 = vadd.f32 %v7105, %v7229
  %v7272 = vadd.f32 %v7106, %v7234
  %v7273 = vadd.f32 %v7107, %v7237
  %v7274 = vadd.f32 %v7108, %v7242
  %v7275 = vadd.f32 %v7109, %v7245
  %v7276 = vadd.f32 %v7110, %v7250
  %v7277 = vadd.f32 %v7111, %v7253
  %v7278 = vadd.f32 %v7112, %v7258
  %v7279 = vadd.f32 %v7113, %v7261
  %v7280 = vsel %vm100, %v7264, 0.0
  %7281 = vadd.xlane.f32.xlu0 %v7280
  %v7282 = vpop.xlane.xlu0 %7281
  %v7283 = vsel %vm100, %v7265, 0.0
  %7284 = vadd.xlane.f32.xlu0 %v7283
  %v7285 = vpop.xlane.xlu0 %7284
  %v7286 = vsel %vm100, %v7266, 0.0
  %7287 = vadd.xlane.f32.xlu0 %v7286
  %v7288 = vpop.xlane.xlu0 %7287
  %v7289 = vsel %vm100, %v7267, 0.0
  %7290 = vadd.xlane.f32.xlu0 %v7289
  %v7291 = vpop.xlane.xlu0 %7290
  %v7292 = vsel %vm100, %v7268, 0.0
  %7293 = vadd.xlane.f32.xlu0 %v7292
  %v7294 = vpop.xlane.xlu0 %7293
  %v7295 = vsel %vm100, %v7269, 0.0
  %7296 = vadd.xlane.f32.xlu0 %v7295
  %v7297 = vpop.xlane.xlu0 %7296
  %v7298 = vsel %vm100, %v7270, 0.0
  %7299 = vadd.xlane.f32.xlu0 %v7298
  %v7300 = vpop.xlane.xlu0 %7299
  %v7301 = vsel %vm100, %v7271, 0.0
  %7302 = vadd.xlane.f32.xlu0 %v7301
  %v7303 = vpop.xlane.xlu0 %7302
  %v7304 = vsel %vm100, %v7272, 0.0
  %7305 = vadd.xlane.f32.xlu0 %v7304
  %v7306 = vpop.xlane.xlu0 %7305
  %v7307 = vsel %vm100, %v7273, 0.0
  %7308 = vadd.xlane.f32.xlu0 %v7307
  %v7309 = vpop.xlane.xlu0 %7308
  %v7310 = vsel %vm100, %v7274, 0.0
  %7311 = vadd.xlane.f32.xlu0 %v7310
  %v7312 = vpop.xlane.xlu0 %7311
  %v7313 = vsel %vm100, %v7275, 0.0
  %7314 = vadd.xlane.f32.xlu0 %v7313
  %v7315 = vpop.xlane.xlu0 %7314
  %v7316 = vsel %vm100, %v7276, 0.0
  %7317 = vadd.xlane.f32.xlu0 %v7316
  %v7318 = vpop.xlane.xlu0 %7317
  %v7319 = vsel %vm100, %v7277, 0.0
  %7320 = vadd.xlane.f32.xlu0 %v7319
  %v7321 = vpop.xlane.xlu0 %7320
  %v7322 = vsel %vm100, %v7278, 0.0
  %7323 = vadd.xlane.f32.xlu0 %v7322
  %v7324 = vpop.xlane.xlu0 %7323
  %v7325 = vsel %vm100, %v7279, 0.0
  %7326 = vadd.xlane.f32.xlu0 %v7325
  %v7327 = vpop.xlane.xlu0 %7326
  %v7328 = vadd.f32 %v7282, %v7285
  %v7329 = vadd.f32 %v7328, %v7288
  %v7330 = vadd.f32 %v7329, %v7291
  %v7331 = vadd.f32 %v7330, %v7294
  %v7332 = vadd.f32 %v7331, %v7297
  %v7333 = vadd.f32 %v7332, %v7300
  %v7334 = vadd.f32 %v7333, %v7303
  %v7335 = vrot.slane %v7334, 4
  %v7336 = vadd.f32 %v7334, %v7335
  %v7337 = vrot.slane %v7336, 2
  %v7338 = vadd.f32 %v7336, %v7337
  %v7339 = vrot.slane %v7338, 1
  %v7340 = vadd.f32 %v7338, %v7339
  %v7341 = vadd.f32 %v7306, %v7309
  %v7342 = vadd.f32 %v7341, %v7312
  %v7343 = vadd.f32 %v7342, %v7315
  %v7344 = vadd.f32 %v7343, %v7318
  %v7345 = vadd.f32 %v7344, %v7321
  %v7346 = vadd.f32 %v7345, %v7324
  %v7347 = vadd.f32 %v7346, %v7327
  %v7348 = vrot.slane %v7347, 4
  %v7349 = vadd.f32 %v7347, %v7348
  %v7350 = vrot.slane %v7349, 2
  %v7351 = vadd.f32 %v7349, %v7350
  %v7352 = vrot.slane %v7351, 1
  %v7353 = vadd.f32 %v7351, %v7352
  %v7354 = vmul.f32 %v7340, 0.001953125
  %v7355 = vmul.f32 %v7353, 0.001953125
  %v7356 = vsub.f32 %v7264, %v7354
  %v7357 = vsub.f32 %v7265, %v7354
  %v7358 = vsub.f32 %v7266, %v7354
  %v7359 = vsub.f32 %v7267, %v7354
  %v7360 = vsub.f32 %v7268, %v7354
  %v7361 = vsub.f32 %v7269, %v7354
  %v7362 = vsub.f32 %v7270, %v7354
  %v7363 = vsub.f32 %v7271, %v7354
  %v7364 = vsub.f32 %v7272, %v7355
  %v7365 = vsub.f32 %v7273, %v7355
  %v7366 = vsub.f32 %v7274, %v7355
  %v7367 = vsub.f32 %v7275, %v7355
  %v7368 = vsub.f32 %v7276, %v7355
  %v7369 = vsub.f32 %v7277, %v7355
  %v7370 = vsub.f32 %v7278, %v7355
  %v7371 = vsub.f32 %v7279, %v7355
  %v7372 = vmul.f32 %v7356, %v7356
  %v7373 = vmul.f32 %v7357, %v7357
  %v7374 = vmul.f32 %v7358, %v7358
  %v7375 = vmul.f32 %v7359, %v7359
  %v7376 = vmul.f32 %v7360, %v7360
  %v7377 = vmul.f32 %v7361, %v7361
  %v7378 = vmul.f32 %v7362, %v7362
  %v7379 = vmul.f32 %v7363, %v7363
  %v7380 = vmul.f32 %v7364, %v7364
  %v7381 = vmul.f32 %v7365, %v7365
  %v7382 = vmul.f32 %v7366, %v7366
  %v7383 = vmul.f32 %v7367, %v7367
  %v7384 = vmul.f32 %v7368, %v7368
  %v7385 = vmul.f32 %v7369, %v7369
  %v7386 = vmul.f32 %v7370, %v7370
  %v7387 = vmul.f32 %v7371, %v7371
  %v7388 = vsel %vm100, %v7372, 0.0
  %7389 = vadd.xlane.f32.xlu0 %v7388
  %v7390 = vpop.xlane.xlu0 %7389
  %v7391 = vsel %vm100, %v7373, 0.0
  %7392 = vadd.xlane.f32.xlu0 %v7391
  %v7393 = vpop.xlane.xlu0 %7392
  %v7394 = vsel %vm100, %v7374, 0.0
  %7395 = vadd.xlane.f32.xlu0 %v7394
  %v7396 = vpop.xlane.xlu0 %7395
  %v7397 = vsel %vm100, %v7375, 0.0
  %7398 = vadd.xlane.f32.xlu0 %v7397
  %v7399 = vpop.xlane.xlu0 %7398
  %v7400 = vsel %vm100, %v7376, 0.0
  %7401 = vadd.xlane.f32.xlu0 %v7400
  %v7402 = vpop.xlane.xlu0 %7401
  %v7403 = vsel %vm100, %v7377, 0.0
  %7404 = vadd.xlane.f32.xlu0 %v7403
  %v7405 = vpop.xlane.xlu0 %7404
  %v7406 = vsel %vm100, %v7378, 0.0
  %7407 = vadd.xlane.f32.xlu0 %v7406
  %v7408 = vpop.xlane.xlu0 %7407
  %v7409 = vsel %vm100, %v7379, 0.0
  %7410 = vadd.xlane.f32.xlu0 %v7409
  %v7411 = vpop.xlane.xlu0 %7410
  %v7412 = vsel %vm100, %v7380, 0.0
  %7413 = vadd.xlane.f32.xlu0 %v7412
  %v7414 = vpop.xlane.xlu0 %7413
  %v7415 = vsel %vm100, %v7381, 0.0
  %7416 = vadd.xlane.f32.xlu0 %v7415
  %v7417 = vpop.xlane.xlu0 %7416
  %v7418 = vsel %vm100, %v7382, 0.0
  %7419 = vadd.xlane.f32.xlu0 %v7418
  %v7420 = vpop.xlane.xlu0 %7419
  %v7421 = vsel %vm100, %v7383, 0.0
  %7422 = vadd.xlane.f32.xlu0 %v7421
  %v7423 = vpop.xlane.xlu0 %7422
  %v7424 = vsel %vm100, %v7384, 0.0
  %7425 = vadd.xlane.f32.xlu0 %v7424
  %v7426 = vpop.xlane.xlu0 %7425
  %v7427 = vsel %vm100, %v7385, 0.0
  %7428 = vadd.xlane.f32.xlu0 %v7427
  %v7429 = vpop.xlane.xlu0 %7428
  %v7430 = vsel %vm100, %v7386, 0.0
  %7431 = vadd.xlane.f32.xlu0 %v7430
  %v7432 = vpop.xlane.xlu0 %7431
  %v7433 = vsel %vm100, %v7387, 0.0
  %7434 = vadd.xlane.f32.xlu0 %v7433
  %v7435 = vpop.xlane.xlu0 %7434
  %v7436 = vadd.f32 %v7390, %v7393
  %v7437 = vadd.f32 %v7436, %v7396
  %v7438 = vadd.f32 %v7437, %v7399
  %v7439 = vadd.f32 %v7438, %v7402
  %v7440 = vadd.f32 %v7439, %v7405
  %v7441 = vadd.f32 %v7440, %v7408
  %v7442 = vadd.f32 %v7441, %v7411
  %v7443 = vrot.slane %v7442, 4
  %v7444 = vadd.f32 %v7442, %v7443
  %v7445 = vrot.slane %v7444, 2
  %v7446 = vadd.f32 %v7444, %v7445
  %v7447 = vrot.slane %v7446, 1
  %v7448 = vadd.f32 %v7446, %v7447
  %v7449 = vadd.f32 %v7414, %v7417
  %v7450 = vadd.f32 %v7449, %v7420
  %v7451 = vadd.f32 %v7450, %v7423
  %v7452 = vadd.f32 %v7451, %v7426
  %v7453 = vadd.f32 %v7452, %v7429
  %v7454 = vadd.f32 %v7453, %v7432
  %v7455 = vadd.f32 %v7454, %v7435
  %v7456 = vrot.slane %v7455, 4
  %v7457 = vadd.f32 %v7455, %v7456
  %v7458 = vrot.slane %v7457, 2
  %v7459 = vadd.f32 %v7457, %v7458
  %v7460 = vrot.slane %v7459, 1
  %v7461 = vadd.f32 %v7459, %v7460
  %v7462 = vmul.f32 %v7448, 0.001953125
  %v7463 = vmul.f32 %v7461, 0.001953125
  %v7464 = vadd.f32 %v7462, 1e-05
  %v7465 = vadd.f32 %v7463, 1e-05
  %v7466 = vrsqrt.pop %v7464
  %v7467 = vrsqrt.pop %v7465
  %v7468 = vmul.f32 %v7356, %v7466
  %v7469 = vmul.f32 %v7357, %v7466
  %v7470 = vmul.f32 %v7358, %v7466
  %v7471 = vmul.f32 %v7359, %v7466
  %v7472 = vmul.f32 %v7360, %v7466
  %v7473 = vmul.f32 %v7361, %v7466
  %v7474 = vmul.f32 %v7362, %v7466
  %v7475 = vmul.f32 %v7363, %v7466
  %v7476 = vmul.f32 %v7364, %v7467
  %v7477 = vmul.f32 %v7365, %v7467
  %v7478 = vmul.f32 %v7366, %v7467
  %v7479 = vmul.f32 %v7367, %v7467
  %v7480 = vmul.f32 %v7368, %v7467
  %v7481 = vmul.f32 %v7369, %v7467
  %v7482 = vmul.f32 %v7370, %v7467
  %v7483 = vmul.f32 %v7371, %v7467
  %v7484 = vld [vmem:[%s11] sm:$0x1]
  %v7486 = vlaneseq
  %v7487 = vshrl.u32 %v7486, 7
  %v7488 = vsub.s32 0, %v7487
  %v7489 = vrot.slane %v7484, %v7488
  %v7491 = vmul.f32 %v7468, %v7489
  %v7492 = vmul.f32 %v7469, %v7489
  %v7493 = vmul.f32 %v7470, %v7489
  %v7494 = vmul.f32 %v7471, %v7489
  %v7495 = vmul.f32 %v7472, %v7489
  %v7496 = vmul.f32 %v7473, %v7489
  %v7497 = vmul.f32 %v7474, %v7489
  %v7498 = vmul.f32 %v7475, %v7489
  %v7499 = vmul.f32 %v7476, %v7489
  %v7500 = vmul.f32 %v7477, %v7489
  %v7501 = vmul.f32 %v7478, %v7489
  %v7502 = vmul.f32 %v7479, %v7489
  %v7503 = vmul.f32 %v7480, %v7489
  %v7504 = vmul.f32 %v7481, %v7489
  %v7505 = vmul.f32 %v7482, %v7489
  %v7506 = vmul.f32 %v7483, %v7489
  %v7507 = vld [vmem:[%s12] sm:$0x1]
  %v7509 = vlaneseq
  %v7510 = vshrl.u32 %v7509, 7
  %v7511 = vsub.s32 0, %v7510
  %v7512 = vrot.slane %v7507, %v7511
  %v7514 = vadd.f32 %v7491, %v7512
  %v7515 = vadd.f32 %v7492, %v7512
  %v7516 = vadd.f32 %v7493, %v7512
  %v7517 = vadd.f32 %v7494, %v7512
  %v7518 = vadd.f32 %v7495, %v7512
  %v7519 = vadd.f32 %v7496, %v7512
  %v7520 = vadd.f32 %v7497, %v7512
  %v7521 = vadd.f32 %v7498, %v7512
  %v7522 = vadd.f32 %v7499, %v7512
  %v7523 = vadd.f32 %v7500, %v7512
  %v7524 = vadd.f32 %v7501, %v7512
  %v7525 = vadd.f32 %v7502, %v7512
  %v7526 = vadd.f32 %v7503, %v7512
  %v7527 = vadd.f32 %v7504, %v7512
  %v7528 = vadd.f32 %v7505, %v7512
  %v7529 = vadd.f32 %v7506, %v7512
  %s7530 = smul.u32 0, 2
  %s7531 = scalar_lea.vmem %s13, %s7530
  %v7532 = vld [vmem:[%s7531] sm:$0x3]
  %v7535 = vunpack.c.l.s4 1966171168
  %v7536 = vunpack.c.0.s8 %v7535
  %v7537 = vlaneseq
  %v7538 = vshrl.u32 %v7537, 7
  %v7539 = vsub.s32 %v7536, %v7538
  %v7540 = vrot.slane %v7532, %v7539
  %v7541 = vcombine.high %v7540, %v7540
  %v7543 = vunpack.c.l.s4 1966171168
  %v7544 = vunpack.c.0.s8 %v7543
  %v7545 = vlaneseq
  %v7546 = vshrl.u32 %v7545, 7
  %v7547 = vsub.s32 %v7544, %v7546
  %v7548 = vrot.slane %v7540, %v7547
  %v7550 = vunpack.c.l.s4 1966171168
  %v7551 = vunpack.c.0.s8 %v7550
  %v7552 = vlaneseq
  %v7553 = vshrl.u32 %v7552, 7
  %v7554 = vsub.s32 %v7551, %v7553
  %v7555 = vrot.slane %v7541, %v7554
  %v7556 = vlaneseq
  %v7557 = vshrl.u32 %v7556, 7
  %v7558 = vsub.s32 0, %v7557
  %v7559 = vrot.slane %v7548, %v7558
  %v7560 = vlaneseq
  %v7561 = vshrl.u32 %v7560, 7
  %v7562 = vsub.s32 0, %v7561
  %v7563 = vrot.slane %v7555, %v7562
  %v7566 = vadd.f32 %v7514, %v7559
  %v7567 = vadd.f32 %v7515, %v7559
  %v7568 = vadd.f32 %v7516, %v7559
  %v7569 = vadd.f32 %v7517, %v7559
  %v7570 = vadd.f32 %v7518, %v7559
  %v7571 = vadd.f32 %v7519, %v7559
  %v7572 = vadd.f32 %v7520, %v7559
  %v7573 = vadd.f32 %v7521, %v7559
  %v7574 = vadd.f32 %v7522, %v7563
  %v7575 = vadd.f32 %v7523, %v7563
  %v7576 = vadd.f32 %v7524, %v7563
  %v7577 = vadd.f32 %v7525, %v7563
  %v7578 = vadd.f32 %v7526, %v7563
  %v7579 = vadd.f32 %v7527, %v7563
  %v7580 = vadd.f32 %v7528, %v7563
  %v7581 = vadd.f32 %v7529, %v7563
  %7582 = vst.msk [vmem:[%s14] sm:$0xff] %vm100, %v7566
  %7583 = vst.msk [vmem:[%s14 + $0x8] sm:$0xff] %vm100, %v7567
  %7584 = vst.msk [vmem:[%s14 + $0x10] sm:$0xff] %vm100, %v7568
  %7585 = vst.msk [vmem:[%s14 + $0x18] sm:$0xff] %vm100, %v7569
  %7586 = vst.msk [vmem:[%s14 + $0x20] sm:$0xff] %vm100, %v7570
  %7587 = vst.msk [vmem:[%s14 + $0x28] sm:$0xff] %vm100, %v7571
  %7588 = vst.msk [vmem:[%s14 + $0x30] sm:$0xff] %vm100, %v7572
  %7589 = vst.msk [vmem:[%s14 + $0x38] sm:$0xff] %vm100, %v7573
  %7590 = vst.msk [vmem:[%s14 + $0x40] sm:$0xff] %vm100, %v7574
  %7591 = vst.msk [vmem:[%s14 + $0x48] sm:$0xff] %vm100, %v7575
  %7592 = vst.msk [vmem:[%s14 + $0x50] sm:$0xff] %vm100, %v7576
  %7593 = vst.msk [vmem:[%s14 + $0x58] sm:$0xff] %vm100, %v7577
  %7594 = vst.msk [vmem:[%s14 + $0x60] sm:$0xff] %vm100, %v7578
  %7595 = vst.msk [vmem:[%s14 + $0x68] sm:$0xff] %vm100, %v7579
  %7596 = vst.msk [vmem:[%s14 + $0x70] sm:$0xff] %vm100, %v7580
  %7597 = vst.msk [vmem:[%s14 + $0x78] sm:$0xff] %vm100, %v7581
  // Predicated region
  $region58: #{tpu_custom_call.1} parent=0 // pred_check
    _
  $region59: #{tpu_custom_call.1} parent=0 // pred_check_branch
    %7599 = sbr.rel (0) target = $region61
  $region60: #{tpu_custom_call.1} parent=0 // pred_region
    _
  $region61: #{tpu_custom_call.1} parent=0 // pred_fallthru
    _
  // Predicated region
  $region62: #{tpu_custom_call.1} parent=0 // pred_check
    _
  $region63: #{tpu_custom_call.1} parent=0 // pred_check_branch
    %7601 = sbr.rel (0) target = $region65
  $region64: #{tpu_custom_call.1} parent=0 // pred_region
    _
  $region65: #{tpu_custom_call.1} parent=0 // pred_fallthru
    _

</llo_original>
